<compile_context>
chip_gen: v6e
topology: v6e:2x2x1
jax: 0.10.0
libtpu: 0.0.40
codegen_flags: <defaults>
</compile_context>

<pallas_src>
import jax
import jax.numpy as jnp
from jax.experimental import pallas as pl
from jax.experimental.pallas import tpu as pltpu


# ----------------------------------------------------------------------------
# Fused Pallas kernel: gather + 2-layer LSTM + FC + sigmoid (last timestep only)
# ----------------------------------------------------------------------------
def _fused_sentiment_lstm_kernel(
        ids_ref,     # (T*B,) int32, SMEM  : time-major token ids
        emb_ref,     # (V, 1, 4H) f32      : embedding @ Wih1^T + b1, i/f/o cols *0.5
        wpack_ref,   # (120, 4H) f32       : [Whh1 | Wih2 | Whh2 | b2 | fc_w | fc_b]
        hc0_ref,     # (4, B, H) f32       : [h0_l0, h0_l1, c0_l0, c0_l1]
        sig_ref,     # (B, 1) f32 out      : sigmoid(fc(h2[T-1]))
        hcn_ref,     # (4, B, H) f32 out   : [h1_n, h2_n, c1_n, c2_n]
        gx_sc,       # (T, B, 4H) VMEM scratch : per-step input-projected gates
        h1_seq):     # (T, B, H)  VMEM scratch : layer-1 hidden sequence
    T, B, four_h = gx_sc.shape
    H = four_h // 4
    HIGH = jax.lax.Precision.HIGHEST
    # T-aware unroll: full unroll only for tiny sequences.
    unroll = True if T <= 16 else 8

    # ---- 1. In-kernel embedding gather into the layer-1 gate scratch ---------
    # Dynamic index only on the leading (non-tiled) dim of emb_ref.
    def gather_step(t, carry):
        for b in range(B):                       # B is a tiny static constant
            gx_sc[t, b:b + 1, :] = emb_ref[ids_ref[t * B + b]]
        return carry
    jax.lax.fori_loop(0, T, gather_step, 0, unroll=unroll)

    # ---- 2. Load packed weights once (all 8-sublane-aligned static slices) ---
    whh1 = wpack_ref[0:H, :]                     # (H, 4H)  i/f/o cols pre-*0.5
    wih2 = wpack_ref[H:2 * H, :]                 # (H, 4H)
    whh2 = wpack_ref[2 * H:3 * H, :]             # (H, 4H)
    b2 = wpack_ref[3 * H:3 * H + 1, :]           # (1, 4H)
    fcw = wpack_ref[3 * H + 8:3 * H + 9, 0:H]    # (1, H)
    fcb = wpack_ref[3 * H + 16:3 * H + 17, 0:1]  # (1, 1)

    # Hoisted gate-lane mask (g gate lives in lanes [2H, 3H)).
    lane = jax.lax.broadcasted_iota(jnp.int32, (B, four_h), 1)
    g_mask = (lane >= 2 * H) & (lane < 3 * H)

    def lstm_cell(gates_half, c):
        # i/f/o pre-activations arrive pre-scaled by 0.5, so a SINGLE tanh over
        # the full (B, 4H) vreg yields tanh(g) and 0.5*tanh(x/2)+0.5 == sigmoid(x).
        t = jnp.tanh(gates_half)
        act = jnp.where(g_mask, t, 0.5 * t + 0.5)
        i_g = act[:, 0 * H:1 * H]
        f_g = act[:, 1 * H:2 * H]
        g_g = act[:, 2 * H:3 * H]
        o_g = act[:, 3 * H:4 * H]
        c_new = f_g * c + i_g * g_g
        h_new = o_g * jnp.tanh(c_new)
        return h_new, c_new

    # ---- 3. Layer-1 recurrence; record h1 sequence for the hoisted projection
    def l1_step(t, carry):
        h, c = carry
        g = gx_sc[t] + jnp.dot(h, whh1, precision=HIGH,
                               preferred_element_type=jnp.float32)
        h, c = lstm_cell(g, c)
        h1_seq[t] = h
        return (h, c)
    h1, c1 = jax.lax.fori_loop(0, T, l1_step,
                               (hc0_ref[0], hc0_ref[2]), unroll=unroll)

    # ---- 4. Hoisted layer-2 input projection: ONE (T*B,H)@(H,4H) MXU pass ----
    h1_flat = h1_seq[...].reshape(T * B, H)
    gx2 = jnp.dot(h1_flat, wih2, precision=HIGH,
                  preferred_element_type=jnp.float32) + b2
    gx_sc[...] = gx2.reshape(T, B, four_h)

    # ---- 5. Layer-2 recurrence: only h @ Whh2 + cell math on the serial path -
    # (Inter-layer dropout = identity, eval mode.)
    def l2_step(t, carry):
        h, c = carry
        g = gx_sc[t] + jnp.dot(h, whh2, precision=HIGH,
                               preferred_element_type=jnp.float32)
        return lstm_cell(g, c)
    h2, c2 = jax.lax.fori_loop(0, T, l2_step,
                               (hc0_ref[1], hc0_ref[3]), unroll=unroll)

    # ---- 6. Final states (written once) + FC + sigmoid on the LAST step only -
    hcn_ref[0] = h1
    hcn_ref[1] = h2
    hcn_ref[2] = c1
    hcn_ref[3] = c2
    fc = jnp.sum(h2 * fcw, axis=1, keepdims=True) + fcb   # fc is (H,1) -> lane reduce
    sig_ref[...] = jax.nn.sigmoid(fc)


def sentiment_lstm_pallas(ids, emb_proj, wpack, hc0):
    """ids: (T*B,) int32 time-major; emb_proj: (V,1,4H); wpack: (120,4H); hc0: (4,B,H)."""
    TB = ids.shape[0]
    four_h = emb_proj.shape[-1]
    H = four_h // 4
    L2, B, _ = hc0.shape
    assert L2 == 4, "fused kernel is specialized to n_layers=2"
    T = TB // B
    n_out = 1          # fused FC reduction is specialized to n_output == 1

    def full_spec(shape):
        nd = len(shape)
        return pl.BlockSpec(shape, lambda: (0,) * nd)

    out_shape = (
        jax.ShapeDtypeStruct((B, n_out), jnp.float32),   # sigmoid(fc(h2[T-1]))
        jax.ShapeDtypeStruct((L2, B, H), jnp.float32),   # [h1_n, h2_n, c1_n, c2_n]
    )
    return pl.pallas_call(
        _fused_sentiment_lstm_kernel,
        out_shape=out_shape,
        in_specs=[
            pl.BlockSpec(memory_space=pltpu.MemorySpace.SMEM),  # token ids
            full_spec(emb_proj.shape),
            full_spec(wpack.shape),
            full_spec(hc0.shape),
        ],
        out_specs=tuple(full_spec(s.shape) for s in out_shape),
        scratch_shapes=[
            pltpu.VMEM((T, B, four_h), jnp.float32),   # gate pre-activations
            pltpu.VMEM((T, B, H), jnp.float32),        # layer-1 hidden sequence
        ],
    )(ids, emb_proj, wpack, hc0)


# ----------------------------------------------------------------------------
# Parameter init + one-time fusion/pre-scaling of the weights
# ----------------------------------------------------------------------------
def init_params(key, n_vocab, n_embed, n_hidden, n_output, n_layers):
    params = {}
    keys = jax.random.split(key, 2 + 4 * n_layers + 2)
    k = iter(keys)
    params["embedding"] = jax.random.normal(next(k), (n_vocab, n_embed), jnp.float32)
    bound = 1.0 / jnp.sqrt(n_hidden)
    lstm = []
    for layer in range(n_layers):
        d_in = n_embed if layer == 0 else n_hidden
        wih = jax.random.uniform(next(k), (4 * n_hidden, d_in), jnp.float32, -bound, bound)
        whh = jax.random.uniform(next(k), (4 * n_hidden, n_hidden), jnp.float32, -bound, bound)
        bih = jax.random.uniform(next(k), (4 * n_hidden,), jnp.float32, -bound, bound)
        bhh = jax.random.uniform(next(k), (4 * n_hidden,), jnp.float32, -bound, bound)
        lstm.append({"wih": wih, "whh": whh, "bih": bih, "bhh": bhh})
    params["lstm"] = lstm
    fc_bound = 1.0 / jnp.sqrt(n_hidden)
    params["fc_w"] = jax.random.uniform(next(k), (n_output, n_hidden), jnp.float32,
                                        -fc_bound, fc_bound)
    params["fc_b"] = jax.random.uniform(next(k), (n_output,), jnp.float32,
                                        -fc_bound, fc_bound)
    return params


def prepare_fused_params(params):
    """One-time reparameterization for the fused kernel.

    * emb_proj = embedding @ Wih1^T + (bih1+bhh1), i/f/o columns * 0.5
      (the 0.5 makes sigmoid(x) == 0.5*tanh(x_half)+0.5 inside the kernel).
    * All LSTM weights transposed to (in, 4H) with the same column scaling,
      packed with the FC weights into a single lane-aligned (120, 4H) array.
    """
    HIGH = jax.lax.Precision.HIGHEST
    p1, p2 = params["lstm"]
    H = p1["whh"].shape[1]
    n_out = params["fc_w"].shape[0]
    assert n_out == 1, "fused FC is specialized to n_output == 1"

    # gate order (PyTorch): i, f, g, o -> scale i/f/o by 0.5, keep g at 1.0
    s = jnp.concatenate([jnp.full((2 * H,), 0.5, jnp.float32),
                         jnp.ones((H,), jnp.float32),
                         jnp.full((H,), 0.5, jnp.float32)])

    emb_proj = (jnp.dot(params["embedding"], p1["wih"].T, precision=HIGH)
                + p1["bih"] + p1["bhh"]) * s                     # (V, 4H)
    emb_proj = emb_proj.reshape(emb_proj.shape[0], 1, 4 * H)     # (V, 1, 4H)

    whh1 = p1["whh"].T * s                                       # (H, 4H)
    wih2 = p2["wih"].T * s                                       # (H, 4H)
    whh2 = p2["whh"].T * s                                       # (H, 4H)
    b2 = ((p2["bih"] + p2["bhh"]) * s).reshape(1, 4 * H)         # (1, 4H)
    fcw_row = jnp.pad(params["fc_w"], ((0, 0), (0, 3 * H)))      # (1, 4H)
    fcb_row = jnp.broadcast_to(params["fc_b"].reshape(1, 1), (1, 4 * H))
    pad7 = jnp.zeros((7, 4 * H), jnp.float32)
    # rows: 0:H whh1 | H:2H wih2 | 2H:3H whh2 | 3H b2 | 3H+8 fc_w | 3H+16 fc_b
    wpack = jnp.concatenate([whh1, wih2, whh2, b2, pad7,
                             fcw_row, pad7, fcb_row, pad7], axis=0)
    return {"emb_proj": emb_proj.astype(jnp.float32),
            "wpack": wpack.astype(jnp.float32)}


# ----------------------------------------------------------------------------
# Forward pass (matches SentimentLSTM.forward semantics, eval mode)
# ----------------------------------------------------------------------------
@jax.jit
def sentiment_lstm_forward(fused, input_words, hidden):
    """input_words: (B, T) int32; hidden: tuple of (n_layers, B, H) arrays.

    Returns (sigmoid_last (B,), (h_n, c_n)) like SentimentLSTM.forward.
    """
    h0_all, c0_all = hidden
    L = h0_all.shape[0]
    # time-major flat token ids (for B == 1 this is a pure reshape)
    ids = jnp.swapaxes(input_words, 0, 1).reshape(-1).astype(jnp.int32)
    hc0 = jnp.concatenate([h0_all, c0_all], axis=0)              # (2L, B, H)
    sig, hcn = sentiment_lstm_pallas(ids, fused["emb_proj"], fused["wpack"], hc0)
    h_n, c_n = hcn[:L], hcn[L:]
    # nn.Dropout in eval mode = identity;
    # sigmoid_out.view(B, -1)[:, -1] == last output column of the last timestep.
    return sig[:, -1], (h_n, c_n)


# ----------------------------------------------------------------------------
# Pure-JAX reference (for correctness check)
# ----------------------------------------------------------------------------
def reference_forward(params, input_words, hidden):
    HIGH = jax.lax.Precision.HIGHEST
    h0_all, c0_all = hidden
    n_layers, B, H = h0_all.shape
    x = params["embedding"][input_words]  # (B, T, E)

    def run_layer(x_btd, p, h0, c0):
        def step(carry, x_t):
            h, c = carry
            gates = (jnp.dot(x_t, p["wih"].T, precision=HIGH)
                     + jnp.dot(h, p["whh"].T, precision=HIGH)
                     + p["bih"] + p["bhh"])
            i_g = jax.nn.sigmoid(gates[:, 0 * H:1 * H])
            f_g = jax.nn.sigmoid(gates[:, 1 * H:2 * H])
            g_g = jnp.tanh(gates[:, 2 * H:3 * H])
            o_g = jax.nn.sigmoid(gates[:, 3 * H:4 * H])
            c_new = f_g * c + i_g * g_g
            h_new = o_g * jnp.tanh(c_new)
            return (h_new, c_new), h_new
        (h_n, c_n), ys = jax.lax.scan(step, (h0, c0),
                                      jnp.transpose(x_btd, (1, 0, 2)))
        return jnp.transpose(ys, (1, 0, 2)), h_n, c_n

    hs, cs = [], []
    for layer in range(n_layers):
        x, h_n, c_n = run_layer(x, params["lstm"][layer],
                                h0_all[layer], c0_all[layer])
        hs.append(h_n)
        cs.append(c_n)
    fc = jnp.dot(x.reshape(-1, H), params["fc_w"].T, precision=HIGH) + params["fc_b"]
    sig = jax.nn.sigmoid(fc).reshape(x.shape[0], -1)
    return sig[:, -1], (jnp.stack(hs), jnp.stack(cs))


# ----------------------------------------------------------------------------
# Main
# ----------------------------------------------------------------------------
if __name__ == "__main__":
    # Small shapes consistent with the module (batch_size=1 in the script);
    # H=32 keeps 4H=128 lane-aligned.
    n_vocab, n_embed, n_hidden, n_output, n_layers = 50, 50, 32, 1, 2
    batch_size, seq_len = 1, 8

    key = jax.random.PRNGKey(0)
    pkey, dkey = jax.random.split(key)
    params = init_params(pkey, n_vocab, n_embed, n_hidden, n_output, n_layers)
    fused = prepare_fused_params(params)

    input_words = jax.random.randint(dkey, (batch_size, seq_len), 0, n_vocab,
                                     dtype=jnp.int32)
    # init_hidden: zeros of shape (n_layers, B, H)
    hidden = (jnp.zeros((n_layers, batch_size, n_hidden), jnp.float32),
              jnp.zeros((n_layers, batch_size, n_hidden), jnp.float32))

    sig_last, (h_n, c_n) = sentiment_lstm_forward(fused, input_words, hidden)
    jax.block_until_ready((sig_last, h_n, c_n))

    ref_sig, (ref_h, ref_c) = reference_forward(params, input_words, hidden)
    assert jnp.allclose(sig_last, ref_sig, atol=1e-5, rtol=1e-5)
    assert jnp.allclose(h_n, ref_h, atol=1e-5, rtol=1e-5)
    assert jnp.allclose(c_n, ref_c, atol=1e-5, rtol=1e-5)

    print("KERNEL_OK")
</pallas_src>

<mosaic_0001>
module attributes {stable_mosaic.version = 11 : i64} {
  func.func @_fused_sentiment_lstm_kernel(%arg0: memref<8xi32, #tpu.memory_space<smem>>, %arg1: memref<50x1x128xf32, #tpu.memory_space<vmem>>, %arg2: memref<120x128xf32, #tpu.memory_space<vmem>>, %arg3: memref<4x1x32xf32, #tpu.memory_space<vmem>>, %arg4: memref<1x1xf32, #tpu.memory_space<vmem>>, %arg5: memref<4x1x32xf32, #tpu.memory_space<vmem>>, %arg6: memref<8x1x128xf32, #tpu.memory_space<vmem>>, %arg7: memref<8x1x32xf32, #tpu.memory_space<vmem>>) attributes {dimension_semantics = [], scalar_prefetch = 0 : i64, scratch_operands = 2 : i64, tpu.core_type = #tpu.core_type<tc>} {
    %c0_i32 = arith.constant 0 : i32
    %c1_i32 = arith.constant 1 : i32
    %0 = arith.muli %c0_i32, %c1_i32 : i32
    %c0_i32_0 = arith.constant 0 : i32
    %1 = arith.addi %0, %c0_i32_0 : i32
    %2 = arith.index_cast %1 : i32 to index
    %3 = memref.load %arg0[%2] : memref<8xi32, #tpu.memory_space<smem>>
    %4 = arith.index_cast %3 : i32 to index
    %c0 = arith.constant 0 : index
    %c0_1 = arith.constant 0 : index
    %5 = vector.load %arg1[%4, %c0, %c0_1] : memref<50x1x128xf32, #tpu.memory_space<vmem>>, vector<1x1x128xf32>
    %6 = vector.shape_cast %5 : vector<1x1x128xf32> to vector<1x128xf32>
    %7 = arith.index_cast %c0_i32 : i32 to index
    %c0_2 = arith.constant 0 : index
    %c0_3 = arith.constant 0 : index
    %8 = vector.load %arg6[%7, %c0_2, %c0_3] : memref<8x1x128xf32, #tpu.memory_space<vmem>>, vector<1x1x128xf32>
    %9 = vector.shape_cast %8 : vector<1x1x128xf32> to vector<1x128xf32>
    %10 = vector.shape_cast %6 : vector<1x128xf32> to vector<1x1x128xf32>
    tpu.vector_store %arg6[%7, %c0_2, %c0_3], %10 {strides = array<i32>} : memref<8x1x128xf32, #tpu.memory_space<vmem>>, vector<1x1x128xf32>,
    %c1_i32_4 = arith.constant 1 : i32
    %c1_i32_5 = arith.constant 1 : i32
    %11 = arith.muli %c1_i32_4, %c1_i32_5 : i32
    %c0_i32_6 = arith.constant 0 : i32
    %12 = arith.addi %11, %c0_i32_6 : i32
    %13 = arith.index_cast %12 : i32 to index
    %14 = memref.load %arg0[%13] : memref<8xi32, #tpu.memory_space<smem>>
    %15 = arith.index_cast %14 : i32 to index
    %c0_7 = arith.constant 0 : index
    %c0_8 = arith.constant 0 : index
    %16 = vector.load %arg1[%15, %c0_7, %c0_8] : memref<50x1x128xf32, #tpu.memory_space<vmem>>, vector<1x1x128xf32>
    %17 = vector.shape_cast %16 : vector<1x1x128xf32> to vector<1x128xf32>
    %18 = arith.index_cast %c1_i32_4 : i32 to index
    %c0_9 = arith.constant 0 : index
    %c0_10 = arith.constant 0 : index
    %19 = vector.load %arg6[%18, %c0_9, %c0_10] : memref<8x1x128xf32, #tpu.memory_space<vmem>>, vector<1x1x128xf32>
    %20 = vector.shape_cast %19 : vector<1x1x128xf32> to vector<1x128xf32>
    %21 = vector.shape_cast %17 : vector<1x128xf32> to vector<1x1x128xf32>
    tpu.vector_store %arg6[%18, %c0_9, %c0_10], %21 {strides = array<i32>} : memref<8x1x128xf32, #tpu.memory_space<vmem>>, vector<1x1x128xf32>,
    %c2_i32 = arith.constant 2 : i32
    %c1_i32_11 = arith.constant 1 : i32
    %22 = arith.muli %c2_i32, %c1_i32_11 : i32
    %c0_i32_12 = arith.constant 0 : i32
    %23 = arith.addi %22, %c0_i32_12 : i32
    %24 = arith.index_cast %23 : i32 to index
    %25 = memref.load %arg0[%24] : memref<8xi32, #tpu.memory_space<smem>>
    %26 = arith.index_cast %25 : i32 to index
    %c0_13 = arith.constant 0 : index
    %c0_14 = arith.constant 0 : index
    %27 = vector.load %arg1[%26, %c0_13, %c0_14] : memref<50x1x128xf32, #tpu.memory_space<vmem>>, vector<1x1x128xf32>
    %28 = vector.shape_cast %27 : vector<1x1x128xf32> to vector<1x128xf32>
    %29 = arith.index_cast %c2_i32 : i32 to index
    %c0_15 = arith.constant 0 : index
    %c0_16 = arith.constant 0 : index
    %30 = vector.load %arg6[%29, %c0_15, %c0_16] : memref<8x1x128xf32, #tpu.memory_space<vmem>>, vector<1x1x128xf32>
    %31 = vector.shape_cast %30 : vector<1x1x128xf32> to vector<1x128xf32>
    %32 = vector.shape_cast %28 : vector<1x128xf32> to vector<1x1x128xf32>
    tpu.vector_store %arg6[%29, %c0_15, %c0_16], %32 {strides = array<i32>} : memref<8x1x128xf32, #tpu.memory_space<vmem>>, vector<1x1x128xf32>,
    %c3_i32 = arith.constant 3 : i32
    %c1_i32_17 = arith.constant 1 : i32
    %33 = arith.muli %c3_i32, %c1_i32_17 : i32
    %c0_i32_18 = arith.constant 0 : i32
    %34 = arith.addi %33, %c0_i32_18 : i32
    %35 = arith.index_cast %34 : i32 to index
    %36 = memref.load %arg0[%35] : memref<8xi32, #tpu.memory_space<smem>>
    %37 = arith.index_cast %36 : i32 to index
    %c0_19 = arith.constant 0 : index
    %c0_20 = arith.constant 0 : index
    %38 = vector.load %arg1[%37, %c0_19, %c0_20] : memref<50x1x128xf32, #tpu.memory_space<vmem>>, vector<1x1x128xf32>
    %39 = vector.shape_cast %38 : vector<1x1x128xf32> to vector<1x128xf32>
    %40 = arith.index_cast %c3_i32 : i32 to index
    %c0_21 = arith.constant 0 : index
    %c0_22 = arith.constant 0 : index
    %41 = vector.load %arg6[%40, %c0_21, %c0_22] : memref<8x1x128xf32, #tpu.memory_space<vmem>>, vector<1x1x128xf32>
    %42 = vector.shape_cast %41 : vector<1x1x128xf32> to vector<1x128xf32>
    %43 = vector.shape_cast %39 : vector<1x128xf32> to vector<1x1x128xf32>
    tpu.vector_store %arg6[%40, %c0_21, %c0_22], %43 {strides = array<i32>} : memref<8x1x128xf32, #tpu.memory_space<vmem>>, vector<1x1x128xf32>,
    %c4_i32 = arith.constant 4 : i32
    %c1_i32_23 = arith.constant 1 : i32
    %44 = arith.muli %c4_i32, %c1_i32_23 : i32
    %c0_i32_24 = arith.constant 0 : i32
    %45 = arith.addi %44, %c0_i32_24 : i32
    %46 = arith.index_cast %45 : i32 to index
    %47 = memref.load %arg0[%46] : memref<8xi32, #tpu.memory_space<smem>>
    %48 = arith.index_cast %47 : i32 to index
    %c0_25 = arith.constant 0 : index
    %c0_26 = arith.constant 0 : index
    %49 = vector.load %arg1[%48, %c0_25, %c0_26] : memref<50x1x128xf32, #tpu.memory_space<vmem>>, vector<1x1x128xf32>
    %50 = vector.shape_cast %49 : vector<1x1x128xf32> to vector<1x128xf32>
    %51 = arith.index_cast %c4_i32 : i32 to index
    %c0_27 = arith.constant 0 : index
    %c0_28 = arith.constant 0 : index
    %52 = vector.load %arg6[%51, %c0_27, %c0_28] : memref<8x1x128xf32, #tpu.memory_space<vmem>>, vector<1x1x128xf32>
    %53 = vector.shape_cast %52 : vector<1x1x128xf32> to vector<1x128xf32>
    %54 = vector.shape_cast %50 : vector<1x128xf32> to vector<1x1x128xf32>
    tpu.vector_store %arg6[%51, %c0_27, %c0_28], %54 {strides = array<i32>} : memref<8x1x128xf32, #tpu.memory_space<vmem>>, vector<1x1x128xf32>,
    %c5_i32 = arith.constant 5 : i32
    %c1_i32_29 = arith.constant 1 : i32
    %55 = arith.muli %c5_i32, %c1_i32_29 : i32
    %c0_i32_30 = arith.constant 0 : i32
    %56 = arith.addi %55, %c0_i32_30 : i32
    %57 = arith.index_cast %56 : i32 to index
    %58 = memref.load %arg0[%57] : memref<8xi32, #tpu.memory_space<smem>>
    %59 = arith.index_cast %58 : i32 to index
    %c0_31 = arith.constant 0 : index
    %c0_32 = arith.constant 0 : index
    %60 = vector.load %arg1[%59, %c0_31, %c0_32] : memref<50x1x128xf32, #tpu.memory_space<vmem>>, vector<1x1x128xf32>
    %61 = vector.shape_cast %60 : vector<1x1x128xf32> to vector<1x128xf32>
    %62 = arith.index_cast %c5_i32 : i32 to index
    %c0_33 = arith.constant 0 : index
    %c0_34 = arith.constant 0 : index
    %63 = vector.load %arg6[%62, %c0_33, %c0_34] : memref<8x1x128xf32, #tpu.memory_space<vmem>>, vector<1x1x128xf32>
    %64 = vector.shape_cast %63 : vector<1x1x128xf32> to vector<1x128xf32>
    %65 = vector.shape_cast %61 : vector<1x128xf32> to vector<1x1x128xf32>
    tpu.vector_store %arg6[%62, %c0_33, %c0_34], %65 {strides = array<i32>} : memref<8x1x128xf32, #tpu.memory_space<vmem>>, vector<1x1x128xf32>,
    %c6_i32 = arith.constant 6 : i32
    %c1_i32_35 = arith.constant 1 : i32
    %66 = arith.muli %c6_i32, %c1_i32_35 : i32
    %c0_i32_36 = arith.constant 0 : i32
    %67 = arith.addi %66, %c0_i32_36 : i32
    %68 = arith.index_cast %67 : i32 to index
    %69 = memref.load %arg0[%68] : memref<8xi32, #tpu.memory_space<smem>>
    %70 = arith.index_cast %69 : i32 to index
    %c0_37 = arith.constant 0 : index
    %c0_38 = arith.constant 0 : index
    %71 = vector.load %arg1[%70, %c0_37, %c0_38] : memref<50x1x128xf32, #tpu.memory_space<vmem>>, vector<1x1x128xf32>
    %72 = vector.shape_cast %71 : vector<1x1x128xf32> to vector<1x128xf32>
    %73 = arith.index_cast %c6_i32 : i32 to index
    %c0_39 = arith.constant 0 : index
    %c0_40 = arith.constant 0 : index
    %74 = vector.load %arg6[%73, %c0_39, %c0_40] : memref<8x1x128xf32, #tpu.memory_space<vmem>>, vector<1x1x128xf32>
    %75 = vector.shape_cast %74 : vector<1x1x128xf32> to vector<1x128xf32>
    %76 = vector.shape_cast %72 : vector<1x128xf32> to vector<1x1x128xf32>
    tpu.vector_store %arg6[%73, %c0_39, %c0_40], %76 {strides = array<i32>} : memref<8x1x128xf32, #tpu.memory_space<vmem>>, vector<1x1x128xf32>,
    %c7_i32 = arith.constant 7 : i32
    %c1_i32_41 = arith.constant 1 : i32
    %77 = arith.muli %c7_i32, %c1_i32_41 : i32
    %c0_i32_42 = arith.constant 0 : i32
    %78 = arith.addi %77, %c0_i32_42 : i32
    %79 = arith.index_cast %78 : i32 to index
    %80 = memref.load %arg0[%79] : memref<8xi32, #tpu.memory_space<smem>>
    %81 = arith.index_cast %80 : i32 to index
    %c0_43 = arith.constant 0 : index
    %c0_44 = arith.constant 0 : index
    %82 = vector.load %arg1[%81, %c0_43, %c0_44] : memref<50x1x128xf32, #tpu.memory_space<vmem>>, vector<1x1x128xf32>
    %83 = vector.shape_cast %82 : vector<1x1x128xf32> to vector<1x128xf32>
    %84 = arith.index_cast %c7_i32 : i32 to index
    %c0_45 = arith.constant 0 : index
    %c0_46 = arith.constant 0 : index
    %85 = vector.load %arg6[%84, %c0_45, %c0_46] : memref<8x1x128xf32, #tpu.memory_space<vmem>>, vector<1x1x128xf32>
    %86 = vector.shape_cast %85 : vector<1x1x128xf32> to vector<1x128xf32>
    %87 = vector.shape_cast %83 : vector<1x128xf32> to vector<1x1x128xf32>
    tpu.vector_store %arg6[%84, %c0_45, %c0_46], %87 {strides = array<i32>} : memref<8x1x128xf32, #tpu.memory_space<vmem>>, vector<1x1x128xf32>,
    %c8_i32 = arith.constant 8 : i32
    %c0_47 = arith.constant 0 : index
    %c0_48 = arith.constant 0 : index
    %88 = vector.load %arg2[%c0_47, %c0_48] : memref<120x128xf32, #tpu.memory_space<vmem>>, vector<32x128xf32>
    %c32 = arith.constant 32 : index
    %c0_49 = arith.constant 0 : index
    %89 = vector.load %arg2[%c32, %c0_49] : memref<120x128xf32, #tpu.memory_space<vmem>>, vector<32x128xf32>
    %c64 = arith.constant 64 : index
    %c0_50 = arith.constant 0 : index
    %90 = vector.load %arg2[%c64, %c0_50] : memref<120x128xf32, #tpu.memory_space<vmem>>, vector<32x128xf32>
    %c96 = arith.constant 96 : index
    %c0_51 = arith.constant 0 : index
    %91 = vector.load %arg2[%c96, %c0_51] : memref<120x128xf32, #tpu.memory_space<vmem>>, vector<1x128xf32>
    %c104 = arith.constant 104 : index
    %c0_52 = arith.constant 0 : index
    %92 = vector.load %arg2[%c104, %c0_52] : memref<120x128xf32, #tpu.memory_space<vmem>>, vector<1x32xf32>
    %c112 = arith.constant 112 : index
    %c0_53 = arith.constant 0 : index
    %93 = vector.load %arg2[%c112, %c0_53] : memref<120x128xf32, #tpu.memory_space<vmem>>, vector<1x1xf32>
    %94 = tpu.iota {dimensions = array<i32: 1>} : vector<1x128xi32>
    %c64_i32 = arith.constant 64 : i32
    %95 = vector.broadcast %c64_i32 : i32 to vector<1x128xi32>
    %96 = arith.cmpi sge, %94, %95 : vector<1x128xi32>
    %c96_i32 = arith.constant 96 : i32
    %97 = vector.broadcast %c96_i32 : i32 to vector<1x128xi32>
    %98 = arith.cmpi slt, %94, %97 : vector<1x128xi32>
    %99 = arith.andi %96, %98 : vector<1x128xi1>
    %c0_54 = arith.constant 0 : index
    %c0_55 = arith.constant 0 : index
    %c0_56 = arith.constant 0 : index
    %100 = vector.load %arg3[%c0_54, %c0_55, %c0_56] : memref<4x1x32xf32, #tpu.memory_space<vmem>>, vector<1x1x32xf32>
    %101 = vector.shape_cast %100 : vector<1x1x32xf32> to vector<1x32xf32>
    %c2 = arith.constant 2 : index
    %c0_57 = arith.constant 0 : index
    %c0_58 = arith.constant 0 : index
    %102 = vector.load %arg3[%c2, %c0_57, %c0_58] : memref<4x1x32xf32, #tpu.memory_space<vmem>>, vector<1x1x32xf32>
    %103 = vector.shape_cast %102 : vector<1x1x32xf32> to vector<1x32xf32>
    %c0_i32_59 = arith.constant 0 : i32
    %104 = arith.index_cast %c0_i32_59 : i32 to index
    %c0_60 = arith.constant 0 : index
    %c0_61 = arith.constant 0 : index
    %105 = vector.load %arg6[%104, %c0_60, %c0_61] : memref<8x1x128xf32, #tpu.memory_space<vmem>>, vector<1x1x128xf32>
    %106 = vector.shape_cast %105 : vector<1x1x128xf32> to vector<1x128xf32>
    %cst = arith.constant dense<0.000000e+00> : vector<1x128xf32>
    %107 = tpu.matmul %101, %88, %cst {dimension_numbers = #tpu.dot_dimension_numbers<[1], [0], [0], [1], [0, 0, 1, 1], [], []>, precision = #tpu.contract_precision<fp32>} : vector<1x32xf32>, vector<32x128xf32>, vector<1x128xf32> -> vector<1x128xf32>
    %108 = arith.addf %106, %107 : vector<1x128xf32>
    %109 = math.tanh %108 : vector<1x128xf32>
    %cst_62 = arith.constant 5.000000e-01 : f32
    %110 = vector.broadcast %cst_62 : f32 to vector<1x128xf32>
    %111 = arith.mulf %110, %109 : vector<1x128xf32>
    %cst_63 = arith.constant 5.000000e-01 : f32
    %112 = vector.broadcast %cst_63 : f32 to vector<1x128xf32>
    %113 = arith.addf %111, %112 : vector<1x128xf32>
    %114 = arith.select %99, %109, %113 : vector<1x128xi1>, vector<1x128xf32>
    %115 = vector.extract_strided_slice %114 {offsets = [0, 0], sizes = [1, 32], strides = [1, 1]} : vector<1x128xf32> to vector<1x32xf32>
    %116 = vector.extract_strided_slice %114 {offsets = [0, 32], sizes = [1, 32], strides = [1, 1]} : vector<1x128xf32> to vector<1x32xf32>
    %117 = vector.extract_strided_slice %114 {offsets = [0, 64], sizes = [1, 32], strides = [1, 1]} : vector<1x128xf32> to vector<1x32xf32>
    %118 = vector.extract_strided_slice %114 {offsets = [0, 96], sizes = [1, 32], strides = [1, 1]} : vector<1x128xf32> to vector<1x32xf32>
    %119 = arith.mulf %116, %103 : vector<1x32xf32>
    %120 = arith.mulf %115, %117 : vector<1x32xf32>
    %121 = arith.addf %119, %120 : vector<1x32xf32>
    %122 = math.tanh %121 : vector<1x32xf32>
    %123 = arith.mulf %118, %122 : vector<1x32xf32>
    %124 = arith.index_cast %c0_i32_59 : i32 to index
    %c0_64 = arith.constant 0 : index
    %c0_65 = arith.constant 0 : index
    %125 = vector.load %arg7[%124, %c0_64, %c0_65] : memref<8x1x32xf32, #tpu.memory_space<vmem>>, vector<1x1x32xf32>
    %126 = vector.shape_cast %125 : vector<1x1x32xf32> to vector<1x32xf32>
    %127 = vector.shape_cast %123 : vector<1x32xf32> to vector<1x1x32xf32>
    tpu.vector_store %arg7[%124, %c0_64, %c0_65], %127 {strides = array<i32>} : memref<8x1x32xf32, #tpu.memory_space<vmem>>, vector<1x1x32xf32>,
    %c1_i32_66 = arith.constant 1 : i32
    %128 = arith.index_cast %c1_i32_66 : i32 to index
    %c0_67 = arith.constant 0 : index
    %c0_68 = arith.constant 0 : index
    %129 = vector.load %arg6[%128, %c0_67, %c0_68] : memref<8x1x128xf32, #tpu.memory_space<vmem>>, vector<1x1x128xf32>
    %130 = vector.shape_cast %129 : vector<1x1x128xf32> to vector<1x128xf32>
    %cst_69 = arith.constant dense<0.000000e+00> : vector<1x128xf32>
    %131 = tpu.matmul %123, %88, %cst_69 {dimension_numbers = #tpu.dot_dimension_numbers<[1], [0], [0], [1], [0, 0, 1, 1], [], []>, precision = #tpu.contract_precision<fp32>} : vector<1x32xf32>, vector<32x128xf32>, vector<1x128xf32> -> vector<1x128xf32>
    %132 = arith.addf %130, %131 : vector<1x128xf32>
    %133 = math.tanh %132 : vector<1x128xf32>
    %cst_70 = arith.constant 5.000000e-01 : f32
    %134 = vector.broadcast %cst_70 : f32 to vector<1x128xf32>
    %135 = arith.mulf %134, %133 : vector<1x128xf32>
    %cst_71 = arith.constant 5.000000e-01 : f32
    %136 = vector.broadcast %cst_71 : f32 to vector<1x128xf32>
    %137 = arith.addf %135, %136 : vector<1x128xf32>
    %138 = arith.select %99, %133, %137 : vector<1x128xi1>, vector<1x128xf32>
    %139 = vector.extract_strided_slice %138 {offsets = [0, 0], sizes = [1, 32], strides = [1, 1]} : vector<1x128xf32> to vector<1x32xf32>
    %140 = vector.extract_strided_slice %138 {offsets = [0, 32], sizes = [1, 32], strides = [1, 1]} : vector<1x128xf32> to vector<1x32xf32>
    %141 = vector.extract_strided_slice %138 {offsets = [0, 64], sizes = [1, 32], strides = [1, 1]} : vector<1x128xf32> to vector<1x32xf32>
    %142 = vector.extract_strided_slice %138 {offsets = [0, 96], sizes = [1, 32], strides = [1, 1]} : vector<1x128xf32> to vector<1x32xf32>
    %143 = arith.mulf %140, %121 : vector<1x32xf32>
    %144 = arith.mulf %139, %141 : vector<1x32xf32>
    %145 = arith.addf %143, %144 : vector<1x32xf32>
    %146 = math.tanh %145 : vector<1x32xf32>
    %147 = arith.mulf %142, %146 : vector<1x32xf32>
    %148 = arith.index_cast %c1_i32_66 : i32 to index
    %c0_72 = arith.constant 0 : index
    %c0_73 = arith.constant 0 : index
    %149 = vector.load %arg7[%148, %c0_72, %c0_73] : memref<8x1x32xf32, #tpu.memory_space<vmem>>, vector<1x1x32xf32>
    %150 = vector.shape_cast %149 : vector<1x1x32xf32> to vector<1x32xf32>
    %151 = vector.shape_cast %147 : vector<1x32xf32> to vector<1x1x32xf32>
    tpu.vector_store %arg7[%148, %c0_72, %c0_73], %151 {strides = array<i32>} : memref<8x1x32xf32, #tpu.memory_space<vmem>>, vector<1x1x32xf32>,
    %c2_i32_74 = arith.constant 2 : i32
    %152 = arith.index_cast %c2_i32_74 : i32 to index
    %c0_75 = arith.constant 0 : index
    %c0_76 = arith.constant 0 : index
    %153 = vector.load %arg6[%152, %c0_75, %c0_76] : memref<8x1x128xf32, #tpu.memory_space<vmem>>, vector<1x1x128xf32>
    %154 = vector.shape_cast %153 : vector<1x1x128xf32> to vector<1x128xf32>
    %cst_77 = arith.constant dense<0.000000e+00> : vector<1x128xf32>
    %155 = tpu.matmul %147, %88, %cst_77 {dimension_numbers = #tpu.dot_dimension_numbers<[1], [0], [0], [1], [0, 0, 1, 1], [], []>, precision = #tpu.contract_precision<fp32>} : vector<1x32xf32>, vector<32x128xf32>, vector<1x128xf32> -> vector<1x128xf32>
    %156 = arith.addf %154, %155 : vector<1x128xf32>
    %157 = math.tanh %156 : vector<1x128xf32>
    %cst_78 = arith.constant 5.000000e-01 : f32
    %158 = vector.broadcast %cst_78 : f32 to vector<1x128xf32>
    %159 = arith.mulf %158, %157 : vector<1x128xf32>
    %cst_79 = arith.constant 5.000000e-01 : f32
    %160 = vector.broadcast %cst_79 : f32 to vector<1x128xf32>
    %161 = arith.addf %159, %160 : vector<1x128xf32>
    %162 = arith.select %99, %157, %161 : vector<1x128xi1>, vector<1x128xf32>
    %163 = vector.extract_strided_slice %162 {offsets = [0, 0], sizes = [1, 32], strides = [1, 1]} : vector<1x128xf32> to vector<1x32xf32>
    %164 = vector.extract_strided_slice %162 {offsets = [0, 32], sizes = [1, 32], strides = [1, 1]} : vector<1x128xf32> to vector<1x32xf32>
    %165 = vector.extract_strided_slice %162 {offsets = [0, 64], sizes = [1, 32], strides = [1, 1]} : vector<1x128xf32> to vector<1x32xf32>
    %166 = vector.extract_strided_slice %162 {offsets = [0, 96], sizes = [1, 32], strides = [1, 1]} : vector<1x128xf32> to vector<1x32xf32>
    %167 = arith.mulf %164, %145 : vector<1x32xf32>
    %168 = arith.mulf %163, %165 : vector<1x32xf32>
    %169 = arith.addf %167, %168 : vector<1x32xf32>
    %170 = math.tanh %169 : vector<1x32xf32>
    %171 = arith.mulf %166, %170 : vector<1x32xf32>
    %172 = arith.index_cast %c2_i32_74 : i32 to index
    %c0_80 = arith.constant 0 : index
    %c0_81 = arith.constant 0 : index
    %173 = vector.load %arg7[%172, %c0_80, %c0_81] : memref<8x1x32xf32, #tpu.memory_space<vmem>>, vector<1x1x32xf32>
    %174 = vector.shape_cast %173 : vector<1x1x32xf32> to vector<1x32xf32>
    %175 = vector.shape_cast %171 : vector<1x32xf32> to vector<1x1x32xf32>
    tpu.vector_store %arg7[%172, %c0_80, %c0_81], %175 {strides = array<i32>} : memref<8x1x32xf32, #tpu.memory_space<vmem>>, vector<1x1x32xf32>,
    %c3_i32_82 = arith.constant 3 : i32
    %176 = arith.index_cast %c3_i32_82 : i32 to index
    %c0_83 = arith.constant 0 : index
    %c0_84 = arith.constant 0 : index
    %177 = vector.load %arg6[%176, %c0_83, %c0_84] : memref<8x1x128xf32, #tpu.memory_space<vmem>>, vector<1x1x128xf32>
    %178 = vector.shape_cast %177 : vector<1x1x128xf32> to vector<1x128xf32>
    %cst_85 = arith.constant dense<0.000000e+00> : vector<1x128xf32>
    %179 = tpu.matmul %171, %88, %cst_85 {dimension_numbers = #tpu.dot_dimension_numbers<[1], [0], [0], [1], [0, 0, 1, 1], [], []>, precision = #tpu.contract_precision<fp32>} : vector<1x32xf32>, vector<32x128xf32>, vector<1x128xf32> -> vector<1x128xf32>
    %180 = arith.addf %178, %179 : vector<1x128xf32>
    %181 = math.tanh %180 : vector<1x128xf32>
    %cst_86 = arith.constant 5.000000e-01 : f32
    %182 = vector.broadcast %cst_86 : f32 to vector<1x128xf32>
    %183 = arith.mulf %182, %181 : vector<1x128xf32>
    %cst_87 = arith.constant 5.000000e-01 : f32
    %184 = vector.broadcast %cst_87 : f32 to vector<1x128xf32>
    %185 = arith.addf %183, %184 : vector<1x128xf32>
    %186 = arith.select %99, %181, %185 : vector<1x128xi1>, vector<1x128xf32>
    %187 = vector.extract_strided_slice %186 {offsets = [0, 0], sizes = [1, 32], strides = [1, 1]} : vector<1x128xf32> to vector<1x32xf32>
    %188 = vector.extract_strided_slice %186 {offsets = [0, 32], sizes = [1, 32], strides = [1, 1]} : vector<1x128xf32> to vector<1x32xf32>
    %189 = vector.extract_strided_slice %186 {offsets = [0, 64], sizes = [1, 32], strides = [1, 1]} : vector<1x128xf32> to vector<1x32xf32>
    %190 = vector.extract_strided_slice %186 {offsets = [0, 96], sizes = [1, 32], strides = [1, 1]} : vector<1x128xf32> to vector<1x32xf32>
    %191 = arith.mulf %188, %169 : vector<1x32xf32>
    %192 = arith.mulf %187, %189 : vector<1x32xf32>
    %193 = arith.addf %191, %192 : vector<1x32xf32>
    %194 = math.tanh %193 : vector<1x32xf32>
    %195 = arith.mulf %190, %194 : vector<1x32xf32>
    %196 = arith.index_cast %c3_i32_82 : i32 to index
    %c0_88 = arith.constant 0 : index
    %c0_89 = arith.constant 0 : index
    %197 = vector.load %arg7[%196, %c0_88, %c0_89] : memref<8x1x32xf32, #tpu.memory_space<vmem>>, vector<1x1x32xf32>
    %198 = vector.shape_cast %197 : vector<1x1x32xf32> to vector<1x32xf32>
    %199 = vector.shape_cast %195 : vector<1x32xf32> to vector<1x1x32xf32>
    tpu.vector_store %arg7[%196, %c0_88, %c0_89], %199 {strides = array<i32>} : memref<8x1x32xf32, #tpu.memory_space<vmem>>, vector<1x1x32xf32>,
    %c4_i32_90 = arith.constant 4 : i32
    %200 = arith.index_cast %c4_i32_90 : i32 to index
    %c0_91 = arith.constant 0 : index
    %c0_92 = arith.constant 0 : index
    %201 = vector.load %arg6[%200, %c0_91, %c0_92] : memref<8x1x128xf32, #tpu.memory_space<vmem>>, vector<1x1x128xf32>
    %202 = vector.shape_cast %201 : vector<1x1x128xf32> to vector<1x128xf32>
    %cst_93 = arith.constant dense<0.000000e+00> : vector<1x128xf32>
    %203 = tpu.matmul %195, %88, %cst_93 {dimension_numbers = #tpu.dot_dimension_numbers<[1], [0], [0], [1], [0, 0, 1, 1], [], []>, precision = #tpu.contract_precision<fp32>} : vector<1x32xf32>, vector<32x128xf32>, vector<1x128xf32> -> vector<1x128xf32>
    %204 = arith.addf %202, %203 : vector<1x128xf32>
    %205 = math.tanh %204 : vector<1x128xf32>
    %cst_94 = arith.constant 5.000000e-01 : f32
    %206 = vector.broadcast %cst_94 : f32 to vector<1x128xf32>
    %207 = arith.mulf %206, %205 : vector<1x128xf32>
    %cst_95 = arith.constant 5.000000e-01 : f32
    %208 = vector.broadcast %cst_95 : f32 to vector<1x128xf32>
    %209 = arith.addf %207, %208 : vector<1x128xf32>
    %210 = arith.select %99, %205, %209 : vector<1x128xi1>, vector<1x128xf32>
    %211 = vector.extract_strided_slice %210 {offsets = [0, 0], sizes = [1, 32], strides = [1, 1]} : vector<1x128xf32> to vector<1x32xf32>
    %212 = vector.extract_strided_slice %210 {offsets = [0, 32], sizes = [1, 32], strides = [1, 1]} : vector<1x128xf32> to vector<1x32xf32>
    %213 = vector.extract_strided_slice %210 {offsets = [0, 64], sizes = [1, 32], strides = [1, 1]} : vector<1x128xf32> to vector<1x32xf32>
    %214 = vector.extract_strided_slice %210 {offsets = [0, 96], sizes = [1, 32], strides = [1, 1]} : vector<1x128xf32> to vector<1x32xf32>
    %215 = arith.mulf %212, %193 : vector<1x32xf32>
    %216 = arith.mulf %211, %213 : vector<1x32xf32>
    %217 = arith.addf %215, %216 : vector<1x32xf32>
    %218 = math.tanh %217 : vector<1x32xf32>
    %219 = arith.mulf %214, %218 : vector<1x32xf32>
    %220 = arith.index_cast %c4_i32_90 : i32 to index
    %c0_96 = arith.constant 0 : index
    %c0_97 = arith.constant 0 : index
    %221 = vector.load %arg7[%220, %c0_96, %c0_97] : memref<8x1x32xf32, #tpu.memory_space<vmem>>, vector<1x1x32xf32>
    %222 = vector.shape_cast %221 : vector<1x1x32xf32> to vector<1x32xf32>
    %223 = vector.shape_cast %219 : vector<1x32xf32> to vector<1x1x32xf32>
    tpu.vector_store %arg7[%220, %c0_96, %c0_97], %223 {strides = array<i32>} : memref<8x1x32xf32, #tpu.memory_space<vmem>>, vector<1x1x32xf32>,
    %c5_i32_98 = arith.constant 5 : i32
    %224 = arith.index_cast %c5_i32_98 : i32 to index
    %c0_99 = arith.constant 0 : index
    %c0_100 = arith.constant 0 : index
    %225 = vector.load %arg6[%224, %c0_99, %c0_100] : memref<8x1x128xf32, #tpu.memory_space<vmem>>, vector<1x1x128xf32>
    %226 = vector.shape_cast %225 : vector<1x1x128xf32> to vector<1x128xf32>
    %cst_101 = arith.constant dense<0.000000e+00> : vector<1x128xf32>
    %227 = tpu.matmul %219, %88, %cst_101 {dimension_numbers = #tpu.dot_dimension_numbers<[1], [0], [0], [1], [0, 0, 1, 1], [], []>, precision = #tpu.contract_precision<fp32>} : vector<1x32xf32>, vector<32x128xf32>, vector<1x128xf32> -> vector<1x128xf32>
    %228 = arith.addf %226, %227 : vector<1x128xf32>
    %229 = math.tanh %228 : vector<1x128xf32>
    %cst_102 = arith.constant 5.000000e-01 : f32
    %230 = vector.broadcast %cst_102 : f32 to vector<1x128xf32>
    %231 = arith.mulf %230, %229 : vector<1x128xf32>
    %cst_103 = arith.constant 5.000000e-01 : f32
    %232 = vector.broadcast %cst_103 : f32 to vector<1x128xf32>
    %233 = arith.addf %231, %232 : vector<1x128xf32>
    %234 = arith.select %99, %229, %233 : vector<1x128xi1>, vector<1x128xf32>
    %235 = vector.extract_strided_slice %234 {offsets = [0, 0], sizes = [1, 32], strides = [1, 1]} : vector<1x128xf32> to vector<1x32xf32>
    %236 = vector.extract_strided_slice %234 {offsets = [0, 32], sizes = [1, 32], strides = [1, 1]} : vector<1x128xf32> to vector<1x32xf32>
    %237 = vector.extract_strided_slice %234 {offsets = [0, 64], sizes = [1, 32], strides = [1, 1]} : vector<1x128xf32> to vector<1x32xf32>
    %238 = vector.extract_strided_slice %234 {offsets = [0, 96], sizes = [1, 32], strides = [1, 1]} : vector<1x128xf32> to vector<1x32xf32>
    %239 = arith.mulf %236, %217 : vector<1x32xf32>
    %240 = arith.mulf %235, %237 : vector<1x32xf32>
    %241 = arith.addf %239, %240 : vector<1x32xf32>
    %242 = math.tanh %241 : vector<1x32xf32>
    %243 = arith.mulf %238, %242 : vector<1x32xf32>
    %244 = arith.index_cast %c5_i32_98 : i32 to index
    %c0_104 = arith.constant 0 : index
    %c0_105 = arith.constant 0 : index
    %245 = vector.load %arg7[%244, %c0_104, %c0_105] : memref<8x1x32xf32, #tpu.memory_space<vmem>>, vector<1x1x32xf32>
    %246 = vector.shape_cast %245 : vector<1x1x32xf32> to vector<1x32xf32>
    %247 = vector.shape_cast %243 : vector<1x32xf32> to vector<1x1x32xf32>
    tpu.vector_store %arg7[%244, %c0_104, %c0_105], %247 {strides = array<i32>} : memref<8x1x32xf32, #tpu.memory_space<vmem>>, vector<1x1x32xf32>,
    %c6_i32_106 = arith.constant 6 : i32
    %248 = arith.index_cast %c6_i32_106 : i32 to index
    %c0_107 = arith.constant 0 : index
    %c0_108 = arith.constant 0 : index
    %249 = vector.load %arg6[%248, %c0_107, %c0_108] : memref<8x1x128xf32, #tpu.memory_space<vmem>>, vector<1x1x128xf32>
    %250 = vector.shape_cast %249 : vector<1x1x128xf32> to vector<1x128xf32>
    %cst_109 = arith.constant dense<0.000000e+00> : vector<1x128xf32>
    %251 = tpu.matmul %243, %88, %cst_109 {dimension_numbers = #tpu.dot_dimension_numbers<[1], [0], [0], [1], [0, 0, 1, 1], [], []>, precision = #tpu.contract_precision<fp32>} : vector<1x32xf32>, vector<32x128xf32>, vector<1x128xf32> -> vector<1x128xf32>
    %252 = arith.addf %250, %251 : vector<1x128xf32>
    %253 = math.tanh %252 : vector<1x128xf32>
    %cst_110 = arith.constant 5.000000e-01 : f32
    %254 = vector.broadcast %cst_110 : f32 to vector<1x128xf32>
    %255 = arith.mulf %254, %253 : vector<1x128xf32>
    %cst_111 = arith.constant 5.000000e-01 : f32
    %256 = vector.broadcast %cst_111 : f32 to vector<1x128xf32>
    %257 = arith.addf %255, %256 : vector<1x128xf32>
    %258 = arith.select %99, %253, %257 : vector<1x128xi1>, vector<1x128xf32>
    %259 = vector.extract_strided_slice %258 {offsets = [0, 0], sizes = [1, 32], strides = [1, 1]} : vector<1x128xf32> to vector<1x32xf32>
    %260 = vector.extract_strided_slice %258 {offsets = [0, 32], sizes = [1, 32], strides = [1, 1]} : vector<1x128xf32> to vector<1x32xf32>
    %261 = vector.extract_strided_slice %258 {offsets = [0, 64], sizes = [1, 32], strides = [1, 1]} : vector<1x128xf32> to vector<1x32xf32>
    %262 = vector.extract_strided_slice %258 {offsets = [0, 96], sizes = [1, 32], strides = [1, 1]} : vector<1x128xf32> to vector<1x32xf32>
    %263 = arith.mulf %260, %241 : vector<1x32xf32>
    %264 = arith.mulf %259, %261 : vector<1x32xf32>
    %265 = arith.addf %263, %264 : vector<1x32xf32>
    %266 = math.tanh %265 : vector<1x32xf32>
    %267 = arith.mulf %262, %266 : vector<1x32xf32>
    %268 = arith.index_cast %c6_i32_106 : i32 to index
    %c0_112 = arith.constant 0 : index
    %c0_113 = arith.constant 0 : index
    %269 = vector.load %arg7[%268, %c0_112, %c0_113] : memref<8x1x32xf32, #tpu.memory_space<vmem>>, vector<1x1x32xf32>
    %270 = vector.shape_cast %269 : vector<1x1x32xf32> to vector<1x32xf32>
    %271 = vector.shape_cast %267 : vector<1x32xf32> to vector<1x1x32xf32>
    tpu.vector_store %arg7[%268, %c0_112, %c0_113], %271 {strides = array<i32>} : memref<8x1x32xf32, #tpu.memory_space<vmem>>, vector<1x1x32xf32>,
    %c7_i32_114 = arith.constant 7 : i32
    %272 = arith.index_cast %c7_i32_114 : i32 to index
    %c0_115 = arith.constant 0 : index
    %c0_116 = arith.constant 0 : index
    %273 = vector.load %arg6[%272, %c0_115, %c0_116] : memref<8x1x128xf32, #tpu.memory_space<vmem>>, vector<1x1x128xf32>
    %274 = vector.shape_cast %273 : vector<1x1x128xf32> to vector<1x128xf32>
    %cst_117 = arith.constant dense<0.000000e+00> : vector<1x128xf32>
    %275 = tpu.matmul %267, %88, %cst_117 {dimension_numbers = #tpu.dot_dimension_numbers<[1], [0], [0], [1], [0, 0, 1, 1], [], []>, precision = #tpu.contract_precision<fp32>} : vector<1x32xf32>, vector<32x128xf32>, vector<1x128xf32> -> vector<1x128xf32>
    %276 = arith.addf %274, %275 : vector<1x128xf32>
    %277 = math.tanh %276 : vector<1x128xf32>
    %cst_118 = arith.constant 5.000000e-01 : f32
    %278 = vector.broadcast %cst_118 : f32 to vector<1x128xf32>
    %279 = arith.mulf %278, %277 : vector<1x128xf32>
    %cst_119 = arith.constant 5.000000e-01 : f32
    %280 = vector.broadcast %cst_119 : f32 to vector<1x128xf32>
    %281 = arith.addf %279, %280 : vector<1x128xf32>
    %282 = arith.select %99, %277, %281 : vector<1x128xi1>, vector<1x128xf32>
    %283 = vector.extract_strided_slice %282 {offsets = [0, 0], sizes = [1, 32], strides = [1, 1]} : vector<1x128xf32> to vector<1x32xf32>
    %284 = vector.extract_strided_slice %282 {offsets = [0, 32], sizes = [1, 32], strides = [1, 1]} : vector<1x128xf32> to vector<1x32xf32>
    %285 = vector.extract_strided_slice %282 {offsets = [0, 64], sizes = [1, 32], strides = [1, 1]} : vector<1x128xf32> to vector<1x32xf32>
    %286 = vector.extract_strided_slice %282 {offsets = [0, 96], sizes = [1, 32], strides = [1, 1]} : vector<1x128xf32> to vector<1x32xf32>
    %287 = arith.mulf %284, %265 : vector<1x32xf32>
    %288 = arith.mulf %283, %285 : vector<1x32xf32>
    %289 = arith.addf %287, %288 : vector<1x32xf32>
    %290 = math.tanh %289 : vector<1x32xf32>
    %291 = arith.mulf %286, %290 : vector<1x32xf32>
    %292 = arith.index_cast %c7_i32_114 : i32 to index
    %c0_120 = arith.constant 0 : index
    %c0_121 = arith.constant 0 : index
    %293 = vector.load %arg7[%292, %c0_120, %c0_121] : memref<8x1x32xf32, #tpu.memory_space<vmem>>, vector<1x1x32xf32>
    %294 = vector.shape_cast %293 : vector<1x1x32xf32> to vector<1x32xf32>
    %295 = vector.shape_cast %291 : vector<1x32xf32> to vector<1x1x32xf32>
    tpu.vector_store %arg7[%292, %c0_120, %c0_121], %295 {strides = array<i32>} : memref<8x1x32xf32, #tpu.memory_space<vmem>>, vector<1x1x32xf32>,
    %c8_i32_122 = arith.constant 8 : i32
    %c0_123 = arith.constant 0 : index
    %c0_124 = arith.constant 0 : index
    %c0_125 = arith.constant 0 : index
    %296 = vector.load %arg7[%c0_123, %c0_124, %c0_125] : memref<8x1x32xf32, #tpu.memory_space<vmem>>, vector<8x1x32xf32>
    %297 = vector.shape_cast %296 : vector<8x1x32xf32> to vector<8x32xf32>
    %cst_126 = arith.constant dense<0.000000e+00> : vector<8x128xf32>
    %298 = tpu.matmul %297, %89, %cst_126 {dimension_numbers = #tpu.dot_dimension_numbers<[1], [0], [0], [1], [0, 0, 1, 1], [], []>, precision = #tpu.contract_precision<fp32>} : vector<8x32xf32>, vector<32x128xf32>, vector<8x128xf32> -> vector<8x128xf32>
    %299 = vector.broadcast %91 : vector<1x128xf32> to vector<8x128xf32>
    %300 = arith.addf %298, %299 : vector<8x128xf32>
    %301 = vector.shape_cast %300 : vector<8x128xf32> to vector<8x1x128xf32>
    %c0_127 = arith.constant 0 : index
    %c0_128 = arith.constant 0 : index
    %c0_129 = arith.constant 0 : index
    %302 = vector.load %arg6[%c0_127, %c0_128, %c0_129] : memref<8x1x128xf32, #tpu.memory_space<vmem>>, vector<8x1x128xf32>
    tpu.vector_store %arg6[%c0_127, %c0_128, %c0_129], %301 {strides = array<i32>} : memref<8x1x128xf32, #tpu.memory_space<vmem>>, vector<8x1x128xf32>,
    %c1 = arith.constant 1 : index
    %c0_130 = arith.constant 0 : index
    %c0_131 = arith.constant 0 : index
    %303 = vector.load %arg3[%c1, %c0_130, %c0_131] : memref<4x1x32xf32, #tpu.memory_space<vmem>>, vector<1x1x32xf32>
    %304 = vector.shape_cast %303 : vector<1x1x32xf32> to vector<1x32xf32>
    %c3 = arith.constant 3 : index
    %c0_132 = arith.constant 0 : index
    %c0_133 = arith.constant 0 : index
    %305 = vector.load %arg3[%c3, %c0_132, %c0_133] : memref<4x1x32xf32, #tpu.memory_space<vmem>>, vector<1x1x32xf32>
    %306 = vector.shape_cast %305 : vector<1x1x32xf32> to vector<1x32xf32>
    %c0_i32_134 = arith.constant 0 : i32
    %307 = arith.index_cast %c0_i32_134 : i32 to index
    %c0_135 = arith.constant 0 : index
    %c0_136 = arith.constant 0 : index
    %308 = vector.load %arg6[%307, %c0_135, %c0_136] : memref<8x1x128xf32, #tpu.memory_space<vmem>>, vector<1x1x128xf32>
    %309 = vector.shape_cast %308 : vector<1x1x128xf32> to vector<1x128xf32>
    %cst_137 = arith.constant dense<0.000000e+00> : vector<1x128xf32>
    %310 = tpu.matmul %304, %90, %cst_137 {dimension_numbers = #tpu.dot_dimension_numbers<[1], [0], [0], [1], [0, 0, 1, 1], [], []>, precision = #tpu.contract_precision<fp32>} : vector<1x32xf32>, vector<32x128xf32>, vector<1x128xf32> -> vector<1x128xf32>
    %311 = arith.addf %309, %310 : vector<1x128xf32>
    %312 = math.tanh %311 : vector<1x128xf32>
    %cst_138 = arith.constant 5.000000e-01 : f32
    %313 = vector.broadcast %cst_138 : f32 to vector<1x128xf32>
    %314 = arith.mulf %313, %312 : vector<1x128xf32>
    %cst_139 = arith.constant 5.000000e-01 : f32
    %315 = vector.broadcast %cst_139 : f32 to vector<1x128xf32>
    %316 = arith.addf %314, %315 : vector<1x128xf32>
    %317 = arith.select %99, %312, %316 : vector<1x128xi1>, vector<1x128xf32>
    %318 = vector.extract_strided_slice %317 {offsets = [0, 0], sizes = [1, 32], strides = [1, 1]} : vector<1x128xf32> to vector<1x32xf32>
    %319 = vector.extract_strided_slice %317 {offsets = [0, 32], sizes = [1, 32], strides = [1, 1]} : vector<1x128xf32> to vector<1x32xf32>
    %320 = vector.extract_strided_slice %317 {offsets = [0, 64], sizes = [1, 32], strides = [1, 1]} : vector<1x128xf32> to vector<1x32xf32>
    %321 = vector.extract_strided_slice %317 {offsets = [0, 96], sizes = [1, 32], strides = [1, 1]} : vector<1x128xf32> to vector<1x32xf32>
    %322 = arith.mulf %319, %306 : vector<1x32xf32>
    %323 = arith.mulf %318, %320 : vector<1x32xf32>
    %324 = arith.addf %322, %323 : vector<1x32xf32>
    %325 = math.tanh %324 : vector<1x32xf32>
    %326 = arith.mulf %321, %325 : vector<1x32xf32>
    %c1_i32_140 = arith.constant 1 : i32
    %327 = arith.index_cast %c1_i32_140 : i32 to index
    %c0_141 = arith.constant 0 : index
    %c0_142 = arith.constant 0 : index
    %328 = vector.load %arg6[%327, %c0_141, %c0_142] : memref<8x1x128xf32, #tpu.memory_space<vmem>>, vector<1x1x128xf32>
    %329 = vector.shape_cast %328 : vector<1x1x128xf32> to vector<1x128xf32>
    %cst_143 = arith.constant dense<0.000000e+00> : vector<1x128xf32>
    %330 = tpu.matmul %326, %90, %cst_143 {dimension_numbers = #tpu.dot_dimension_numbers<[1], [0], [0], [1], [0, 0, 1, 1], [], []>, precision = #tpu.contract_precision<fp32>} : vector<1x32xf32>, vector<32x128xf32>, vector<1x128xf32> -> vector<1x128xf32>
    %331 = arith.addf %329, %330 : vector<1x128xf32>
    %332 = math.tanh %331 : vector<1x128xf32>
    %cst_144 = arith.constant 5.000000e-01 : f32
    %333 = vector.broadcast %cst_144 : f32 to vector<1x128xf32>
    %334 = arith.mulf %333, %332 : vector<1x128xf32>
    %cst_145 = arith.constant 5.000000e-01 : f32
    %335 = vector.broadcast %cst_145 : f32 to vector<1x128xf32>
    %336 = arith.addf %334, %335 : vector<1x128xf32>
    %337 = arith.select %99, %332, %336 : vector<1x128xi1>, vector<1x128xf32>
    %338 = vector.extract_strided_slice %337 {offsets = [0, 0], sizes = [1, 32], strides = [1, 1]} : vector<1x128xf32> to vector<1x32xf32>
    %339 = vector.extract_strided_slice %337 {offsets = [0, 32], sizes = [1, 32], strides = [1, 1]} : vector<1x128xf32> to vector<1x32xf32>
    %340 = vector.extract_strided_slice %337 {offsets = [0, 64], sizes = [1, 32], strides = [1, 1]} : vector<1x128xf32> to vector<1x32xf32>
    %341 = vector.extract_strided_slice %337 {offsets = [0, 96], sizes = [1, 32], strides = [1, 1]} : vector<1x128xf32> to vector<1x32xf32>
    %342 = arith.mulf %339, %324 : vector<1x32xf32>
    %343 = arith.mulf %338, %340 : vector<1x32xf32>
    %344 = arith.addf %342, %343 : vector<1x32xf32>
    %345 = math.tanh %344 : vector<1x32xf32>
    %346 = arith.mulf %341, %345 : vector<1x32xf32>
    %c2_i32_146 = arith.constant 2 : i32
    %347 = arith.index_cast %c2_i32_146 : i32 to index
    %c0_147 = arith.constant 0 : index
    %c0_148 = arith.constant 0 : index
    %348 = vector.load %arg6[%347, %c0_147, %c0_148] : memref<8x1x128xf32, #tpu.memory_space<vmem>>, vector<1x1x128xf32>
    %349 = vector.shape_cast %348 : vector<1x1x128xf32> to vector<1x128xf32>
    %cst_149 = arith.constant dense<0.000000e+00> : vector<1x128xf32>
    %350 = tpu.matmul %346, %90, %cst_149 {dimension_numbers = #tpu.dot_dimension_numbers<[1], [0], [0], [1], [0, 0, 1, 1], [], []>, precision = #tpu.contract_precision<fp32>} : vector<1x32xf32>, vector<32x128xf32>, vector<1x128xf32> -> vector<1x128xf32>
    %351 = arith.addf %349, %350 : vector<1x128xf32>
    %352 = math.tanh %351 : vector<1x128xf32>
    %cst_150 = arith.constant 5.000000e-01 : f32
    %353 = vector.broadcast %cst_150 : f32 to vector<1x128xf32>
    %354 = arith.mulf %353, %352 : vector<1x128xf32>
    %cst_151 = arith.constant 5.000000e-01 : f32
    %355 = vector.broadcast %cst_151 : f32 to vector<1x128xf32>
    %356 = arith.addf %354, %355 : vector<1x128xf32>
    %357 = arith.select %99, %352, %356 : vector<1x128xi1>, vector<1x128xf32>
    %358 = vector.extract_strided_slice %357 {offsets = [0, 0], sizes = [1, 32], strides = [1, 1]} : vector<1x128xf32> to vector<1x32xf32>
    %359 = vector.extract_strided_slice %357 {offsets = [0, 32], sizes = [1, 32], strides = [1, 1]} : vector<1x128xf32> to vector<1x32xf32>
    %360 = vector.extract_strided_slice %357 {offsets = [0, 64], sizes = [1, 32], strides = [1, 1]} : vector<1x128xf32> to vector<1x32xf32>
    %361 = vector.extract_strided_slice %357 {offsets = [0, 96], sizes = [1, 32], strides = [1, 1]} : vector<1x128xf32> to vector<1x32xf32>
    %362 = arith.mulf %359, %344 : vector<1x32xf32>
    %363 = arith.mulf %358, %360 : vector<1x32xf32>
    %364 = arith.addf %362, %363 : vector<1x32xf32>
    %365 = math.tanh %364 : vector<1x32xf32>
    %366 = arith.mulf %361, %365 : vector<1x32xf32>
    %c3_i32_152 = arith.constant 3 : i32
    %367 = arith.index_cast %c3_i32_152 : i32 to index
    %c0_153 = arith.constant 0 : index
    %c0_154 = arith.constant 0 : index
    %368 = vector.load %arg6[%367, %c0_153, %c0_154] : memref<8x1x128xf32, #tpu.memory_space<vmem>>, vector<1x1x128xf32>
    %369 = vector.shape_cast %368 : vector<1x1x128xf32> to vector<1x128xf32>
    %cst_155 = arith.constant dense<0.000000e+00> : vector<1x128xf32>
    %370 = tpu.matmul %366, %90, %cst_155 {dimension_numbers = #tpu.dot_dimension_numbers<[1], [0], [0], [1], [0, 0, 1, 1], [], []>, precision = #tpu.contract_precision<fp32>} : vector<1x32xf32>, vector<32x128xf32>, vector<1x128xf32> -> vector<1x128xf32>
    %371 = arith.addf %369, %370 : vector<1x128xf32>
    %372 = math.tanh %371 : vector<1x128xf32>
    %cst_156 = arith.constant 5.000000e-01 : f32
    %373 = vector.broadcast %cst_156 : f32 to vector<1x128xf32>
    %374 = arith.mulf %373, %372 : vector<1x128xf32>
    %cst_157 = arith.constant 5.000000e-01 : f32
    %375 = vector.broadcast %cst_157 : f32 to vector<1x128xf32>
    %376 = arith.addf %374, %375 : vector<1x128xf32>
    %377 = arith.select %99, %372, %376 : vector<1x128xi1>, vector<1x128xf32>
    %378 = vector.extract_strided_slice %377 {offsets = [0, 0], sizes = [1, 32], strides = [1, 1]} : vector<1x128xf32> to vector<1x32xf32>
    %379 = vector.extract_strided_slice %377 {offsets = [0, 32], sizes = [1, 32], strides = [1, 1]} : vector<1x128xf32> to vector<1x32xf32>
    %380 = vector.extract_strided_slice %377 {offsets = [0, 64], sizes = [1, 32], strides = [1, 1]} : vector<1x128xf32> to vector<1x32xf32>
    %381 = vector.extract_strided_slice %377 {offsets = [0, 96], sizes = [1, 32], strides = [1, 1]} : vector<1x128xf32> to vector<1x32xf32>
    %382 = arith.mulf %379, %364 : vector<1x32xf32>
    %383 = arith.mulf %378, %380 : vector<1x32xf32>
    %384 = arith.addf %382, %383 : vector<1x32xf32>
    %385 = math.tanh %384 : vector<1x32xf32>
    %386 = arith.mulf %381, %385 : vector<1x32xf32>
    %c4_i32_158 = arith.constant 4 : i32
    %387 = arith.index_cast %c4_i32_158 : i32 to index
    %c0_159 = arith.constant 0 : index
    %c0_160 = arith.constant 0 : index
    %388 = vector.load %arg6[%387, %c0_159, %c0_160] : memref<8x1x128xf32, #tpu.memory_space<vmem>>, vector<1x1x128xf32>
    %389 = vector.shape_cast %388 : vector<1x1x128xf32> to vector<1x128xf32>
    %cst_161 = arith.constant dense<0.000000e+00> : vector<1x128xf32>
    %390 = tpu.matmul %386, %90, %cst_161 {dimension_numbers = #tpu.dot_dimension_numbers<[1], [0], [0], [1], [0, 0, 1, 1], [], []>, precision = #tpu.contract_precision<fp32>} : vector<1x32xf32>, vector<32x128xf32>, vector<1x128xf32> -> vector<1x128xf32>
    %391 = arith.addf %389, %390 : vector<1x128xf32>
    %392 = math.tanh %391 : vector<1x128xf32>
    %cst_162 = arith.constant 5.000000e-01 : f32
    %393 = vector.broadcast %cst_162 : f32 to vector<1x128xf32>
    %394 = arith.mulf %393, %392 : vector<1x128xf32>
    %cst_163 = arith.constant 5.000000e-01 : f32
    %395 = vector.broadcast %cst_163 : f32 to vector<1x128xf32>
    %396 = arith.addf %394, %395 : vector<1x128xf32>
    %397 = arith.select %99, %392, %396 : vector<1x128xi1>, vector<1x128xf32>
    %398 = vector.extract_strided_slice %397 {offsets = [0, 0], sizes = [1, 32], strides = [1, 1]} : vector<1x128xf32> to vector<1x32xf32>
    %399 = vector.extract_strided_slice %397 {offsets = [0, 32], sizes = [1, 32], strides = [1, 1]} : vector<1x128xf32> to vector<1x32xf32>
    %400 = vector.extract_strided_slice %397 {offsets = [0, 64], sizes = [1, 32], strides = [1, 1]} : vector<1x128xf32> to vector<1x32xf32>
    %401 = vector.extract_strided_slice %397 {offsets = [0, 96], sizes = [1, 32], strides = [1, 1]} : vector<1x128xf32> to vector<1x32xf32>
    %402 = arith.mulf %399, %384 : vector<1x32xf32>
    %403 = arith.mulf %398, %400 : vector<1x32xf32>
    %404 = arith.addf %402, %403 : vector<1x32xf32>
    %405 = math.tanh %404 : vector<1x32xf32>
    %406 = arith.mulf %401, %405 : vector<1x32xf32>
    %c5_i32_164 = arith.constant 5 : i32
    %407 = arith.index_cast %c5_i32_164 : i32 to index
    %c0_165 = arith.constant 0 : index
    %c0_166 = arith.constant 0 : index
    %408 = vector.load %arg6[%407, %c0_165, %c0_166] : memref<8x1x128xf32, #tpu.memory_space<vmem>>, vector<1x1x128xf32>
    %409 = vector.shape_cast %408 : vector<1x1x128xf32> to vector<1x128xf32>
    %cst_167 = arith.constant dense<0.000000e+00> : vector<1x128xf32>
    %410 = tpu.matmul %406, %90, %cst_167 {dimension_numbers = #tpu.dot_dimension_numbers<[1], [0], [0], [1], [0, 0, 1, 1], [], []>, precision = #tpu.contract_precision<fp32>} : vector<1x32xf32>, vector<32x128xf32>, vector<1x128xf32> -> vector<1x128xf32>
    %411 = arith.addf %409, %410 : vector<1x128xf32>
    %412 = math.tanh %411 : vector<1x128xf32>
    %cst_168 = arith.constant 5.000000e-01 : f32
    %413 = vector.broadcast %cst_168 : f32 to vector<1x128xf32>
    %414 = arith.mulf %413, %412 : vector<1x128xf32>
    %cst_169 = arith.constant 5.000000e-01 : f32
    %415 = vector.broadcast %cst_169 : f32 to vector<1x128xf32>
    %416 = arith.addf %414, %415 : vector<1x128xf32>
    %417 = arith.select %99, %412, %416 : vector<1x128xi1>, vector<1x128xf32>
    %418 = vector.extract_strided_slice %417 {offsets = [0, 0], sizes = [1, 32], strides = [1, 1]} : vector<1x128xf32> to vector<1x32xf32>
    %419 = vector.extract_strided_slice %417 {offsets = [0, 32], sizes = [1, 32], strides = [1, 1]} : vector<1x128xf32> to vector<1x32xf32>
    %420 = vector.extract_strided_slice %417 {offsets = [0, 64], sizes = [1, 32], strides = [1, 1]} : vector<1x128xf32> to vector<1x32xf32>
    %421 = vector.extract_strided_slice %417 {offsets = [0, 96], sizes = [1, 32], strides = [1, 1]} : vector<1x128xf32> to vector<1x32xf32>
    %422 = arith.mulf %419, %404 : vector<1x32xf32>
    %423 = arith.mulf %418, %420 : vector<1x32xf32>
    %424 = arith.addf %422, %423 : vector<1x32xf32>
    %425 = math.tanh %424 : vector<1x32xf32>
    %426 = arith.mulf %421, %425 : vector<1x32xf32>
    %c6_i32_170 = arith.constant 6 : i32
    %427 = arith.index_cast %c6_i32_170 : i32 to index
    %c0_171 = arith.constant 0 : index
    %c0_172 = arith.constant 0 : index
    %428 = vector.load %arg6[%427, %c0_171, %c0_172] : memref<8x1x128xf32, #tpu.memory_space<vmem>>, vector<1x1x128xf32>
    %429 = vector.shape_cast %428 : vector<1x1x128xf32> to vector<1x128xf32>
    %cst_173 = arith.constant dense<0.000000e+00> : vector<1x128xf32>
    %430 = tpu.matmul %426, %90, %cst_173 {dimension_numbers = #tpu.dot_dimension_numbers<[1], [0], [0], [1], [0, 0, 1, 1], [], []>, precision = #tpu.contract_precision<fp32>} : vector<1x32xf32>, vector<32x128xf32>, vector<1x128xf32> -> vector<1x128xf32>
    %431 = arith.addf %429, %430 : vector<1x128xf32>
    %432 = math.tanh %431 : vector<1x128xf32>
    %cst_174 = arith.constant 5.000000e-01 : f32
    %433 = vector.broadcast %cst_174 : f32 to vector<1x128xf32>
    %434 = arith.mulf %433, %432 : vector<1x128xf32>
    %cst_175 = arith.constant 5.000000e-01 : f32
    %435 = vector.broadcast %cst_175 : f32 to vector<1x128xf32>
    %436 = arith.addf %434, %435 : vector<1x128xf32>
    %437 = arith.select %99, %432, %436 : vector<1x128xi1>, vector<1x128xf32>
    %438 = vector.extract_strided_slice %437 {offsets = [0, 0], sizes = [1, 32], strides = [1, 1]} : vector<1x128xf32> to vector<1x32xf32>
    %439 = vector.extract_strided_slice %437 {offsets = [0, 32], sizes = [1, 32], strides = [1, 1]} : vector<1x128xf32> to vector<1x32xf32>
    %440 = vector.extract_strided_slice %437 {offsets = [0, 64], sizes = [1, 32], strides = [1, 1]} : vector<1x128xf32> to vector<1x32xf32>
    %441 = vector.extract_strided_slice %437 {offsets = [0, 96], sizes = [1, 32], strides = [1, 1]} : vector<1x128xf32> to vector<1x32xf32>
    %442 = arith.mulf %439, %424 : vector<1x32xf32>
    %443 = arith.mulf %438, %440 : vector<1x32xf32>
    %444 = arith.addf %442, %443 : vector<1x32xf32>
    %445 = math.tanh %444 : vector<1x32xf32>
    %446 = arith.mulf %441, %445 : vector<1x32xf32>
    %c7_i32_176 = arith.constant 7 : i32
    %447 = arith.index_cast %c7_i32_176 : i32 to index
    %c0_177 = arith.constant 0 : index
    %c0_178 = arith.constant 0 : index
    %448 = vector.load %arg6[%447, %c0_177, %c0_178] : memref<8x1x128xf32, #tpu.memory_space<vmem>>, vector<1x1x128xf32>
    %449 = vector.shape_cast %448 : vector<1x1x128xf32> to vector<1x128xf32>
    %cst_179 = arith.constant dense<0.000000e+00> : vector<1x128xf32>
    %450 = tpu.matmul %446, %90, %cst_179 {dimension_numbers = #tpu.dot_dimension_numbers<[1], [0], [0], [1], [0, 0, 1, 1], [], []>, precision = #tpu.contract_precision<fp32>} : vector<1x32xf32>, vector<32x128xf32>, vector<1x128xf32> -> vector<1x128xf32>
    %451 = arith.addf %449, %450 : vector<1x128xf32>
    %452 = math.tanh %451 : vector<1x128xf32>
    %cst_180 = arith.constant 5.000000e-01 : f32
    %453 = vector.broadcast %cst_180 : f32 to vector<1x128xf32>
    %454 = arith.mulf %453, %452 : vector<1x128xf32>
    %cst_181 = arith.constant 5.000000e-01 : f32
    %455 = vector.broadcast %cst_181 : f32 to vector<1x128xf32>
    %456 = arith.addf %454, %455 : vector<1x128xf32>
    %457 = arith.select %99, %452, %456 : vector<1x128xi1>, vector<1x128xf32>
    %458 = vector.extract_strided_slice %457 {offsets = [0, 0], sizes = [1, 32], strides = [1, 1]} : vector<1x128xf32> to vector<1x32xf32>
    %459 = vector.extract_strided_slice %457 {offsets = [0, 32], sizes = [1, 32], strides = [1, 1]} : vector<1x128xf32> to vector<1x32xf32>
    %460 = vector.extract_strided_slice %457 {offsets = [0, 64], sizes = [1, 32], strides = [1, 1]} : vector<1x128xf32> to vector<1x32xf32>
    %461 = vector.extract_strided_slice %457 {offsets = [0, 96], sizes = [1, 32], strides = [1, 1]} : vector<1x128xf32> to vector<1x32xf32>
    %462 = arith.mulf %459, %444 : vector<1x32xf32>
    %463 = arith.mulf %458, %460 : vector<1x32xf32>
    %464 = arith.addf %462, %463 : vector<1x32xf32>
    %465 = math.tanh %464 : vector<1x32xf32>
    %466 = arith.mulf %461, %465 : vector<1x32xf32>
    %c8_i32_182 = arith.constant 8 : i32
    %c0_183 = arith.constant 0 : index
    %c0_184 = arith.constant 0 : index
    %c0_185 = arith.constant 0 : index
    %467 = vector.load %arg5[%c0_183, %c0_184, %c0_185] : memref<4x1x32xf32, #tpu.memory_space<vmem>>, vector<1x1x32xf32>
    %468 = vector.shape_cast %467 : vector<1x1x32xf32> to vector<1x32xf32>
    %469 = vector.shape_cast %291 : vector<1x32xf32> to vector<1x1x32xf32>
    tpu.vector_store %arg5[%c0_183, %c0_184, %c0_185], %469 {strides = array<i32>} : memref<4x1x32xf32, #tpu.memory_space<vmem>>, vector<1x1x32xf32>,
    %c1_186 = arith.constant 1 : index
    %c0_187 = arith.constant 0 : index
    %c0_188 = arith.constant 0 : index
    %470 = vector.load %arg5[%c1_186, %c0_187, %c0_188] : memref<4x1x32xf32, #tpu.memory_space<vmem>>, vector<1x1x32xf32>
    %471 = vector.shape_cast %470 : vector<1x1x32xf32> to vector<1x32xf32>
    %472 = vector.shape_cast %466 : vector<1x32xf32> to vector<1x1x32xf32>
    tpu.vector_store %arg5[%c1_186, %c0_187, %c0_188], %472 {strides = array<i32>} : memref<4x1x32xf32, #tpu.memory_space<vmem>>, vector<1x1x32xf32>,
    %c2_189 = arith.constant 2 : index
    %c0_190 = arith.constant 0 : index
    %c0_191 = arith.constant 0 : index
    %473 = vector.load %arg5[%c2_189, %c0_190, %c0_191] : memref<4x1x32xf32, #tpu.memory_space<vmem>>, vector<1x1x32xf32>
    %474 = vector.shape_cast %473 : vector<1x1x32xf32> to vector<1x32xf32>
    %475 = vector.shape_cast %289 : vector<1x32xf32> to vector<1x1x32xf32>
    tpu.vector_store %arg5[%c2_189, %c0_190, %c0_191], %475 {strides = array<i32>} : memref<4x1x32xf32, #tpu.memory_space<vmem>>, vector<1x1x32xf32>,
    %c3_192 = arith.constant 3 : index
    %c0_193 = arith.constant 0 : index
    %c0_194 = arith.constant 0 : index
    %476 = vector.load %arg5[%c3_192, %c0_193, %c0_194] : memref<4x1x32xf32, #tpu.memory_space<vmem>>, vector<1x1x32xf32>
    %477 = vector.shape_cast %476 : vector<1x1x32xf32> to vector<1x32xf32>
    %478 = vector.shape_cast %464 : vector<1x32xf32> to vector<1x1x32xf32>
    tpu.vector_store %arg5[%c3_192, %c0_193, %c0_194], %478 {strides = array<i32>} : memref<4x1x32xf32, #tpu.memory_space<vmem>>, vector<1x1x32xf32>,
    %479 = arith.mulf %466, %92 : vector<1x32xf32>
    %cst_195 = arith.constant dense<0.000000e+00> : vector<1xf32>
    %480 = vector.multi_reduction <add>, %479, %cst_195 [1] : vector<1x32xf32> to vector<1xf32>
    %481 = vector.shape_cast %480 : vector<1xf32> to vector<1x1xf32>
    %482 = arith.addf %481, %93 : vector<1x1xf32>
    %483 = arith.negf %482 : vector<1x1xf32>
    %484 = math.exp %483 : vector<1x1xf32>
    %cst_196 = arith.constant 1.000000e+00 : f32
    %485 = vector.broadcast %cst_196 : f32 to vector<1x1xf32>
    %486 = arith.addf %485, %484 : vector<1x1xf32>
    %487 = arith.divf %485, %486 : vector<1x1xf32>
    %c0_197 = arith.constant 0 : index
    %c0_198 = arith.constant 0 : index
    %488 = vector.load %arg4[%c0_197, %c0_198] : memref<1x1xf32, #tpu.memory_space<vmem>>, vector<1x1xf32>
    tpu.vector_store %arg4[%c0_197, %c0_198], %487 {strides = array<i32>} : memref<1x1xf32, #tpu.memory_space<vmem>>, vector<1x1xf32>,
    return
  }
}

</mosaic_0001>

<llo_original>
// kernel: sentiment_lstm_forward.1
$region0: #{sentiment_lstm_forward.1}
  #allocation0 [shape = 'u32[]', space=smem, size = 0x4, offset = 0x4, fixed_abs, tag = 'smem constant byte address 0x4 - core index']
  #allocation1 [shape = 'u32[144,128]{1,0:T(1,128)}', space=vmem, size = 0x12000, scoped, tag = 'internal scratch']
  #allocation2 [shape = 'f32[8,1,128]{2,1,0:T(1,128)}', space=vmem, size = 0x1000, scoped, tag = 'scratch operand']
  #allocation3 [shape = 'f32[8,1,32]{2,1,0:T(1,128)}', space=vmem, size = 0x1000, scoped, tag = 'scratch operand']
  %s0 = inlined_call_operand.vmem [shape: s32[8], index: 0, kind: input, shape index: {}]
  %s1 = inlined_call_operand.hbm [shape: f32[50,1,128], index: 1, kind: input, shape index: {}]
  %s2 = inlined_call_operand.hbm [shape: f32[120,128], index: 2, kind: input, shape index: {}]
  %s3 = inlined_call_operand.vmem [shape: f32[4,1,32], index: 3, kind: input, shape index: {}]
  %s4 = inlined_call_operand.hbm [shape: f32[1,1], index: 4, kind: output, shape index: {0}]
  %s5 = inlined_call_operand.vmem [shape: f32[4,1,32], index: 5, kind: output, shape index: {1}]
  %6 = xla_tuple %s4, %s5
  %s7 = sld [smem:[#allocation0]]
  $region46: #{sentiment_lstm_forward.1} parent=0
    _
  %s9 = ssub.s32 1, %s7
  %s10 = scalar_select 0, %s9, %s7
  $region1: #{sentiment_lstm_forward.1} parent=0
    #allocation4 [shape = 'u8[512]{0}', space=smem, size = 0x200, scoped, tag = 'input window, operand 0, single buffered']
    #allocation5 [shape = 's32[1]{0}', space=sflag, size = 0x4, scoped, tag = 'scoped memory for sentiment_lstm_forward.1']
    #allocation6 [shape = 's32[1]{0}', space=sflag, size = 0x4, scoped, tag = 'scoped memory for sentiment_lstm_forward.1']
    #allocation7 [shape = 's32[1]{0}', space=sflag, size = 0x4, scoped, tag = 'scoped memory for sentiment_lstm_forward.1']
    #allocation8 [shape = 'u8[25600]{0}', space=vmem, size = 0x6400, scoped, tag = 'input window, operand 1, single buffered']
    #allocation9 [shape = 'u8[61440]{0}', space=vmem, size = 0xf000, scoped, tag = 'input window, operand 2, single buffered']
    #allocation10 [shape = 's32[1]{0}', space=sflag, size = 0x4, scoped, tag = 'scoped memory for sentiment_lstm_forward.1']
    #allocation11 [shape = 'u8[512]{0}', space=vmem, size = 0x400, scoped, tag = 'output window, operand 0, single buffered']
    %11 = vsyncpa [#allocation7], 0
    %12 = vsyncpa [#allocation5], 0
    %13 = vsyncpa [#allocation10], 0
    %14 = vsyncpa [#allocation6], 0
    // Predicated region
    $region2: #{sentiment_lstm_forward.1} parent=1 // pred_check
      _
    $region3: #{sentiment_lstm_forward.1} parent=1 // pred_check_branch
      %16 = sbr.rel (0) target = $region5
    $region4: #{sentiment_lstm_forward.1} parent=1 // pred_region
      %s18 = ssub.s32 16, 16
      %19 = vsyncadd [#allocation7], %s18
      %s21 = sshll.u32 %s0, 4
      %s22 = int_to_ptr.vmem [resolvable:$true] %s21
      %24 = dma.vmem_to_smem %s22, 16, [#allocation4], [#allocation7]
    $region5: #{sentiment_lstm_forward.1} parent=1 // pred_fallthru
      _
    // Predicated region
    $region6: #{sentiment_lstm_forward.1} parent=1 // pred_check
      _
    $region7: #{sentiment_lstm_forward.1} parent=1 // pred_check_branch
      %26 = sbr.rel (0) target = $region9
    $region8: #{sentiment_lstm_forward.1} parent=1 // pred_region
      %s28 = ssub.s32 800, 800
      %29 = vsyncadd [#allocation5], %s28
      %s30 = sshll.u32 [#allocation8], 4
      %s31 = int_to_ptr.vmem [resolvable:$true] %s30
      %36 = dma.hbm_to_vmem [thread:$0]  %s1, 800, %s31, [#allocation5], 16, 16, 1
    $region9: #{sentiment_lstm_forward.1} parent=1 // pred_fallthru
      _
    // Predicated region
    $region10: #{sentiment_lstm_forward.1} parent=1 // pred_check
      _
    $region11: #{sentiment_lstm_forward.1} parent=1 // pred_check_branch
      %38 = sbr.rel (0) target = $region13
    $region12: #{sentiment_lstm_forward.1} parent=1 // pred_region
      %s40 = ssub.s32 1920, 1920
      %41 = vsyncadd [#allocation10], %s40
      %s42 = sshll.u32 [#allocation9], 4
      %s43 = int_to_ptr.vmem [resolvable:$true] %s42
      %48 = dma.hbm_to_vmem [thread:$0]  %s2, 1920, %s43, [#allocation10], 128, 128, 8
    $region13: #{sentiment_lstm_forward.1} parent=1 // pred_fallthru
      _
    // Predicated region
    $region14: #{sentiment_lstm_forward.1} parent=1 // pred_check
      _
    $region15: #{sentiment_lstm_forward.1} parent=1 // pred_check_branch
      %50 = sbr.rel (0) target = $region17
    $region16: #{sentiment_lstm_forward.1} parent=1 // pred_region
      _
    $region17: #{sentiment_lstm_forward.1} parent=1 // pred_fallthru
      _
    // Predicated region
    $region18: #{sentiment_lstm_forward.1} parent=1 // pred_check
      _
    $region19: #{sentiment_lstm_forward.1} parent=1 // pred_check_branch
      %52 = sbr.rel (0) target = $region21
    $region20: #{sentiment_lstm_forward.1} parent=1 // pred_region
      %53 = dma.done [#allocation7], 16
    $region21: #{sentiment_lstm_forward.1} parent=1 // pred_fallthru
      _
    // Predicated region
    $region22: #{sentiment_lstm_forward.1} parent=1 // pred_check
      _
    $region23: #{sentiment_lstm_forward.1} parent=1 // pred_check_branch
      %55 = sbr.rel (0) target = $region25
    $region24: #{sentiment_lstm_forward.1} parent=1 // pred_region
      %56 = dma.done [#allocation5], 800
    $region25: #{sentiment_lstm_forward.1} parent=1 // pred_fallthru
      _
    // Predicated region
    $region26: #{sentiment_lstm_forward.1} parent=1 // pred_check
      _
    $region27: #{sentiment_lstm_forward.1} parent=1 // pred_check_branch
      %58 = sbr.rel (0) target = $region29
    $region28: #{sentiment_lstm_forward.1} parent=1 // pred_region
      %59 = dma.done [#allocation10], 1920
    $region29: #{sentiment_lstm_forward.1} parent=1 // pred_fallthru
      _
    %60 = sfence
    %s61 = sld [smem:[#allocation4]]
    %s62 = scalar_lea.vmem [#allocation8], %s61
    %v63 = vld [vmem:[%s62] sm:$0x1]
    %64 = vst [vmem:[#allocation2] sm:$0x1] %v63
    %s65 = sld [smem:[#allocation4 + $0x1]]
    %s66 = scalar_lea.vmem [#allocation8], %s65
    %v67 = vld [vmem:[%s66] sm:$0x1]
    %s68 = scalar_lea.vmem [#allocation2], 1
    %69 = vst [vmem:[%s68] sm:$0x1] %v67
    %s70 = sld [smem:[#allocation4 + $0x2]]
    %s71 = scalar_lea.vmem [#allocation8], %s70
    %v72 = vld [vmem:[%s71] sm:$0x1]
    %s73 = scalar_lea.vmem [#allocation2], 2
    %74 = vst [vmem:[%s73] sm:$0x1] %v72
    %s75 = sld [smem:[#allocation4 + $0x3]]
    %s76 = scalar_lea.vmem [#allocation8], %s75
    %v77 = vld [vmem:[%s76] sm:$0x1]
    %s78 = scalar_lea.vmem [#allocation2], 3
    %79 = vst [vmem:[%s78] sm:$0x1] %v77
    %s80 = sld [smem:[#allocation4 + $0x4]]
    %s81 = scalar_lea.vmem [#allocation8], %s80
    %v82 = vld [vmem:[%s81] sm:$0x1]
    %s83 = scalar_lea.vmem [#allocation2], 4
    %84 = vst [vmem:[%s83] sm:$0x1] %v82
    %s85 = sld [smem:[#allocation4 + $0x5]]
    %s86 = scalar_lea.vmem [#allocation8], %s85
    %v87 = vld [vmem:[%s86] sm:$0x1]
    %s88 = scalar_lea.vmem [#allocation2], 5
    %89 = vst [vmem:[%s88] sm:$0x1] %v87
    %s90 = sld [smem:[#allocation4 + $0x6]]
    %s91 = scalar_lea.vmem [#allocation8], %s90
    %v92 = vld [vmem:[%s91] sm:$0x1]
    %s93 = scalar_lea.vmem [#allocation2], 6
    %94 = vst [vmem:[%s93] sm:$0x1] %v92
    %s95 = sld [smem:[#allocation4 + $0x7]]
    %s96 = scalar_lea.vmem [#allocation8], %s95
    %v97 = vld [vmem:[%s96] sm:$0x1]
    %s98 = scalar_lea.vmem [#allocation2], 7
    %99 = vst [vmem:[%s98] sm:$0x1] %v97
    %v100 = vld [vmem:[#allocation9] sm:$0xff]
    %v101 = vld [vmem:[#allocation9 + $0x8] sm:$0xff]
    %v102 = vld [vmem:[#allocation9 + $0x10] sm:$0xff]
    %v103 = vld [vmem:[#allocation9 + $0x18] sm:$0xff]
    %v104 = vld [vmem:[#allocation9 + $0x20] sm:$0xff]
    %v105 = vld [vmem:[#allocation9 + $0x28] sm:$0xff]
    %v106 = vld [vmem:[#allocation9 + $0x30] sm:$0xff]
    %v107 = vld [vmem:[#allocation9 + $0x38] sm:$0xff]
    %v108 = vld [vmem:[#allocation9 + $0x40] sm:$0xff]
    %v109 = vld [vmem:[#allocation9 + $0x48] sm:$0xff]
    %v110 = vld [vmem:[#allocation9 + $0x50] sm:$0xff]
    %v111 = vld [vmem:[#allocation9 + $0x58] sm:$0xff]
    %v112 = vld [vmem:[#allocation9 + $0x60] sm:$0x1]
    %v113 = vld [vmem:[#allocation9 + $0x68] sm:$0x1]
    %v114 = vld [vmem:[#allocation9 + $0x70] sm:$0x1]
    %v115 = vlaneseq
    %v116 = vand.u32 %v115, 127
    %vm117 = vcmp.ge.s32.totalorder %v116, 64
    %vm118 = vcmp.lt.s32.totalorder %v116, 96
    %vm119 = vmand %vm117, %vm118
    %v120 = vld [vmem:[%s3] sm:$0x1]
    %s121 = scalar_lea.vmem %s3, 2
    %v122 = vld [vmem:[%s121] sm:$0x1]
    %v123 = vld [vmem:[#allocation2] sm:$0x1]
    %vm124 = vcmask 261120
    %v126 = vsel %vm124, %v120, 0
    %128 = vmatprep.subr.mxu0 0.0
    %129 = vmatpush1.msra.mxu0 0.0
    %130 = vmatprep.subr.mxu0 0.0
    %131 = vmatpush1.msra.mxu0 0.0
    %132 = vmatprep.subr.mxu0 0.0
    %133 = vmatpush1.msra.mxu0 0.0
    %134 = vmatprep.subr.mxu0 0.0
    %135 = vmatpush1.msra.mxu0 0.0
    %136 = vmatprep.subr.mxu0 0.0
    %137 = vmatpush1.msra.mxu0 0.0
    %138 = vmatprep.subr.mxu0 0.0
    %139 = vmatpush1.msra.mxu0 0.0
    %140 = vmatprep.subr.mxu0 0.0
    %141 = vmatpush1.msra.mxu0 0.0
    %142 = vmatprep.subr.mxu0 0.0
    %143 = vmatpush1.msra.mxu0 0.0
    %144 = vmatprep.subr.mxu0 0.0
    %145 = vmatpush1.msra.mxu0 0.0
    %146 = vmatprep.subr.mxu0 0.0
    %147 = vmatpush1.msra.mxu0 0.0
    %148 = vmatprep.subr.mxu0 0.0
    %149 = vmatpush1.msra.mxu0 0.0
    %150 = vmatprep.subr.mxu0 0.0
    %151 = vmatpush1.msra.mxu0 0.0
    %152 = vmatprep.subr.mxu0 0.0
    %v153 = vand.u32 %v103, 4294901760
    %154 = vmatpush1.msra.mxu0 %v153
    %155 = vmatprep.subr.mxu0 0.0
    %v156 = vand.u32 %v102, 4294901760
    %157 = vmatpush1.msra.mxu0 %v156
    %158 = vmatprep.subr.mxu0 0.0
    %v159 = vand.u32 %v101, 4294901760
    %160 = vmatpush1.msra.mxu0 %v159
    %161 = vmatprep.subr.mxu0 0.0
    %v162 = vand.u32 %v100, 4294901760
    %163 = vmatpush1.msra.mxu0 %v162
    %164 = vmatprep.subr.mxu0 0.0
    %165 = vmatpush2.msra.mxu0 0.0
    %166 = vmatprep.subr.mxu0 0.0
    %167 = vmatpush2.msra.mxu0 0.0
    %168 = vmatprep.subr.mxu0 0.0
    %169 = vmatpush2.msra.mxu0 0.0
    %170 = vmatprep.subr.mxu0 0.0
    %171 = vmatpush2.msra.mxu0 0.0
    %172 = vmatprep.subr.mxu0 0.0
    %173 = vmatpush2.msra.mxu0 0.0
    %174 = vmatprep.subr.mxu0 0.0
    %175 = vmatpush2.msra.mxu0 0.0
    %176 = vmatprep.subr.mxu0 0.0
    %177 = vmatpush2.msra.mxu0 0.0
    %178 = vmatprep.subr.mxu0 0.0
    %179 = vmatpush2.msra.mxu0 0.0
    %180 = vmatprep.subr.mxu0 0.0
    %181 = vmatpush2.msra.mxu0 0.0
    %182 = vmatprep.subr.mxu0 0.0
    %183 = vmatpush2.msra.mxu0 0.0
    %184 = vmatprep.subr.mxu0 0.0
    %185 = vmatpush2.msra.mxu0 0.0
    %186 = vmatprep.subr.mxu0 0.0
    %187 = vmatpush2.msra.mxu0 0.0
    %188 = vmatprep.subr.mxu0 0.0
    %189 = vmatpush2.msra.mxu0 0.0
    %190 = vmatprep.subr.mxu0 0.0
    %191 = vmatpush2.msra.mxu0 0.0
    %192 = vmatprep.subr.mxu0 0.0
    %193 = vmatpush2.msra.mxu0 0.0
    %194 = vmatprep.subr.mxu0 0.0
    %195 = vmatpush2.msra.mxu0 0.0
    %196 = vmatprep.mubr.f32.mxu0 0.0
    %v197 = vand.u32 %v126, 4294901760
    %v198 = vsub.f32 %v126, %v197
    %v199 = vand.u32 %v198, 4294901760
    %v200 = vsub.f32 %v198, %v199
    %v201 = vand.u32 %v200, 4294901760
    %202 = vmatmul.mubr.f32.gmra.mxu0 %v201
    %v203 = vpop.f32.mrf.mxu0
    %v204 = vadd.f32 0.0, %v203
    %v205 = vpop.f32.mrf.mxu0
    %206 = vdwg.mxu0
    %207 = vmatprep.subr.mxu0 0.0
    %208 = vmatpush1.msra.mxu0 0.0
    %209 = vmatprep.subr.mxu0 0.0
    %210 = vmatpush1.msra.mxu0 0.0
    %211 = vmatprep.subr.mxu0 0.0
    %212 = vmatpush1.msra.mxu0 0.0
    %213 = vmatprep.subr.mxu0 0.0
    %214 = vmatpush1.msra.mxu0 0.0
    %215 = vmatprep.subr.mxu0 0.0
    %216 = vmatpush1.msra.mxu0 0.0
    %217 = vmatprep.subr.mxu0 0.0
    %218 = vmatpush1.msra.mxu0 0.0
    %219 = vmatprep.subr.mxu0 0.0
    %220 = vmatpush1.msra.mxu0 0.0
    %221 = vmatprep.subr.mxu0 0.0
    %222 = vmatpush1.msra.mxu0 0.0
    %223 = vmatprep.subr.mxu0 0.0
    %224 = vmatpush1.msra.mxu0 0.0
    %225 = vmatprep.subr.mxu0 0.0
    %226 = vmatpush1.msra.mxu0 0.0
    %227 = vmatprep.subr.mxu0 0.0
    %228 = vmatpush1.msra.mxu0 0.0
    %229 = vmatprep.subr.mxu0 0.0
    %230 = vmatpush1.msra.mxu0 0.0
    %231 = vmatprep.subr.mxu0 0.0
    %v232 = vand.u32 %v103, 4294901760
    %v233 = vsub.f32 %v103, %v232
    %v234 = vand.u32 %v233, 4294901760
    %v235 = vsub.f32 %v233, %v234
    %v236 = vand.u32 %v235, 4294901760
    %237 = vmatpush1.msra.mxu0 %v236
    %238 = vmatprep.subr.mxu0 0.0
    %v239 = vand.u32 %v102, 4294901760
    %v240 = vsub.f32 %v102, %v239
    %v241 = vand.u32 %v240, 4294901760
    %v242 = vsub.f32 %v240, %v241
    %v243 = vand.u32 %v242, 4294901760
    %244 = vmatpush1.msra.mxu0 %v243
    %245 = vmatprep.subr.mxu0 0.0
    %v246 = vand.u32 %v101, 4294901760
    %v247 = vsub.f32 %v101, %v246
    %v248 = vand.u32 %v247, 4294901760
    %v249 = vsub.f32 %v247, %v248
    %v250 = vand.u32 %v249, 4294901760
    %251 = vmatpush1.msra.mxu0 %v250
    %252 = vmatprep.subr.mxu0 0.0
    %v253 = vand.u32 %v100, 4294901760
    %v254 = vsub.f32 %v100, %v253
    %v255 = vand.u32 %v254, 4294901760
    %v256 = vsub.f32 %v254, %v255
    %v257 = vand.u32 %v256, 4294901760
    %258 = vmatpush1.msra.mxu0 %v257
    %259 = vmatprep.subr.mxu0 0.0
    %260 = vmatpush2.msra.mxu0 0.0
    %261 = vmatprep.subr.mxu0 0.0
    %262 = vmatpush2.msra.mxu0 0.0
    %263 = vmatprep.subr.mxu0 0.0
    %264 = vmatpush2.msra.mxu0 0.0
    %265 = vmatprep.subr.mxu0 0.0
    %266 = vmatpush2.msra.mxu0 0.0
    %267 = vmatprep.subr.mxu0 0.0
    %268 = vmatpush2.msra.mxu0 0.0
    %269 = vmatprep.subr.mxu0 0.0
    %270 = vmatpush2.msra.mxu0 0.0
    %271 = vmatprep.subr.mxu0 0.0
    %272 = vmatpush2.msra.mxu0 0.0
    %273 = vmatprep.subr.mxu0 0.0
    %274 = vmatpush2.msra.mxu0 0.0
    %275 = vmatprep.subr.mxu0 0.0
    %276 = vmatpush2.msra.mxu0 0.0
    %277 = vmatprep.subr.mxu0 0.0
    %278 = vmatpush2.msra.mxu0 0.0
    %279 = vmatprep.subr.mxu0 0.0
    %280 = vmatpush2.msra.mxu0 0.0
    %281 = vmatprep.subr.mxu0 0.0
    %282 = vmatpush2.msra.mxu0 0.0
    %283 = vmatprep.subr.mxu0 0.0
    %284 = vmatpush2.msra.mxu0 0.0
    %285 = vmatprep.subr.mxu0 0.0
    %286 = vmatpush2.msra.mxu0 0.0
    %287 = vmatprep.subr.mxu0 0.0
    %288 = vmatpush2.msra.mxu0 0.0
    %289 = vmatprep.subr.mxu0 0.0
    %290 = vmatpush2.msra.mxu0 0.0
    %291 = vmatprep.mubr.f32.mxu0 0.0
    %v292 = vand.u32 %v126, 4294901760
    %293 = vmatmul.mubr.f32.gmra.mxu0 %v292
    %v294 = vpop.f32.mrf.mxu0
    %v295 = vadd.f32 %v204, %v294
    %v296 = vpop.f32.mrf.mxu0
    %297 = vdwg.mxu0
    %298 = vmatprep.subr.mxu0 0.0
    %299 = vmatpush1.msra.mxu0 0.0
    %300 = vmatprep.subr.mxu0 0.0
    %301 = vmatpush1.msra.mxu0 0.0
    %302 = vmatprep.subr.mxu0 0.0
    %303 = vmatpush1.msra.mxu0 0.0
    %304 = vmatprep.subr.mxu0 0.0
    %305 = vmatpush1.msra.mxu0 0.0
    %306 = vmatprep.subr.mxu0 0.0
    %307 = vmatpush1.msra.mxu0 0.0
    %308 = vmatprep.subr.mxu0 0.0
    %309 = vmatpush1.msra.mxu0 0.0
    %310 = vmatprep.subr.mxu0 0.0
    %311 = vmatpush1.msra.mxu0 0.0
    %312 = vmatprep.subr.mxu0 0.0
    %313 = vmatpush1.msra.mxu0 0.0
    %314 = vmatprep.subr.mxu0 0.0
    %315 = vmatpush1.msra.mxu0 0.0
    %316 = vmatprep.subr.mxu0 0.0
    %317 = vmatpush1.msra.mxu0 0.0
    %318 = vmatprep.subr.mxu0 0.0
    %319 = vmatpush1.msra.mxu0 0.0
    %320 = vmatprep.subr.mxu0 0.0
    %321 = vmatpush1.msra.mxu0 0.0
    %322 = vmatprep.subr.mxu0 0.0
    %v323 = vand.u32 %v103, 4294901760
    %v324 = vsub.f32 %v103, %v323
    %325 = vmatpush1.msra.mxu0 %v324
    %326 = vmatprep.subr.mxu0 0.0
    %v327 = vand.u32 %v102, 4294901760
    %v328 = vsub.f32 %v102, %v327
    %329 = vmatpush1.msra.mxu0 %v328
    %330 = vmatprep.subr.mxu0 0.0
    %v331 = vand.u32 %v101, 4294901760
    %v332 = vsub.f32 %v101, %v331
    %333 = vmatpush1.msra.mxu0 %v332
    %334 = vmatprep.subr.mxu0 0.0
    %v335 = vand.u32 %v100, 4294901760
    %v336 = vsub.f32 %v100, %v335
    %337 = vmatpush1.msra.mxu0 %v336
    %338 = vmatprep.subr.mxu0 0.0
    %339 = vmatpush2.msra.mxu0 0.0
    %340 = vmatprep.subr.mxu0 0.0
    %341 = vmatpush2.msra.mxu0 0.0
    %342 = vmatprep.subr.mxu0 0.0
    %343 = vmatpush2.msra.mxu0 0.0
    %344 = vmatprep.subr.mxu0 0.0
    %345 = vmatpush2.msra.mxu0 0.0
    %346 = vmatprep.subr.mxu0 0.0
    %347 = vmatpush2.msra.mxu0 0.0
    %348 = vmatprep.subr.mxu0 0.0
    %349 = vmatpush2.msra.mxu0 0.0
    %350 = vmatprep.subr.mxu0 0.0
    %351 = vmatpush2.msra.mxu0 0.0
    %352 = vmatprep.subr.mxu0 0.0
    %353 = vmatpush2.msra.mxu0 0.0
    %354 = vmatprep.subr.mxu0 0.0
    %355 = vmatpush2.msra.mxu0 0.0
    %356 = vmatprep.subr.mxu0 0.0
    %357 = vmatpush2.msra.mxu0 0.0
    %358 = vmatprep.subr.mxu0 0.0
    %359 = vmatpush2.msra.mxu0 0.0
    %360 = vmatprep.subr.mxu0 0.0
    %361 = vmatpush2.msra.mxu0 0.0
    %362 = vmatprep.subr.mxu0 0.0
    %363 = vmatpush2.msra.mxu0 0.0
    %364 = vmatprep.subr.mxu0 0.0
    %365 = vmatpush2.msra.mxu0 0.0
    %366 = vmatprep.subr.mxu0 0.0
    %367 = vmatpush2.msra.mxu0 0.0
    %368 = vmatprep.subr.mxu0 0.0
    %369 = vmatpush2.msra.mxu0 0.0
    %370 = vmatprep.mubr.f32.mxu0 0.0
    %v371 = vand.u32 %v126, 4294901760
    %v372 = vsub.f32 %v126, %v371
    %373 = vmatmul.mubr.f32.gmra.mxu0 %v372
    %v374 = vpop.f32.mrf.mxu0
    %v375 = vadd.f32 %v295, %v374
    %v376 = vpop.f32.mrf.mxu0
    %377 = vdwg.mxu0
    %378 = vmatprep.subr.mxu0 0.0
    %379 = vmatpush1.msra.mxu0 0.0
    %380 = vmatprep.subr.mxu0 0.0
    %381 = vmatpush1.msra.mxu0 0.0
    %382 = vmatprep.subr.mxu0 0.0
    %383 = vmatpush1.msra.mxu0 0.0
    %384 = vmatprep.subr.mxu0 0.0
    %385 = vmatpush1.msra.mxu0 0.0
    %386 = vmatprep.subr.mxu0 0.0
    %387 = vmatpush1.msra.mxu0 0.0
    %388 = vmatprep.subr.mxu0 0.0
    %389 = vmatpush1.msra.mxu0 0.0
    %390 = vmatprep.subr.mxu0 0.0
    %391 = vmatpush1.msra.mxu0 0.0
    %392 = vmatprep.subr.mxu0 0.0
    %393 = vmatpush1.msra.mxu0 0.0
    %394 = vmatprep.subr.mxu0 0.0
    %395 = vmatpush1.msra.mxu0 0.0
    %396 = vmatprep.subr.mxu0 0.0
    %397 = vmatpush1.msra.mxu0 0.0
    %398 = vmatprep.subr.mxu0 0.0
    %399 = vmatpush1.msra.mxu0 0.0
    %400 = vmatprep.subr.mxu0 0.0
    %401 = vmatpush1.msra.mxu0 0.0
    %402 = vmatprep.subr.mxu0 0.0
    %v403 = vand.u32 %v103, 4294901760
    %404 = vmatpush1.msra.mxu0 %v403
    %405 = vmatprep.subr.mxu0 0.0
    %v406 = vand.u32 %v102, 4294901760
    %407 = vmatpush1.msra.mxu0 %v406
    %408 = vmatprep.subr.mxu0 0.0
    %v409 = vand.u32 %v101, 4294901760
    %410 = vmatpush1.msra.mxu0 %v409
    %411 = vmatprep.subr.mxu0 0.0
    %v412 = vand.u32 %v100, 4294901760
    %413 = vmatpush1.msra.mxu0 %v412
    %414 = vmatprep.subr.mxu0 0.0
    %415 = vmatpush2.msra.mxu0 0.0
    %416 = vmatprep.subr.mxu0 0.0
    %417 = vmatpush2.msra.mxu0 0.0
    %418 = vmatprep.subr.mxu0 0.0
    %419 = vmatpush2.msra.mxu0 0.0
    %420 = vmatprep.subr.mxu0 0.0
    %421 = vmatpush2.msra.mxu0 0.0
    %422 = vmatprep.subr.mxu0 0.0
    %423 = vmatpush2.msra.mxu0 0.0
    %424 = vmatprep.subr.mxu0 0.0
    %425 = vmatpush2.msra.mxu0 0.0
    %426 = vmatprep.subr.mxu0 0.0
    %427 = vmatpush2.msra.mxu0 0.0
    %428 = vmatprep.subr.mxu0 0.0
    %429 = vmatpush2.msra.mxu0 0.0
    %430 = vmatprep.subr.mxu0 0.0
    %431 = vmatpush2.msra.mxu0 0.0
    %432 = vmatprep.subr.mxu0 0.0
    %433 = vmatpush2.msra.mxu0 0.0
    %434 = vmatprep.subr.mxu0 0.0
    %435 = vmatpush2.msra.mxu0 0.0
    %436 = vmatprep.subr.mxu0 0.0
    %437 = vmatpush2.msra.mxu0 0.0
    %438 = vmatprep.subr.mxu0 0.0
    %439 = vmatpush2.msra.mxu0 0.0
    %440 = vmatprep.subr.mxu0 0.0
    %441 = vmatpush2.msra.mxu0 0.0
    %442 = vmatprep.subr.mxu0 0.0
    %443 = vmatpush2.msra.mxu0 0.0
    %444 = vmatprep.subr.mxu0 0.0
    %445 = vmatpush2.msra.mxu0 0.0
    %446 = vmatprep.mubr.f32.mxu0 0.0
    %v447 = vand.u32 %v126, 4294901760
    %v448 = vsub.f32 %v126, %v447
    %v449 = vand.u32 %v448, 4294901760
    %450 = vmatmul.mubr.f32.gmra.mxu0 %v449
    %v451 = vpop.f32.mrf.mxu0
    %v452 = vadd.f32 %v375, %v451
    %v453 = vpop.f32.mrf.mxu0
    %454 = vdwg.mxu0
    %455 = vmatprep.subr.mxu0 0.0
    %456 = vmatpush1.msra.mxu0 0.0
    %457 = vmatprep.subr.mxu0 0.0
    %458 = vmatpush1.msra.mxu0 0.0
    %459 = vmatprep.subr.mxu0 0.0
    %460 = vmatpush1.msra.mxu0 0.0
    %461 = vmatprep.subr.mxu0 0.0
    %462 = vmatpush1.msra.mxu0 0.0
    %463 = vmatprep.subr.mxu0 0.0
    %464 = vmatpush1.msra.mxu0 0.0
    %465 = vmatprep.subr.mxu0 0.0
    %466 = vmatpush1.msra.mxu0 0.0
    %467 = vmatprep.subr.mxu0 0.0
    %468 = vmatpush1.msra.mxu0 0.0
    %469 = vmatprep.subr.mxu0 0.0
    %470 = vmatpush1.msra.mxu0 0.0
    %471 = vmatprep.subr.mxu0 0.0
    %472 = vmatpush1.msra.mxu0 0.0
    %473 = vmatprep.subr.mxu0 0.0
    %474 = vmatpush1.msra.mxu0 0.0
    %475 = vmatprep.subr.mxu0 0.0
    %476 = vmatpush1.msra.mxu0 0.0
    %477 = vmatprep.subr.mxu0 0.0
    %478 = vmatpush1.msra.mxu0 0.0
    %479 = vmatprep.subr.mxu0 0.0
    %v480 = vand.u32 %v103, 4294901760
    %v481 = vsub.f32 %v103, %v480
    %v482 = vand.u32 %v481, 4294901760
    %483 = vmatpush1.msra.mxu0 %v482
    %484 = vmatprep.subr.mxu0 0.0
    %v485 = vand.u32 %v102, 4294901760
    %v486 = vsub.f32 %v102, %v485
    %v487 = vand.u32 %v486, 4294901760
    %488 = vmatpush1.msra.mxu0 %v487
    %489 = vmatprep.subr.mxu0 0.0
    %v490 = vand.u32 %v101, 4294901760
    %v491 = vsub.f32 %v101, %v490
    %v492 = vand.u32 %v491, 4294901760
    %493 = vmatpush1.msra.mxu0 %v492
    %494 = vmatprep.subr.mxu0 0.0
    %v495 = vand.u32 %v100, 4294901760
    %v496 = vsub.f32 %v100, %v495
    %v497 = vand.u32 %v496, 4294901760
    %498 = vmatpush1.msra.mxu0 %v497
    %499 = vmatprep.subr.mxu0 0.0
    %500 = vmatpush2.msra.mxu0 0.0
    %501 = vmatprep.subr.mxu0 0.0
    %502 = vmatpush2.msra.mxu0 0.0
    %503 = vmatprep.subr.mxu0 0.0
    %504 = vmatpush2.msra.mxu0 0.0
    %505 = vmatprep.subr.mxu0 0.0
    %506 = vmatpush2.msra.mxu0 0.0
    %507 = vmatprep.subr.mxu0 0.0
    %508 = vmatpush2.msra.mxu0 0.0
    %509 = vmatprep.subr.mxu0 0.0
    %510 = vmatpush2.msra.mxu0 0.0
    %511 = vmatprep.subr.mxu0 0.0
    %512 = vmatpush2.msra.mxu0 0.0
    %513 = vmatprep.subr.mxu0 0.0
    %514 = vmatpush2.msra.mxu0 0.0
    %515 = vmatprep.subr.mxu0 0.0
    %516 = vmatpush2.msra.mxu0 0.0
    %517 = vmatprep.subr.mxu0 0.0
    %518 = vmatpush2.msra.mxu0 0.0
    %519 = vmatprep.subr.mxu0 0.0
    %520 = vmatpush2.msra.mxu0 0.0
    %521 = vmatprep.subr.mxu0 0.0
    %522 = vmatpush2.msra.mxu0 0.0
    %523 = vmatprep.subr.mxu0 0.0
    %524 = vmatpush2.msra.mxu0 0.0
    %525 = vmatprep.subr.mxu0 0.0
    %526 = vmatpush2.msra.mxu0 0.0
    %527 = vmatprep.subr.mxu0 0.0
    %528 = vmatpush2.msra.mxu0 0.0
    %529 = vmatprep.subr.mxu0 0.0
    %530 = vmatpush2.msra.mxu0 0.0
    %531 = vmatprep.mubr.f32.mxu0 0.0
    %v532 = vand.u32 %v126, 4294901760
    %533 = vmatmul.mubr.f32.gmra.mxu0 %v532
    %v534 = vpop.f32.mrf.mxu0
    %v535 = vadd.f32 %v452, %v534
    %v536 = vpop.f32.mrf.mxu0
    %537 = vdwg.mxu0
    %538 = vmatprep.subr.mxu0 0.0
    %539 = vmatpush1.msra.mxu0 0.0
    %540 = vmatprep.subr.mxu0 0.0
    %541 = vmatpush1.msra.mxu0 0.0
    %542 = vmatprep.subr.mxu0 0.0
    %543 = vmatpush1.msra.mxu0 0.0
    %544 = vmatprep.subr.mxu0 0.0
    %545 = vmatpush1.msra.mxu0 0.0
    %546 = vmatprep.subr.mxu0 0.0
    %547 = vmatpush1.msra.mxu0 0.0
    %548 = vmatprep.subr.mxu0 0.0
    %549 = vmatpush1.msra.mxu0 0.0
    %550 = vmatprep.subr.mxu0 0.0
    %551 = vmatpush1.msra.mxu0 0.0
    %552 = vmatprep.subr.mxu0 0.0
    %553 = vmatpush1.msra.mxu0 0.0
    %554 = vmatprep.subr.mxu0 0.0
    %555 = vmatpush1.msra.mxu0 0.0
    %556 = vmatprep.subr.mxu0 0.0
    %557 = vmatpush1.msra.mxu0 0.0
    %558 = vmatprep.subr.mxu0 0.0
    %559 = vmatpush1.msra.mxu0 0.0
    %560 = vmatprep.subr.mxu0 0.0
    %561 = vmatpush1.msra.mxu0 0.0
    %562 = vmatprep.subr.mxu0 0.0
    %v563 = vand.u32 %v103, 4294901760
    %564 = vmatpush1.msra.mxu0 %v563
    %565 = vmatprep.subr.mxu0 0.0
    %v566 = vand.u32 %v102, 4294901760
    %567 = vmatpush1.msra.mxu0 %v566
    %568 = vmatprep.subr.mxu0 0.0
    %v569 = vand.u32 %v101, 4294901760
    %570 = vmatpush1.msra.mxu0 %v569
    %571 = vmatprep.subr.mxu0 0.0
    %v572 = vand.u32 %v100, 4294901760
    %573 = vmatpush1.msra.mxu0 %v572
    %574 = vmatprep.subr.mxu0 0.0
    %575 = vmatpush2.msra.mxu0 0.0
    %576 = vmatprep.subr.mxu0 0.0
    %577 = vmatpush2.msra.mxu0 0.0
    %578 = vmatprep.subr.mxu0 0.0
    %579 = vmatpush2.msra.mxu0 0.0
    %580 = vmatprep.subr.mxu0 0.0
    %581 = vmatpush2.msra.mxu0 0.0
    %582 = vmatprep.subr.mxu0 0.0
    %583 = vmatpush2.msra.mxu0 0.0
    %584 = vmatprep.subr.mxu0 0.0
    %585 = vmatpush2.msra.mxu0 0.0
    %586 = vmatprep.subr.mxu0 0.0
    %587 = vmatpush2.msra.mxu0 0.0
    %588 = vmatprep.subr.mxu0 0.0
    %589 = vmatpush2.msra.mxu0 0.0
    %590 = vmatprep.subr.mxu0 0.0
    %591 = vmatpush2.msra.mxu0 0.0
    %592 = vmatprep.subr.mxu0 0.0
    %593 = vmatpush2.msra.mxu0 0.0
    %594 = vmatprep.subr.mxu0 0.0
    %595 = vmatpush2.msra.mxu0 0.0
    %596 = vmatprep.subr.mxu0 0.0
    %597 = vmatpush2.msra.mxu0 0.0
    %598 = vmatprep.subr.mxu0 0.0
    %599 = vmatpush2.msra.mxu0 0.0
    %600 = vmatprep.subr.mxu0 0.0
    %601 = vmatpush2.msra.mxu0 0.0
    %602 = vmatprep.subr.mxu0 0.0
    %603 = vmatpush2.msra.mxu0 0.0
    %604 = vmatprep.subr.mxu0 0.0
    %605 = vmatpush2.msra.mxu0 0.0
    %606 = vmatprep.mubr.f32.mxu0 0.0
    %v607 = vand.u32 %v126, 4294901760
    %608 = vmatmul.mubr.f32.gmra.mxu0 %v607
    %v609 = vpop.f32.mrf.mxu0
    %v610 = vadd.f32 %v535, %v609
    %v611 = vpop.f32.mrf.mxu0
    %612 = vdwg.mxu0
    %v613 = vadd.f32 %v123, %v610
    %v614 = vtanh.pop %v613
    %v615 = vmul.f32 %v614, 0.5
    %v616 = vadd.f32 %v615, 0.5
    %v617 = vsel %vm119, %v614, %v616
    %v619 = vlaneseq
    %v620 = vshrl.u32 %v619, 7
    %v621 = vsub.s32 0, %v620
    %v622 = vrot.slane %v122, %v621
    %623 = vrot.lane.b32.xlu0 %v622, 32
    %v624 = vpop.permute.xlu0 %623
    %v626 = vmul.f32 %v617, %v624
    %628 = vrot.lane.b32.xlu0 %v617, 64
    %v629 = vpop.permute.xlu0 %628
    %v631 = vmul.f32 %v617, %v629
    %633 = vrot.lane.b32.xlu0 %v631, 32
    %v634 = vpop.permute.xlu0 %633
    %v636 = vadd.f32 %v626, %v634
    %v637 = vtanh.pop %v636
    %639 = vrot.lane.b32.xlu0 %v637, 64
    %v640 = vpop.permute.xlu0 %639
    %v642 = vmul.f32 %v617, %v640
    %644 = vrot.lane.b32.xlu0 %v642, 32
    %v645 = vpop.permute.xlu0 %644
    %vm647 = vcmask 253952
    %648 = vst.msk [vmem:[#allocation3] sm:$0x1] %vm647, %v645
    %v649 = vld [vmem:[%s68] sm:$0x1]
    %v650 = vsel %vm124, %v645, 0
    %652 = vmatprep.subr.mxu0 0.0
    %653 = vmatpush1.msra.mxu0 0.0
    %654 = vmatprep.subr.mxu0 0.0
    %655 = vmatpush1.msra.mxu0 0.0
    %656 = vmatprep.subr.mxu0 0.0
    %657 = vmatpush1.msra.mxu0 0.0
    %658 = vmatprep.subr.mxu0 0.0
    %659 = vmatpush1.msra.mxu0 0.0
    %660 = vmatprep.subr.mxu0 0.0
    %661 = vmatpush1.msra.mxu0 0.0
    %662 = vmatprep.subr.mxu0 0.0
    %663 = vmatpush1.msra.mxu0 0.0
    %664 = vmatprep.subr.mxu0 0.0
    %665 = vmatpush1.msra.mxu0 0.0
    %666 = vmatprep.subr.mxu0 0.0
    %667 = vmatpush1.msra.mxu0 0.0
    %668 = vmatprep.subr.mxu0 0.0
    %669 = vmatpush1.msra.mxu0 0.0
    %670 = vmatprep.subr.mxu0 0.0
    %671 = vmatpush1.msra.mxu0 0.0
    %672 = vmatprep.subr.mxu0 0.0
    %673 = vmatpush1.msra.mxu0 0.0
    %674 = vmatprep.subr.mxu0 0.0
    %675 = vmatpush1.msra.mxu0 0.0
    %676 = vmatprep.subr.mxu0 0.0
    %v677 = vand.u32 %v103, 4294901760
    %678 = vmatpush1.msra.mxu0 %v677
    %679 = vmatprep.subr.mxu0 0.0
    %v680 = vand.u32 %v102, 4294901760
    %681 = vmatpush1.msra.mxu0 %v680
    %682 = vmatprep.subr.mxu0 0.0
    %v683 = vand.u32 %v101, 4294901760
    %684 = vmatpush1.msra.mxu0 %v683
    %685 = vmatprep.subr.mxu0 0.0
    %v686 = vand.u32 %v100, 4294901760
    %687 = vmatpush1.msra.mxu0 %v686
    %688 = vmatprep.subr.mxu0 0.0
    %689 = vmatpush2.msra.mxu0 0.0
    %690 = vmatprep.subr.mxu0 0.0
    %691 = vmatpush2.msra.mxu0 0.0
    %692 = vmatprep.subr.mxu0 0.0
    %693 = vmatpush2.msra.mxu0 0.0
    %694 = vmatprep.subr.mxu0 0.0
    %695 = vmatpush2.msra.mxu0 0.0
    %696 = vmatprep.subr.mxu0 0.0
    %697 = vmatpush2.msra.mxu0 0.0
    %698 = vmatprep.subr.mxu0 0.0
    %699 = vmatpush2.msra.mxu0 0.0
    %700 = vmatprep.subr.mxu0 0.0
    %701 = vmatpush2.msra.mxu0 0.0
    %702 = vmatprep.subr.mxu0 0.0
    %703 = vmatpush2.msra.mxu0 0.0
    %704 = vmatprep.subr.mxu0 0.0
    %705 = vmatpush2.msra.mxu0 0.0
    %706 = vmatprep.subr.mxu0 0.0
    %707 = vmatpush2.msra.mxu0 0.0
    %708 = vmatprep.subr.mxu0 0.0
    %709 = vmatpush2.msra.mxu0 0.0
    %710 = vmatprep.subr.mxu0 0.0
    %711 = vmatpush2.msra.mxu0 0.0
    %712 = vmatprep.subr.mxu0 0.0
    %713 = vmatpush2.msra.mxu0 0.0
    %714 = vmatprep.subr.mxu0 0.0
    %715 = vmatpush2.msra.mxu0 0.0
    %716 = vmatprep.subr.mxu0 0.0
    %717 = vmatpush2.msra.mxu0 0.0
    %718 = vmatprep.subr.mxu0 0.0
    %719 = vmatpush2.msra.mxu0 0.0
    %720 = vmatprep.mubr.f32.mxu0 0.0
    %v721 = vand.u32 %v650, 4294901760
    %v722 = vsub.f32 %v650, %v721
    %v723 = vand.u32 %v722, 4294901760
    %v724 = vsub.f32 %v722, %v723
    %v725 = vand.u32 %v724, 4294901760
    %726 = vmatmul.mubr.f32.gmra.mxu0 %v725
    %v727 = vpop.f32.mrf.mxu0
    %v728 = vadd.f32 0.0, %v727
    %v729 = vpop.f32.mrf.mxu0
    %730 = vdwg.mxu0
    %731 = vmatprep.subr.mxu0 0.0
    %732 = vmatpush1.msra.mxu0 0.0
    %733 = vmatprep.subr.mxu0 0.0
    %734 = vmatpush1.msra.mxu0 0.0
    %735 = vmatprep.subr.mxu0 0.0
    %736 = vmatpush1.msra.mxu0 0.0
    %737 = vmatprep.subr.mxu0 0.0
    %738 = vmatpush1.msra.mxu0 0.0
    %739 = vmatprep.subr.mxu0 0.0
    %740 = vmatpush1.msra.mxu0 0.0
    %741 = vmatprep.subr.mxu0 0.0
    %742 = vmatpush1.msra.mxu0 0.0
    %743 = vmatprep.subr.mxu0 0.0
    %744 = vmatpush1.msra.mxu0 0.0
    %745 = vmatprep.subr.mxu0 0.0
    %746 = vmatpush1.msra.mxu0 0.0
    %747 = vmatprep.subr.mxu0 0.0
    %748 = vmatpush1.msra.mxu0 0.0
    %749 = vmatprep.subr.mxu0 0.0
    %750 = vmatpush1.msra.mxu0 0.0
    %751 = vmatprep.subr.mxu0 0.0
    %752 = vmatpush1.msra.mxu0 0.0
    %753 = vmatprep.subr.mxu0 0.0
    %754 = vmatpush1.msra.mxu0 0.0
    %755 = vmatprep.subr.mxu0 0.0
    %v756 = vand.u32 %v103, 4294901760
    %v757 = vsub.f32 %v103, %v756
    %v758 = vand.u32 %v757, 4294901760
    %v759 = vsub.f32 %v757, %v758
    %v760 = vand.u32 %v759, 4294901760
    %761 = vmatpush1.msra.mxu0 %v760
    %762 = vmatprep.subr.mxu0 0.0
    %v763 = vand.u32 %v102, 4294901760
    %v764 = vsub.f32 %v102, %v763
    %v765 = vand.u32 %v764, 4294901760
    %v766 = vsub.f32 %v764, %v765
    %v767 = vand.u32 %v766, 4294901760
    %768 = vmatpush1.msra.mxu0 %v767
    %769 = vmatprep.subr.mxu0 0.0
    %v770 = vand.u32 %v101, 4294901760
    %v771 = vsub.f32 %v101, %v770
    %v772 = vand.u32 %v771, 4294901760
    %v773 = vsub.f32 %v771, %v772
    %v774 = vand.u32 %v773, 4294901760
    %775 = vmatpush1.msra.mxu0 %v774
    %776 = vmatprep.subr.mxu0 0.0
    %v777 = vand.u32 %v100, 4294901760
    %v778 = vsub.f32 %v100, %v777
    %v779 = vand.u32 %v778, 4294901760
    %v780 = vsub.f32 %v778, %v779
    %v781 = vand.u32 %v780, 4294901760
    %782 = vmatpush1.msra.mxu0 %v781
    %783 = vmatprep.subr.mxu0 0.0
    %784 = vmatpush2.msra.mxu0 0.0
    %785 = vmatprep.subr.mxu0 0.0
    %786 = vmatpush2.msra.mxu0 0.0
    %787 = vmatprep.subr.mxu0 0.0
    %788 = vmatpush2.msra.mxu0 0.0
    %789 = vmatprep.subr.mxu0 0.0
    %790 = vmatpush2.msra.mxu0 0.0
    %791 = vmatprep.subr.mxu0 0.0
    %792 = vmatpush2.msra.mxu0 0.0
    %793 = vmatprep.subr.mxu0 0.0
    %794 = vmatpush2.msra.mxu0 0.0
    %795 = vmatprep.subr.mxu0 0.0
    %796 = vmatpush2.msra.mxu0 0.0
    %797 = vmatprep.subr.mxu0 0.0
    %798 = vmatpush2.msra.mxu0 0.0
    %799 = vmatprep.subr.mxu0 0.0
    %800 = vmatpush2.msra.mxu0 0.0
    %801 = vmatprep.subr.mxu0 0.0
    %802 = vmatpush2.msra.mxu0 0.0
    %803 = vmatprep.subr.mxu0 0.0
    %804 = vmatpush2.msra.mxu0 0.0
    %805 = vmatprep.subr.mxu0 0.0
    %806 = vmatpush2.msra.mxu0 0.0
    %807 = vmatprep.subr.mxu0 0.0
    %808 = vmatpush2.msra.mxu0 0.0
    %809 = vmatprep.subr.mxu0 0.0
    %810 = vmatpush2.msra.mxu0 0.0
    %811 = vmatprep.subr.mxu0 0.0
    %812 = vmatpush2.msra.mxu0 0.0
    %813 = vmatprep.subr.mxu0 0.0
    %814 = vmatpush2.msra.mxu0 0.0
    %815 = vmatprep.mubr.f32.mxu0 0.0
    %v816 = vand.u32 %v650, 4294901760
    %817 = vmatmul.mubr.f32.gmra.mxu0 %v816
    %v818 = vpop.f32.mrf.mxu0
    %v819 = vadd.f32 %v728, %v818
    %v820 = vpop.f32.mrf.mxu0
    %821 = vdwg.mxu0
    %822 = vmatprep.subr.mxu0 0.0
    %823 = vmatpush1.msra.mxu0 0.0
    %824 = vmatprep.subr.mxu0 0.0
    %825 = vmatpush1.msra.mxu0 0.0
    %826 = vmatprep.subr.mxu0 0.0
    %827 = vmatpush1.msra.mxu0 0.0
    %828 = vmatprep.subr.mxu0 0.0
    %829 = vmatpush1.msra.mxu0 0.0
    %830 = vmatprep.subr.mxu0 0.0
    %831 = vmatpush1.msra.mxu0 0.0
    %832 = vmatprep.subr.mxu0 0.0
    %833 = vmatpush1.msra.mxu0 0.0
    %834 = vmatprep.subr.mxu0 0.0
    %835 = vmatpush1.msra.mxu0 0.0
    %836 = vmatprep.subr.mxu0 0.0
    %837 = vmatpush1.msra.mxu0 0.0
    %838 = vmatprep.subr.mxu0 0.0
    %839 = vmatpush1.msra.mxu0 0.0
    %840 = vmatprep.subr.mxu0 0.0
    %841 = vmatpush1.msra.mxu0 0.0
    %842 = vmatprep.subr.mxu0 0.0
    %843 = vmatpush1.msra.mxu0 0.0
    %844 = vmatprep.subr.mxu0 0.0
    %845 = vmatpush1.msra.mxu0 0.0
    %846 = vmatprep.subr.mxu0 0.0
    %v847 = vand.u32 %v103, 4294901760
    %v848 = vsub.f32 %v103, %v847
    %849 = vmatpush1.msra.mxu0 %v848
    %850 = vmatprep.subr.mxu0 0.0
    %v851 = vand.u32 %v102, 4294901760
    %v852 = vsub.f32 %v102, %v851
    %853 = vmatpush1.msra.mxu0 %v852
    %854 = vmatprep.subr.mxu0 0.0
    %v855 = vand.u32 %v101, 4294901760
    %v856 = vsub.f32 %v101, %v855
    %857 = vmatpush1.msra.mxu0 %v856
    %858 = vmatprep.subr.mxu0 0.0
    %v859 = vand.u32 %v100, 4294901760
    %v860 = vsub.f32 %v100, %v859
    %861 = vmatpush1.msra.mxu0 %v860
    %862 = vmatprep.subr.mxu0 0.0
    %863 = vmatpush2.msra.mxu0 0.0
    %864 = vmatprep.subr.mxu0 0.0
    %865 = vmatpush2.msra.mxu0 0.0
    %866 = vmatprep.subr.mxu0 0.0
    %867 = vmatpush2.msra.mxu0 0.0
    %868 = vmatprep.subr.mxu0 0.0
    %869 = vmatpush2.msra.mxu0 0.0
    %870 = vmatprep.subr.mxu0 0.0
    %871 = vmatpush2.msra.mxu0 0.0
    %872 = vmatprep.subr.mxu0 0.0
    %873 = vmatpush2.msra.mxu0 0.0
    %874 = vmatprep.subr.mxu0 0.0
    %875 = vmatpush2.msra.mxu0 0.0
    %876 = vmatprep.subr.mxu0 0.0
    %877 = vmatpush2.msra.mxu0 0.0
    %878 = vmatprep.subr.mxu0 0.0
    %879 = vmatpush2.msra.mxu0 0.0
    %880 = vmatprep.subr.mxu0 0.0
    %881 = vmatpush2.msra.mxu0 0.0
    %882 = vmatprep.subr.mxu0 0.0
    %883 = vmatpush2.msra.mxu0 0.0
    %884 = vmatprep.subr.mxu0 0.0
    %885 = vmatpush2.msra.mxu0 0.0
    %886 = vmatprep.subr.mxu0 0.0
    %887 = vmatpush2.msra.mxu0 0.0
    %888 = vmatprep.subr.mxu0 0.0
    %889 = vmatpush2.msra.mxu0 0.0
    %890 = vmatprep.subr.mxu0 0.0
    %891 = vmatpush2.msra.mxu0 0.0
    %892 = vmatprep.subr.mxu0 0.0
    %893 = vmatpush2.msra.mxu0 0.0
    %894 = vmatprep.mubr.f32.mxu0 0.0
    %v895 = vand.u32 %v650, 4294901760
    %v896 = vsub.f32 %v650, %v895
    %897 = vmatmul.mubr.f32.gmra.mxu0 %v896
    %v898 = vpop.f32.mrf.mxu0
    %v899 = vadd.f32 %v819, %v898
    %v900 = vpop.f32.mrf.mxu0
    %901 = vdwg.mxu0
    %902 = vmatprep.subr.mxu0 0.0
    %903 = vmatpush1.msra.mxu0 0.0
    %904 = vmatprep.subr.mxu0 0.0
    %905 = vmatpush1.msra.mxu0 0.0
    %906 = vmatprep.subr.mxu0 0.0
    %907 = vmatpush1.msra.mxu0 0.0
    %908 = vmatprep.subr.mxu0 0.0
    %909 = vmatpush1.msra.mxu0 0.0
    %910 = vmatprep.subr.mxu0 0.0
    %911 = vmatpush1.msra.mxu0 0.0
    %912 = vmatprep.subr.mxu0 0.0
    %913 = vmatpush1.msra.mxu0 0.0
    %914 = vmatprep.subr.mxu0 0.0
    %915 = vmatpush1.msra.mxu0 0.0
    %916 = vmatprep.subr.mxu0 0.0
    %917 = vmatpush1.msra.mxu0 0.0
    %918 = vmatprep.subr.mxu0 0.0
    %919 = vmatpush1.msra.mxu0 0.0
    %920 = vmatprep.subr.mxu0 0.0
    %921 = vmatpush1.msra.mxu0 0.0
    %922 = vmatprep.subr.mxu0 0.0
    %923 = vmatpush1.msra.mxu0 0.0
    %924 = vmatprep.subr.mxu0 0.0
    %925 = vmatpush1.msra.mxu0 0.0
    %926 = vmatprep.subr.mxu0 0.0
    %v927 = vand.u32 %v103, 4294901760
    %928 = vmatpush1.msra.mxu0 %v927
    %929 = vmatprep.subr.mxu0 0.0
    %v930 = vand.u32 %v102, 4294901760
    %931 = vmatpush1.msra.mxu0 %v930
    %932 = vmatprep.subr.mxu0 0.0
    %v933 = vand.u32 %v101, 4294901760
    %934 = vmatpush1.msra.mxu0 %v933
    %935 = vmatprep.subr.mxu0 0.0
    %v936 = vand.u32 %v100, 4294901760
    %937 = vmatpush1.msra.mxu0 %v936
    %938 = vmatprep.subr.mxu0 0.0
    %939 = vmatpush2.msra.mxu0 0.0
    %940 = vmatprep.subr.mxu0 0.0
    %941 = vmatpush2.msra.mxu0 0.0
    %942 = vmatprep.subr.mxu0 0.0
    %943 = vmatpush2.msra.mxu0 0.0
    %944 = vmatprep.subr.mxu0 0.0
    %945 = vmatpush2.msra.mxu0 0.0
    %946 = vmatprep.subr.mxu0 0.0
    %947 = vmatpush2.msra.mxu0 0.0
    %948 = vmatprep.subr.mxu0 0.0
    %949 = vmatpush2.msra.mxu0 0.0
    %950 = vmatprep.subr.mxu0 0.0
    %951 = vmatpush2.msra.mxu0 0.0
    %952 = vmatprep.subr.mxu0 0.0
    %953 = vmatpush2.msra.mxu0 0.0
    %954 = vmatprep.subr.mxu0 0.0
    %955 = vmatpush2.msra.mxu0 0.0
    %956 = vmatprep.subr.mxu0 0.0
    %957 = vmatpush2.msra.mxu0 0.0
    %958 = vmatprep.subr.mxu0 0.0
    %959 = vmatpush2.msra.mxu0 0.0
    %960 = vmatprep.subr.mxu0 0.0
    %961 = vmatpush2.msra.mxu0 0.0
    %962 = vmatprep.subr.mxu0 0.0
    %963 = vmatpush2.msra.mxu0 0.0
    %964 = vmatprep.subr.mxu0 0.0
    %965 = vmatpush2.msra.mxu0 0.0
    %966 = vmatprep.subr.mxu0 0.0
    %967 = vmatpush2.msra.mxu0 0.0
    %968 = vmatprep.subr.mxu0 0.0
    %969 = vmatpush2.msra.mxu0 0.0
    %970 = vmatprep.mubr.f32.mxu0 0.0
    %v971 = vand.u32 %v650, 4294901760
    %v972 = vsub.f32 %v650, %v971
    %v973 = vand.u32 %v972, 4294901760
    %974 = vmatmul.mubr.f32.gmra.mxu0 %v973
    %v975 = vpop.f32.mrf.mxu0
    %v976 = vadd.f32 %v899, %v975
    %v977 = vpop.f32.mrf.mxu0
    %978 = vdwg.mxu0
    %979 = vmatprep.subr.mxu0 0.0
    %980 = vmatpush1.msra.mxu0 0.0
    %981 = vmatprep.subr.mxu0 0.0
    %982 = vmatpush1.msra.mxu0 0.0
    %983 = vmatprep.subr.mxu0 0.0
    %984 = vmatpush1.msra.mxu0 0.0
    %985 = vmatprep.subr.mxu0 0.0
    %986 = vmatpush1.msra.mxu0 0.0
    %987 = vmatprep.subr.mxu0 0.0
    %988 = vmatpush1.msra.mxu0 0.0
    %989 = vmatprep.subr.mxu0 0.0
    %990 = vmatpush1.msra.mxu0 0.0
    %991 = vmatprep.subr.mxu0 0.0
    %992 = vmatpush1.msra.mxu0 0.0
    %993 = vmatprep.subr.mxu0 0.0
    %994 = vmatpush1.msra.mxu0 0.0
    %995 = vmatprep.subr.mxu0 0.0
    %996 = vmatpush1.msra.mxu0 0.0
    %997 = vmatprep.subr.mxu0 0.0
    %998 = vmatpush1.msra.mxu0 0.0
    %999 = vmatprep.subr.mxu0 0.0
    %1000 = vmatpush1.msra.mxu0 0.0
    %1001 = vmatprep.subr.mxu0 0.0
    %1002 = vmatpush1.msra.mxu0 0.0
    %1003 = vmatprep.subr.mxu0 0.0
    %v1004 = vand.u32 %v103, 4294901760
    %v1005 = vsub.f32 %v103, %v1004
    %v1006 = vand.u32 %v1005, 4294901760
    %1007 = vmatpush1.msra.mxu0 %v1006
    %1008 = vmatprep.subr.mxu0 0.0
    %v1009 = vand.u32 %v102, 4294901760
    %v1010 = vsub.f32 %v102, %v1009
    %v1011 = vand.u32 %v1010, 4294901760
    %1012 = vmatpush1.msra.mxu0 %v1011
    %1013 = vmatprep.subr.mxu0 0.0
    %v1014 = vand.u32 %v101, 4294901760
    %v1015 = vsub.f32 %v101, %v1014
    %v1016 = vand.u32 %v1015, 4294901760
    %1017 = vmatpush1.msra.mxu0 %v1016
    %1018 = vmatprep.subr.mxu0 0.0
    %v1019 = vand.u32 %v100, 4294901760
    %v1020 = vsub.f32 %v100, %v1019
    %v1021 = vand.u32 %v1020, 4294901760
    %1022 = vmatpush1.msra.mxu0 %v1021
    %1023 = vmatprep.subr.mxu0 0.0
    %1024 = vmatpush2.msra.mxu0 0.0
    %1025 = vmatprep.subr.mxu0 0.0
    %1026 = vmatpush2.msra.mxu0 0.0
    %1027 = vmatprep.subr.mxu0 0.0
    %1028 = vmatpush2.msra.mxu0 0.0
    %1029 = vmatprep.subr.mxu0 0.0
    %1030 = vmatpush2.msra.mxu0 0.0
    %1031 = vmatprep.subr.mxu0 0.0
    %1032 = vmatpush2.msra.mxu0 0.0
    %1033 = vmatprep.subr.mxu0 0.0
    %1034 = vmatpush2.msra.mxu0 0.0
    %1035 = vmatprep.subr.mxu0 0.0
    %1036 = vmatpush2.msra.mxu0 0.0
    %1037 = vmatprep.subr.mxu0 0.0
    %1038 = vmatpush2.msra.mxu0 0.0
    %1039 = vmatprep.subr.mxu0 0.0
    %1040 = vmatpush2.msra.mxu0 0.0
    %1041 = vmatprep.subr.mxu0 0.0
    %1042 = vmatpush2.msra.mxu0 0.0
    %1043 = vmatprep.subr.mxu0 0.0
    %1044 = vmatpush2.msra.mxu0 0.0
    %1045 = vmatprep.subr.mxu0 0.0
    %1046 = vmatpush2.msra.mxu0 0.0
    %1047 = vmatprep.subr.mxu0 0.0
    %1048 = vmatpush2.msra.mxu0 0.0
    %1049 = vmatprep.subr.mxu0 0.0
    %1050 = vmatpush2.msra.mxu0 0.0
    %1051 = vmatprep.subr.mxu0 0.0
    %1052 = vmatpush2.msra.mxu0 0.0
    %1053 = vmatprep.subr.mxu0 0.0
    %1054 = vmatpush2.msra.mxu0 0.0
    %1055 = vmatprep.mubr.f32.mxu0 0.0
    %v1056 = vand.u32 %v650, 4294901760
    %1057 = vmatmul.mubr.f32.gmra.mxu0 %v1056
    %v1058 = vpop.f32.mrf.mxu0
    %v1059 = vadd.f32 %v976, %v1058
    %v1060 = vpop.f32.mrf.mxu0
    %1061 = vdwg.mxu0
    %1062 = vmatprep.subr.mxu0 0.0
    %1063 = vmatpush1.msra.mxu0 0.0
    %1064 = vmatprep.subr.mxu0 0.0
    %1065 = vmatpush1.msra.mxu0 0.0
    %1066 = vmatprep.subr.mxu0 0.0
    %1067 = vmatpush1.msra.mxu0 0.0
    %1068 = vmatprep.subr.mxu0 0.0
    %1069 = vmatpush1.msra.mxu0 0.0
    %1070 = vmatprep.subr.mxu0 0.0
    %1071 = vmatpush1.msra.mxu0 0.0
    %1072 = vmatprep.subr.mxu0 0.0
    %1073 = vmatpush1.msra.mxu0 0.0
    %1074 = vmatprep.subr.mxu0 0.0
    %1075 = vmatpush1.msra.mxu0 0.0
    %1076 = vmatprep.subr.mxu0 0.0
    %1077 = vmatpush1.msra.mxu0 0.0
    %1078 = vmatprep.subr.mxu0 0.0
    %1079 = vmatpush1.msra.mxu0 0.0
    %1080 = vmatprep.subr.mxu0 0.0
    %1081 = vmatpush1.msra.mxu0 0.0
    %1082 = vmatprep.subr.mxu0 0.0
    %1083 = vmatpush1.msra.mxu0 0.0
    %1084 = vmatprep.subr.mxu0 0.0
    %1085 = vmatpush1.msra.mxu0 0.0
    %1086 = vmatprep.subr.mxu0 0.0
    %v1087 = vand.u32 %v103, 4294901760
    %1088 = vmatpush1.msra.mxu0 %v1087
    %1089 = vmatprep.subr.mxu0 0.0
    %v1090 = vand.u32 %v102, 4294901760
    %1091 = vmatpush1.msra.mxu0 %v1090
    %1092 = vmatprep.subr.mxu0 0.0
    %v1093 = vand.u32 %v101, 4294901760
    %1094 = vmatpush1.msra.mxu0 %v1093
    %1095 = vmatprep.subr.mxu0 0.0
    %v1096 = vand.u32 %v100, 4294901760
    %1097 = vmatpush1.msra.mxu0 %v1096
    %1098 = vmatprep.subr.mxu0 0.0
    %1099 = vmatpush2.msra.mxu0 0.0
    %1100 = vmatprep.subr.mxu0 0.0
    %1101 = vmatpush2.msra.mxu0 0.0
    %1102 = vmatprep.subr.mxu0 0.0
    %1103 = vmatpush2.msra.mxu0 0.0
    %1104 = vmatprep.subr.mxu0 0.0
    %1105 = vmatpush2.msra.mxu0 0.0
    %1106 = vmatprep.subr.mxu0 0.0
    %1107 = vmatpush2.msra.mxu0 0.0
    %1108 = vmatprep.subr.mxu0 0.0
    %1109 = vmatpush2.msra.mxu0 0.0
    %1110 = vmatprep.subr.mxu0 0.0
    %1111 = vmatpush2.msra.mxu0 0.0
    %1112 = vmatprep.subr.mxu0 0.0
    %1113 = vmatpush2.msra.mxu0 0.0
    %1114 = vmatprep.subr.mxu0 0.0
    %1115 = vmatpush2.msra.mxu0 0.0
    %1116 = vmatprep.subr.mxu0 0.0
    %1117 = vmatpush2.msra.mxu0 0.0
    %1118 = vmatprep.subr.mxu0 0.0
    %1119 = vmatpush2.msra.mxu0 0.0
    %1120 = vmatprep.subr.mxu0 0.0
    %1121 = vmatpush2.msra.mxu0 0.0
    %1122 = vmatprep.subr.mxu0 0.0
    %1123 = vmatpush2.msra.mxu0 0.0
    %1124 = vmatprep.subr.mxu0 0.0
    %1125 = vmatpush2.msra.mxu0 0.0
    %1126 = vmatprep.subr.mxu0 0.0
    %1127 = vmatpush2.msra.mxu0 0.0
    %1128 = vmatprep.subr.mxu0 0.0
    %1129 = vmatpush2.msra.mxu0 0.0
    %1130 = vmatprep.mubr.f32.mxu0 0.0
    %v1131 = vand.u32 %v650, 4294901760
    %1132 = vmatmul.mubr.f32.gmra.mxu0 %v1131
    %v1133 = vpop.f32.mrf.mxu0
    %v1134 = vadd.f32 %v1059, %v1133
    %v1135 = vpop.f32.mrf.mxu0
    %1136 = vdwg.mxu0
    %v1137 = vadd.f32 %v649, %v1134
    %v1138 = vtanh.pop %v1137
    %v1139 = vmul.f32 %v1138, 0.5
    %v1140 = vadd.f32 %v1139, 0.5
    %v1141 = vsel %vm119, %v1138, %v1140
    %v1142 = vmul.f32 %v1141, %v636
    %1144 = vrot.lane.b32.xlu0 %v1141, 64
    %v1145 = vpop.permute.xlu0 %1144
    %v1147 = vmul.f32 %v1141, %v1145
    %1149 = vrot.lane.b32.xlu0 %v1147, 32
    %v1150 = vpop.permute.xlu0 %1149
    %v1152 = vadd.f32 %v1142, %v1150
    %v1153 = vtanh.pop %v1152
    %1155 = vrot.lane.b32.xlu0 %v1153, 64
    %v1156 = vpop.permute.xlu0 %1155
    %v1158 = vmul.f32 %v1141, %v1156
    %1160 = vrot.lane.b32.xlu0 %v1158, 32
    %v1161 = vpop.permute.xlu0 %1160
    %s1163 = scalar_lea.vmem [#allocation3], 1
    %1164 = vst.msk [vmem:[%s1163] sm:$0x1] %vm647, %v1161
    %v1165 = vld [vmem:[%s73] sm:$0x1]
    %v1166 = vsel %vm124, %v1161, 0
    %1168 = vmatprep.subr.mxu0 0.0
    %1169 = vmatpush1.msra.mxu0 0.0
    %1170 = vmatprep.subr.mxu0 0.0
    %1171 = vmatpush1.msra.mxu0 0.0
    %1172 = vmatprep.subr.mxu0 0.0
    %1173 = vmatpush1.msra.mxu0 0.0
    %1174 = vmatprep.subr.mxu0 0.0
    %1175 = vmatpush1.msra.mxu0 0.0
    %1176 = vmatprep.subr.mxu0 0.0
    %1177 = vmatpush1.msra.mxu0 0.0
    %1178 = vmatprep.subr.mxu0 0.0
    %1179 = vmatpush1.msra.mxu0 0.0
    %1180 = vmatprep.subr.mxu0 0.0
    %1181 = vmatpush1.msra.mxu0 0.0
    %1182 = vmatprep.subr.mxu0 0.0
    %1183 = vmatpush1.msra.mxu0 0.0
    %1184 = vmatprep.subr.mxu0 0.0
    %1185 = vmatpush1.msra.mxu0 0.0
    %1186 = vmatprep.subr.mxu0 0.0
    %1187 = vmatpush1.msra.mxu0 0.0
    %1188 = vmatprep.subr.mxu0 0.0
    %1189 = vmatpush1.msra.mxu0 0.0
    %1190 = vmatprep.subr.mxu0 0.0
    %1191 = vmatpush1.msra.mxu0 0.0
    %1192 = vmatprep.subr.mxu0 0.0
    %v1193 = vand.u32 %v103, 4294901760
    %1194 = vmatpush1.msra.mxu0 %v1193
    %1195 = vmatprep.subr.mxu0 0.0
    %v1196 = vand.u32 %v102, 4294901760
    %1197 = vmatpush1.msra.mxu0 %v1196
    %1198 = vmatprep.subr.mxu0 0.0
    %v1199 = vand.u32 %v101, 4294901760
    %1200 = vmatpush1.msra.mxu0 %v1199
    %1201 = vmatprep.subr.mxu0 0.0
    %v1202 = vand.u32 %v100, 4294901760
    %1203 = vmatpush1.msra.mxu0 %v1202
    %1204 = vmatprep.subr.mxu0 0.0
    %1205 = vmatpush2.msra.mxu0 0.0
    %1206 = vmatprep.subr.mxu0 0.0
    %1207 = vmatpush2.msra.mxu0 0.0
    %1208 = vmatprep.subr.mxu0 0.0
    %1209 = vmatpush2.msra.mxu0 0.0
    %1210 = vmatprep.subr.mxu0 0.0
    %1211 = vmatpush2.msra.mxu0 0.0
    %1212 = vmatprep.subr.mxu0 0.0
    %1213 = vmatpush2.msra.mxu0 0.0
    %1214 = vmatprep.subr.mxu0 0.0
    %1215 = vmatpush2.msra.mxu0 0.0
    %1216 = vmatprep.subr.mxu0 0.0
    %1217 = vmatpush2.msra.mxu0 0.0
    %1218 = vmatprep.subr.mxu0 0.0
    %1219 = vmatpush2.msra.mxu0 0.0
    %1220 = vmatprep.subr.mxu0 0.0
    %1221 = vmatpush2.msra.mxu0 0.0
    %1222 = vmatprep.subr.mxu0 0.0
    %1223 = vmatpush2.msra.mxu0 0.0
    %1224 = vmatprep.subr.mxu0 0.0
    %1225 = vmatpush2.msra.mxu0 0.0
    %1226 = vmatprep.subr.mxu0 0.0
    %1227 = vmatpush2.msra.mxu0 0.0
    %1228 = vmatprep.subr.mxu0 0.0
    %1229 = vmatpush2.msra.mxu0 0.0
    %1230 = vmatprep.subr.mxu0 0.0
    %1231 = vmatpush2.msra.mxu0 0.0
    %1232 = vmatprep.subr.mxu0 0.0
    %1233 = vmatpush2.msra.mxu0 0.0
    %1234 = vmatprep.subr.mxu0 0.0
    %1235 = vmatpush2.msra.mxu0 0.0
    %1236 = vmatprep.mubr.f32.mxu0 0.0
    %v1237 = vand.u32 %v1166, 4294901760
    %v1238 = vsub.f32 %v1166, %v1237
    %v1239 = vand.u32 %v1238, 4294901760
    %v1240 = vsub.f32 %v1238, %v1239
    %v1241 = vand.u32 %v1240, 4294901760
    %1242 = vmatmul.mubr.f32.gmra.mxu0 %v1241
    %v1243 = vpop.f32.mrf.mxu0
    %v1244 = vadd.f32 0.0, %v1243
    %v1245 = vpop.f32.mrf.mxu0
    %1246 = vdwg.mxu0
    %1247 = vmatprep.subr.mxu0 0.0
    %1248 = vmatpush1.msra.mxu0 0.0
    %1249 = vmatprep.subr.mxu0 0.0
    %1250 = vmatpush1.msra.mxu0 0.0
    %1251 = vmatprep.subr.mxu0 0.0
    %1252 = vmatpush1.msra.mxu0 0.0
    %1253 = vmatprep.subr.mxu0 0.0
    %1254 = vmatpush1.msra.mxu0 0.0
    %1255 = vmatprep.subr.mxu0 0.0
    %1256 = vmatpush1.msra.mxu0 0.0
    %1257 = vmatprep.subr.mxu0 0.0
    %1258 = vmatpush1.msra.mxu0 0.0
    %1259 = vmatprep.subr.mxu0 0.0
    %1260 = vmatpush1.msra.mxu0 0.0
    %1261 = vmatprep.subr.mxu0 0.0
    %1262 = vmatpush1.msra.mxu0 0.0
    %1263 = vmatprep.subr.mxu0 0.0
    %1264 = vmatpush1.msra.mxu0 0.0
    %1265 = vmatprep.subr.mxu0 0.0
    %1266 = vmatpush1.msra.mxu0 0.0
    %1267 = vmatprep.subr.mxu0 0.0
    %1268 = vmatpush1.msra.mxu0 0.0
    %1269 = vmatprep.subr.mxu0 0.0
    %1270 = vmatpush1.msra.mxu0 0.0
    %1271 = vmatprep.subr.mxu0 0.0
    %v1272 = vand.u32 %v103, 4294901760
    %v1273 = vsub.f32 %v103, %v1272
    %v1274 = vand.u32 %v1273, 4294901760
    %v1275 = vsub.f32 %v1273, %v1274
    %v1276 = vand.u32 %v1275, 4294901760
    %1277 = vmatpush1.msra.mxu0 %v1276
    %1278 = vmatprep.subr.mxu0 0.0
    %v1279 = vand.u32 %v102, 4294901760
    %v1280 = vsub.f32 %v102, %v1279
    %v1281 = vand.u32 %v1280, 4294901760
    %v1282 = vsub.f32 %v1280, %v1281
    %v1283 = vand.u32 %v1282, 4294901760
    %1284 = vmatpush1.msra.mxu0 %v1283
    %1285 = vmatprep.subr.mxu0 0.0
    %v1286 = vand.u32 %v101, 4294901760
    %v1287 = vsub.f32 %v101, %v1286
    %v1288 = vand.u32 %v1287, 4294901760
    %v1289 = vsub.f32 %v1287, %v1288
    %v1290 = vand.u32 %v1289, 4294901760
    %1291 = vmatpush1.msra.mxu0 %v1290
    %1292 = vmatprep.subr.mxu0 0.0
    %v1293 = vand.u32 %v100, 4294901760
    %v1294 = vsub.f32 %v100, %v1293
    %v1295 = vand.u32 %v1294, 4294901760
    %v1296 = vsub.f32 %v1294, %v1295
    %v1297 = vand.u32 %v1296, 4294901760
    %1298 = vmatpush1.msra.mxu0 %v1297
    %1299 = vmatprep.subr.mxu0 0.0
    %1300 = vmatpush2.msra.mxu0 0.0
    %1301 = vmatprep.subr.mxu0 0.0
    %1302 = vmatpush2.msra.mxu0 0.0
    %1303 = vmatprep.subr.mxu0 0.0
    %1304 = vmatpush2.msra.mxu0 0.0
    %1305 = vmatprep.subr.mxu0 0.0
    %1306 = vmatpush2.msra.mxu0 0.0
    %1307 = vmatprep.subr.mxu0 0.0
    %1308 = vmatpush2.msra.mxu0 0.0
    %1309 = vmatprep.subr.mxu0 0.0
    %1310 = vmatpush2.msra.mxu0 0.0
    %1311 = vmatprep.subr.mxu0 0.0
    %1312 = vmatpush2.msra.mxu0 0.0
    %1313 = vmatprep.subr.mxu0 0.0
    %1314 = vmatpush2.msra.mxu0 0.0
    %1315 = vmatprep.subr.mxu0 0.0
    %1316 = vmatpush2.msra.mxu0 0.0
    %1317 = vmatprep.subr.mxu0 0.0
    %1318 = vmatpush2.msra.mxu0 0.0
    %1319 = vmatprep.subr.mxu0 0.0
    %1320 = vmatpush2.msra.mxu0 0.0
    %1321 = vmatprep.subr.mxu0 0.0
    %1322 = vmatpush2.msra.mxu0 0.0
    %1323 = vmatprep.subr.mxu0 0.0
    %1324 = vmatpush2.msra.mxu0 0.0
    %1325 = vmatprep.subr.mxu0 0.0
    %1326 = vmatpush2.msra.mxu0 0.0
    %1327 = vmatprep.subr.mxu0 0.0
    %1328 = vmatpush2.msra.mxu0 0.0
    %1329 = vmatprep.subr.mxu0 0.0
    %1330 = vmatpush2.msra.mxu0 0.0
    %1331 = vmatprep.mubr.f32.mxu0 0.0
    %v1332 = vand.u32 %v1166, 4294901760
    %1333 = vmatmul.mubr.f32.gmra.mxu0 %v1332
    %v1334 = vpop.f32.mrf.mxu0
    %v1335 = vadd.f32 %v1244, %v1334
    %v1336 = vpop.f32.mrf.mxu0
    %1337 = vdwg.mxu0
    %1338 = vmatprep.subr.mxu0 0.0
    %1339 = vmatpush1.msra.mxu0 0.0
    %1340 = vmatprep.subr.mxu0 0.0
    %1341 = vmatpush1.msra.mxu0 0.0
    %1342 = vmatprep.subr.mxu0 0.0
    %1343 = vmatpush1.msra.mxu0 0.0
    %1344 = vmatprep.subr.mxu0 0.0
    %1345 = vmatpush1.msra.mxu0 0.0
    %1346 = vmatprep.subr.mxu0 0.0
    %1347 = vmatpush1.msra.mxu0 0.0
    %1348 = vmatprep.subr.mxu0 0.0
    %1349 = vmatpush1.msra.mxu0 0.0
    %1350 = vmatprep.subr.mxu0 0.0
    %1351 = vmatpush1.msra.mxu0 0.0
    %1352 = vmatprep.subr.mxu0 0.0
    %1353 = vmatpush1.msra.mxu0 0.0
    %1354 = vmatprep.subr.mxu0 0.0
    %1355 = vmatpush1.msra.mxu0 0.0
    %1356 = vmatprep.subr.mxu0 0.0
    %1357 = vmatpush1.msra.mxu0 0.0
    %1358 = vmatprep.subr.mxu0 0.0
    %1359 = vmatpush1.msra.mxu0 0.0
    %1360 = vmatprep.subr.mxu0 0.0
    %1361 = vmatpush1.msra.mxu0 0.0
    %1362 = vmatprep.subr.mxu0 0.0
    %v1363 = vand.u32 %v103, 4294901760
    %v1364 = vsub.f32 %v103, %v1363
    %1365 = vmatpush1.msra.mxu0 %v1364
    %1366 = vmatprep.subr.mxu0 0.0
    %v1367 = vand.u32 %v102, 4294901760
    %v1368 = vsub.f32 %v102, %v1367
    %1369 = vmatpush1.msra.mxu0 %v1368
    %1370 = vmatprep.subr.mxu0 0.0
    %v1371 = vand.u32 %v101, 4294901760
    %v1372 = vsub.f32 %v101, %v1371
    %1373 = vmatpush1.msra.mxu0 %v1372
    %1374 = vmatprep.subr.mxu0 0.0
    %v1375 = vand.u32 %v100, 4294901760
    %v1376 = vsub.f32 %v100, %v1375
    %1377 = vmatpush1.msra.mxu0 %v1376
    %1378 = vmatprep.subr.mxu0 0.0
    %1379 = vmatpush2.msra.mxu0 0.0
    %1380 = vmatprep.subr.mxu0 0.0
    %1381 = vmatpush2.msra.mxu0 0.0
    %1382 = vmatprep.subr.mxu0 0.0
    %1383 = vmatpush2.msra.mxu0 0.0
    %1384 = vmatprep.subr.mxu0 0.0
    %1385 = vmatpush2.msra.mxu0 0.0
    %1386 = vmatprep.subr.mxu0 0.0
    %1387 = vmatpush2.msra.mxu0 0.0
    %1388 = vmatprep.subr.mxu0 0.0
    %1389 = vmatpush2.msra.mxu0 0.0
    %1390 = vmatprep.subr.mxu0 0.0
    %1391 = vmatpush2.msra.mxu0 0.0
    %1392 = vmatprep.subr.mxu0 0.0
    %1393 = vmatpush2.msra.mxu0 0.0
    %1394 = vmatprep.subr.mxu0 0.0
    %1395 = vmatpush2.msra.mxu0 0.0
    %1396 = vmatprep.subr.mxu0 0.0
    %1397 = vmatpush2.msra.mxu0 0.0
    %1398 = vmatprep.subr.mxu0 0.0
    %1399 = vmatpush2.msra.mxu0 0.0
    %1400 = vmatprep.subr.mxu0 0.0
    %1401 = vmatpush2.msra.mxu0 0.0
    %1402 = vmatprep.subr.mxu0 0.0
    %1403 = vmatpush2.msra.mxu0 0.0
    %1404 = vmatprep.subr.mxu0 0.0
    %1405 = vmatpush2.msra.mxu0 0.0
    %1406 = vmatprep.subr.mxu0 0.0
    %1407 = vmatpush2.msra.mxu0 0.0
    %1408 = vmatprep.subr.mxu0 0.0
    %1409 = vmatpush2.msra.mxu0 0.0
    %1410 = vmatprep.mubr.f32.mxu0 0.0
    %v1411 = vand.u32 %v1166, 4294901760
    %v1412 = vsub.f32 %v1166, %v1411
    %1413 = vmatmul.mubr.f32.gmra.mxu0 %v1412
    %v1414 = vpop.f32.mrf.mxu0
    %v1415 = vadd.f32 %v1335, %v1414
    %v1416 = vpop.f32.mrf.mxu0
    %1417 = vdwg.mxu0
    %1418 = vmatprep.subr.mxu0 0.0
    %1419 = vmatpush1.msra.mxu0 0.0
    %1420 = vmatprep.subr.mxu0 0.0
    %1421 = vmatpush1.msra.mxu0 0.0
    %1422 = vmatprep.subr.mxu0 0.0
    %1423 = vmatpush1.msra.mxu0 0.0
    %1424 = vmatprep.subr.mxu0 0.0
    %1425 = vmatpush1.msra.mxu0 0.0
    %1426 = vmatprep.subr.mxu0 0.0
    %1427 = vmatpush1.msra.mxu0 0.0
    %1428 = vmatprep.subr.mxu0 0.0
    %1429 = vmatpush1.msra.mxu0 0.0
    %1430 = vmatprep.subr.mxu0 0.0
    %1431 = vmatpush1.msra.mxu0 0.0
    %1432 = vmatprep.subr.mxu0 0.0
    %1433 = vmatpush1.msra.mxu0 0.0
    %1434 = vmatprep.subr.mxu0 0.0
    %1435 = vmatpush1.msra.mxu0 0.0
    %1436 = vmatprep.subr.mxu0 0.0
    %1437 = vmatpush1.msra.mxu0 0.0
    %1438 = vmatprep.subr.mxu0 0.0
    %1439 = vmatpush1.msra.mxu0 0.0
    %1440 = vmatprep.subr.mxu0 0.0
    %1441 = vmatpush1.msra.mxu0 0.0
    %1442 = vmatprep.subr.mxu0 0.0
    %v1443 = vand.u32 %v103, 4294901760
    %1444 = vmatpush1.msra.mxu0 %v1443
    %1445 = vmatprep.subr.mxu0 0.0
    %v1446 = vand.u32 %v102, 4294901760
    %1447 = vmatpush1.msra.mxu0 %v1446
    %1448 = vmatprep.subr.mxu0 0.0
    %v1449 = vand.u32 %v101, 4294901760
    %1450 = vmatpush1.msra.mxu0 %v1449
    %1451 = vmatprep.subr.mxu0 0.0
    %v1452 = vand.u32 %v100, 4294901760
    %1453 = vmatpush1.msra.mxu0 %v1452
    %1454 = vmatprep.subr.mxu0 0.0
    %1455 = vmatpush2.msra.mxu0 0.0
    %1456 = vmatprep.subr.mxu0 0.0
    %1457 = vmatpush2.msra.mxu0 0.0
    %1458 = vmatprep.subr.mxu0 0.0
    %1459 = vmatpush2.msra.mxu0 0.0
    %1460 = vmatprep.subr.mxu0 0.0
    %1461 = vmatpush2.msra.mxu0 0.0
    %1462 = vmatprep.subr.mxu0 0.0
    %1463 = vmatpush2.msra.mxu0 0.0
    %1464 = vmatprep.subr.mxu0 0.0
    %1465 = vmatpush2.msra.mxu0 0.0
    %1466 = vmatprep.subr.mxu0 0.0
    %1467 = vmatpush2.msra.mxu0 0.0
    %1468 = vmatprep.subr.mxu0 0.0
    %1469 = vmatpush2.msra.mxu0 0.0
    %1470 = vmatprep.subr.mxu0 0.0
    %1471 = vmatpush2.msra.mxu0 0.0
    %1472 = vmatprep.subr.mxu0 0.0
    %1473 = vmatpush2.msra.mxu0 0.0
    %1474 = vmatprep.subr.mxu0 0.0
    %1475 = vmatpush2.msra.mxu0 0.0
    %1476 = vmatprep.subr.mxu0 0.0
    %1477 = vmatpush2.msra.mxu0 0.0
    %1478 = vmatprep.subr.mxu0 0.0
    %1479 = vmatpush2.msra.mxu0 0.0
    %1480 = vmatprep.subr.mxu0 0.0
    %1481 = vmatpush2.msra.mxu0 0.0
    %1482 = vmatprep.subr.mxu0 0.0
    %1483 = vmatpush2.msra.mxu0 0.0
    %1484 = vmatprep.subr.mxu0 0.0
    %1485 = vmatpush2.msra.mxu0 0.0
    %1486 = vmatprep.mubr.f32.mxu0 0.0
    %v1487 = vand.u32 %v1166, 4294901760
    %v1488 = vsub.f32 %v1166, %v1487
    %v1489 = vand.u32 %v1488, 4294901760
    %1490 = vmatmul.mubr.f32.gmra.mxu0 %v1489
    %v1491 = vpop.f32.mrf.mxu0
    %v1492 = vadd.f32 %v1415, %v1491
    %v1493 = vpop.f32.mrf.mxu0
    %1494 = vdwg.mxu0
    %1495 = vmatprep.subr.mxu0 0.0
    %1496 = vmatpush1.msra.mxu0 0.0
    %1497 = vmatprep.subr.mxu0 0.0
    %1498 = vmatpush1.msra.mxu0 0.0
    %1499 = vmatprep.subr.mxu0 0.0
    %1500 = vmatpush1.msra.mxu0 0.0
    %1501 = vmatprep.subr.mxu0 0.0
    %1502 = vmatpush1.msra.mxu0 0.0
    %1503 = vmatprep.subr.mxu0 0.0
    %1504 = vmatpush1.msra.mxu0 0.0
    %1505 = vmatprep.subr.mxu0 0.0
    %1506 = vmatpush1.msra.mxu0 0.0
    %1507 = vmatprep.subr.mxu0 0.0
    %1508 = vmatpush1.msra.mxu0 0.0
    %1509 = vmatprep.subr.mxu0 0.0
    %1510 = vmatpush1.msra.mxu0 0.0
    %1511 = vmatprep.subr.mxu0 0.0
    %1512 = vmatpush1.msra.mxu0 0.0
    %1513 = vmatprep.subr.mxu0 0.0
    %1514 = vmatpush1.msra.mxu0 0.0
    %1515 = vmatprep.subr.mxu0 0.0
    %1516 = vmatpush1.msra.mxu0 0.0
    %1517 = vmatprep.subr.mxu0 0.0
    %1518 = vmatpush1.msra.mxu0 0.0
    %1519 = vmatprep.subr.mxu0 0.0
    %v1520 = vand.u32 %v103, 4294901760
    %v1521 = vsub.f32 %v103, %v1520
    %v1522 = vand.u32 %v1521, 4294901760
    %1523 = vmatpush1.msra.mxu0 %v1522
    %1524 = vmatprep.subr.mxu0 0.0
    %v1525 = vand.u32 %v102, 4294901760
    %v1526 = vsub.f32 %v102, %v1525
    %v1527 = vand.u32 %v1526, 4294901760
    %1528 = vmatpush1.msra.mxu0 %v1527
    %1529 = vmatprep.subr.mxu0 0.0
    %v1530 = vand.u32 %v101, 4294901760
    %v1531 = vsub.f32 %v101, %v1530
    %v1532 = vand.u32 %v1531, 4294901760
    %1533 = vmatpush1.msra.mxu0 %v1532
    %1534 = vmatprep.subr.mxu0 0.0
    %v1535 = vand.u32 %v100, 4294901760
    %v1536 = vsub.f32 %v100, %v1535
    %v1537 = vand.u32 %v1536, 4294901760
    %1538 = vmatpush1.msra.mxu0 %v1537
    %1539 = vmatprep.subr.mxu0 0.0
    %1540 = vmatpush2.msra.mxu0 0.0
    %1541 = vmatprep.subr.mxu0 0.0
    %1542 = vmatpush2.msra.mxu0 0.0
    %1543 = vmatprep.subr.mxu0 0.0
    %1544 = vmatpush2.msra.mxu0 0.0
    %1545 = vmatprep.subr.mxu0 0.0
    %1546 = vmatpush2.msra.mxu0 0.0
    %1547 = vmatprep.subr.mxu0 0.0
    %1548 = vmatpush2.msra.mxu0 0.0
    %1549 = vmatprep.subr.mxu0 0.0
    %1550 = vmatpush2.msra.mxu0 0.0
    %1551 = vmatprep.subr.mxu0 0.0
    %1552 = vmatpush2.msra.mxu0 0.0
    %1553 = vmatprep.subr.mxu0 0.0
    %1554 = vmatpush2.msra.mxu0 0.0
    %1555 = vmatprep.subr.mxu0 0.0
    %1556 = vmatpush2.msra.mxu0 0.0
    %1557 = vmatprep.subr.mxu0 0.0
    %1558 = vmatpush2.msra.mxu0 0.0
    %1559 = vmatprep.subr.mxu0 0.0
    %1560 = vmatpush2.msra.mxu0 0.0
    %1561 = vmatprep.subr.mxu0 0.0
    %1562 = vmatpush2.msra.mxu0 0.0
    %1563 = vmatprep.subr.mxu0 0.0
    %1564 = vmatpush2.msra.mxu0 0.0
    %1565 = vmatprep.subr.mxu0 0.0
    %1566 = vmatpush2.msra.mxu0 0.0
    %1567 = vmatprep.subr.mxu0 0.0
    %1568 = vmatpush2.msra.mxu0 0.0
    %1569 = vmatprep.subr.mxu0 0.0
    %1570 = vmatpush2.msra.mxu0 0.0
    %1571 = vmatprep.mubr.f32.mxu0 0.0
    %v1572 = vand.u32 %v1166, 4294901760
    %1573 = vmatmul.mubr.f32.gmra.mxu0 %v1572
    %v1574 = vpop.f32.mrf.mxu0
    %v1575 = vadd.f32 %v1492, %v1574
    %v1576 = vpop.f32.mrf.mxu0
    %1577 = vdwg.mxu0
    %1578 = vmatprep.subr.mxu0 0.0
    %1579 = vmatpush1.msra.mxu0 0.0
    %1580 = vmatprep.subr.mxu0 0.0
    %1581 = vmatpush1.msra.mxu0 0.0
    %1582 = vmatprep.subr.mxu0 0.0
    %1583 = vmatpush1.msra.mxu0 0.0
    %1584 = vmatprep.subr.mxu0 0.0
    %1585 = vmatpush1.msra.mxu0 0.0
    %1586 = vmatprep.subr.mxu0 0.0
    %1587 = vmatpush1.msra.mxu0 0.0
    %1588 = vmatprep.subr.mxu0 0.0
    %1589 = vmatpush1.msra.mxu0 0.0
    %1590 = vmatprep.subr.mxu0 0.0
    %1591 = vmatpush1.msra.mxu0 0.0
    %1592 = vmatprep.subr.mxu0 0.0
    %1593 = vmatpush1.msra.mxu0 0.0
    %1594 = vmatprep.subr.mxu0 0.0
    %1595 = vmatpush1.msra.mxu0 0.0
    %1596 = vmatprep.subr.mxu0 0.0
    %1597 = vmatpush1.msra.mxu0 0.0
    %1598 = vmatprep.subr.mxu0 0.0
    %1599 = vmatpush1.msra.mxu0 0.0
    %1600 = vmatprep.subr.mxu0 0.0
    %1601 = vmatpush1.msra.mxu0 0.0
    %1602 = vmatprep.subr.mxu0 0.0
    %v1603 = vand.u32 %v103, 4294901760
    %1604 = vmatpush1.msra.mxu0 %v1603
    %1605 = vmatprep.subr.mxu0 0.0
    %v1606 = vand.u32 %v102, 4294901760
    %1607 = vmatpush1.msra.mxu0 %v1606
    %1608 = vmatprep.subr.mxu0 0.0
    %v1609 = vand.u32 %v101, 4294901760
    %1610 = vmatpush1.msra.mxu0 %v1609
    %1611 = vmatprep.subr.mxu0 0.0
    %v1612 = vand.u32 %v100, 4294901760
    %1613 = vmatpush1.msra.mxu0 %v1612
    %1614 = vmatprep.subr.mxu0 0.0
    %1615 = vmatpush2.msra.mxu0 0.0
    %1616 = vmatprep.subr.mxu0 0.0
    %1617 = vmatpush2.msra.mxu0 0.0
    %1618 = vmatprep.subr.mxu0 0.0
    %1619 = vmatpush2.msra.mxu0 0.0
    %1620 = vmatprep.subr.mxu0 0.0
    %1621 = vmatpush2.msra.mxu0 0.0
    %1622 = vmatprep.subr.mxu0 0.0
    %1623 = vmatpush2.msra.mxu0 0.0
    %1624 = vmatprep.subr.mxu0 0.0
    %1625 = vmatpush2.msra.mxu0 0.0
    %1626 = vmatprep.subr.mxu0 0.0
    %1627 = vmatpush2.msra.mxu0 0.0
    %1628 = vmatprep.subr.mxu0 0.0
    %1629 = vmatpush2.msra.mxu0 0.0
    %1630 = vmatprep.subr.mxu0 0.0
    %1631 = vmatpush2.msra.mxu0 0.0
    %1632 = vmatprep.subr.mxu0 0.0
    %1633 = vmatpush2.msra.mxu0 0.0
    %1634 = vmatprep.subr.mxu0 0.0
    %1635 = vmatpush2.msra.mxu0 0.0
    %1636 = vmatprep.subr.mxu0 0.0
    %1637 = vmatpush2.msra.mxu0 0.0
    %1638 = vmatprep.subr.mxu0 0.0
    %1639 = vmatpush2.msra.mxu0 0.0
    %1640 = vmatprep.subr.mxu0 0.0
    %1641 = vmatpush2.msra.mxu0 0.0
    %1642 = vmatprep.subr.mxu0 0.0
    %1643 = vmatpush2.msra.mxu0 0.0
    %1644 = vmatprep.subr.mxu0 0.0
    %1645 = vmatpush2.msra.mxu0 0.0
    %1646 = vmatprep.mubr.f32.mxu0 0.0
    %v1647 = vand.u32 %v1166, 4294901760
    %1648 = vmatmul.mubr.f32.gmra.mxu0 %v1647
    %v1649 = vpop.f32.mrf.mxu0
    %v1650 = vadd.f32 %v1575, %v1649
    %v1651 = vpop.f32.mrf.mxu0
    %1652 = vdwg.mxu0
    %v1653 = vadd.f32 %v1165, %v1650
    %v1654 = vtanh.pop %v1653
    %v1655 = vmul.f32 %v1654, 0.5
    %v1656 = vadd.f32 %v1655, 0.5
    %v1657 = vsel %vm119, %v1654, %v1656
    %v1658 = vmul.f32 %v1657, %v1152
    %1660 = vrot.lane.b32.xlu0 %v1657, 64
    %v1661 = vpop.permute.xlu0 %1660
    %v1663 = vmul.f32 %v1657, %v1661
    %1665 = vrot.lane.b32.xlu0 %v1663, 32
    %v1666 = vpop.permute.xlu0 %1665
    %v1668 = vadd.f32 %v1658, %v1666
    %v1669 = vtanh.pop %v1668
    %1671 = vrot.lane.b32.xlu0 %v1669, 64
    %v1672 = vpop.permute.xlu0 %1671
    %v1674 = vmul.f32 %v1657, %v1672
    %1676 = vrot.lane.b32.xlu0 %v1674, 32
    %v1677 = vpop.permute.xlu0 %1676
    %s1679 = scalar_lea.vmem [#allocation3], 2
    %1680 = vst.msk [vmem:[%s1679] sm:$0x1] %vm647, %v1677
    %v1681 = vld [vmem:[%s78] sm:$0x1]
    %v1682 = vsel %vm124, %v1677, 0
    %1684 = vmatprep.subr.mxu0 0.0
    %1685 = vmatpush1.msra.mxu0 0.0
    %1686 = vmatprep.subr.mxu0 0.0
    %1687 = vmatpush1.msra.mxu0 0.0
    %1688 = vmatprep.subr.mxu0 0.0
    %1689 = vmatpush1.msra.mxu0 0.0
    %1690 = vmatprep.subr.mxu0 0.0
    %1691 = vmatpush1.msra.mxu0 0.0
    %1692 = vmatprep.subr.mxu0 0.0
    %1693 = vmatpush1.msra.mxu0 0.0
    %1694 = vmatprep.subr.mxu0 0.0
    %1695 = vmatpush1.msra.mxu0 0.0
    %1696 = vmatprep.subr.mxu0 0.0
    %1697 = vmatpush1.msra.mxu0 0.0
    %1698 = vmatprep.subr.mxu0 0.0
    %1699 = vmatpush1.msra.mxu0 0.0
    %1700 = vmatprep.subr.mxu0 0.0
    %1701 = vmatpush1.msra.mxu0 0.0
    %1702 = vmatprep.subr.mxu0 0.0
    %1703 = vmatpush1.msra.mxu0 0.0
    %1704 = vmatprep.subr.mxu0 0.0
    %1705 = vmatpush1.msra.mxu0 0.0
    %1706 = vmatprep.subr.mxu0 0.0
    %1707 = vmatpush1.msra.mxu0 0.0
    %1708 = vmatprep.subr.mxu0 0.0
    %v1709 = vand.u32 %v103, 4294901760
    %1710 = vmatpush1.msra.mxu0 %v1709
    %1711 = vmatprep.subr.mxu0 0.0
    %v1712 = vand.u32 %v102, 4294901760
    %1713 = vmatpush1.msra.mxu0 %v1712
    %1714 = vmatprep.subr.mxu0 0.0
    %v1715 = vand.u32 %v101, 4294901760
    %1716 = vmatpush1.msra.mxu0 %v1715
    %1717 = vmatprep.subr.mxu0 0.0
    %v1718 = vand.u32 %v100, 4294901760
    %1719 = vmatpush1.msra.mxu0 %v1718
    %1720 = vmatprep.subr.mxu0 0.0
    %1721 = vmatpush2.msra.mxu0 0.0
    %1722 = vmatprep.subr.mxu0 0.0
    %1723 = vmatpush2.msra.mxu0 0.0
    %1724 = vmatprep.subr.mxu0 0.0
    %1725 = vmatpush2.msra.mxu0 0.0
    %1726 = vmatprep.subr.mxu0 0.0
    %1727 = vmatpush2.msra.mxu0 0.0
    %1728 = vmatprep.subr.mxu0 0.0
    %1729 = vmatpush2.msra.mxu0 0.0
    %1730 = vmatprep.subr.mxu0 0.0
    %1731 = vmatpush2.msra.mxu0 0.0
    %1732 = vmatprep.subr.mxu0 0.0
    %1733 = vmatpush2.msra.mxu0 0.0
    %1734 = vmatprep.subr.mxu0 0.0
    %1735 = vmatpush2.msra.mxu0 0.0
    %1736 = vmatprep.subr.mxu0 0.0
    %1737 = vmatpush2.msra.mxu0 0.0
    %1738 = vmatprep.subr.mxu0 0.0
    %1739 = vmatpush2.msra.mxu0 0.0
    %1740 = vmatprep.subr.mxu0 0.0
    %1741 = vmatpush2.msra.mxu0 0.0
    %1742 = vmatprep.subr.mxu0 0.0
    %1743 = vmatpush2.msra.mxu0 0.0
    %1744 = vmatprep.subr.mxu0 0.0
    %1745 = vmatpush2.msra.mxu0 0.0
    %1746 = vmatprep.subr.mxu0 0.0
    %1747 = vmatpush2.msra.mxu0 0.0
    %1748 = vmatprep.subr.mxu0 0.0
    %1749 = vmatpush2.msra.mxu0 0.0
    %1750 = vmatprep.subr.mxu0 0.0
    %1751 = vmatpush2.msra.mxu0 0.0
    %1752 = vmatprep.mubr.f32.mxu0 0.0
    %v1753 = vand.u32 %v1682, 4294901760
    %v1754 = vsub.f32 %v1682, %v1753
    %v1755 = vand.u32 %v1754, 4294901760
    %v1756 = vsub.f32 %v1754, %v1755
    %v1757 = vand.u32 %v1756, 4294901760
    %1758 = vmatmul.mubr.f32.gmra.mxu0 %v1757
    %v1759 = vpop.f32.mrf.mxu0
    %v1760 = vadd.f32 0.0, %v1759
    %v1761 = vpop.f32.mrf.mxu0
    %1762 = vdwg.mxu0
    %1763 = vmatprep.subr.mxu0 0.0
    %1764 = vmatpush1.msra.mxu0 0.0
    %1765 = vmatprep.subr.mxu0 0.0
    %1766 = vmatpush1.msra.mxu0 0.0
    %1767 = vmatprep.subr.mxu0 0.0
    %1768 = vmatpush1.msra.mxu0 0.0
    %1769 = vmatprep.subr.mxu0 0.0
    %1770 = vmatpush1.msra.mxu0 0.0
    %1771 = vmatprep.subr.mxu0 0.0
    %1772 = vmatpush1.msra.mxu0 0.0
    %1773 = vmatprep.subr.mxu0 0.0
    %1774 = vmatpush1.msra.mxu0 0.0
    %1775 = vmatprep.subr.mxu0 0.0
    %1776 = vmatpush1.msra.mxu0 0.0
    %1777 = vmatprep.subr.mxu0 0.0
    %1778 = vmatpush1.msra.mxu0 0.0
    %1779 = vmatprep.subr.mxu0 0.0
    %1780 = vmatpush1.msra.mxu0 0.0
    %1781 = vmatprep.subr.mxu0 0.0
    %1782 = vmatpush1.msra.mxu0 0.0
    %1783 = vmatprep.subr.mxu0 0.0
    %1784 = vmatpush1.msra.mxu0 0.0
    %1785 = vmatprep.subr.mxu0 0.0
    %1786 = vmatpush1.msra.mxu0 0.0
    %1787 = vmatprep.subr.mxu0 0.0
    %v1788 = vand.u32 %v103, 4294901760
    %v1789 = vsub.f32 %v103, %v1788
    %v1790 = vand.u32 %v1789, 4294901760
    %v1791 = vsub.f32 %v1789, %v1790
    %v1792 = vand.u32 %v1791, 4294901760
    %1793 = vmatpush1.msra.mxu0 %v1792
    %1794 = vmatprep.subr.mxu0 0.0
    %v1795 = vand.u32 %v102, 4294901760
    %v1796 = vsub.f32 %v102, %v1795
    %v1797 = vand.u32 %v1796, 4294901760
    %v1798 = vsub.f32 %v1796, %v1797
    %v1799 = vand.u32 %v1798, 4294901760
    %1800 = vmatpush1.msra.mxu0 %v1799
    %1801 = vmatprep.subr.mxu0 0.0
    %v1802 = vand.u32 %v101, 4294901760
    %v1803 = vsub.f32 %v101, %v1802
    %v1804 = vand.u32 %v1803, 4294901760
    %v1805 = vsub.f32 %v1803, %v1804
    %v1806 = vand.u32 %v1805, 4294901760
    %1807 = vmatpush1.msra.mxu0 %v1806
    %1808 = vmatprep.subr.mxu0 0.0
    %v1809 = vand.u32 %v100, 4294901760
    %v1810 = vsub.f32 %v100, %v1809
    %v1811 = vand.u32 %v1810, 4294901760
    %v1812 = vsub.f32 %v1810, %v1811
    %v1813 = vand.u32 %v1812, 4294901760
    %1814 = vmatpush1.msra.mxu0 %v1813
    %1815 = vmatprep.subr.mxu0 0.0
    %1816 = vmatpush2.msra.mxu0 0.0
    %1817 = vmatprep.subr.mxu0 0.0
    %1818 = vmatpush2.msra.mxu0 0.0
    %1819 = vmatprep.subr.mxu0 0.0
    %1820 = vmatpush2.msra.mxu0 0.0
    %1821 = vmatprep.subr.mxu0 0.0
    %1822 = vmatpush2.msra.mxu0 0.0
    %1823 = vmatprep.subr.mxu0 0.0
    %1824 = vmatpush2.msra.mxu0 0.0
    %1825 = vmatprep.subr.mxu0 0.0
    %1826 = vmatpush2.msra.mxu0 0.0
    %1827 = vmatprep.subr.mxu0 0.0
    %1828 = vmatpush2.msra.mxu0 0.0
    %1829 = vmatprep.subr.mxu0 0.0
    %1830 = vmatpush2.msra.mxu0 0.0
    %1831 = vmatprep.subr.mxu0 0.0
    %1832 = vmatpush2.msra.mxu0 0.0
    %1833 = vmatprep.subr.mxu0 0.0
    %1834 = vmatpush2.msra.mxu0 0.0
    %1835 = vmatprep.subr.mxu0 0.0
    %1836 = vmatpush2.msra.mxu0 0.0
    %1837 = vmatprep.subr.mxu0 0.0
    %1838 = vmatpush2.msra.mxu0 0.0
    %1839 = vmatprep.subr.mxu0 0.0
    %1840 = vmatpush2.msra.mxu0 0.0
    %1841 = vmatprep.subr.mxu0 0.0
    %1842 = vmatpush2.msra.mxu0 0.0
    %1843 = vmatprep.subr.mxu0 0.0
    %1844 = vmatpush2.msra.mxu0 0.0
    %1845 = vmatprep.subr.mxu0 0.0
    %1846 = vmatpush2.msra.mxu0 0.0
    %1847 = vmatprep.mubr.f32.mxu0 0.0
    %v1848 = vand.u32 %v1682, 4294901760
    %1849 = vmatmul.mubr.f32.gmra.mxu0 %v1848
    %v1850 = vpop.f32.mrf.mxu0
    %v1851 = vadd.f32 %v1760, %v1850
    %v1852 = vpop.f32.mrf.mxu0
    %1853 = vdwg.mxu0
    %1854 = vmatprep.subr.mxu0 0.0
    %1855 = vmatpush1.msra.mxu0 0.0
    %1856 = vmatprep.subr.mxu0 0.0
    %1857 = vmatpush1.msra.mxu0 0.0
    %1858 = vmatprep.subr.mxu0 0.0
    %1859 = vmatpush1.msra.mxu0 0.0
    %1860 = vmatprep.subr.mxu0 0.0
    %1861 = vmatpush1.msra.mxu0 0.0
    %1862 = vmatprep.subr.mxu0 0.0
    %1863 = vmatpush1.msra.mxu0 0.0
    %1864 = vmatprep.subr.mxu0 0.0
    %1865 = vmatpush1.msra.mxu0 0.0
    %1866 = vmatprep.subr.mxu0 0.0
    %1867 = vmatpush1.msra.mxu0 0.0
    %1868 = vmatprep.subr.mxu0 0.0
    %1869 = vmatpush1.msra.mxu0 0.0
    %1870 = vmatprep.subr.mxu0 0.0
    %1871 = vmatpush1.msra.mxu0 0.0
    %1872 = vmatprep.subr.mxu0 0.0
    %1873 = vmatpush1.msra.mxu0 0.0
    %1874 = vmatprep.subr.mxu0 0.0
    %1875 = vmatpush1.msra.mxu0 0.0
    %1876 = vmatprep.subr.mxu0 0.0
    %1877 = vmatpush1.msra.mxu0 0.0
    %1878 = vmatprep.subr.mxu0 0.0
    %v1879 = vand.u32 %v103, 4294901760
    %v1880 = vsub.f32 %v103, %v1879
    %1881 = vmatpush1.msra.mxu0 %v1880
    %1882 = vmatprep.subr.mxu0 0.0
    %v1883 = vand.u32 %v102, 4294901760
    %v1884 = vsub.f32 %v102, %v1883
    %1885 = vmatpush1.msra.mxu0 %v1884
    %1886 = vmatprep.subr.mxu0 0.0
    %v1887 = vand.u32 %v101, 4294901760
    %v1888 = vsub.f32 %v101, %v1887
    %1889 = vmatpush1.msra.mxu0 %v1888
    %1890 = vmatprep.subr.mxu0 0.0
    %v1891 = vand.u32 %v100, 4294901760
    %v1892 = vsub.f32 %v100, %v1891
    %1893 = vmatpush1.msra.mxu0 %v1892
    %1894 = vmatprep.subr.mxu0 0.0
    %1895 = vmatpush2.msra.mxu0 0.0
    %1896 = vmatprep.subr.mxu0 0.0
    %1897 = vmatpush2.msra.mxu0 0.0
    %1898 = vmatprep.subr.mxu0 0.0
    %1899 = vmatpush2.msra.mxu0 0.0
    %1900 = vmatprep.subr.mxu0 0.0
    %1901 = vmatpush2.msra.mxu0 0.0
    %1902 = vmatprep.subr.mxu0 0.0
    %1903 = vmatpush2.msra.mxu0 0.0
    %1904 = vmatprep.subr.mxu0 0.0
    %1905 = vmatpush2.msra.mxu0 0.0
    %1906 = vmatprep.subr.mxu0 0.0
    %1907 = vmatpush2.msra.mxu0 0.0
    %1908 = vmatprep.subr.mxu0 0.0
    %1909 = vmatpush2.msra.mxu0 0.0
    %1910 = vmatprep.subr.mxu0 0.0
    %1911 = vmatpush2.msra.mxu0 0.0
    %1912 = vmatprep.subr.mxu0 0.0
    %1913 = vmatpush2.msra.mxu0 0.0
    %1914 = vmatprep.subr.mxu0 0.0
    %1915 = vmatpush2.msra.mxu0 0.0
    %1916 = vmatprep.subr.mxu0 0.0
    %1917 = vmatpush2.msra.mxu0 0.0
    %1918 = vmatprep.subr.mxu0 0.0
    %1919 = vmatpush2.msra.mxu0 0.0
    %1920 = vmatprep.subr.mxu0 0.0
    %1921 = vmatpush2.msra.mxu0 0.0
    %1922 = vmatprep.subr.mxu0 0.0
    %1923 = vmatpush2.msra.mxu0 0.0
    %1924 = vmatprep.subr.mxu0 0.0
    %1925 = vmatpush2.msra.mxu0 0.0
    %1926 = vmatprep.mubr.f32.mxu0 0.0
    %v1927 = vand.u32 %v1682, 4294901760
    %v1928 = vsub.f32 %v1682, %v1927
    %1929 = vmatmul.mubr.f32.gmra.mxu0 %v1928
    %v1930 = vpop.f32.mrf.mxu0
    %v1931 = vadd.f32 %v1851, %v1930
    %v1932 = vpop.f32.mrf.mxu0
    %1933 = vdwg.mxu0
    %1934 = vmatprep.subr.mxu0 0.0
    %1935 = vmatpush1.msra.mxu0 0.0
    %1936 = vmatprep.subr.mxu0 0.0
    %1937 = vmatpush1.msra.mxu0 0.0
    %1938 = vmatprep.subr.mxu0 0.0
    %1939 = vmatpush1.msra.mxu0 0.0
    %1940 = vmatprep.subr.mxu0 0.0
    %1941 = vmatpush1.msra.mxu0 0.0
    %1942 = vmatprep.subr.mxu0 0.0
    %1943 = vmatpush1.msra.mxu0 0.0
    %1944 = vmatprep.subr.mxu0 0.0
    %1945 = vmatpush1.msra.mxu0 0.0
    %1946 = vmatprep.subr.mxu0 0.0
    %1947 = vmatpush1.msra.mxu0 0.0
    %1948 = vmatprep.subr.mxu0 0.0
    %1949 = vmatpush1.msra.mxu0 0.0
    %1950 = vmatprep.subr.mxu0 0.0
    %1951 = vmatpush1.msra.mxu0 0.0
    %1952 = vmatprep.subr.mxu0 0.0
    %1953 = vmatpush1.msra.mxu0 0.0
    %1954 = vmatprep.subr.mxu0 0.0
    %1955 = vmatpush1.msra.mxu0 0.0
    %1956 = vmatprep.subr.mxu0 0.0
    %1957 = vmatpush1.msra.mxu0 0.0
    %1958 = vmatprep.subr.mxu0 0.0
    %v1959 = vand.u32 %v103, 4294901760
    %1960 = vmatpush1.msra.mxu0 %v1959
    %1961 = vmatprep.subr.mxu0 0.0
    %v1962 = vand.u32 %v102, 4294901760
    %1963 = vmatpush1.msra.mxu0 %v1962
    %1964 = vmatprep.subr.mxu0 0.0
    %v1965 = vand.u32 %v101, 4294901760
    %1966 = vmatpush1.msra.mxu0 %v1965
    %1967 = vmatprep.subr.mxu0 0.0
    %v1968 = vand.u32 %v100, 4294901760
    %1969 = vmatpush1.msra.mxu0 %v1968
    %1970 = vmatprep.subr.mxu0 0.0
    %1971 = vmatpush2.msra.mxu0 0.0
    %1972 = vmatprep.subr.mxu0 0.0
    %1973 = vmatpush2.msra.mxu0 0.0
    %1974 = vmatprep.subr.mxu0 0.0
    %1975 = vmatpush2.msra.mxu0 0.0
    %1976 = vmatprep.subr.mxu0 0.0
    %1977 = vmatpush2.msra.mxu0 0.0
    %1978 = vmatprep.subr.mxu0 0.0
    %1979 = vmatpush2.msra.mxu0 0.0
    %1980 = vmatprep.subr.mxu0 0.0
    %1981 = vmatpush2.msra.mxu0 0.0
    %1982 = vmatprep.subr.mxu0 0.0
    %1983 = vmatpush2.msra.mxu0 0.0
    %1984 = vmatprep.subr.mxu0 0.0
    %1985 = vmatpush2.msra.mxu0 0.0
    %1986 = vmatprep.subr.mxu0 0.0
    %1987 = vmatpush2.msra.mxu0 0.0
    %1988 = vmatprep.subr.mxu0 0.0
    %1989 = vmatpush2.msra.mxu0 0.0
    %1990 = vmatprep.subr.mxu0 0.0
    %1991 = vmatpush2.msra.mxu0 0.0
    %1992 = vmatprep.subr.mxu0 0.0
    %1993 = vmatpush2.msra.mxu0 0.0
    %1994 = vmatprep.subr.mxu0 0.0
    %1995 = vmatpush2.msra.mxu0 0.0
    %1996 = vmatprep.subr.mxu0 0.0
    %1997 = vmatpush2.msra.mxu0 0.0
    %1998 = vmatprep.subr.mxu0 0.0
    %1999 = vmatpush2.msra.mxu0 0.0
    %2000 = vmatprep.subr.mxu0 0.0
    %2001 = vmatpush2.msra.mxu0 0.0
    %2002 = vmatprep.mubr.f32.mxu0 0.0
    %v2003 = vand.u32 %v1682, 4294901760
    %v2004 = vsub.f32 %v1682, %v2003
    %v2005 = vand.u32 %v2004, 4294901760
    %2006 = vmatmul.mubr.f32.gmra.mxu0 %v2005
    %v2007 = vpop.f32.mrf.mxu0
    %v2008 = vadd.f32 %v1931, %v2007
    %v2009 = vpop.f32.mrf.mxu0
    %2010 = vdwg.mxu0
    %2011 = vmatprep.subr.mxu0 0.0
    %2012 = vmatpush1.msra.mxu0 0.0
    %2013 = vmatprep.subr.mxu0 0.0
    %2014 = vmatpush1.msra.mxu0 0.0
    %2015 = vmatprep.subr.mxu0 0.0
    %2016 = vmatpush1.msra.mxu0 0.0
    %2017 = vmatprep.subr.mxu0 0.0
    %2018 = vmatpush1.msra.mxu0 0.0
    %2019 = vmatprep.subr.mxu0 0.0
    %2020 = vmatpush1.msra.mxu0 0.0
    %2021 = vmatprep.subr.mxu0 0.0
    %2022 = vmatpush1.msra.mxu0 0.0
    %2023 = vmatprep.subr.mxu0 0.0
    %2024 = vmatpush1.msra.mxu0 0.0
    %2025 = vmatprep.subr.mxu0 0.0
    %2026 = vmatpush1.msra.mxu0 0.0
    %2027 = vmatprep.subr.mxu0 0.0
    %2028 = vmatpush1.msra.mxu0 0.0
    %2029 = vmatprep.subr.mxu0 0.0
    %2030 = vmatpush1.msra.mxu0 0.0
    %2031 = vmatprep.subr.mxu0 0.0
    %2032 = vmatpush1.msra.mxu0 0.0
    %2033 = vmatprep.subr.mxu0 0.0
    %2034 = vmatpush1.msra.mxu0 0.0
    %2035 = vmatprep.subr.mxu0 0.0
    %v2036 = vand.u32 %v103, 4294901760
    %v2037 = vsub.f32 %v103, %v2036
    %v2038 = vand.u32 %v2037, 4294901760
    %2039 = vmatpush1.msra.mxu0 %v2038
    %2040 = vmatprep.subr.mxu0 0.0
    %v2041 = vand.u32 %v102, 4294901760
    %v2042 = vsub.f32 %v102, %v2041
    %v2043 = vand.u32 %v2042, 4294901760
    %2044 = vmatpush1.msra.mxu0 %v2043
    %2045 = vmatprep.subr.mxu0 0.0
    %v2046 = vand.u32 %v101, 4294901760
    %v2047 = vsub.f32 %v101, %v2046
    %v2048 = vand.u32 %v2047, 4294901760
    %2049 = vmatpush1.msra.mxu0 %v2048
    %2050 = vmatprep.subr.mxu0 0.0
    %v2051 = vand.u32 %v100, 4294901760
    %v2052 = vsub.f32 %v100, %v2051
    %v2053 = vand.u32 %v2052, 4294901760
    %2054 = vmatpush1.msra.mxu0 %v2053
    %2055 = vmatprep.subr.mxu0 0.0
    %2056 = vmatpush2.msra.mxu0 0.0
    %2057 = vmatprep.subr.mxu0 0.0
    %2058 = vmatpush2.msra.mxu0 0.0
    %2059 = vmatprep.subr.mxu0 0.0
    %2060 = vmatpush2.msra.mxu0 0.0
    %2061 = vmatprep.subr.mxu0 0.0
    %2062 = vmatpush2.msra.mxu0 0.0
    %2063 = vmatprep.subr.mxu0 0.0
    %2064 = vmatpush2.msra.mxu0 0.0
    %2065 = vmatprep.subr.mxu0 0.0
    %2066 = vmatpush2.msra.mxu0 0.0
    %2067 = vmatprep.subr.mxu0 0.0
    %2068 = vmatpush2.msra.mxu0 0.0
    %2069 = vmatprep.subr.mxu0 0.0
    %2070 = vmatpush2.msra.mxu0 0.0
    %2071 = vmatprep.subr.mxu0 0.0
    %2072 = vmatpush2.msra.mxu0 0.0
    %2073 = vmatprep.subr.mxu0 0.0
    %2074 = vmatpush2.msra.mxu0 0.0
    %2075 = vmatprep.subr.mxu0 0.0
    %2076 = vmatpush2.msra.mxu0 0.0
    %2077 = vmatprep.subr.mxu0 0.0
    %2078 = vmatpush2.msra.mxu0 0.0
    %2079 = vmatprep.subr.mxu0 0.0
    %2080 = vmatpush2.msra.mxu0 0.0
    %2081 = vmatprep.subr.mxu0 0.0
    %2082 = vmatpush2.msra.mxu0 0.0
    %2083 = vmatprep.subr.mxu0 0.0
    %2084 = vmatpush2.msra.mxu0 0.0
    %2085 = vmatprep.subr.mxu0 0.0
    %2086 = vmatpush2.msra.mxu0 0.0
    %2087 = vmatprep.mubr.f32.mxu0 0.0
    %v2088 = vand.u32 %v1682, 4294901760
    %2089 = vmatmul.mubr.f32.gmra.mxu0 %v2088
    %v2090 = vpop.f32.mrf.mxu0
    %v2091 = vadd.f32 %v2008, %v2090
    %v2092 = vpop.f32.mrf.mxu0
    %2093 = vdwg.mxu0
    %2094 = vmatprep.subr.mxu0 0.0
    %2095 = vmatpush1.msra.mxu0 0.0
    %2096 = vmatprep.subr.mxu0 0.0
    %2097 = vmatpush1.msra.mxu0 0.0
    %2098 = vmatprep.subr.mxu0 0.0
    %2099 = vmatpush1.msra.mxu0 0.0
    %2100 = vmatprep.subr.mxu0 0.0
    %2101 = vmatpush1.msra.mxu0 0.0
    %2102 = vmatprep.subr.mxu0 0.0
    %2103 = vmatpush1.msra.mxu0 0.0
    %2104 = vmatprep.subr.mxu0 0.0
    %2105 = vmatpush1.msra.mxu0 0.0
    %2106 = vmatprep.subr.mxu0 0.0
    %2107 = vmatpush1.msra.mxu0 0.0
    %2108 = vmatprep.subr.mxu0 0.0
    %2109 = vmatpush1.msra.mxu0 0.0
    %2110 = vmatprep.subr.mxu0 0.0
    %2111 = vmatpush1.msra.mxu0 0.0
    %2112 = vmatprep.subr.mxu0 0.0
    %2113 = vmatpush1.msra.mxu0 0.0
    %2114 = vmatprep.subr.mxu0 0.0
    %2115 = vmatpush1.msra.mxu0 0.0
    %2116 = vmatprep.subr.mxu0 0.0
    %2117 = vmatpush1.msra.mxu0 0.0
    %2118 = vmatprep.subr.mxu0 0.0
    %v2119 = vand.u32 %v103, 4294901760
    %2120 = vmatpush1.msra.mxu0 %v2119
    %2121 = vmatprep.subr.mxu0 0.0
    %v2122 = vand.u32 %v102, 4294901760
    %2123 = vmatpush1.msra.mxu0 %v2122
    %2124 = vmatprep.subr.mxu0 0.0
    %v2125 = vand.u32 %v101, 4294901760
    %2126 = vmatpush1.msra.mxu0 %v2125
    %2127 = vmatprep.subr.mxu0 0.0
    %v2128 = vand.u32 %v100, 4294901760
    %2129 = vmatpush1.msra.mxu0 %v2128
    %2130 = vmatprep.subr.mxu0 0.0
    %2131 = vmatpush2.msra.mxu0 0.0
    %2132 = vmatprep.subr.mxu0 0.0
    %2133 = vmatpush2.msra.mxu0 0.0
    %2134 = vmatprep.subr.mxu0 0.0
    %2135 = vmatpush2.msra.mxu0 0.0
    %2136 = vmatprep.subr.mxu0 0.0
    %2137 = vmatpush2.msra.mxu0 0.0
    %2138 = vmatprep.subr.mxu0 0.0
    %2139 = vmatpush2.msra.mxu0 0.0
    %2140 = vmatprep.subr.mxu0 0.0
    %2141 = vmatpush2.msra.mxu0 0.0
    %2142 = vmatprep.subr.mxu0 0.0
    %2143 = vmatpush2.msra.mxu0 0.0
    %2144 = vmatprep.subr.mxu0 0.0
    %2145 = vmatpush2.msra.mxu0 0.0
    %2146 = vmatprep.subr.mxu0 0.0
    %2147 = vmatpush2.msra.mxu0 0.0
    %2148 = vmatprep.subr.mxu0 0.0
    %2149 = vmatpush2.msra.mxu0 0.0
    %2150 = vmatprep.subr.mxu0 0.0
    %2151 = vmatpush2.msra.mxu0 0.0
    %2152 = vmatprep.subr.mxu0 0.0
    %2153 = vmatpush2.msra.mxu0 0.0
    %2154 = vmatprep.subr.mxu0 0.0
    %2155 = vmatpush2.msra.mxu0 0.0
    %2156 = vmatprep.subr.mxu0 0.0
    %2157 = vmatpush2.msra.mxu0 0.0
    %2158 = vmatprep.subr.mxu0 0.0
    %2159 = vmatpush2.msra.mxu0 0.0
    %2160 = vmatprep.subr.mxu0 0.0
    %2161 = vmatpush2.msra.mxu0 0.0
    %2162 = vmatprep.mubr.f32.mxu0 0.0
    %v2163 = vand.u32 %v1682, 4294901760
    %2164 = vmatmul.mubr.f32.gmra.mxu0 %v2163
    %v2165 = vpop.f32.mrf.mxu0
    %v2166 = vadd.f32 %v2091, %v2165
    %v2167 = vpop.f32.mrf.mxu0
    %2168 = vdwg.mxu0
    %v2169 = vadd.f32 %v1681, %v2166
    %v2170 = vtanh.pop %v2169
    %v2171 = vmul.f32 %v2170, 0.5
    %v2172 = vadd.f32 %v2171, 0.5
    %v2173 = vsel %vm119, %v2170, %v2172
    %v2174 = vmul.f32 %v2173, %v1668
    %2176 = vrot.lane.b32.xlu0 %v2173, 64
    %v2177 = vpop.permute.xlu0 %2176
    %v2179 = vmul.f32 %v2173, %v2177
    %2181 = vrot.lane.b32.xlu0 %v2179, 32
    %v2182 = vpop.permute.xlu0 %2181
    %v2184 = vadd.f32 %v2174, %v2182
    %v2185 = vtanh.pop %v2184
    %2187 = vrot.lane.b32.xlu0 %v2185, 64
    %v2188 = vpop.permute.xlu0 %2187
    %v2190 = vmul.f32 %v2173, %v2188
    %2192 = vrot.lane.b32.xlu0 %v2190, 32
    %v2193 = vpop.permute.xlu0 %2192
    %s2195 = scalar_lea.vmem [#allocation3], 3
    %2196 = vst.msk [vmem:[%s2195] sm:$0x1] %vm647, %v2193
    %v2197 = vld [vmem:[%s83] sm:$0x1]
    %v2198 = vsel %vm124, %v2193, 0
    %2200 = vmatprep.subr.mxu0 0.0
    %2201 = vmatpush1.msra.mxu0 0.0
    %2202 = vmatprep.subr.mxu0 0.0
    %2203 = vmatpush1.msra.mxu0 0.0
    %2204 = vmatprep.subr.mxu0 0.0
    %2205 = vmatpush1.msra.mxu0 0.0
    %2206 = vmatprep.subr.mxu0 0.0
    %2207 = vmatpush1.msra.mxu0 0.0
    %2208 = vmatprep.subr.mxu0 0.0
    %2209 = vmatpush1.msra.mxu0 0.0
    %2210 = vmatprep.subr.mxu0 0.0
    %2211 = vmatpush1.msra.mxu0 0.0
    %2212 = vmatprep.subr.mxu0 0.0
    %2213 = vmatpush1.msra.mxu0 0.0
    %2214 = vmatprep.subr.mxu0 0.0
    %2215 = vmatpush1.msra.mxu0 0.0
    %2216 = vmatprep.subr.mxu0 0.0
    %2217 = vmatpush1.msra.mxu0 0.0
    %2218 = vmatprep.subr.mxu0 0.0
    %2219 = vmatpush1.msra.mxu0 0.0
    %2220 = vmatprep.subr.mxu0 0.0
    %2221 = vmatpush1.msra.mxu0 0.0
    %2222 = vmatprep.subr.mxu0 0.0
    %2223 = vmatpush1.msra.mxu0 0.0
    %2224 = vmatprep.subr.mxu0 0.0
    %v2225 = vand.u32 %v103, 4294901760
    %2226 = vmatpush1.msra.mxu0 %v2225
    %2227 = vmatprep.subr.mxu0 0.0
    %v2228 = vand.u32 %v102, 4294901760
    %2229 = vmatpush1.msra.mxu0 %v2228
    %2230 = vmatprep.subr.mxu0 0.0
    %v2231 = vand.u32 %v101, 4294901760
    %2232 = vmatpush1.msra.mxu0 %v2231
    %2233 = vmatprep.subr.mxu0 0.0
    %v2234 = vand.u32 %v100, 4294901760
    %2235 = vmatpush1.msra.mxu0 %v2234
    %2236 = vmatprep.subr.mxu0 0.0
    %2237 = vmatpush2.msra.mxu0 0.0
    %2238 = vmatprep.subr.mxu0 0.0
    %2239 = vmatpush2.msra.mxu0 0.0
    %2240 = vmatprep.subr.mxu0 0.0
    %2241 = vmatpush2.msra.mxu0 0.0
    %2242 = vmatprep.subr.mxu0 0.0
    %2243 = vmatpush2.msra.mxu0 0.0
    %2244 = vmatprep.subr.mxu0 0.0
    %2245 = vmatpush2.msra.mxu0 0.0
    %2246 = vmatprep.subr.mxu0 0.0
    %2247 = vmatpush2.msra.mxu0 0.0
    %2248 = vmatprep.subr.mxu0 0.0
    %2249 = vmatpush2.msra.mxu0 0.0
    %2250 = vmatprep.subr.mxu0 0.0
    %2251 = vmatpush2.msra.mxu0 0.0
    %2252 = vmatprep.subr.mxu0 0.0
    %2253 = vmatpush2.msra.mxu0 0.0
    %2254 = vmatprep.subr.mxu0 0.0
    %2255 = vmatpush2.msra.mxu0 0.0
    %2256 = vmatprep.subr.mxu0 0.0
    %2257 = vmatpush2.msra.mxu0 0.0
    %2258 = vmatprep.subr.mxu0 0.0
    %2259 = vmatpush2.msra.mxu0 0.0
    %2260 = vmatprep.subr.mxu0 0.0
    %2261 = vmatpush2.msra.mxu0 0.0
    %2262 = vmatprep.subr.mxu0 0.0
    %2263 = vmatpush2.msra.mxu0 0.0
    %2264 = vmatprep.subr.mxu0 0.0
    %2265 = vmatpush2.msra.mxu0 0.0
    %2266 = vmatprep.subr.mxu0 0.0
    %2267 = vmatpush2.msra.mxu0 0.0
    %2268 = vmatprep.mubr.f32.mxu0 0.0
    %v2269 = vand.u32 %v2198, 4294901760
    %v2270 = vsub.f32 %v2198, %v2269
    %v2271 = vand.u32 %v2270, 4294901760
    %v2272 = vsub.f32 %v2270, %v2271
    %v2273 = vand.u32 %v2272, 4294901760
    %2274 = vmatmul.mubr.f32.gmra.mxu0 %v2273
    %v2275 = vpop.f32.mrf.mxu0
    %v2276 = vadd.f32 0.0, %v2275
    %v2277 = vpop.f32.mrf.mxu0
    %2278 = vdwg.mxu0
    %2279 = vmatprep.subr.mxu0 0.0
    %2280 = vmatpush1.msra.mxu0 0.0
    %2281 = vmatprep.subr.mxu0 0.0
    %2282 = vmatpush1.msra.mxu0 0.0
    %2283 = vmatprep.subr.mxu0 0.0
    %2284 = vmatpush1.msra.mxu0 0.0
    %2285 = vmatprep.subr.mxu0 0.0
    %2286 = vmatpush1.msra.mxu0 0.0
    %2287 = vmatprep.subr.mxu0 0.0
    %2288 = vmatpush1.msra.mxu0 0.0
    %2289 = vmatprep.subr.mxu0 0.0
    %2290 = vmatpush1.msra.mxu0 0.0
    %2291 = vmatprep.subr.mxu0 0.0
    %2292 = vmatpush1.msra.mxu0 0.0
    %2293 = vmatprep.subr.mxu0 0.0
    %2294 = vmatpush1.msra.mxu0 0.0
    %2295 = vmatprep.subr.mxu0 0.0
    %2296 = vmatpush1.msra.mxu0 0.0
    %2297 = vmatprep.subr.mxu0 0.0
    %2298 = vmatpush1.msra.mxu0 0.0
    %2299 = vmatprep.subr.mxu0 0.0
    %2300 = vmatpush1.msra.mxu0 0.0
    %2301 = vmatprep.subr.mxu0 0.0
    %2302 = vmatpush1.msra.mxu0 0.0
    %2303 = vmatprep.subr.mxu0 0.0
    %v2304 = vand.u32 %v103, 4294901760
    %v2305 = vsub.f32 %v103, %v2304
    %v2306 = vand.u32 %v2305, 4294901760
    %v2307 = vsub.f32 %v2305, %v2306
    %v2308 = vand.u32 %v2307, 4294901760
    %2309 = vmatpush1.msra.mxu0 %v2308
    %2310 = vmatprep.subr.mxu0 0.0
    %v2311 = vand.u32 %v102, 4294901760
    %v2312 = vsub.f32 %v102, %v2311
    %v2313 = vand.u32 %v2312, 4294901760
    %v2314 = vsub.f32 %v2312, %v2313
    %v2315 = vand.u32 %v2314, 4294901760
    %2316 = vmatpush1.msra.mxu0 %v2315
    %2317 = vmatprep.subr.mxu0 0.0
    %v2318 = vand.u32 %v101, 4294901760
    %v2319 = vsub.f32 %v101, %v2318
    %v2320 = vand.u32 %v2319, 4294901760
    %v2321 = vsub.f32 %v2319, %v2320
    %v2322 = vand.u32 %v2321, 4294901760
    %2323 = vmatpush1.msra.mxu0 %v2322
    %2324 = vmatprep.subr.mxu0 0.0
    %v2325 = vand.u32 %v100, 4294901760
    %v2326 = vsub.f32 %v100, %v2325
    %v2327 = vand.u32 %v2326, 4294901760
    %v2328 = vsub.f32 %v2326, %v2327
    %v2329 = vand.u32 %v2328, 4294901760
    %2330 = vmatpush1.msra.mxu0 %v2329
    %2331 = vmatprep.subr.mxu0 0.0
    %2332 = vmatpush2.msra.mxu0 0.0
    %2333 = vmatprep.subr.mxu0 0.0
    %2334 = vmatpush2.msra.mxu0 0.0
    %2335 = vmatprep.subr.mxu0 0.0
    %2336 = vmatpush2.msra.mxu0 0.0
    %2337 = vmatprep.subr.mxu0 0.0
    %2338 = vmatpush2.msra.mxu0 0.0
    %2339 = vmatprep.subr.mxu0 0.0
    %2340 = vmatpush2.msra.mxu0 0.0
    %2341 = vmatprep.subr.mxu0 0.0
    %2342 = vmatpush2.msra.mxu0 0.0
    %2343 = vmatprep.subr.mxu0 0.0
    %2344 = vmatpush2.msra.mxu0 0.0
    %2345 = vmatprep.subr.mxu0 0.0
    %2346 = vmatpush2.msra.mxu0 0.0
    %2347 = vmatprep.subr.mxu0 0.0
    %2348 = vmatpush2.msra.mxu0 0.0
    %2349 = vmatprep.subr.mxu0 0.0
    %2350 = vmatpush2.msra.mxu0 0.0
    %2351 = vmatprep.subr.mxu0 0.0
    %2352 = vmatpush2.msra.mxu0 0.0
    %2353 = vmatprep.subr.mxu0 0.0
    %2354 = vmatpush2.msra.mxu0 0.0
    %2355 = vmatprep.subr.mxu0 0.0
    %2356 = vmatpush2.msra.mxu0 0.0
    %2357 = vmatprep.subr.mxu0 0.0
    %2358 = vmatpush2.msra.mxu0 0.0
    %2359 = vmatprep.subr.mxu0 0.0
    %2360 = vmatpush2.msra.mxu0 0.0
    %2361 = vmatprep.subr.mxu0 0.0
    %2362 = vmatpush2.msra.mxu0 0.0
    %2363 = vmatprep.mubr.f32.mxu0 0.0
    %v2364 = vand.u32 %v2198, 4294901760
    %2365 = vmatmul.mubr.f32.gmra.mxu0 %v2364
    %v2366 = vpop.f32.mrf.mxu0
    %v2367 = vadd.f32 %v2276, %v2366
    %v2368 = vpop.f32.mrf.mxu0
    %2369 = vdwg.mxu0
    %2370 = vmatprep.subr.mxu0 0.0
    %2371 = vmatpush1.msra.mxu0 0.0
    %2372 = vmatprep.subr.mxu0 0.0
    %2373 = vmatpush1.msra.mxu0 0.0
    %2374 = vmatprep.subr.mxu0 0.0
    %2375 = vmatpush1.msra.mxu0 0.0
    %2376 = vmatprep.subr.mxu0 0.0
    %2377 = vmatpush1.msra.mxu0 0.0
    %2378 = vmatprep.subr.mxu0 0.0
    %2379 = vmatpush1.msra.mxu0 0.0
    %2380 = vmatprep.subr.mxu0 0.0
    %2381 = vmatpush1.msra.mxu0 0.0
    %2382 = vmatprep.subr.mxu0 0.0
    %2383 = vmatpush1.msra.mxu0 0.0
    %2384 = vmatprep.subr.mxu0 0.0
    %2385 = vmatpush1.msra.mxu0 0.0
    %2386 = vmatprep.subr.mxu0 0.0
    %2387 = vmatpush1.msra.mxu0 0.0
    %2388 = vmatprep.subr.mxu0 0.0
    %2389 = vmatpush1.msra.mxu0 0.0
    %2390 = vmatprep.subr.mxu0 0.0
    %2391 = vmatpush1.msra.mxu0 0.0
    %2392 = vmatprep.subr.mxu0 0.0
    %2393 = vmatpush1.msra.mxu0 0.0
    %2394 = vmatprep.subr.mxu0 0.0
    %v2395 = vand.u32 %v103, 4294901760
    %v2396 = vsub.f32 %v103, %v2395
    %2397 = vmatpush1.msra.mxu0 %v2396
    %2398 = vmatprep.subr.mxu0 0.0
    %v2399 = vand.u32 %v102, 4294901760
    %v2400 = vsub.f32 %v102, %v2399
    %2401 = vmatpush1.msra.mxu0 %v2400
    %2402 = vmatprep.subr.mxu0 0.0
    %v2403 = vand.u32 %v101, 4294901760
    %v2404 = vsub.f32 %v101, %v2403
    %2405 = vmatpush1.msra.mxu0 %v2404
    %2406 = vmatprep.subr.mxu0 0.0
    %v2407 = vand.u32 %v100, 4294901760
    %v2408 = vsub.f32 %v100, %v2407
    %2409 = vmatpush1.msra.mxu0 %v2408
    %2410 = vmatprep.subr.mxu0 0.0
    %2411 = vmatpush2.msra.mxu0 0.0
    %2412 = vmatprep.subr.mxu0 0.0
    %2413 = vmatpush2.msra.mxu0 0.0
    %2414 = vmatprep.subr.mxu0 0.0
    %2415 = vmatpush2.msra.mxu0 0.0
    %2416 = vmatprep.subr.mxu0 0.0
    %2417 = vmatpush2.msra.mxu0 0.0
    %2418 = vmatprep.subr.mxu0 0.0
    %2419 = vmatpush2.msra.mxu0 0.0
    %2420 = vmatprep.subr.mxu0 0.0
    %2421 = vmatpush2.msra.mxu0 0.0
    %2422 = vmatprep.subr.mxu0 0.0
    %2423 = vmatpush2.msra.mxu0 0.0
    %2424 = vmatprep.subr.mxu0 0.0
    %2425 = vmatpush2.msra.mxu0 0.0
    %2426 = vmatprep.subr.mxu0 0.0
    %2427 = vmatpush2.msra.mxu0 0.0
    %2428 = vmatprep.subr.mxu0 0.0
    %2429 = vmatpush2.msra.mxu0 0.0
    %2430 = vmatprep.subr.mxu0 0.0
    %2431 = vmatpush2.msra.mxu0 0.0
    %2432 = vmatprep.subr.mxu0 0.0
    %2433 = vmatpush2.msra.mxu0 0.0
    %2434 = vmatprep.subr.mxu0 0.0
    %2435 = vmatpush2.msra.mxu0 0.0
    %2436 = vmatprep.subr.mxu0 0.0
    %2437 = vmatpush2.msra.mxu0 0.0
    %2438 = vmatprep.subr.mxu0 0.0
    %2439 = vmatpush2.msra.mxu0 0.0
    %2440 = vmatprep.subr.mxu0 0.0
    %2441 = vmatpush2.msra.mxu0 0.0
    %2442 = vmatprep.mubr.f32.mxu0 0.0
    %v2443 = vand.u32 %v2198, 4294901760
    %v2444 = vsub.f32 %v2198, %v2443
    %2445 = vmatmul.mubr.f32.gmra.mxu0 %v2444
    %v2446 = vpop.f32.mrf.mxu0
    %v2447 = vadd.f32 %v2367, %v2446
    %v2448 = vpop.f32.mrf.mxu0
    %2449 = vdwg.mxu0
    %2450 = vmatprep.subr.mxu0 0.0
    %2451 = vmatpush1.msra.mxu0 0.0
    %2452 = vmatprep.subr.mxu0 0.0
    %2453 = vmatpush1.msra.mxu0 0.0
    %2454 = vmatprep.subr.mxu0 0.0
    %2455 = vmatpush1.msra.mxu0 0.0
    %2456 = vmatprep.subr.mxu0 0.0
    %2457 = vmatpush1.msra.mxu0 0.0
    %2458 = vmatprep.subr.mxu0 0.0
    %2459 = vmatpush1.msra.mxu0 0.0
    %2460 = vmatprep.subr.mxu0 0.0
    %2461 = vmatpush1.msra.mxu0 0.0
    %2462 = vmatprep.subr.mxu0 0.0
    %2463 = vmatpush1.msra.mxu0 0.0
    %2464 = vmatprep.subr.mxu0 0.0
    %2465 = vmatpush1.msra.mxu0 0.0
    %2466 = vmatprep.subr.mxu0 0.0
    %2467 = vmatpush1.msra.mxu0 0.0
    %2468 = vmatprep.subr.mxu0 0.0
    %2469 = vmatpush1.msra.mxu0 0.0
    %2470 = vmatprep.subr.mxu0 0.0
    %2471 = vmatpush1.msra.mxu0 0.0
    %2472 = vmatprep.subr.mxu0 0.0
    %2473 = vmatpush1.msra.mxu0 0.0
    %2474 = vmatprep.subr.mxu0 0.0
    %v2475 = vand.u32 %v103, 4294901760
    %2476 = vmatpush1.msra.mxu0 %v2475
    %2477 = vmatprep.subr.mxu0 0.0
    %v2478 = vand.u32 %v102, 4294901760
    %2479 = vmatpush1.msra.mxu0 %v2478
    %2480 = vmatprep.subr.mxu0 0.0
    %v2481 = vand.u32 %v101, 4294901760
    %2482 = vmatpush1.msra.mxu0 %v2481
    %2483 = vmatprep.subr.mxu0 0.0
    %v2484 = vand.u32 %v100, 4294901760
    %2485 = vmatpush1.msra.mxu0 %v2484
    %2486 = vmatprep.subr.mxu0 0.0
    %2487 = vmatpush2.msra.mxu0 0.0
    %2488 = vmatprep.subr.mxu0 0.0
    %2489 = vmatpush2.msra.mxu0 0.0
    %2490 = vmatprep.subr.mxu0 0.0
    %2491 = vmatpush2.msra.mxu0 0.0
    %2492 = vmatprep.subr.mxu0 0.0
    %2493 = vmatpush2.msra.mxu0 0.0
    %2494 = vmatprep.subr.mxu0 0.0
    %2495 = vmatpush2.msra.mxu0 0.0
    %2496 = vmatprep.subr.mxu0 0.0
    %2497 = vmatpush2.msra.mxu0 0.0
    %2498 = vmatprep.subr.mxu0 0.0
    %2499 = vmatpush2.msra.mxu0 0.0
    %2500 = vmatprep.subr.mxu0 0.0
    %2501 = vmatpush2.msra.mxu0 0.0
    %2502 = vmatprep.subr.mxu0 0.0
    %2503 = vmatpush2.msra.mxu0 0.0
    %2504 = vmatprep.subr.mxu0 0.0
    %2505 = vmatpush2.msra.mxu0 0.0
    %2506 = vmatprep.subr.mxu0 0.0
    %2507 = vmatpush2.msra.mxu0 0.0
    %2508 = vmatprep.subr.mxu0 0.0
    %2509 = vmatpush2.msra.mxu0 0.0
    %2510 = vmatprep.subr.mxu0 0.0
    %2511 = vmatpush2.msra.mxu0 0.0
    %2512 = vmatprep.subr.mxu0 0.0
    %2513 = vmatpush2.msra.mxu0 0.0
    %2514 = vmatprep.subr.mxu0 0.0
    %2515 = vmatpush2.msra.mxu0 0.0
    %2516 = vmatprep.subr.mxu0 0.0
    %2517 = vmatpush2.msra.mxu0 0.0
    %2518 = vmatprep.mubr.f32.mxu0 0.0
    %v2519 = vand.u32 %v2198, 4294901760
    %v2520 = vsub.f32 %v2198, %v2519
    %v2521 = vand.u32 %v2520, 4294901760
    %2522 = vmatmul.mubr.f32.gmra.mxu0 %v2521
    %v2523 = vpop.f32.mrf.mxu0
    %v2524 = vadd.f32 %v2447, %v2523
    %v2525 = vpop.f32.mrf.mxu0
    %2526 = vdwg.mxu0
    %2527 = vmatprep.subr.mxu0 0.0
    %2528 = vmatpush1.msra.mxu0 0.0
    %2529 = vmatprep.subr.mxu0 0.0
    %2530 = vmatpush1.msra.mxu0 0.0
    %2531 = vmatprep.subr.mxu0 0.0
    %2532 = vmatpush1.msra.mxu0 0.0
    %2533 = vmatprep.subr.mxu0 0.0
    %2534 = vmatpush1.msra.mxu0 0.0
    %2535 = vmatprep.subr.mxu0 0.0
    %2536 = vmatpush1.msra.mxu0 0.0
    %2537 = vmatprep.subr.mxu0 0.0
    %2538 = vmatpush1.msra.mxu0 0.0
    %2539 = vmatprep.subr.mxu0 0.0
    %2540 = vmatpush1.msra.mxu0 0.0
    %2541 = vmatprep.subr.mxu0 0.0
    %2542 = vmatpush1.msra.mxu0 0.0
    %2543 = vmatprep.subr.mxu0 0.0
    %2544 = vmatpush1.msra.mxu0 0.0
    %2545 = vmatprep.subr.mxu0 0.0
    %2546 = vmatpush1.msra.mxu0 0.0
    %2547 = vmatprep.subr.mxu0 0.0
    %2548 = vmatpush1.msra.mxu0 0.0
    %2549 = vmatprep.subr.mxu0 0.0
    %2550 = vmatpush1.msra.mxu0 0.0
    %2551 = vmatprep.subr.mxu0 0.0
    %v2552 = vand.u32 %v103, 4294901760
    %v2553 = vsub.f32 %v103, %v2552
    %v2554 = vand.u32 %v2553, 4294901760
    %2555 = vmatpush1.msra.mxu0 %v2554
    %2556 = vmatprep.subr.mxu0 0.0
    %v2557 = vand.u32 %v102, 4294901760
    %v2558 = vsub.f32 %v102, %v2557
    %v2559 = vand.u32 %v2558, 4294901760
    %2560 = vmatpush1.msra.mxu0 %v2559
    %2561 = vmatprep.subr.mxu0 0.0
    %v2562 = vand.u32 %v101, 4294901760
    %v2563 = vsub.f32 %v101, %v2562
    %v2564 = vand.u32 %v2563, 4294901760
    %2565 = vmatpush1.msra.mxu0 %v2564
    %2566 = vmatprep.subr.mxu0 0.0
    %v2567 = vand.u32 %v100, 4294901760
    %v2568 = vsub.f32 %v100, %v2567
    %v2569 = vand.u32 %v2568, 4294901760
    %2570 = vmatpush1.msra.mxu0 %v2569
    %2571 = vmatprep.subr.mxu0 0.0
    %2572 = vmatpush2.msra.mxu0 0.0
    %2573 = vmatprep.subr.mxu0 0.0
    %2574 = vmatpush2.msra.mxu0 0.0
    %2575 = vmatprep.subr.mxu0 0.0
    %2576 = vmatpush2.msra.mxu0 0.0
    %2577 = vmatprep.subr.mxu0 0.0
    %2578 = vmatpush2.msra.mxu0 0.0
    %2579 = vmatprep.subr.mxu0 0.0
    %2580 = vmatpush2.msra.mxu0 0.0
    %2581 = vmatprep.subr.mxu0 0.0
    %2582 = vmatpush2.msra.mxu0 0.0
    %2583 = vmatprep.subr.mxu0 0.0
    %2584 = vmatpush2.msra.mxu0 0.0
    %2585 = vmatprep.subr.mxu0 0.0
    %2586 = vmatpush2.msra.mxu0 0.0
    %2587 = vmatprep.subr.mxu0 0.0
    %2588 = vmatpush2.msra.mxu0 0.0
    %2589 = vmatprep.subr.mxu0 0.0
    %2590 = vmatpush2.msra.mxu0 0.0
    %2591 = vmatprep.subr.mxu0 0.0
    %2592 = vmatpush2.msra.mxu0 0.0
    %2593 = vmatprep.subr.mxu0 0.0
    %2594 = vmatpush2.msra.mxu0 0.0
    %2595 = vmatprep.subr.mxu0 0.0
    %2596 = vmatpush2.msra.mxu0 0.0
    %2597 = vmatprep.subr.mxu0 0.0
    %2598 = vmatpush2.msra.mxu0 0.0
    %2599 = vmatprep.subr.mxu0 0.0
    %2600 = vmatpush2.msra.mxu0 0.0
    %2601 = vmatprep.subr.mxu0 0.0
    %2602 = vmatpush2.msra.mxu0 0.0
    %2603 = vmatprep.mubr.f32.mxu0 0.0
    %v2604 = vand.u32 %v2198, 4294901760
    %2605 = vmatmul.mubr.f32.gmra.mxu0 %v2604
    %v2606 = vpop.f32.mrf.mxu0
    %v2607 = vadd.f32 %v2524, %v2606
    %v2608 = vpop.f32.mrf.mxu0
    %2609 = vdwg.mxu0
    %2610 = vmatprep.subr.mxu0 0.0
    %2611 = vmatpush1.msra.mxu0 0.0
    %2612 = vmatprep.subr.mxu0 0.0
    %2613 = vmatpush1.msra.mxu0 0.0
    %2614 = vmatprep.subr.mxu0 0.0
    %2615 = vmatpush1.msra.mxu0 0.0
    %2616 = vmatprep.subr.mxu0 0.0
    %2617 = vmatpush1.msra.mxu0 0.0
    %2618 = vmatprep.subr.mxu0 0.0
    %2619 = vmatpush1.msra.mxu0 0.0
    %2620 = vmatprep.subr.mxu0 0.0
    %2621 = vmatpush1.msra.mxu0 0.0
    %2622 = vmatprep.subr.mxu0 0.0
    %2623 = vmatpush1.msra.mxu0 0.0
    %2624 = vmatprep.subr.mxu0 0.0
    %2625 = vmatpush1.msra.mxu0 0.0
    %2626 = vmatprep.subr.mxu0 0.0
    %2627 = vmatpush1.msra.mxu0 0.0
    %2628 = vmatprep.subr.mxu0 0.0
    %2629 = vmatpush1.msra.mxu0 0.0
    %2630 = vmatprep.subr.mxu0 0.0
    %2631 = vmatpush1.msra.mxu0 0.0
    %2632 = vmatprep.subr.mxu0 0.0
    %2633 = vmatpush1.msra.mxu0 0.0
    %2634 = vmatprep.subr.mxu0 0.0
    %v2635 = vand.u32 %v103, 4294901760
    %2636 = vmatpush1.msra.mxu0 %v2635
    %2637 = vmatprep.subr.mxu0 0.0
    %v2638 = vand.u32 %v102, 4294901760
    %2639 = vmatpush1.msra.mxu0 %v2638
    %2640 = vmatprep.subr.mxu0 0.0
    %v2641 = vand.u32 %v101, 4294901760
    %2642 = vmatpush1.msra.mxu0 %v2641
    %2643 = vmatprep.subr.mxu0 0.0
    %v2644 = vand.u32 %v100, 4294901760
    %2645 = vmatpush1.msra.mxu0 %v2644
    %2646 = vmatprep.subr.mxu0 0.0
    %2647 = vmatpush2.msra.mxu0 0.0
    %2648 = vmatprep.subr.mxu0 0.0
    %2649 = vmatpush2.msra.mxu0 0.0
    %2650 = vmatprep.subr.mxu0 0.0
    %2651 = vmatpush2.msra.mxu0 0.0
    %2652 = vmatprep.subr.mxu0 0.0
    %2653 = vmatpush2.msra.mxu0 0.0
    %2654 = vmatprep.subr.mxu0 0.0
    %2655 = vmatpush2.msra.mxu0 0.0
    %2656 = vmatprep.subr.mxu0 0.0
    %2657 = vmatpush2.msra.mxu0 0.0
    %2658 = vmatprep.subr.mxu0 0.0
    %2659 = vmatpush2.msra.mxu0 0.0
    %2660 = vmatprep.subr.mxu0 0.0
    %2661 = vmatpush2.msra.mxu0 0.0
    %2662 = vmatprep.subr.mxu0 0.0
    %2663 = vmatpush2.msra.mxu0 0.0
    %2664 = vmatprep.subr.mxu0 0.0
    %2665 = vmatpush2.msra.mxu0 0.0
    %2666 = vmatprep.subr.mxu0 0.0
    %2667 = vmatpush2.msra.mxu0 0.0
    %2668 = vmatprep.subr.mxu0 0.0
    %2669 = vmatpush2.msra.mxu0 0.0
    %2670 = vmatprep.subr.mxu0 0.0
    %2671 = vmatpush2.msra.mxu0 0.0
    %2672 = vmatprep.subr.mxu0 0.0
    %2673 = vmatpush2.msra.mxu0 0.0
    %2674 = vmatprep.subr.mxu0 0.0
    %2675 = vmatpush2.msra.mxu0 0.0
    %2676 = vmatprep.subr.mxu0 0.0
    %2677 = vmatpush2.msra.mxu0 0.0
    %2678 = vmatprep.mubr.f32.mxu0 0.0
    %v2679 = vand.u32 %v2198, 4294901760
    %2680 = vmatmul.mubr.f32.gmra.mxu0 %v2679
    %v2681 = vpop.f32.mrf.mxu0
    %v2682 = vadd.f32 %v2607, %v2681
    %v2683 = vpop.f32.mrf.mxu0
    %2684 = vdwg.mxu0
    %v2685 = vadd.f32 %v2197, %v2682
    %v2686 = vtanh.pop %v2685
    %v2687 = vmul.f32 %v2686, 0.5
    %v2688 = vadd.f32 %v2687, 0.5
    %v2689 = vsel %vm119, %v2686, %v2688
    %v2690 = vmul.f32 %v2689, %v2184
    %2692 = vrot.lane.b32.xlu0 %v2689, 64
    %v2693 = vpop.permute.xlu0 %2692
    %v2695 = vmul.f32 %v2689, %v2693
    %2697 = vrot.lane.b32.xlu0 %v2695, 32
    %v2698 = vpop.permute.xlu0 %2697
    %v2700 = vadd.f32 %v2690, %v2698
    %v2701 = vtanh.pop %v2700
    %2703 = vrot.lane.b32.xlu0 %v2701, 64
    %v2704 = vpop.permute.xlu0 %2703
    %v2706 = vmul.f32 %v2689, %v2704
    %2708 = vrot.lane.b32.xlu0 %v2706, 32
    %v2709 = vpop.permute.xlu0 %2708
    %s2711 = scalar_lea.vmem [#allocation3], 4
    %2712 = vst.msk [vmem:[%s2711] sm:$0x1] %vm647, %v2709
    %v2713 = vld [vmem:[%s88] sm:$0x1]
    %v2714 = vsel %vm124, %v2709, 0
    %2716 = vmatprep.subr.mxu0 0.0
    %2717 = vmatpush1.msra.mxu0 0.0
    %2718 = vmatprep.subr.mxu0 0.0
    %2719 = vmatpush1.msra.mxu0 0.0
    %2720 = vmatprep.subr.mxu0 0.0
    %2721 = vmatpush1.msra.mxu0 0.0
    %2722 = vmatprep.subr.mxu0 0.0
    %2723 = vmatpush1.msra.mxu0 0.0
    %2724 = vmatprep.subr.mxu0 0.0
    %2725 = vmatpush1.msra.mxu0 0.0
    %2726 = vmatprep.subr.mxu0 0.0
    %2727 = vmatpush1.msra.mxu0 0.0
    %2728 = vmatprep.subr.mxu0 0.0
    %2729 = vmatpush1.msra.mxu0 0.0
    %2730 = vmatprep.subr.mxu0 0.0
    %2731 = vmatpush1.msra.mxu0 0.0
    %2732 = vmatprep.subr.mxu0 0.0
    %2733 = vmatpush1.msra.mxu0 0.0
    %2734 = vmatprep.subr.mxu0 0.0
    %2735 = vmatpush1.msra.mxu0 0.0
    %2736 = vmatprep.subr.mxu0 0.0
    %2737 = vmatpush1.msra.mxu0 0.0
    %2738 = vmatprep.subr.mxu0 0.0
    %2739 = vmatpush1.msra.mxu0 0.0
    %2740 = vmatprep.subr.mxu0 0.0
    %v2741 = vand.u32 %v103, 4294901760
    %2742 = vmatpush1.msra.mxu0 %v2741
    %2743 = vmatprep.subr.mxu0 0.0
    %v2744 = vand.u32 %v102, 4294901760
    %2745 = vmatpush1.msra.mxu0 %v2744
    %2746 = vmatprep.subr.mxu0 0.0
    %v2747 = vand.u32 %v101, 4294901760
    %2748 = vmatpush1.msra.mxu0 %v2747
    %2749 = vmatprep.subr.mxu0 0.0
    %v2750 = vand.u32 %v100, 4294901760
    %2751 = vmatpush1.msra.mxu0 %v2750
    %2752 = vmatprep.subr.mxu0 0.0
    %2753 = vmatpush2.msra.mxu0 0.0
    %2754 = vmatprep.subr.mxu0 0.0
    %2755 = vmatpush2.msra.mxu0 0.0
    %2756 = vmatprep.subr.mxu0 0.0
    %2757 = vmatpush2.msra.mxu0 0.0
    %2758 = vmatprep.subr.mxu0 0.0
    %2759 = vmatpush2.msra.mxu0 0.0
    %2760 = vmatprep.subr.mxu0 0.0
    %2761 = vmatpush2.msra.mxu0 0.0
    %2762 = vmatprep.subr.mxu0 0.0
    %2763 = vmatpush2.msra.mxu0 0.0
    %2764 = vmatprep.subr.mxu0 0.0
    %2765 = vmatpush2.msra.mxu0 0.0
    %2766 = vmatprep.subr.mxu0 0.0
    %2767 = vmatpush2.msra.mxu0 0.0
    %2768 = vmatprep.subr.mxu0 0.0
    %2769 = vmatpush2.msra.mxu0 0.0
    %2770 = vmatprep.subr.mxu0 0.0
    %2771 = vmatpush2.msra.mxu0 0.0
    %2772 = vmatprep.subr.mxu0 0.0
    %2773 = vmatpush2.msra.mxu0 0.0
    %2774 = vmatprep.subr.mxu0 0.0
    %2775 = vmatpush2.msra.mxu0 0.0
    %2776 = vmatprep.subr.mxu0 0.0
    %2777 = vmatpush2.msra.mxu0 0.0
    %2778 = vmatprep.subr.mxu0 0.0
    %2779 = vmatpush2.msra.mxu0 0.0
    %2780 = vmatprep.subr.mxu0 0.0
    %2781 = vmatpush2.msra.mxu0 0.0
    %2782 = vmatprep.subr.mxu0 0.0
    %2783 = vmatpush2.msra.mxu0 0.0
    %2784 = vmatprep.mubr.f32.mxu0 0.0
    %v2785 = vand.u32 %v2714, 4294901760
    %v2786 = vsub.f32 %v2714, %v2785
    %v2787 = vand.u32 %v2786, 4294901760
    %v2788 = vsub.f32 %v2786, %v2787
    %v2789 = vand.u32 %v2788, 4294901760
    %2790 = vmatmul.mubr.f32.gmra.mxu0 %v2789
    %v2791 = vpop.f32.mrf.mxu0
    %v2792 = vadd.f32 0.0, %v2791
    %v2793 = vpop.f32.mrf.mxu0
    %2794 = vdwg.mxu0
    %2795 = vmatprep.subr.mxu0 0.0
    %2796 = vmatpush1.msra.mxu0 0.0
    %2797 = vmatprep.subr.mxu0 0.0
    %2798 = vmatpush1.msra.mxu0 0.0
    %2799 = vmatprep.subr.mxu0 0.0
    %2800 = vmatpush1.msra.mxu0 0.0
    %2801 = vmatprep.subr.mxu0 0.0
    %2802 = vmatpush1.msra.mxu0 0.0
    %2803 = vmatprep.subr.mxu0 0.0
    %2804 = vmatpush1.msra.mxu0 0.0
    %2805 = vmatprep.subr.mxu0 0.0
    %2806 = vmatpush1.msra.mxu0 0.0
    %2807 = vmatprep.subr.mxu0 0.0
    %2808 = vmatpush1.msra.mxu0 0.0
    %2809 = vmatprep.subr.mxu0 0.0
    %2810 = vmatpush1.msra.mxu0 0.0
    %2811 = vmatprep.subr.mxu0 0.0
    %2812 = vmatpush1.msra.mxu0 0.0
    %2813 = vmatprep.subr.mxu0 0.0
    %2814 = vmatpush1.msra.mxu0 0.0
    %2815 = vmatprep.subr.mxu0 0.0
    %2816 = vmatpush1.msra.mxu0 0.0
    %2817 = vmatprep.subr.mxu0 0.0
    %2818 = vmatpush1.msra.mxu0 0.0
    %2819 = vmatprep.subr.mxu0 0.0
    %v2820 = vand.u32 %v103, 4294901760
    %v2821 = vsub.f32 %v103, %v2820
    %v2822 = vand.u32 %v2821, 4294901760
    %v2823 = vsub.f32 %v2821, %v2822
    %v2824 = vand.u32 %v2823, 4294901760
    %2825 = vmatpush1.msra.mxu0 %v2824
    %2826 = vmatprep.subr.mxu0 0.0
    %v2827 = vand.u32 %v102, 4294901760
    %v2828 = vsub.f32 %v102, %v2827
    %v2829 = vand.u32 %v2828, 4294901760
    %v2830 = vsub.f32 %v2828, %v2829
    %v2831 = vand.u32 %v2830, 4294901760
    %2832 = vmatpush1.msra.mxu0 %v2831
    %2833 = vmatprep.subr.mxu0 0.0
    %v2834 = vand.u32 %v101, 4294901760
    %v2835 = vsub.f32 %v101, %v2834
    %v2836 = vand.u32 %v2835, 4294901760
    %v2837 = vsub.f32 %v2835, %v2836
    %v2838 = vand.u32 %v2837, 4294901760
    %2839 = vmatpush1.msra.mxu0 %v2838
    %2840 = vmatprep.subr.mxu0 0.0
    %v2841 = vand.u32 %v100, 4294901760
    %v2842 = vsub.f32 %v100, %v2841
    %v2843 = vand.u32 %v2842, 4294901760
    %v2844 = vsub.f32 %v2842, %v2843
    %v2845 = vand.u32 %v2844, 4294901760
    %2846 = vmatpush1.msra.mxu0 %v2845
    %2847 = vmatprep.subr.mxu0 0.0
    %2848 = vmatpush2.msra.mxu0 0.0
    %2849 = vmatprep.subr.mxu0 0.0
    %2850 = vmatpush2.msra.mxu0 0.0
    %2851 = vmatprep.subr.mxu0 0.0
    %2852 = vmatpush2.msra.mxu0 0.0
    %2853 = vmatprep.subr.mxu0 0.0
    %2854 = vmatpush2.msra.mxu0 0.0
    %2855 = vmatprep.subr.mxu0 0.0
    %2856 = vmatpush2.msra.mxu0 0.0
    %2857 = vmatprep.subr.mxu0 0.0
    %2858 = vmatpush2.msra.mxu0 0.0
    %2859 = vmatprep.subr.mxu0 0.0
    %2860 = vmatpush2.msra.mxu0 0.0
    %2861 = vmatprep.subr.mxu0 0.0
    %2862 = vmatpush2.msra.mxu0 0.0
    %2863 = vmatprep.subr.mxu0 0.0
    %2864 = vmatpush2.msra.mxu0 0.0
    %2865 = vmatprep.subr.mxu0 0.0
    %2866 = vmatpush2.msra.mxu0 0.0
    %2867 = vmatprep.subr.mxu0 0.0
    %2868 = vmatpush2.msra.mxu0 0.0
    %2869 = vmatprep.subr.mxu0 0.0
    %2870 = vmatpush2.msra.mxu0 0.0
    %2871 = vmatprep.subr.mxu0 0.0
    %2872 = vmatpush2.msra.mxu0 0.0
    %2873 = vmatprep.subr.mxu0 0.0
    %2874 = vmatpush2.msra.mxu0 0.0
    %2875 = vmatprep.subr.mxu0 0.0
    %2876 = vmatpush2.msra.mxu0 0.0
    %2877 = vmatprep.subr.mxu0 0.0
    %2878 = vmatpush2.msra.mxu0 0.0
    %2879 = vmatprep.mubr.f32.mxu0 0.0
    %v2880 = vand.u32 %v2714, 4294901760
    %2881 = vmatmul.mubr.f32.gmra.mxu0 %v2880
    %v2882 = vpop.f32.mrf.mxu0
    %v2883 = vadd.f32 %v2792, %v2882
    %v2884 = vpop.f32.mrf.mxu0
    %2885 = vdwg.mxu0
    %2886 = vmatprep.subr.mxu0 0.0
    %2887 = vmatpush1.msra.mxu0 0.0
    %2888 = vmatprep.subr.mxu0 0.0
    %2889 = vmatpush1.msra.mxu0 0.0
    %2890 = vmatprep.subr.mxu0 0.0
    %2891 = vmatpush1.msra.mxu0 0.0
    %2892 = vmatprep.subr.mxu0 0.0
    %2893 = vmatpush1.msra.mxu0 0.0
    %2894 = vmatprep.subr.mxu0 0.0
    %2895 = vmatpush1.msra.mxu0 0.0
    %2896 = vmatprep.subr.mxu0 0.0
    %2897 = vmatpush1.msra.mxu0 0.0
    %2898 = vmatprep.subr.mxu0 0.0
    %2899 = vmatpush1.msra.mxu0 0.0
    %2900 = vmatprep.subr.mxu0 0.0
    %2901 = vmatpush1.msra.mxu0 0.0
    %2902 = vmatprep.subr.mxu0 0.0
    %2903 = vmatpush1.msra.mxu0 0.0
    %2904 = vmatprep.subr.mxu0 0.0
    %2905 = vmatpush1.msra.mxu0 0.0
    %2906 = vmatprep.subr.mxu0 0.0
    %2907 = vmatpush1.msra.mxu0 0.0
    %2908 = vmatprep.subr.mxu0 0.0
    %2909 = vmatpush1.msra.mxu0 0.0
    %2910 = vmatprep.subr.mxu0 0.0
    %v2911 = vand.u32 %v103, 4294901760
    %v2912 = vsub.f32 %v103, %v2911
    %2913 = vmatpush1.msra.mxu0 %v2912
    %2914 = vmatprep.subr.mxu0 0.0
    %v2915 = vand.u32 %v102, 4294901760
    %v2916 = vsub.f32 %v102, %v2915
    %2917 = vmatpush1.msra.mxu0 %v2916
    %2918 = vmatprep.subr.mxu0 0.0
    %v2919 = vand.u32 %v101, 4294901760
    %v2920 = vsub.f32 %v101, %v2919
    %2921 = vmatpush1.msra.mxu0 %v2920
    %2922 = vmatprep.subr.mxu0 0.0
    %v2923 = vand.u32 %v100, 4294901760
    %v2924 = vsub.f32 %v100, %v2923
    %2925 = vmatpush1.msra.mxu0 %v2924
    %2926 = vmatprep.subr.mxu0 0.0
    %2927 = vmatpush2.msra.mxu0 0.0
    %2928 = vmatprep.subr.mxu0 0.0
    %2929 = vmatpush2.msra.mxu0 0.0
    %2930 = vmatprep.subr.mxu0 0.0
    %2931 = vmatpush2.msra.mxu0 0.0
    %2932 = vmatprep.subr.mxu0 0.0
    %2933 = vmatpush2.msra.mxu0 0.0
    %2934 = vmatprep.subr.mxu0 0.0
    %2935 = vmatpush2.msra.mxu0 0.0
    %2936 = vmatprep.subr.mxu0 0.0
    %2937 = vmatpush2.msra.mxu0 0.0
    %2938 = vmatprep.subr.mxu0 0.0
    %2939 = vmatpush2.msra.mxu0 0.0
    %2940 = vmatprep.subr.mxu0 0.0
    %2941 = vmatpush2.msra.mxu0 0.0
    %2942 = vmatprep.subr.mxu0 0.0
    %2943 = vmatpush2.msra.mxu0 0.0
    %2944 = vmatprep.subr.mxu0 0.0
    %2945 = vmatpush2.msra.mxu0 0.0
    %2946 = vmatprep.subr.mxu0 0.0
    %2947 = vmatpush2.msra.mxu0 0.0
    %2948 = vmatprep.subr.mxu0 0.0
    %2949 = vmatpush2.msra.mxu0 0.0
    %2950 = vmatprep.subr.mxu0 0.0
    %2951 = vmatpush2.msra.mxu0 0.0
    %2952 = vmatprep.subr.mxu0 0.0
    %2953 = vmatpush2.msra.mxu0 0.0
    %2954 = vmatprep.subr.mxu0 0.0
    %2955 = vmatpush2.msra.mxu0 0.0
    %2956 = vmatprep.subr.mxu0 0.0
    %2957 = vmatpush2.msra.mxu0 0.0
    %2958 = vmatprep.mubr.f32.mxu0 0.0
    %v2959 = vand.u32 %v2714, 4294901760
    %v2960 = vsub.f32 %v2714, %v2959
    %2961 = vmatmul.mubr.f32.gmra.mxu0 %v2960
    %v2962 = vpop.f32.mrf.mxu0
    %v2963 = vadd.f32 %v2883, %v2962
    %v2964 = vpop.f32.mrf.mxu0
    %2965 = vdwg.mxu0
    %2966 = vmatprep.subr.mxu0 0.0
    %2967 = vmatpush1.msra.mxu0 0.0
    %2968 = vmatprep.subr.mxu0 0.0
    %2969 = vmatpush1.msra.mxu0 0.0
    %2970 = vmatprep.subr.mxu0 0.0
    %2971 = vmatpush1.msra.mxu0 0.0
    %2972 = vmatprep.subr.mxu0 0.0
    %2973 = vmatpush1.msra.mxu0 0.0
    %2974 = vmatprep.subr.mxu0 0.0
    %2975 = vmatpush1.msra.mxu0 0.0
    %2976 = vmatprep.subr.mxu0 0.0
    %2977 = vmatpush1.msra.mxu0 0.0
    %2978 = vmatprep.subr.mxu0 0.0
    %2979 = vmatpush1.msra.mxu0 0.0
    %2980 = vmatprep.subr.mxu0 0.0
    %2981 = vmatpush1.msra.mxu0 0.0
    %2982 = vmatprep.subr.mxu0 0.0
    %2983 = vmatpush1.msra.mxu0 0.0
    %2984 = vmatprep.subr.mxu0 0.0
    %2985 = vmatpush1.msra.mxu0 0.0
    %2986 = vmatprep.subr.mxu0 0.0
    %2987 = vmatpush1.msra.mxu0 0.0
    %2988 = vmatprep.subr.mxu0 0.0
    %2989 = vmatpush1.msra.mxu0 0.0
    %2990 = vmatprep.subr.mxu0 0.0
    %v2991 = vand.u32 %v103, 4294901760
    %2992 = vmatpush1.msra.mxu0 %v2991
    %2993 = vmatprep.subr.mxu0 0.0
    %v2994 = vand.u32 %v102, 4294901760
    %2995 = vmatpush1.msra.mxu0 %v2994
    %2996 = vmatprep.subr.mxu0 0.0
    %v2997 = vand.u32 %v101, 4294901760
    %2998 = vmatpush1.msra.mxu0 %v2997
    %2999 = vmatprep.subr.mxu0 0.0
    %v3000 = vand.u32 %v100, 4294901760
    %3001 = vmatpush1.msra.mxu0 %v3000
    %3002 = vmatprep.subr.mxu0 0.0
    %3003 = vmatpush2.msra.mxu0 0.0
    %3004 = vmatprep.subr.mxu0 0.0
    %3005 = vmatpush2.msra.mxu0 0.0
    %3006 = vmatprep.subr.mxu0 0.0
    %3007 = vmatpush2.msra.mxu0 0.0
    %3008 = vmatprep.subr.mxu0 0.0
    %3009 = vmatpush2.msra.mxu0 0.0
    %3010 = vmatprep.subr.mxu0 0.0
    %3011 = vmatpush2.msra.mxu0 0.0
    %3012 = vmatprep.subr.mxu0 0.0
    %3013 = vmatpush2.msra.mxu0 0.0
    %3014 = vmatprep.subr.mxu0 0.0
    %3015 = vmatpush2.msra.mxu0 0.0
    %3016 = vmatprep.subr.mxu0 0.0
    %3017 = vmatpush2.msra.mxu0 0.0
    %3018 = vmatprep.subr.mxu0 0.0
    %3019 = vmatpush2.msra.mxu0 0.0
    %3020 = vmatprep.subr.mxu0 0.0
    %3021 = vmatpush2.msra.mxu0 0.0
    %3022 = vmatprep.subr.mxu0 0.0
    %3023 = vmatpush2.msra.mxu0 0.0
    %3024 = vmatprep.subr.mxu0 0.0
    %3025 = vmatpush2.msra.mxu0 0.0
    %3026 = vmatprep.subr.mxu0 0.0
    %3027 = vmatpush2.msra.mxu0 0.0
    %3028 = vmatprep.subr.mxu0 0.0
    %3029 = vmatpush2.msra.mxu0 0.0
    %3030 = vmatprep.subr.mxu0 0.0
    %3031 = vmatpush2.msra.mxu0 0.0
    %3032 = vmatprep.subr.mxu0 0.0
    %3033 = vmatpush2.msra.mxu0 0.0
    %3034 = vmatprep.mubr.f32.mxu0 0.0
    %v3035 = vand.u32 %v2714, 4294901760
    %v3036 = vsub.f32 %v2714, %v3035
    %v3037 = vand.u32 %v3036, 4294901760
    %3038 = vmatmul.mubr.f32.gmra.mxu0 %v3037
    %v3039 = vpop.f32.mrf.mxu0
    %v3040 = vadd.f32 %v2963, %v3039
    %v3041 = vpop.f32.mrf.mxu0
    %3042 = vdwg.mxu0
    %3043 = vmatprep.subr.mxu0 0.0
    %3044 = vmatpush1.msra.mxu0 0.0
    %3045 = vmatprep.subr.mxu0 0.0
    %3046 = vmatpush1.msra.mxu0 0.0
    %3047 = vmatprep.subr.mxu0 0.0
    %3048 = vmatpush1.msra.mxu0 0.0
    %3049 = vmatprep.subr.mxu0 0.0
    %3050 = vmatpush1.msra.mxu0 0.0
    %3051 = vmatprep.subr.mxu0 0.0
    %3052 = vmatpush1.msra.mxu0 0.0
    %3053 = vmatprep.subr.mxu0 0.0
    %3054 = vmatpush1.msra.mxu0 0.0
    %3055 = vmatprep.subr.mxu0 0.0
    %3056 = vmatpush1.msra.mxu0 0.0
    %3057 = vmatprep.subr.mxu0 0.0
    %3058 = vmatpush1.msra.mxu0 0.0
    %3059 = vmatprep.subr.mxu0 0.0
    %3060 = vmatpush1.msra.mxu0 0.0
    %3061 = vmatprep.subr.mxu0 0.0
    %3062 = vmatpush1.msra.mxu0 0.0
    %3063 = vmatprep.subr.mxu0 0.0
    %3064 = vmatpush1.msra.mxu0 0.0
    %3065 = vmatprep.subr.mxu0 0.0
    %3066 = vmatpush1.msra.mxu0 0.0
    %3067 = vmatprep.subr.mxu0 0.0
    %v3068 = vand.u32 %v103, 4294901760
    %v3069 = vsub.f32 %v103, %v3068
    %v3070 = vand.u32 %v3069, 4294901760
    %3071 = vmatpush1.msra.mxu0 %v3070
    %3072 = vmatprep.subr.mxu0 0.0
    %v3073 = vand.u32 %v102, 4294901760
    %v3074 = vsub.f32 %v102, %v3073
    %v3075 = vand.u32 %v3074, 4294901760
    %3076 = vmatpush1.msra.mxu0 %v3075
    %3077 = vmatprep.subr.mxu0 0.0
    %v3078 = vand.u32 %v101, 4294901760
    %v3079 = vsub.f32 %v101, %v3078
    %v3080 = vand.u32 %v3079, 4294901760
    %3081 = vmatpush1.msra.mxu0 %v3080
    %3082 = vmatprep.subr.mxu0 0.0
    %v3083 = vand.u32 %v100, 4294901760
    %v3084 = vsub.f32 %v100, %v3083
    %v3085 = vand.u32 %v3084, 4294901760
    %3086 = vmatpush1.msra.mxu0 %v3085
    %3087 = vmatprep.subr.mxu0 0.0
    %3088 = vmatpush2.msra.mxu0 0.0
    %3089 = vmatprep.subr.mxu0 0.0
    %3090 = vmatpush2.msra.mxu0 0.0
    %3091 = vmatprep.subr.mxu0 0.0
    %3092 = vmatpush2.msra.mxu0 0.0
    %3093 = vmatprep.subr.mxu0 0.0
    %3094 = vmatpush2.msra.mxu0 0.0
    %3095 = vmatprep.subr.mxu0 0.0
    %3096 = vmatpush2.msra.mxu0 0.0
    %3097 = vmatprep.subr.mxu0 0.0
    %3098 = vmatpush2.msra.mxu0 0.0
    %3099 = vmatprep.subr.mxu0 0.0
    %3100 = vmatpush2.msra.mxu0 0.0
    %3101 = vmatprep.subr.mxu0 0.0
    %3102 = vmatpush2.msra.mxu0 0.0
    %3103 = vmatprep.subr.mxu0 0.0
    %3104 = vmatpush2.msra.mxu0 0.0
    %3105 = vmatprep.subr.mxu0 0.0
    %3106 = vmatpush2.msra.mxu0 0.0
    %3107 = vmatprep.subr.mxu0 0.0
    %3108 = vmatpush2.msra.mxu0 0.0
    %3109 = vmatprep.subr.mxu0 0.0
    %3110 = vmatpush2.msra.mxu0 0.0
    %3111 = vmatprep.subr.mxu0 0.0
    %3112 = vmatpush2.msra.mxu0 0.0
    %3113 = vmatprep.subr.mxu0 0.0
    %3114 = vmatpush2.msra.mxu0 0.0
    %3115 = vmatprep.subr.mxu0 0.0
    %3116 = vmatpush2.msra.mxu0 0.0
    %3117 = vmatprep.subr.mxu0 0.0
    %3118 = vmatpush2.msra.mxu0 0.0
    %3119 = vmatprep.mubr.f32.mxu0 0.0
    %v3120 = vand.u32 %v2714, 4294901760
    %3121 = vmatmul.mubr.f32.gmra.mxu0 %v3120
    %v3122 = vpop.f32.mrf.mxu0
    %v3123 = vadd.f32 %v3040, %v3122
    %v3124 = vpop.f32.mrf.mxu0
    %3125 = vdwg.mxu0
    %3126 = vmatprep.subr.mxu0 0.0
    %3127 = vmatpush1.msra.mxu0 0.0
    %3128 = vmatprep.subr.mxu0 0.0
    %3129 = vmatpush1.msra.mxu0 0.0
    %3130 = vmatprep.subr.mxu0 0.0
    %3131 = vmatpush1.msra.mxu0 0.0
    %3132 = vmatprep.subr.mxu0 0.0
    %3133 = vmatpush1.msra.mxu0 0.0
    %3134 = vmatprep.subr.mxu0 0.0
    %3135 = vmatpush1.msra.mxu0 0.0
    %3136 = vmatprep.subr.mxu0 0.0
    %3137 = vmatpush1.msra.mxu0 0.0
    %3138 = vmatprep.subr.mxu0 0.0
    %3139 = vmatpush1.msra.mxu0 0.0
    %3140 = vmatprep.subr.mxu0 0.0
    %3141 = vmatpush1.msra.mxu0 0.0
    %3142 = vmatprep.subr.mxu0 0.0
    %3143 = vmatpush1.msra.mxu0 0.0
    %3144 = vmatprep.subr.mxu0 0.0
    %3145 = vmatpush1.msra.mxu0 0.0
    %3146 = vmatprep.subr.mxu0 0.0
    %3147 = vmatpush1.msra.mxu0 0.0
    %3148 = vmatprep.subr.mxu0 0.0
    %3149 = vmatpush1.msra.mxu0 0.0
    %3150 = vmatprep.subr.mxu0 0.0
    %v3151 = vand.u32 %v103, 4294901760
    %3152 = vmatpush1.msra.mxu0 %v3151
    %3153 = vmatprep.subr.mxu0 0.0
    %v3154 = vand.u32 %v102, 4294901760
    %3155 = vmatpush1.msra.mxu0 %v3154
    %3156 = vmatprep.subr.mxu0 0.0
    %v3157 = vand.u32 %v101, 4294901760
    %3158 = vmatpush1.msra.mxu0 %v3157
    %3159 = vmatprep.subr.mxu0 0.0
    %v3160 = vand.u32 %v100, 4294901760
    %3161 = vmatpush1.msra.mxu0 %v3160
    %3162 = vmatprep.subr.mxu0 0.0
    %3163 = vmatpush2.msra.mxu0 0.0
    %3164 = vmatprep.subr.mxu0 0.0
    %3165 = vmatpush2.msra.mxu0 0.0
    %3166 = vmatprep.subr.mxu0 0.0
    %3167 = vmatpush2.msra.mxu0 0.0
    %3168 = vmatprep.subr.mxu0 0.0
    %3169 = vmatpush2.msra.mxu0 0.0
    %3170 = vmatprep.subr.mxu0 0.0
    %3171 = vmatpush2.msra.mxu0 0.0
    %3172 = vmatprep.subr.mxu0 0.0
    %3173 = vmatpush2.msra.mxu0 0.0
    %3174 = vmatprep.subr.mxu0 0.0
    %3175 = vmatpush2.msra.mxu0 0.0
    %3176 = vmatprep.subr.mxu0 0.0
    %3177 = vmatpush2.msra.mxu0 0.0
    %3178 = vmatprep.subr.mxu0 0.0
    %3179 = vmatpush2.msra.mxu0 0.0
    %3180 = vmatprep.subr.mxu0 0.0
    %3181 = vmatpush2.msra.mxu0 0.0
    %3182 = vmatprep.subr.mxu0 0.0
    %3183 = vmatpush2.msra.mxu0 0.0
    %3184 = vmatprep.subr.mxu0 0.0
    %3185 = vmatpush2.msra.mxu0 0.0
    %3186 = vmatprep.subr.mxu0 0.0
    %3187 = vmatpush2.msra.mxu0 0.0
    %3188 = vmatprep.subr.mxu0 0.0
    %3189 = vmatpush2.msra.mxu0 0.0
    %3190 = vmatprep.subr.mxu0 0.0
    %3191 = vmatpush2.msra.mxu0 0.0
    %3192 = vmatprep.subr.mxu0 0.0
    %3193 = vmatpush2.msra.mxu0 0.0
    %3194 = vmatprep.mubr.f32.mxu0 0.0
    %v3195 = vand.u32 %v2714, 4294901760
    %3196 = vmatmul.mubr.f32.gmra.mxu0 %v3195
    %v3197 = vpop.f32.mrf.mxu0
    %v3198 = vadd.f32 %v3123, %v3197
    %v3199 = vpop.f32.mrf.mxu0
    %3200 = vdwg.mxu0
    %v3201 = vadd.f32 %v2713, %v3198
    %v3202 = vtanh.pop %v3201
    %v3203 = vmul.f32 %v3202, 0.5
    %v3204 = vadd.f32 %v3203, 0.5
    %v3205 = vsel %vm119, %v3202, %v3204
    %v3206 = vmul.f32 %v3205, %v2700
    %3208 = vrot.lane.b32.xlu0 %v3205, 64
    %v3209 = vpop.permute.xlu0 %3208
    %v3211 = vmul.f32 %v3205, %v3209
    %3213 = vrot.lane.b32.xlu0 %v3211, 32
    %v3214 = vpop.permute.xlu0 %3213
    %v3216 = vadd.f32 %v3206, %v3214
    %v3217 = vtanh.pop %v3216
    %3219 = vrot.lane.b32.xlu0 %v3217, 64
    %v3220 = vpop.permute.xlu0 %3219
    %v3222 = vmul.f32 %v3205, %v3220
    %3224 = vrot.lane.b32.xlu0 %v3222, 32
    %v3225 = vpop.permute.xlu0 %3224
    %s3227 = scalar_lea.vmem [#allocation3], 5
    %3228 = vst.msk [vmem:[%s3227] sm:$0x1] %vm647, %v3225
    %v3229 = vld [vmem:[%s93] sm:$0x1]
    %v3230 = vsel %vm124, %v3225, 0
    %3232 = vmatprep.subr.mxu0 0.0
    %3233 = vmatpush1.msra.mxu0 0.0
    %3234 = vmatprep.subr.mxu0 0.0
    %3235 = vmatpush1.msra.mxu0 0.0
    %3236 = vmatprep.subr.mxu0 0.0
    %3237 = vmatpush1.msra.mxu0 0.0
    %3238 = vmatprep.subr.mxu0 0.0
    %3239 = vmatpush1.msra.mxu0 0.0
    %3240 = vmatprep.subr.mxu0 0.0
    %3241 = vmatpush1.msra.mxu0 0.0
    %3242 = vmatprep.subr.mxu0 0.0
    %3243 = vmatpush1.msra.mxu0 0.0
    %3244 = vmatprep.subr.mxu0 0.0
    %3245 = vmatpush1.msra.mxu0 0.0
    %3246 = vmatprep.subr.mxu0 0.0
    %3247 = vmatpush1.msra.mxu0 0.0
    %3248 = vmatprep.subr.mxu0 0.0
    %3249 = vmatpush1.msra.mxu0 0.0
    %3250 = vmatprep.subr.mxu0 0.0
    %3251 = vmatpush1.msra.mxu0 0.0
    %3252 = vmatprep.subr.mxu0 0.0
    %3253 = vmatpush1.msra.mxu0 0.0
    %3254 = vmatprep.subr.mxu0 0.0
    %3255 = vmatpush1.msra.mxu0 0.0
    %3256 = vmatprep.subr.mxu0 0.0
    %v3257 = vand.u32 %v103, 4294901760
    %3258 = vmatpush1.msra.mxu0 %v3257
    %3259 = vmatprep.subr.mxu0 0.0
    %v3260 = vand.u32 %v102, 4294901760
    %3261 = vmatpush1.msra.mxu0 %v3260
    %3262 = vmatprep.subr.mxu0 0.0
    %v3263 = vand.u32 %v101, 4294901760
    %3264 = vmatpush1.msra.mxu0 %v3263
    %3265 = vmatprep.subr.mxu0 0.0
    %v3266 = vand.u32 %v100, 4294901760
    %3267 = vmatpush1.msra.mxu0 %v3266
    %3268 = vmatprep.subr.mxu0 0.0
    %3269 = vmatpush2.msra.mxu0 0.0
    %3270 = vmatprep.subr.mxu0 0.0
    %3271 = vmatpush2.msra.mxu0 0.0
    %3272 = vmatprep.subr.mxu0 0.0
    %3273 = vmatpush2.msra.mxu0 0.0
    %3274 = vmatprep.subr.mxu0 0.0
    %3275 = vmatpush2.msra.mxu0 0.0
    %3276 = vmatprep.subr.mxu0 0.0
    %3277 = vmatpush2.msra.mxu0 0.0
    %3278 = vmatprep.subr.mxu0 0.0
    %3279 = vmatpush2.msra.mxu0 0.0
    %3280 = vmatprep.subr.mxu0 0.0
    %3281 = vmatpush2.msra.mxu0 0.0
    %3282 = vmatprep.subr.mxu0 0.0
    %3283 = vmatpush2.msra.mxu0 0.0
    %3284 = vmatprep.subr.mxu0 0.0
    %3285 = vmatpush2.msra.mxu0 0.0
    %3286 = vmatprep.subr.mxu0 0.0
    %3287 = vmatpush2.msra.mxu0 0.0
    %3288 = vmatprep.subr.mxu0 0.0
    %3289 = vmatpush2.msra.mxu0 0.0
    %3290 = vmatprep.subr.mxu0 0.0
    %3291 = vmatpush2.msra.mxu0 0.0
    %3292 = vmatprep.subr.mxu0 0.0
    %3293 = vmatpush2.msra.mxu0 0.0
    %3294 = vmatprep.subr.mxu0 0.0
    %3295 = vmatpush2.msra.mxu0 0.0
    %3296 = vmatprep.subr.mxu0 0.0
    %3297 = vmatpush2.msra.mxu0 0.0
    %3298 = vmatprep.subr.mxu0 0.0
    %3299 = vmatpush2.msra.mxu0 0.0
    %3300 = vmatprep.mubr.f32.mxu0 0.0
    %v3301 = vand.u32 %v3230, 4294901760
    %v3302 = vsub.f32 %v3230, %v3301
    %v3303 = vand.u32 %v3302, 4294901760
    %v3304 = vsub.f32 %v3302, %v3303
    %v3305 = vand.u32 %v3304, 4294901760
    %3306 = vmatmul.mubr.f32.gmra.mxu0 %v3305
    %v3307 = vpop.f32.mrf.mxu0
    %v3308 = vadd.f32 0.0, %v3307
    %v3309 = vpop.f32.mrf.mxu0
    %3310 = vdwg.mxu0
    %3311 = vmatprep.subr.mxu0 0.0
    %3312 = vmatpush1.msra.mxu0 0.0
    %3313 = vmatprep.subr.mxu0 0.0
    %3314 = vmatpush1.msra.mxu0 0.0
    %3315 = vmatprep.subr.mxu0 0.0
    %3316 = vmatpush1.msra.mxu0 0.0
    %3317 = vmatprep.subr.mxu0 0.0
    %3318 = vmatpush1.msra.mxu0 0.0
    %3319 = vmatprep.subr.mxu0 0.0
    %3320 = vmatpush1.msra.mxu0 0.0
    %3321 = vmatprep.subr.mxu0 0.0
    %3322 = vmatpush1.msra.mxu0 0.0
    %3323 = vmatprep.subr.mxu0 0.0
    %3324 = vmatpush1.msra.mxu0 0.0
    %3325 = vmatprep.subr.mxu0 0.0
    %3326 = vmatpush1.msra.mxu0 0.0
    %3327 = vmatprep.subr.mxu0 0.0
    %3328 = vmatpush1.msra.mxu0 0.0
    %3329 = vmatprep.subr.mxu0 0.0
    %3330 = vmatpush1.msra.mxu0 0.0
    %3331 = vmatprep.subr.mxu0 0.0
    %3332 = vmatpush1.msra.mxu0 0.0
    %3333 = vmatprep.subr.mxu0 0.0
    %3334 = vmatpush1.msra.mxu0 0.0
    %3335 = vmatprep.subr.mxu0 0.0
    %v3336 = vand.u32 %v103, 4294901760
    %v3337 = vsub.f32 %v103, %v3336
    %v3338 = vand.u32 %v3337, 4294901760
    %v3339 = vsub.f32 %v3337, %v3338
    %v3340 = vand.u32 %v3339, 4294901760
    %3341 = vmatpush1.msra.mxu0 %v3340
    %3342 = vmatprep.subr.mxu0 0.0
    %v3343 = vand.u32 %v102, 4294901760
    %v3344 = vsub.f32 %v102, %v3343
    %v3345 = vand.u32 %v3344, 4294901760
    %v3346 = vsub.f32 %v3344, %v3345
    %v3347 = vand.u32 %v3346, 4294901760
    %3348 = vmatpush1.msra.mxu0 %v3347
    %3349 = vmatprep.subr.mxu0 0.0
    %v3350 = vand.u32 %v101, 4294901760
    %v3351 = vsub.f32 %v101, %v3350
    %v3352 = vand.u32 %v3351, 4294901760
    %v3353 = vsub.f32 %v3351, %v3352
    %v3354 = vand.u32 %v3353, 4294901760
    %3355 = vmatpush1.msra.mxu0 %v3354
    %3356 = vmatprep.subr.mxu0 0.0
    %v3357 = vand.u32 %v100, 4294901760
    %v3358 = vsub.f32 %v100, %v3357
    %v3359 = vand.u32 %v3358, 4294901760
    %v3360 = vsub.f32 %v3358, %v3359
    %v3361 = vand.u32 %v3360, 4294901760
    %3362 = vmatpush1.msra.mxu0 %v3361
    %3363 = vmatprep.subr.mxu0 0.0
    %3364 = vmatpush2.msra.mxu0 0.0
    %3365 = vmatprep.subr.mxu0 0.0
    %3366 = vmatpush2.msra.mxu0 0.0
    %3367 = vmatprep.subr.mxu0 0.0
    %3368 = vmatpush2.msra.mxu0 0.0
    %3369 = vmatprep.subr.mxu0 0.0
    %3370 = vmatpush2.msra.mxu0 0.0
    %3371 = vmatprep.subr.mxu0 0.0
    %3372 = vmatpush2.msra.mxu0 0.0
    %3373 = vmatprep.subr.mxu0 0.0
    %3374 = vmatpush2.msra.mxu0 0.0
    %3375 = vmatprep.subr.mxu0 0.0
    %3376 = vmatpush2.msra.mxu0 0.0
    %3377 = vmatprep.subr.mxu0 0.0
    %3378 = vmatpush2.msra.mxu0 0.0
    %3379 = vmatprep.subr.mxu0 0.0
    %3380 = vmatpush2.msra.mxu0 0.0
    %3381 = vmatprep.subr.mxu0 0.0
    %3382 = vmatpush2.msra.mxu0 0.0
    %3383 = vmatprep.subr.mxu0 0.0
    %3384 = vmatpush2.msra.mxu0 0.0
    %3385 = vmatprep.subr.mxu0 0.0
    %3386 = vmatpush2.msra.mxu0 0.0
    %3387 = vmatprep.subr.mxu0 0.0
    %3388 = vmatpush2.msra.mxu0 0.0
    %3389 = vmatprep.subr.mxu0 0.0
    %3390 = vmatpush2.msra.mxu0 0.0
    %3391 = vmatprep.subr.mxu0 0.0
    %3392 = vmatpush2.msra.mxu0 0.0
    %3393 = vmatprep.subr.mxu0 0.0
    %3394 = vmatpush2.msra.mxu0 0.0
    %3395 = vmatprep.mubr.f32.mxu0 0.0
    %v3396 = vand.u32 %v3230, 4294901760
    %3397 = vmatmul.mubr.f32.gmra.mxu0 %v3396
    %v3398 = vpop.f32.mrf.mxu0
    %v3399 = vadd.f32 %v3308, %v3398
    %v3400 = vpop.f32.mrf.mxu0
    %3401 = vdwg.mxu0
    %3402 = vmatprep.subr.mxu0 0.0
    %3403 = vmatpush1.msra.mxu0 0.0
    %3404 = vmatprep.subr.mxu0 0.0
    %3405 = vmatpush1.msra.mxu0 0.0
    %3406 = vmatprep.subr.mxu0 0.0
    %3407 = vmatpush1.msra.mxu0 0.0
    %3408 = vmatprep.subr.mxu0 0.0
    %3409 = vmatpush1.msra.mxu0 0.0
    %3410 = vmatprep.subr.mxu0 0.0
    %3411 = vmatpush1.msra.mxu0 0.0
    %3412 = vmatprep.subr.mxu0 0.0
    %3413 = vmatpush1.msra.mxu0 0.0
    %3414 = vmatprep.subr.mxu0 0.0
    %3415 = vmatpush1.msra.mxu0 0.0
    %3416 = vmatprep.subr.mxu0 0.0
    %3417 = vmatpush1.msra.mxu0 0.0
    %3418 = vmatprep.subr.mxu0 0.0
    %3419 = vmatpush1.msra.mxu0 0.0
    %3420 = vmatprep.subr.mxu0 0.0
    %3421 = vmatpush1.msra.mxu0 0.0
    %3422 = vmatprep.subr.mxu0 0.0
    %3423 = vmatpush1.msra.mxu0 0.0
    %3424 = vmatprep.subr.mxu0 0.0
    %3425 = vmatpush1.msra.mxu0 0.0
    %3426 = vmatprep.subr.mxu0 0.0
    %v3427 = vand.u32 %v103, 4294901760
    %v3428 = vsub.f32 %v103, %v3427
    %3429 = vmatpush1.msra.mxu0 %v3428
    %3430 = vmatprep.subr.mxu0 0.0
    %v3431 = vand.u32 %v102, 4294901760
    %v3432 = vsub.f32 %v102, %v3431
    %3433 = vmatpush1.msra.mxu0 %v3432
    %3434 = vmatprep.subr.mxu0 0.0
    %v3435 = vand.u32 %v101, 4294901760
    %v3436 = vsub.f32 %v101, %v3435
    %3437 = vmatpush1.msra.mxu0 %v3436
    %3438 = vmatprep.subr.mxu0 0.0
    %v3439 = vand.u32 %v100, 4294901760
    %v3440 = vsub.f32 %v100, %v3439
    %3441 = vmatpush1.msra.mxu0 %v3440
    %3442 = vmatprep.subr.mxu0 0.0
    %3443 = vmatpush2.msra.mxu0 0.0
    %3444 = vmatprep.subr.mxu0 0.0
    %3445 = vmatpush2.msra.mxu0 0.0
    %3446 = vmatprep.subr.mxu0 0.0
    %3447 = vmatpush2.msra.mxu0 0.0
    %3448 = vmatprep.subr.mxu0 0.0
    %3449 = vmatpush2.msra.mxu0 0.0
    %3450 = vmatprep.subr.mxu0 0.0
    %3451 = vmatpush2.msra.mxu0 0.0
    %3452 = vmatprep.subr.mxu0 0.0
    %3453 = vmatpush2.msra.mxu0 0.0
    %3454 = vmatprep.subr.mxu0 0.0
    %3455 = vmatpush2.msra.mxu0 0.0
    %3456 = vmatprep.subr.mxu0 0.0
    %3457 = vmatpush2.msra.mxu0 0.0
    %3458 = vmatprep.subr.mxu0 0.0
    %3459 = vmatpush2.msra.mxu0 0.0
    %3460 = vmatprep.subr.mxu0 0.0
    %3461 = vmatpush2.msra.mxu0 0.0
    %3462 = vmatprep.subr.mxu0 0.0
    %3463 = vmatpush2.msra.mxu0 0.0
    %3464 = vmatprep.subr.mxu0 0.0
    %3465 = vmatpush2.msra.mxu0 0.0
    %3466 = vmatprep.subr.mxu0 0.0
    %3467 = vmatpush2.msra.mxu0 0.0
    %3468 = vmatprep.subr.mxu0 0.0
    %3469 = vmatpush2.msra.mxu0 0.0
    %3470 = vmatprep.subr.mxu0 0.0
    %3471 = vmatpush2.msra.mxu0 0.0
    %3472 = vmatprep.subr.mxu0 0.0
    %3473 = vmatpush2.msra.mxu0 0.0
    %3474 = vmatprep.mubr.f32.mxu0 0.0
    %v3475 = vand.u32 %v3230, 4294901760
    %v3476 = vsub.f32 %v3230, %v3475
    %3477 = vmatmul.mubr.f32.gmra.mxu0 %v3476
    %v3478 = vpop.f32.mrf.mxu0
    %v3479 = vadd.f32 %v3399, %v3478
    %v3480 = vpop.f32.mrf.mxu0
    %3481 = vdwg.mxu0
    %3482 = vmatprep.subr.mxu0 0.0
    %3483 = vmatpush1.msra.mxu0 0.0
    %3484 = vmatprep.subr.mxu0 0.0
    %3485 = vmatpush1.msra.mxu0 0.0
    %3486 = vmatprep.subr.mxu0 0.0
    %3487 = vmatpush1.msra.mxu0 0.0
    %3488 = vmatprep.subr.mxu0 0.0
    %3489 = vmatpush1.msra.mxu0 0.0
    %3490 = vmatprep.subr.mxu0 0.0
    %3491 = vmatpush1.msra.mxu0 0.0
    %3492 = vmatprep.subr.mxu0 0.0
    %3493 = vmatpush1.msra.mxu0 0.0
    %3494 = vmatprep.subr.mxu0 0.0
    %3495 = vmatpush1.msra.mxu0 0.0
    %3496 = vmatprep.subr.mxu0 0.0
    %3497 = vmatpush1.msra.mxu0 0.0
    %3498 = vmatprep.subr.mxu0 0.0
    %3499 = vmatpush1.msra.mxu0 0.0
    %3500 = vmatprep.subr.mxu0 0.0
    %3501 = vmatpush1.msra.mxu0 0.0
    %3502 = vmatprep.subr.mxu0 0.0
    %3503 = vmatpush1.msra.mxu0 0.0
    %3504 = vmatprep.subr.mxu0 0.0
    %3505 = vmatpush1.msra.mxu0 0.0
    %3506 = vmatprep.subr.mxu0 0.0
    %v3507 = vand.u32 %v103, 4294901760
    %3508 = vmatpush1.msra.mxu0 %v3507
    %3509 = vmatprep.subr.mxu0 0.0
    %v3510 = vand.u32 %v102, 4294901760
    %3511 = vmatpush1.msra.mxu0 %v3510
    %3512 = vmatprep.subr.mxu0 0.0
    %v3513 = vand.u32 %v101, 4294901760
    %3514 = vmatpush1.msra.mxu0 %v3513
    %3515 = vmatprep.subr.mxu0 0.0
    %v3516 = vand.u32 %v100, 4294901760
    %3517 = vmatpush1.msra.mxu0 %v3516
    %3518 = vmatprep.subr.mxu0 0.0
    %3519 = vmatpush2.msra.mxu0 0.0
    %3520 = vmatprep.subr.mxu0 0.0
    %3521 = vmatpush2.msra.mxu0 0.0
    %3522 = vmatprep.subr.mxu0 0.0
    %3523 = vmatpush2.msra.mxu0 0.0
    %3524 = vmatprep.subr.mxu0 0.0
    %3525 = vmatpush2.msra.mxu0 0.0
    %3526 = vmatprep.subr.mxu0 0.0
    %3527 = vmatpush2.msra.mxu0 0.0
    %3528 = vmatprep.subr.mxu0 0.0
    %3529 = vmatpush2.msra.mxu0 0.0
    %3530 = vmatprep.subr.mxu0 0.0
    %3531 = vmatpush2.msra.mxu0 0.0
    %3532 = vmatprep.subr.mxu0 0.0
    %3533 = vmatpush2.msra.mxu0 0.0
    %3534 = vmatprep.subr.mxu0 0.0
    %3535 = vmatpush2.msra.mxu0 0.0
    %3536 = vmatprep.subr.mxu0 0.0
    %3537 = vmatpush2.msra.mxu0 0.0
    %3538 = vmatprep.subr.mxu0 0.0
    %3539 = vmatpush2.msra.mxu0 0.0
    %3540 = vmatprep.subr.mxu0 0.0
    %3541 = vmatpush2.msra.mxu0 0.0
    %3542 = vmatprep.subr.mxu0 0.0
    %3543 = vmatpush2.msra.mxu0 0.0
    %3544 = vmatprep.subr.mxu0 0.0
    %3545 = vmatpush2.msra.mxu0 0.0
    %3546 = vmatprep.subr.mxu0 0.0
    %3547 = vmatpush2.msra.mxu0 0.0
    %3548 = vmatprep.subr.mxu0 0.0
    %3549 = vmatpush2.msra.mxu0 0.0
    %3550 = vmatprep.mubr.f32.mxu0 0.0
    %v3551 = vand.u32 %v3230, 4294901760
    %v3552 = vsub.f32 %v3230, %v3551
    %v3553 = vand.u32 %v3552, 4294901760
    %3554 = vmatmul.mubr.f32.gmra.mxu0 %v3553
    %v3555 = vpop.f32.mrf.mxu0
    %v3556 = vadd.f32 %v3479, %v3555
    %v3557 = vpop.f32.mrf.mxu0
    %3558 = vdwg.mxu0
    %3559 = vmatprep.subr.mxu0 0.0
    %3560 = vmatpush1.msra.mxu0 0.0
    %3561 = vmatprep.subr.mxu0 0.0
    %3562 = vmatpush1.msra.mxu0 0.0
    %3563 = vmatprep.subr.mxu0 0.0
    %3564 = vmatpush1.msra.mxu0 0.0
    %3565 = vmatprep.subr.mxu0 0.0
    %3566 = vmatpush1.msra.mxu0 0.0
    %3567 = vmatprep.subr.mxu0 0.0
    %3568 = vmatpush1.msra.mxu0 0.0
    %3569 = vmatprep.subr.mxu0 0.0
    %3570 = vmatpush1.msra.mxu0 0.0
    %3571 = vmatprep.subr.mxu0 0.0
    %3572 = vmatpush1.msra.mxu0 0.0
    %3573 = vmatprep.subr.mxu0 0.0
    %3574 = vmatpush1.msra.mxu0 0.0
    %3575 = vmatprep.subr.mxu0 0.0
    %3576 = vmatpush1.msra.mxu0 0.0
    %3577 = vmatprep.subr.mxu0 0.0
    %3578 = vmatpush1.msra.mxu0 0.0
    %3579 = vmatprep.subr.mxu0 0.0
    %3580 = vmatpush1.msra.mxu0 0.0
    %3581 = vmatprep.subr.mxu0 0.0
    %3582 = vmatpush1.msra.mxu0 0.0
    %3583 = vmatprep.subr.mxu0 0.0
    %v3584 = vand.u32 %v103, 4294901760
    %v3585 = vsub.f32 %v103, %v3584
    %v3586 = vand.u32 %v3585, 4294901760
    %3587 = vmatpush1.msra.mxu0 %v3586
    %3588 = vmatprep.subr.mxu0 0.0
    %v3589 = vand.u32 %v102, 4294901760
    %v3590 = vsub.f32 %v102, %v3589
    %v3591 = vand.u32 %v3590, 4294901760
    %3592 = vmatpush1.msra.mxu0 %v3591
    %3593 = vmatprep.subr.mxu0 0.0
    %v3594 = vand.u32 %v101, 4294901760
    %v3595 = vsub.f32 %v101, %v3594
    %v3596 = vand.u32 %v3595, 4294901760
    %3597 = vmatpush1.msra.mxu0 %v3596
    %3598 = vmatprep.subr.mxu0 0.0
    %v3599 = vand.u32 %v100, 4294901760
    %v3600 = vsub.f32 %v100, %v3599
    %v3601 = vand.u32 %v3600, 4294901760
    %3602 = vmatpush1.msra.mxu0 %v3601
    %3603 = vmatprep.subr.mxu0 0.0
    %3604 = vmatpush2.msra.mxu0 0.0
    %3605 = vmatprep.subr.mxu0 0.0
    %3606 = vmatpush2.msra.mxu0 0.0
    %3607 = vmatprep.subr.mxu0 0.0
    %3608 = vmatpush2.msra.mxu0 0.0
    %3609 = vmatprep.subr.mxu0 0.0
    %3610 = vmatpush2.msra.mxu0 0.0
    %3611 = vmatprep.subr.mxu0 0.0
    %3612 = vmatpush2.msra.mxu0 0.0
    %3613 = vmatprep.subr.mxu0 0.0
    %3614 = vmatpush2.msra.mxu0 0.0
    %3615 = vmatprep.subr.mxu0 0.0
    %3616 = vmatpush2.msra.mxu0 0.0
    %3617 = vmatprep.subr.mxu0 0.0
    %3618 = vmatpush2.msra.mxu0 0.0
    %3619 = vmatprep.subr.mxu0 0.0
    %3620 = vmatpush2.msra.mxu0 0.0
    %3621 = vmatprep.subr.mxu0 0.0
    %3622 = vmatpush2.msra.mxu0 0.0
    %3623 = vmatprep.subr.mxu0 0.0
    %3624 = vmatpush2.msra.mxu0 0.0
    %3625 = vmatprep.subr.mxu0 0.0
    %3626 = vmatpush2.msra.mxu0 0.0
    %3627 = vmatprep.subr.mxu0 0.0
    %3628 = vmatpush2.msra.mxu0 0.0
    %3629 = vmatprep.subr.mxu0 0.0
    %3630 = vmatpush2.msra.mxu0 0.0
    %3631 = vmatprep.subr.mxu0 0.0
    %3632 = vmatpush2.msra.mxu0 0.0
    %3633 = vmatprep.subr.mxu0 0.0
    %3634 = vmatpush2.msra.mxu0 0.0
    %3635 = vmatprep.mubr.f32.mxu0 0.0
    %v3636 = vand.u32 %v3230, 4294901760
    %3637 = vmatmul.mubr.f32.gmra.mxu0 %v3636
    %v3638 = vpop.f32.mrf.mxu0
    %v3639 = vadd.f32 %v3556, %v3638
    %v3640 = vpop.f32.mrf.mxu0
    %3641 = vdwg.mxu0
    %3642 = vmatprep.subr.mxu0 0.0
    %3643 = vmatpush1.msra.mxu0 0.0
    %3644 = vmatprep.subr.mxu0 0.0
    %3645 = vmatpush1.msra.mxu0 0.0
    %3646 = vmatprep.subr.mxu0 0.0
    %3647 = vmatpush1.msra.mxu0 0.0
    %3648 = vmatprep.subr.mxu0 0.0
    %3649 = vmatpush1.msra.mxu0 0.0
    %3650 = vmatprep.subr.mxu0 0.0
    %3651 = vmatpush1.msra.mxu0 0.0
    %3652 = vmatprep.subr.mxu0 0.0
    %3653 = vmatpush1.msra.mxu0 0.0
    %3654 = vmatprep.subr.mxu0 0.0
    %3655 = vmatpush1.msra.mxu0 0.0
    %3656 = vmatprep.subr.mxu0 0.0
    %3657 = vmatpush1.msra.mxu0 0.0
    %3658 = vmatprep.subr.mxu0 0.0
    %3659 = vmatpush1.msra.mxu0 0.0
    %3660 = vmatprep.subr.mxu0 0.0
    %3661 = vmatpush1.msra.mxu0 0.0
    %3662 = vmatprep.subr.mxu0 0.0
    %3663 = vmatpush1.msra.mxu0 0.0
    %3664 = vmatprep.subr.mxu0 0.0
    %3665 = vmatpush1.msra.mxu0 0.0
    %3666 = vmatprep.subr.mxu0 0.0
    %v3667 = vand.u32 %v103, 4294901760
    %3668 = vmatpush1.msra.mxu0 %v3667
    %3669 = vmatprep.subr.mxu0 0.0
    %v3670 = vand.u32 %v102, 4294901760
    %3671 = vmatpush1.msra.mxu0 %v3670
    %3672 = vmatprep.subr.mxu0 0.0
    %v3673 = vand.u32 %v101, 4294901760
    %3674 = vmatpush1.msra.mxu0 %v3673
    %3675 = vmatprep.subr.mxu0 0.0
    %v3676 = vand.u32 %v100, 4294901760
    %3677 = vmatpush1.msra.mxu0 %v3676
    %3678 = vmatprep.subr.mxu0 0.0
    %3679 = vmatpush2.msra.mxu0 0.0
    %3680 = vmatprep.subr.mxu0 0.0
    %3681 = vmatpush2.msra.mxu0 0.0
    %3682 = vmatprep.subr.mxu0 0.0
    %3683 = vmatpush2.msra.mxu0 0.0
    %3684 = vmatprep.subr.mxu0 0.0
    %3685 = vmatpush2.msra.mxu0 0.0
    %3686 = vmatprep.subr.mxu0 0.0
    %3687 = vmatpush2.msra.mxu0 0.0
    %3688 = vmatprep.subr.mxu0 0.0
    %3689 = vmatpush2.msra.mxu0 0.0
    %3690 = vmatprep.subr.mxu0 0.0
    %3691 = vmatpush2.msra.mxu0 0.0
    %3692 = vmatprep.subr.mxu0 0.0
    %3693 = vmatpush2.msra.mxu0 0.0
    %3694 = vmatprep.subr.mxu0 0.0
    %3695 = vmatpush2.msra.mxu0 0.0
    %3696 = vmatprep.subr.mxu0 0.0
    %3697 = vmatpush2.msra.mxu0 0.0
    %3698 = vmatprep.subr.mxu0 0.0
    %3699 = vmatpush2.msra.mxu0 0.0
    %3700 = vmatprep.subr.mxu0 0.0
    %3701 = vmatpush2.msra.mxu0 0.0
    %3702 = vmatprep.subr.mxu0 0.0
    %3703 = vmatpush2.msra.mxu0 0.0
    %3704 = vmatprep.subr.mxu0 0.0
    %3705 = vmatpush2.msra.mxu0 0.0
    %3706 = vmatprep.subr.mxu0 0.0
    %3707 = vmatpush2.msra.mxu0 0.0
    %3708 = vmatprep.subr.mxu0 0.0
    %3709 = vmatpush2.msra.mxu0 0.0
    %3710 = vmatprep.mubr.f32.mxu0 0.0
    %v3711 = vand.u32 %v3230, 4294901760
    %3712 = vmatmul.mubr.f32.gmra.mxu0 %v3711
    %v3713 = vpop.f32.mrf.mxu0
    %v3714 = vadd.f32 %v3639, %v3713
    %v3715 = vpop.f32.mrf.mxu0
    %3716 = vdwg.mxu0
    %v3717 = vadd.f32 %v3229, %v3714
    %v3718 = vtanh.pop %v3717
    %v3719 = vmul.f32 %v3718, 0.5
    %v3720 = vadd.f32 %v3719, 0.5
    %v3721 = vsel %vm119, %v3718, %v3720
    %v3722 = vmul.f32 %v3721, %v3216
    %3724 = vrot.lane.b32.xlu0 %v3721, 64
    %v3725 = vpop.permute.xlu0 %3724
    %v3727 = vmul.f32 %v3721, %v3725
    %3729 = vrot.lane.b32.xlu0 %v3727, 32
    %v3730 = vpop.permute.xlu0 %3729
    %v3732 = vadd.f32 %v3722, %v3730
    %v3733 = vtanh.pop %v3732
    %3735 = vrot.lane.b32.xlu0 %v3733, 64
    %v3736 = vpop.permute.xlu0 %3735
    %v3738 = vmul.f32 %v3721, %v3736
    %3740 = vrot.lane.b32.xlu0 %v3738, 32
    %v3741 = vpop.permute.xlu0 %3740
    %s3743 = scalar_lea.vmem [#allocation3], 6
    %3744 = vst.msk [vmem:[%s3743] sm:$0x1] %vm647, %v3741
    %v3745 = vld [vmem:[%s98] sm:$0x1]
    %v3746 = vsel %vm124, %v3741, 0
    %3748 = vmatprep.subr.mxu0 0.0
    %3749 = vmatpush1.msra.mxu0 0.0
    %3750 = vmatprep.subr.mxu0 0.0
    %3751 = vmatpush1.msra.mxu0 0.0
    %3752 = vmatprep.subr.mxu0 0.0
    %3753 = vmatpush1.msra.mxu0 0.0
    %3754 = vmatprep.subr.mxu0 0.0
    %3755 = vmatpush1.msra.mxu0 0.0
    %3756 = vmatprep.subr.mxu0 0.0
    %3757 = vmatpush1.msra.mxu0 0.0
    %3758 = vmatprep.subr.mxu0 0.0
    %3759 = vmatpush1.msra.mxu0 0.0
    %3760 = vmatprep.subr.mxu0 0.0
    %3761 = vmatpush1.msra.mxu0 0.0
    %3762 = vmatprep.subr.mxu0 0.0
    %3763 = vmatpush1.msra.mxu0 0.0
    %3764 = vmatprep.subr.mxu0 0.0
    %3765 = vmatpush1.msra.mxu0 0.0
    %3766 = vmatprep.subr.mxu0 0.0
    %3767 = vmatpush1.msra.mxu0 0.0
    %3768 = vmatprep.subr.mxu0 0.0
    %3769 = vmatpush1.msra.mxu0 0.0
    %3770 = vmatprep.subr.mxu0 0.0
    %3771 = vmatpush1.msra.mxu0 0.0
    %3772 = vmatprep.subr.mxu0 0.0
    %v3773 = vand.u32 %v103, 4294901760
    %3774 = vmatpush1.msra.mxu0 %v3773
    %3775 = vmatprep.subr.mxu0 0.0
    %v3776 = vand.u32 %v102, 4294901760
    %3777 = vmatpush1.msra.mxu0 %v3776
    %3778 = vmatprep.subr.mxu0 0.0
    %v3779 = vand.u32 %v101, 4294901760
    %3780 = vmatpush1.msra.mxu0 %v3779
    %3781 = vmatprep.subr.mxu0 0.0
    %v3782 = vand.u32 %v100, 4294901760
    %3783 = vmatpush1.msra.mxu0 %v3782
    %3784 = vmatprep.subr.mxu0 0.0
    %3785 = vmatpush2.msra.mxu0 0.0
    %3786 = vmatprep.subr.mxu0 0.0
    %3787 = vmatpush2.msra.mxu0 0.0
    %3788 = vmatprep.subr.mxu0 0.0
    %3789 = vmatpush2.msra.mxu0 0.0
    %3790 = vmatprep.subr.mxu0 0.0
    %3791 = vmatpush2.msra.mxu0 0.0
    %3792 = vmatprep.subr.mxu0 0.0
    %3793 = vmatpush2.msra.mxu0 0.0
    %3794 = vmatprep.subr.mxu0 0.0
    %3795 = vmatpush2.msra.mxu0 0.0
    %3796 = vmatprep.subr.mxu0 0.0
    %3797 = vmatpush2.msra.mxu0 0.0
    %3798 = vmatprep.subr.mxu0 0.0
    %3799 = vmatpush2.msra.mxu0 0.0
    %3800 = vmatprep.subr.mxu0 0.0
    %3801 = vmatpush2.msra.mxu0 0.0
    %3802 = vmatprep.subr.mxu0 0.0
    %3803 = vmatpush2.msra.mxu0 0.0
    %3804 = vmatprep.subr.mxu0 0.0
    %3805 = vmatpush2.msra.mxu0 0.0
    %3806 = vmatprep.subr.mxu0 0.0
    %3807 = vmatpush2.msra.mxu0 0.0
    %3808 = vmatprep.subr.mxu0 0.0
    %3809 = vmatpush2.msra.mxu0 0.0
    %3810 = vmatprep.subr.mxu0 0.0
    %3811 = vmatpush2.msra.mxu0 0.0
    %3812 = vmatprep.subr.mxu0 0.0
    %3813 = vmatpush2.msra.mxu0 0.0
    %3814 = vmatprep.subr.mxu0 0.0
    %3815 = vmatpush2.msra.mxu0 0.0
    %3816 = vmatprep.mubr.f32.mxu0 0.0
    %v3817 = vand.u32 %v3746, 4294901760
    %v3818 = vsub.f32 %v3746, %v3817
    %v3819 = vand.u32 %v3818, 4294901760
    %v3820 = vsub.f32 %v3818, %v3819
    %v3821 = vand.u32 %v3820, 4294901760
    %3822 = vmatmul.mubr.f32.gmra.mxu0 %v3821
    %v3823 = vpop.f32.mrf.mxu0
    %v3824 = vadd.f32 0.0, %v3823
    %v3825 = vpop.f32.mrf.mxu0
    %3826 = vdwg.mxu0
    %3827 = vmatprep.subr.mxu0 0.0
    %3828 = vmatpush1.msra.mxu0 0.0
    %3829 = vmatprep.subr.mxu0 0.0
    %3830 = vmatpush1.msra.mxu0 0.0
    %3831 = vmatprep.subr.mxu0 0.0
    %3832 = vmatpush1.msra.mxu0 0.0
    %3833 = vmatprep.subr.mxu0 0.0
    %3834 = vmatpush1.msra.mxu0 0.0
    %3835 = vmatprep.subr.mxu0 0.0
    %3836 = vmatpush1.msra.mxu0 0.0
    %3837 = vmatprep.subr.mxu0 0.0
    %3838 = vmatpush1.msra.mxu0 0.0
    %3839 = vmatprep.subr.mxu0 0.0
    %3840 = vmatpush1.msra.mxu0 0.0
    %3841 = vmatprep.subr.mxu0 0.0
    %3842 = vmatpush1.msra.mxu0 0.0
    %3843 = vmatprep.subr.mxu0 0.0
    %3844 = vmatpush1.msra.mxu0 0.0
    %3845 = vmatprep.subr.mxu0 0.0
    %3846 = vmatpush1.msra.mxu0 0.0
    %3847 = vmatprep.subr.mxu0 0.0
    %3848 = vmatpush1.msra.mxu0 0.0
    %3849 = vmatprep.subr.mxu0 0.0
    %3850 = vmatpush1.msra.mxu0 0.0
    %3851 = vmatprep.subr.mxu0 0.0
    %v3852 = vand.u32 %v103, 4294901760
    %v3853 = vsub.f32 %v103, %v3852
    %v3854 = vand.u32 %v3853, 4294901760
    %v3855 = vsub.f32 %v3853, %v3854
    %v3856 = vand.u32 %v3855, 4294901760
    %3857 = vmatpush1.msra.mxu0 %v3856
    %3858 = vmatprep.subr.mxu0 0.0
    %v3859 = vand.u32 %v102, 4294901760
    %v3860 = vsub.f32 %v102, %v3859
    %v3861 = vand.u32 %v3860, 4294901760
    %v3862 = vsub.f32 %v3860, %v3861
    %v3863 = vand.u32 %v3862, 4294901760
    %3864 = vmatpush1.msra.mxu0 %v3863
    %3865 = vmatprep.subr.mxu0 0.0
    %v3866 = vand.u32 %v101, 4294901760
    %v3867 = vsub.f32 %v101, %v3866
    %v3868 = vand.u32 %v3867, 4294901760
    %v3869 = vsub.f32 %v3867, %v3868
    %v3870 = vand.u32 %v3869, 4294901760
    %3871 = vmatpush1.msra.mxu0 %v3870
    %3872 = vmatprep.subr.mxu0 0.0
    %v3873 = vand.u32 %v100, 4294901760
    %v3874 = vsub.f32 %v100, %v3873
    %v3875 = vand.u32 %v3874, 4294901760
    %v3876 = vsub.f32 %v3874, %v3875
    %v3877 = vand.u32 %v3876, 4294901760
    %3878 = vmatpush1.msra.mxu0 %v3877
    %3879 = vmatprep.subr.mxu0 0.0
    %3880 = vmatpush2.msra.mxu0 0.0
    %3881 = vmatprep.subr.mxu0 0.0
    %3882 = vmatpush2.msra.mxu0 0.0
    %3883 = vmatprep.subr.mxu0 0.0
    %3884 = vmatpush2.msra.mxu0 0.0
    %3885 = vmatprep.subr.mxu0 0.0
    %3886 = vmatpush2.msra.mxu0 0.0
    %3887 = vmatprep.subr.mxu0 0.0
    %3888 = vmatpush2.msra.mxu0 0.0
    %3889 = vmatprep.subr.mxu0 0.0
    %3890 = vmatpush2.msra.mxu0 0.0
    %3891 = vmatprep.subr.mxu0 0.0
    %3892 = vmatpush2.msra.mxu0 0.0
    %3893 = vmatprep.subr.mxu0 0.0
    %3894 = vmatpush2.msra.mxu0 0.0
    %3895 = vmatprep.subr.mxu0 0.0
    %3896 = vmatpush2.msra.mxu0 0.0
    %3897 = vmatprep.subr.mxu0 0.0
    %3898 = vmatpush2.msra.mxu0 0.0
    %3899 = vmatprep.subr.mxu0 0.0
    %3900 = vmatpush2.msra.mxu0 0.0
    %3901 = vmatprep.subr.mxu0 0.0
    %3902 = vmatpush2.msra.mxu0 0.0
    %3903 = vmatprep.subr.mxu0 0.0
    %3904 = vmatpush2.msra.mxu0 0.0
    %3905 = vmatprep.subr.mxu0 0.0
    %3906 = vmatpush2.msra.mxu0 0.0
    %3907 = vmatprep.subr.mxu0 0.0
    %3908 = vmatpush2.msra.mxu0 0.0
    %3909 = vmatprep.subr.mxu0 0.0
    %3910 = vmatpush2.msra.mxu0 0.0
    %3911 = vmatprep.mubr.f32.mxu0 0.0
    %v3912 = vand.u32 %v3746, 4294901760
    %3913 = vmatmul.mubr.f32.gmra.mxu0 %v3912
    %v3914 = vpop.f32.mrf.mxu0
    %v3915 = vadd.f32 %v3824, %v3914
    %v3916 = vpop.f32.mrf.mxu0
    %3917 = vdwg.mxu0
    %3918 = vmatprep.subr.mxu0 0.0
    %3919 = vmatpush1.msra.mxu0 0.0
    %3920 = vmatprep.subr.mxu0 0.0
    %3921 = vmatpush1.msra.mxu0 0.0
    %3922 = vmatprep.subr.mxu0 0.0
    %3923 = vmatpush1.msra.mxu0 0.0
    %3924 = vmatprep.subr.mxu0 0.0
    %3925 = vmatpush1.msra.mxu0 0.0
    %3926 = vmatprep.subr.mxu0 0.0
    %3927 = vmatpush1.msra.mxu0 0.0
    %3928 = vmatprep.subr.mxu0 0.0
    %3929 = vmatpush1.msra.mxu0 0.0
    %3930 = vmatprep.subr.mxu0 0.0
    %3931 = vmatpush1.msra.mxu0 0.0
    %3932 = vmatprep.subr.mxu0 0.0
    %3933 = vmatpush1.msra.mxu0 0.0
    %3934 = vmatprep.subr.mxu0 0.0
    %3935 = vmatpush1.msra.mxu0 0.0
    %3936 = vmatprep.subr.mxu0 0.0
    %3937 = vmatpush1.msra.mxu0 0.0
    %3938 = vmatprep.subr.mxu0 0.0
    %3939 = vmatpush1.msra.mxu0 0.0
    %3940 = vmatprep.subr.mxu0 0.0
    %3941 = vmatpush1.msra.mxu0 0.0
    %3942 = vmatprep.subr.mxu0 0.0
    %v3943 = vand.u32 %v103, 4294901760
    %v3944 = vsub.f32 %v103, %v3943
    %3945 = vmatpush1.msra.mxu0 %v3944
    %3946 = vmatprep.subr.mxu0 0.0
    %v3947 = vand.u32 %v102, 4294901760
    %v3948 = vsub.f32 %v102, %v3947
    %3949 = vmatpush1.msra.mxu0 %v3948
    %3950 = vmatprep.subr.mxu0 0.0
    %v3951 = vand.u32 %v101, 4294901760
    %v3952 = vsub.f32 %v101, %v3951
    %3953 = vmatpush1.msra.mxu0 %v3952
    %3954 = vmatprep.subr.mxu0 0.0
    %v3955 = vand.u32 %v100, 4294901760
    %v3956 = vsub.f32 %v100, %v3955
    %3957 = vmatpush1.msra.mxu0 %v3956
    %3958 = vmatprep.subr.mxu0 0.0
    %3959 = vmatpush2.msra.mxu0 0.0
    %3960 = vmatprep.subr.mxu0 0.0
    %3961 = vmatpush2.msra.mxu0 0.0
    %3962 = vmatprep.subr.mxu0 0.0
    %3963 = vmatpush2.msra.mxu0 0.0
    %3964 = vmatprep.subr.mxu0 0.0
    %3965 = vmatpush2.msra.mxu0 0.0
    %3966 = vmatprep.subr.mxu0 0.0
    %3967 = vmatpush2.msra.mxu0 0.0
    %3968 = vmatprep.subr.mxu0 0.0
    %3969 = vmatpush2.msra.mxu0 0.0
    %3970 = vmatprep.subr.mxu0 0.0
    %3971 = vmatpush2.msra.mxu0 0.0
    %3972 = vmatprep.subr.mxu0 0.0
    %3973 = vmatpush2.msra.mxu0 0.0
    %3974 = vmatprep.subr.mxu0 0.0
    %3975 = vmatpush2.msra.mxu0 0.0
    %3976 = vmatprep.subr.mxu0 0.0
    %3977 = vmatpush2.msra.mxu0 0.0
    %3978 = vmatprep.subr.mxu0 0.0
    %3979 = vmatpush2.msra.mxu0 0.0
    %3980 = vmatprep.subr.mxu0 0.0
    %3981 = vmatpush2.msra.mxu0 0.0
    %3982 = vmatprep.subr.mxu0 0.0
    %3983 = vmatpush2.msra.mxu0 0.0
    %3984 = vmatprep.subr.mxu0 0.0
    %3985 = vmatpush2.msra.mxu0 0.0
    %3986 = vmatprep.subr.mxu0 0.0
    %3987 = vmatpush2.msra.mxu0 0.0
    %3988 = vmatprep.subr.mxu0 0.0
    %3989 = vmatpush2.msra.mxu0 0.0
    %3990 = vmatprep.mubr.f32.mxu0 0.0
    %v3991 = vand.u32 %v3746, 4294901760
    %v3992 = vsub.f32 %v3746, %v3991
    %3993 = vmatmul.mubr.f32.gmra.mxu0 %v3992
    %v3994 = vpop.f32.mrf.mxu0
    %v3995 = vadd.f32 %v3915, %v3994
    %v3996 = vpop.f32.mrf.mxu0
    %3997 = vdwg.mxu0
    %3998 = vmatprep.subr.mxu0 0.0
    %3999 = vmatpush1.msra.mxu0 0.0
    %4000 = vmatprep.subr.mxu0 0.0
    %4001 = vmatpush1.msra.mxu0 0.0
    %4002 = vmatprep.subr.mxu0 0.0
    %4003 = vmatpush1.msra.mxu0 0.0
    %4004 = vmatprep.subr.mxu0 0.0
    %4005 = vmatpush1.msra.mxu0 0.0
    %4006 = vmatprep.subr.mxu0 0.0
    %4007 = vmatpush1.msra.mxu0 0.0
    %4008 = vmatprep.subr.mxu0 0.0
    %4009 = vmatpush1.msra.mxu0 0.0
    %4010 = vmatprep.subr.mxu0 0.0
    %4011 = vmatpush1.msra.mxu0 0.0
    %4012 = vmatprep.subr.mxu0 0.0
    %4013 = vmatpush1.msra.mxu0 0.0
    %4014 = vmatprep.subr.mxu0 0.0
    %4015 = vmatpush1.msra.mxu0 0.0
    %4016 = vmatprep.subr.mxu0 0.0
    %4017 = vmatpush1.msra.mxu0 0.0
    %4018 = vmatprep.subr.mxu0 0.0
    %4019 = vmatpush1.msra.mxu0 0.0
    %4020 = vmatprep.subr.mxu0 0.0
    %4021 = vmatpush1.msra.mxu0 0.0
    %4022 = vmatprep.subr.mxu0 0.0
    %v4023 = vand.u32 %v103, 4294901760
    %4024 = vmatpush1.msra.mxu0 %v4023
    %4025 = vmatprep.subr.mxu0 0.0
    %v4026 = vand.u32 %v102, 4294901760
    %4027 = vmatpush1.msra.mxu0 %v4026
    %4028 = vmatprep.subr.mxu0 0.0
    %v4029 = vand.u32 %v101, 4294901760
    %4030 = vmatpush1.msra.mxu0 %v4029
    %4031 = vmatprep.subr.mxu0 0.0
    %v4032 = vand.u32 %v100, 4294901760
    %4033 = vmatpush1.msra.mxu0 %v4032
    %4034 = vmatprep.subr.mxu0 0.0
    %4035 = vmatpush2.msra.mxu0 0.0
    %4036 = vmatprep.subr.mxu0 0.0
    %4037 = vmatpush2.msra.mxu0 0.0
    %4038 = vmatprep.subr.mxu0 0.0
    %4039 = vmatpush2.msra.mxu0 0.0
    %4040 = vmatprep.subr.mxu0 0.0
    %4041 = vmatpush2.msra.mxu0 0.0
    %4042 = vmatprep.subr.mxu0 0.0
    %4043 = vmatpush2.msra.mxu0 0.0
    %4044 = vmatprep.subr.mxu0 0.0
    %4045 = vmatpush2.msra.mxu0 0.0
    %4046 = vmatprep.subr.mxu0 0.0
    %4047 = vmatpush2.msra.mxu0 0.0
    %4048 = vmatprep.subr.mxu0 0.0
    %4049 = vmatpush2.msra.mxu0 0.0
    %4050 = vmatprep.subr.mxu0 0.0
    %4051 = vmatpush2.msra.mxu0 0.0
    %4052 = vmatprep.subr.mxu0 0.0
    %4053 = vmatpush2.msra.mxu0 0.0
    %4054 = vmatprep.subr.mxu0 0.0
    %4055 = vmatpush2.msra.mxu0 0.0
    %4056 = vmatprep.subr.mxu0 0.0
    %4057 = vmatpush2.msra.mxu0 0.0
    %4058 = vmatprep.subr.mxu0 0.0
    %4059 = vmatpush2.msra.mxu0 0.0
    %4060 = vmatprep.subr.mxu0 0.0
    %4061 = vmatpush2.msra.mxu0 0.0
    %4062 = vmatprep.subr.mxu0 0.0
    %4063 = vmatpush2.msra.mxu0 0.0
    %4064 = vmatprep.subr.mxu0 0.0
    %4065 = vmatpush2.msra.mxu0 0.0
    %4066 = vmatprep.mubr.f32.mxu0 0.0
    %v4067 = vand.u32 %v3746, 4294901760
    %v4068 = vsub.f32 %v3746, %v4067
    %v4069 = vand.u32 %v4068, 4294901760
    %4070 = vmatmul.mubr.f32.gmra.mxu0 %v4069
    %v4071 = vpop.f32.mrf.mxu0
    %v4072 = vadd.f32 %v3995, %v4071
    %v4073 = vpop.f32.mrf.mxu0
    %4074 = vdwg.mxu0
    %4075 = vmatprep.subr.mxu0 0.0
    %4076 = vmatpush1.msra.mxu0 0.0
    %4077 = vmatprep.subr.mxu0 0.0
    %4078 = vmatpush1.msra.mxu0 0.0
    %4079 = vmatprep.subr.mxu0 0.0
    %4080 = vmatpush1.msra.mxu0 0.0
    %4081 = vmatprep.subr.mxu0 0.0
    %4082 = vmatpush1.msra.mxu0 0.0
    %4083 = vmatprep.subr.mxu0 0.0
    %4084 = vmatpush1.msra.mxu0 0.0
    %4085 = vmatprep.subr.mxu0 0.0
    %4086 = vmatpush1.msra.mxu0 0.0
    %4087 = vmatprep.subr.mxu0 0.0
    %4088 = vmatpush1.msra.mxu0 0.0
    %4089 = vmatprep.subr.mxu0 0.0
    %4090 = vmatpush1.msra.mxu0 0.0
    %4091 = vmatprep.subr.mxu0 0.0
    %4092 = vmatpush1.msra.mxu0 0.0
    %4093 = vmatprep.subr.mxu0 0.0
    %4094 = vmatpush1.msra.mxu0 0.0
    %4095 = vmatprep.subr.mxu0 0.0
    %4096 = vmatpush1.msra.mxu0 0.0
    %4097 = vmatprep.subr.mxu0 0.0
    %4098 = vmatpush1.msra.mxu0 0.0
    %4099 = vmatprep.subr.mxu0 0.0
    %v4100 = vand.u32 %v103, 4294901760
    %v4101 = vsub.f32 %v103, %v4100
    %v4102 = vand.u32 %v4101, 4294901760
    %4103 = vmatpush1.msra.mxu0 %v4102
    %4104 = vmatprep.subr.mxu0 0.0
    %v4105 = vand.u32 %v102, 4294901760
    %v4106 = vsub.f32 %v102, %v4105
    %v4107 = vand.u32 %v4106, 4294901760
    %4108 = vmatpush1.msra.mxu0 %v4107
    %4109 = vmatprep.subr.mxu0 0.0
    %v4110 = vand.u32 %v101, 4294901760
    %v4111 = vsub.f32 %v101, %v4110
    %v4112 = vand.u32 %v4111, 4294901760
    %4113 = vmatpush1.msra.mxu0 %v4112
    %4114 = vmatprep.subr.mxu0 0.0
    %v4115 = vand.u32 %v100, 4294901760
    %v4116 = vsub.f32 %v100, %v4115
    %v4117 = vand.u32 %v4116, 4294901760
    %4118 = vmatpush1.msra.mxu0 %v4117
    %4119 = vmatprep.subr.mxu0 0.0
    %4120 = vmatpush2.msra.mxu0 0.0
    %4121 = vmatprep.subr.mxu0 0.0
    %4122 = vmatpush2.msra.mxu0 0.0
    %4123 = vmatprep.subr.mxu0 0.0
    %4124 = vmatpush2.msra.mxu0 0.0
    %4125 = vmatprep.subr.mxu0 0.0
    %4126 = vmatpush2.msra.mxu0 0.0
    %4127 = vmatprep.subr.mxu0 0.0
    %4128 = vmatpush2.msra.mxu0 0.0
    %4129 = vmatprep.subr.mxu0 0.0
    %4130 = vmatpush2.msra.mxu0 0.0
    %4131 = vmatprep.subr.mxu0 0.0
    %4132 = vmatpush2.msra.mxu0 0.0
    %4133 = vmatprep.subr.mxu0 0.0
    %4134 = vmatpush2.msra.mxu0 0.0
    %4135 = vmatprep.subr.mxu0 0.0
    %4136 = vmatpush2.msra.mxu0 0.0
    %4137 = vmatprep.subr.mxu0 0.0
    %4138 = vmatpush2.msra.mxu0 0.0
    %4139 = vmatprep.subr.mxu0 0.0
    %4140 = vmatpush2.msra.mxu0 0.0
    %4141 = vmatprep.subr.mxu0 0.0
    %4142 = vmatpush2.msra.mxu0 0.0
    %4143 = vmatprep.subr.mxu0 0.0
    %4144 = vmatpush2.msra.mxu0 0.0
    %4145 = vmatprep.subr.mxu0 0.0
    %4146 = vmatpush2.msra.mxu0 0.0
    %4147 = vmatprep.subr.mxu0 0.0
    %4148 = vmatpush2.msra.mxu0 0.0
    %4149 = vmatprep.subr.mxu0 0.0
    %4150 = vmatpush2.msra.mxu0 0.0
    %4151 = vmatprep.mubr.f32.mxu0 0.0
    %v4152 = vand.u32 %v3746, 4294901760
    %4153 = vmatmul.mubr.f32.gmra.mxu0 %v4152
    %v4154 = vpop.f32.mrf.mxu0
    %v4155 = vadd.f32 %v4072, %v4154
    %v4156 = vpop.f32.mrf.mxu0
    %4157 = vdwg.mxu0
    %4158 = vmatprep.subr.mxu0 0.0
    %4159 = vmatpush1.msra.mxu0 0.0
    %4160 = vmatprep.subr.mxu0 0.0
    %4161 = vmatpush1.msra.mxu0 0.0
    %4162 = vmatprep.subr.mxu0 0.0
    %4163 = vmatpush1.msra.mxu0 0.0
    %4164 = vmatprep.subr.mxu0 0.0
    %4165 = vmatpush1.msra.mxu0 0.0
    %4166 = vmatprep.subr.mxu0 0.0
    %4167 = vmatpush1.msra.mxu0 0.0
    %4168 = vmatprep.subr.mxu0 0.0
    %4169 = vmatpush1.msra.mxu0 0.0
    %4170 = vmatprep.subr.mxu0 0.0
    %4171 = vmatpush1.msra.mxu0 0.0
    %4172 = vmatprep.subr.mxu0 0.0
    %4173 = vmatpush1.msra.mxu0 0.0
    %4174 = vmatprep.subr.mxu0 0.0
    %4175 = vmatpush1.msra.mxu0 0.0
    %4176 = vmatprep.subr.mxu0 0.0
    %4177 = vmatpush1.msra.mxu0 0.0
    %4178 = vmatprep.subr.mxu0 0.0
    %4179 = vmatpush1.msra.mxu0 0.0
    %4180 = vmatprep.subr.mxu0 0.0
    %4181 = vmatpush1.msra.mxu0 0.0
    %4182 = vmatprep.subr.mxu0 0.0
    %v4183 = vand.u32 %v103, 4294901760
    %4184 = vmatpush1.msra.mxu0 %v4183
    %4185 = vmatprep.subr.mxu0 0.0
    %v4186 = vand.u32 %v102, 4294901760
    %4187 = vmatpush1.msra.mxu0 %v4186
    %4188 = vmatprep.subr.mxu0 0.0
    %v4189 = vand.u32 %v101, 4294901760
    %4190 = vmatpush1.msra.mxu0 %v4189
    %4191 = vmatprep.subr.mxu0 0.0
    %v4192 = vand.u32 %v100, 4294901760
    %4193 = vmatpush1.msra.mxu0 %v4192
    %4194 = vmatprep.subr.mxu0 0.0
    %4195 = vmatpush2.msra.mxu0 0.0
    %4196 = vmatprep.subr.mxu0 0.0
    %4197 = vmatpush2.msra.mxu0 0.0
    %4198 = vmatprep.subr.mxu0 0.0
    %4199 = vmatpush2.msra.mxu0 0.0
    %4200 = vmatprep.subr.mxu0 0.0
    %4201 = vmatpush2.msra.mxu0 0.0
    %4202 = vmatprep.subr.mxu0 0.0
    %4203 = vmatpush2.msra.mxu0 0.0
    %4204 = vmatprep.subr.mxu0 0.0
    %4205 = vmatpush2.msra.mxu0 0.0
    %4206 = vmatprep.subr.mxu0 0.0
    %4207 = vmatpush2.msra.mxu0 0.0
    %4208 = vmatprep.subr.mxu0 0.0
    %4209 = vmatpush2.msra.mxu0 0.0
    %4210 = vmatprep.subr.mxu0 0.0
    %4211 = vmatpush2.msra.mxu0 0.0
    %4212 = vmatprep.subr.mxu0 0.0
    %4213 = vmatpush2.msra.mxu0 0.0
    %4214 = vmatprep.subr.mxu0 0.0
    %4215 = vmatpush2.msra.mxu0 0.0
    %4216 = vmatprep.subr.mxu0 0.0
    %4217 = vmatpush2.msra.mxu0 0.0
    %4218 = vmatprep.subr.mxu0 0.0
    %4219 = vmatpush2.msra.mxu0 0.0
    %4220 = vmatprep.subr.mxu0 0.0
    %4221 = vmatpush2.msra.mxu0 0.0
    %4222 = vmatprep.subr.mxu0 0.0
    %4223 = vmatpush2.msra.mxu0 0.0
    %4224 = vmatprep.subr.mxu0 0.0
    %4225 = vmatpush2.msra.mxu0 0.0
    %4226 = vmatprep.mubr.f32.mxu0 0.0
    %v4227 = vand.u32 %v3746, 4294901760
    %4228 = vmatmul.mubr.f32.gmra.mxu0 %v4227
    %v4229 = vpop.f32.mrf.mxu0
    %v4230 = vadd.f32 %v4155, %v4229
    %v4231 = vpop.f32.mrf.mxu0
    %4232 = vdwg.mxu0
    %v4233 = vadd.f32 %v3745, %v4230
    %v4234 = vtanh.pop %v4233
    %v4235 = vmul.f32 %v4234, 0.5
    %v4236 = vadd.f32 %v4235, 0.5
    %v4237 = vsel %vm119, %v4234, %v4236
    %v4238 = vmul.f32 %v4237, %v3732
    %4240 = vrot.lane.b32.xlu0 %v4237, 64
    %v4241 = vpop.permute.xlu0 %4240
    %v4243 = vmul.f32 %v4237, %v4241
    %4245 = vrot.lane.b32.xlu0 %v4243, 32
    %v4246 = vpop.permute.xlu0 %4245
    %v4248 = vadd.f32 %v4238, %v4246
    %v4249 = vtanh.pop %v4248
    %4251 = vrot.lane.b32.xlu0 %v4249, 64
    %v4252 = vpop.permute.xlu0 %4251
    %v4254 = vmul.f32 %v4237, %v4252
    %4256 = vrot.lane.b32.xlu0 %v4254, 32
    %v4257 = vpop.permute.xlu0 %4256
    %s4259 = scalar_lea.vmem [#allocation3], 7
    %4260 = vst.msk [vmem:[%s4259] sm:$0x1] %vm647, %v4257
    %v4261 = vld [vmem:[#allocation3] sm:$0x1]
    %v4262 = vld [vmem:[#allocation3 + $0x1] sm:$0x1]
    %v4263 = vld [vmem:[#allocation3 + $0x2] sm:$0x1]
    %v4264 = vld [vmem:[#allocation3 + $0x3] sm:$0x1]
    %v4265 = vld [vmem:[#allocation3 + $0x4] sm:$0x1]
    %v4266 = vld [vmem:[#allocation3 + $0x5] sm:$0x1]
    %v4267 = vld [vmem:[#allocation3 + $0x6] sm:$0x1]
    %v4268 = vld [vmem:[#allocation3 + $0x7] sm:$0x1]
    %v4269 = vlaneseq
    %v4270 = vshrl.u32 %v4269, 7
    %v4271 = vsub.s32 0, %v4270
    %v4272 = vrot.slane %v112, %v4271
    %v4281 = vcombine.low %v4261, %v4262
    %v4282 = vcombine.low %v4263, %v4264
    %v4283 = vcombine.low %v4265, %v4266
    %v4284 = vcombine.low %v4267, %v4268
    %v4286 = vunpack.c.l.s4 1966171168
    %v4287 = vunpack.c.0.s8 %v4286
    %v4288 = vlaneseq
    %v4289 = vshrl.u32 %v4288, 7
    %v4290 = vsub.s32 %v4287, %v4289
    %v4291 = vrot.slane %v4281, %v4290
    %v4293 = vunpack.c.l.s4 1966171168
    %v4294 = vunpack.c.0.s8 %v4293
    %v4295 = vlaneseq
    %v4296 = vshrl.u32 %v4295, 7
    %v4297 = vsub.s32 %v4294, %v4296
    %v4298 = vrot.slane %v4282, %v4297
    %v4300 = vunpack.c.l.s4 1966171168
    %v4301 = vunpack.c.0.s8 %v4300
    %v4302 = vlaneseq
    %v4303 = vshrl.u32 %v4302, 7
    %v4304 = vsub.s32 %v4301, %v4303
    %v4305 = vrot.slane %v4283, %v4304
    %v4307 = vunpack.c.l.s4 1966171168
    %v4308 = vunpack.c.0.s8 %v4307
    %v4309 = vlaneseq
    %v4310 = vshrl.u32 %v4309, 7
    %v4311 = vsub.s32 %v4308, %v4310
    %v4312 = vrot.slane %v4284, %v4311
    %v4313 = vcombine.low %v4291, %v4298
    %v4314 = vcombine.low %v4305, %v4312
    %v4316 = vunpack.c.l.s4 1966171168
    %v4317 = vunpack.c.0.s8 %v4316
    %v4318 = vlaneseq
    %v4319 = vshrl.u32 %v4318, 7
    %v4320 = vsub.s32 %v4317, %v4319
    %v4321 = vrot.slane %v4313, %v4320
    %v4323 = vunpack.c.l.s4 1966171168
    %v4324 = vunpack.c.0.s8 %v4323
    %v4325 = vlaneseq
    %v4326 = vshrl.u32 %v4325, 7
    %v4327 = vsub.s32 %v4324, %v4326
    %v4328 = vrot.slane %v4314, %v4327
    %v4329 = vcombine.low %v4321, %v4328
    %v4330 = vsel %vm124, %v4329, 0
    %4332 = vmatprep.subr.mxu0 0.0
    %4333 = vmatpush1.msra.mxu0 0.0
    %4334 = vmatprep.subr.mxu0 0.0
    %4335 = vmatpush1.msra.mxu0 0.0
    %4336 = vmatprep.subr.mxu0 0.0
    %4337 = vmatpush1.msra.mxu0 0.0
    %4338 = vmatprep.subr.mxu0 0.0
    %4339 = vmatpush1.msra.mxu0 0.0
    %4340 = vmatprep.subr.mxu0 0.0
    %4341 = vmatpush1.msra.mxu0 0.0
    %4342 = vmatprep.subr.mxu0 0.0
    %4343 = vmatpush1.msra.mxu0 0.0
    %4344 = vmatprep.subr.mxu0 0.0
    %4345 = vmatpush1.msra.mxu0 0.0
    %4346 = vmatprep.subr.mxu0 0.0
    %4347 = vmatpush1.msra.mxu0 0.0
    %4348 = vmatprep.subr.mxu0 0.0
    %4349 = vmatpush1.msra.mxu0 0.0
    %4350 = vmatprep.subr.mxu0 0.0
    %4351 = vmatpush1.msra.mxu0 0.0
    %4352 = vmatprep.subr.mxu0 0.0
    %4353 = vmatpush1.msra.mxu0 0.0
    %4354 = vmatprep.subr.mxu0 0.0
    %4355 = vmatpush1.msra.mxu0 0.0
    %4356 = vmatprep.subr.mxu0 0.0
    %v4357 = vand.u32 %v107, 4294901760
    %4358 = vmatpush1.msra.mxu0 %v4357
    %4359 = vmatprep.subr.mxu0 0.0
    %v4360 = vand.u32 %v106, 4294901760
    %4361 = vmatpush1.msra.mxu0 %v4360
    %4362 = vmatprep.subr.mxu0 0.0
    %v4363 = vand.u32 %v105, 4294901760
    %4364 = vmatpush1.msra.mxu0 %v4363
    %4365 = vmatprep.subr.mxu0 0.0
    %v4366 = vand.u32 %v104, 4294901760
    %4367 = vmatpush1.msra.mxu0 %v4366
    %4368 = vmatprep.subr.mxu0 0.0
    %4369 = vmatpush2.msra.mxu0 0.0
    %4370 = vmatprep.subr.mxu0 0.0
    %4371 = vmatpush2.msra.mxu0 0.0
    %4372 = vmatprep.subr.mxu0 0.0
    %4373 = vmatpush2.msra.mxu0 0.0
    %4374 = vmatprep.subr.mxu0 0.0
    %4375 = vmatpush2.msra.mxu0 0.0
    %4376 = vmatprep.subr.mxu0 0.0
    %4377 = vmatpush2.msra.mxu0 0.0
    %4378 = vmatprep.subr.mxu0 0.0
    %4379 = vmatpush2.msra.mxu0 0.0
    %4380 = vmatprep.subr.mxu0 0.0
    %4381 = vmatpush2.msra.mxu0 0.0
    %4382 = vmatprep.subr.mxu0 0.0
    %4383 = vmatpush2.msra.mxu0 0.0
    %4384 = vmatprep.subr.mxu0 0.0
    %4385 = vmatpush2.msra.mxu0 0.0
    %4386 = vmatprep.subr.mxu0 0.0
    %4387 = vmatpush2.msra.mxu0 0.0
    %4388 = vmatprep.subr.mxu0 0.0
    %4389 = vmatpush2.msra.mxu0 0.0
    %4390 = vmatprep.subr.mxu0 0.0
    %4391 = vmatpush2.msra.mxu0 0.0
    %4392 = vmatprep.subr.mxu0 0.0
    %4393 = vmatpush2.msra.mxu0 0.0
    %4394 = vmatprep.subr.mxu0 0.0
    %4395 = vmatpush2.msra.mxu0 0.0
    %4396 = vmatprep.subr.mxu0 0.0
    %4397 = vmatpush2.msra.mxu0 0.0
    %4398 = vmatprep.subr.mxu0 0.0
    %4399 = vmatpush2.msra.mxu0 0.0
    %4400 = vmatprep.mubr.f32.mxu0 0.0
    %v4401 = vand.u32 %v4330, 4294901760
    %v4402 = vsub.f32 %v4330, %v4401
    %v4403 = vand.u32 %v4402, 4294901760
    %v4404 = vsub.f32 %v4402, %v4403
    %v4405 = vand.u32 %v4404, 4294901760
    %4406 = vmatmul.mubr.f32.gmra.mxu0 %v4405
    %v4407 = vpop.f32.mrf.mxu0
    %v4408 = vadd.f32 %v4272, %v4407
    %v4409 = vpop.f32.mrf.mxu0
    %4410 = vdwg.mxu0
    %4411 = vmatprep.subr.mxu0 0.0
    %4412 = vmatpush1.msra.mxu0 0.0
    %4413 = vmatprep.subr.mxu0 0.0
    %4414 = vmatpush1.msra.mxu0 0.0
    %4415 = vmatprep.subr.mxu0 0.0
    %4416 = vmatpush1.msra.mxu0 0.0
    %4417 = vmatprep.subr.mxu0 0.0
    %4418 = vmatpush1.msra.mxu0 0.0
    %4419 = vmatprep.subr.mxu0 0.0
    %4420 = vmatpush1.msra.mxu0 0.0
    %4421 = vmatprep.subr.mxu0 0.0
    %4422 = vmatpush1.msra.mxu0 0.0
    %4423 = vmatprep.subr.mxu0 0.0
    %4424 = vmatpush1.msra.mxu0 0.0
    %4425 = vmatprep.subr.mxu0 0.0
    %4426 = vmatpush1.msra.mxu0 0.0
    %4427 = vmatprep.subr.mxu0 0.0
    %4428 = vmatpush1.msra.mxu0 0.0
    %4429 = vmatprep.subr.mxu0 0.0
    %4430 = vmatpush1.msra.mxu0 0.0
    %4431 = vmatprep.subr.mxu0 0.0
    %4432 = vmatpush1.msra.mxu0 0.0
    %4433 = vmatprep.subr.mxu0 0.0
    %4434 = vmatpush1.msra.mxu0 0.0
    %4435 = vmatprep.subr.mxu0 0.0
    %v4436 = vand.u32 %v107, 4294901760
    %v4437 = vsub.f32 %v107, %v4436
    %v4438 = vand.u32 %v4437, 4294901760
    %v4439 = vsub.f32 %v4437, %v4438
    %v4440 = vand.u32 %v4439, 4294901760
    %4441 = vmatpush1.msra.mxu0 %v4440
    %4442 = vmatprep.subr.mxu0 0.0
    %v4443 = vand.u32 %v106, 4294901760
    %v4444 = vsub.f32 %v106, %v4443
    %v4445 = vand.u32 %v4444, 4294901760
    %v4446 = vsub.f32 %v4444, %v4445
    %v4447 = vand.u32 %v4446, 4294901760
    %4448 = vmatpush1.msra.mxu0 %v4447
    %4449 = vmatprep.subr.mxu0 0.0
    %v4450 = vand.u32 %v105, 4294901760
    %v4451 = vsub.f32 %v105, %v4450
    %v4452 = vand.u32 %v4451, 4294901760
    %v4453 = vsub.f32 %v4451, %v4452
    %v4454 = vand.u32 %v4453, 4294901760
    %4455 = vmatpush1.msra.mxu0 %v4454
    %4456 = vmatprep.subr.mxu0 0.0
    %v4457 = vand.u32 %v104, 4294901760
    %v4458 = vsub.f32 %v104, %v4457
    %v4459 = vand.u32 %v4458, 4294901760
    %v4460 = vsub.f32 %v4458, %v4459
    %v4461 = vand.u32 %v4460, 4294901760
    %4462 = vmatpush1.msra.mxu0 %v4461
    %4463 = vmatprep.subr.mxu0 0.0
    %4464 = vmatpush2.msra.mxu0 0.0
    %4465 = vmatprep.subr.mxu0 0.0
    %4466 = vmatpush2.msra.mxu0 0.0
    %4467 = vmatprep.subr.mxu0 0.0
    %4468 = vmatpush2.msra.mxu0 0.0
    %4469 = vmatprep.subr.mxu0 0.0
    %4470 = vmatpush2.msra.mxu0 0.0
    %4471 = vmatprep.subr.mxu0 0.0
    %4472 = vmatpush2.msra.mxu0 0.0
    %4473 = vmatprep.subr.mxu0 0.0
    %4474 = vmatpush2.msra.mxu0 0.0
    %4475 = vmatprep.subr.mxu0 0.0
    %4476 = vmatpush2.msra.mxu0 0.0
    %4477 = vmatprep.subr.mxu0 0.0
    %4478 = vmatpush2.msra.mxu0 0.0
    %4479 = vmatprep.subr.mxu0 0.0
    %4480 = vmatpush2.msra.mxu0 0.0
    %4481 = vmatprep.subr.mxu0 0.0
    %4482 = vmatpush2.msra.mxu0 0.0
    %4483 = vmatprep.subr.mxu0 0.0
    %4484 = vmatpush2.msra.mxu0 0.0
    %4485 = vmatprep.subr.mxu0 0.0
    %4486 = vmatpush2.msra.mxu0 0.0
    %4487 = vmatprep.subr.mxu0 0.0
    %4488 = vmatpush2.msra.mxu0 0.0
    %4489 = vmatprep.subr.mxu0 0.0
    %4490 = vmatpush2.msra.mxu0 0.0
    %4491 = vmatprep.subr.mxu0 0.0
    %4492 = vmatpush2.msra.mxu0 0.0
    %4493 = vmatprep.subr.mxu0 0.0
    %4494 = vmatpush2.msra.mxu0 0.0
    %4495 = vmatprep.mubr.f32.mxu0 0.0
    %v4496 = vand.u32 %v4330, 4294901760
    %4497 = vmatmul.mubr.f32.gmra.mxu0 %v4496
    %v4498 = vpop.f32.mrf.mxu0
    %v4499 = vadd.f32 %v4408, %v4498
    %v4500 = vpop.f32.mrf.mxu0
    %4501 = vdwg.mxu0
    %4502 = vmatprep.subr.mxu0 0.0
    %4503 = vmatpush1.msra.mxu0 0.0
    %4504 = vmatprep.subr.mxu0 0.0
    %4505 = vmatpush1.msra.mxu0 0.0
    %4506 = vmatprep.subr.mxu0 0.0
    %4507 = vmatpush1.msra.mxu0 0.0
    %4508 = vmatprep.subr.mxu0 0.0
    %4509 = vmatpush1.msra.mxu0 0.0
    %4510 = vmatprep.subr.mxu0 0.0
    %4511 = vmatpush1.msra.mxu0 0.0
    %4512 = vmatprep.subr.mxu0 0.0
    %4513 = vmatpush1.msra.mxu0 0.0
    %4514 = vmatprep.subr.mxu0 0.0
    %4515 = vmatpush1.msra.mxu0 0.0
    %4516 = vmatprep.subr.mxu0 0.0
    %4517 = vmatpush1.msra.mxu0 0.0
    %4518 = vmatprep.subr.mxu0 0.0
    %4519 = vmatpush1.msra.mxu0 0.0
    %4520 = vmatprep.subr.mxu0 0.0
    %4521 = vmatpush1.msra.mxu0 0.0
    %4522 = vmatprep.subr.mxu0 0.0
    %4523 = vmatpush1.msra.mxu0 0.0
    %4524 = vmatprep.subr.mxu0 0.0
    %4525 = vmatpush1.msra.mxu0 0.0
    %4526 = vmatprep.subr.mxu0 0.0
    %v4527 = vand.u32 %v107, 4294901760
    %v4528 = vsub.f32 %v107, %v4527
    %4529 = vmatpush1.msra.mxu0 %v4528
    %4530 = vmatprep.subr.mxu0 0.0
    %v4531 = vand.u32 %v106, 4294901760
    %v4532 = vsub.f32 %v106, %v4531
    %4533 = vmatpush1.msra.mxu0 %v4532
    %4534 = vmatprep.subr.mxu0 0.0
    %v4535 = vand.u32 %v105, 4294901760
    %v4536 = vsub.f32 %v105, %v4535
    %4537 = vmatpush1.msra.mxu0 %v4536
    %4538 = vmatprep.subr.mxu0 0.0
    %v4539 = vand.u32 %v104, 4294901760
    %v4540 = vsub.f32 %v104, %v4539
    %4541 = vmatpush1.msra.mxu0 %v4540
    %4542 = vmatprep.subr.mxu0 0.0
    %4543 = vmatpush2.msra.mxu0 0.0
    %4544 = vmatprep.subr.mxu0 0.0
    %4545 = vmatpush2.msra.mxu0 0.0
    %4546 = vmatprep.subr.mxu0 0.0
    %4547 = vmatpush2.msra.mxu0 0.0
    %4548 = vmatprep.subr.mxu0 0.0
    %4549 = vmatpush2.msra.mxu0 0.0
    %4550 = vmatprep.subr.mxu0 0.0
    %4551 = vmatpush2.msra.mxu0 0.0
    %4552 = vmatprep.subr.mxu0 0.0
    %4553 = vmatpush2.msra.mxu0 0.0
    %4554 = vmatprep.subr.mxu0 0.0
    %4555 = vmatpush2.msra.mxu0 0.0
    %4556 = vmatprep.subr.mxu0 0.0
    %4557 = vmatpush2.msra.mxu0 0.0
    %4558 = vmatprep.subr.mxu0 0.0
    %4559 = vmatpush2.msra.mxu0 0.0
    %4560 = vmatprep.subr.mxu0 0.0
    %4561 = vmatpush2.msra.mxu0 0.0
    %4562 = vmatprep.subr.mxu0 0.0
    %4563 = vmatpush2.msra.mxu0 0.0
    %4564 = vmatprep.subr.mxu0 0.0
    %4565 = vmatpush2.msra.mxu0 0.0
    %4566 = vmatprep.subr.mxu0 0.0
    %4567 = vmatpush2.msra.mxu0 0.0
    %4568 = vmatprep.subr.mxu0 0.0
    %4569 = vmatpush2.msra.mxu0 0.0
    %4570 = vmatprep.subr.mxu0 0.0
    %4571 = vmatpush2.msra.mxu0 0.0
    %4572 = vmatprep.subr.mxu0 0.0
    %4573 = vmatpush2.msra.mxu0 0.0
    %4574 = vmatprep.mubr.f32.mxu0 0.0
    %v4575 = vand.u32 %v4330, 4294901760
    %v4576 = vsub.f32 %v4330, %v4575
    %4577 = vmatmul.mubr.f32.gmra.mxu0 %v4576
    %v4578 = vpop.f32.mrf.mxu0
    %v4579 = vadd.f32 %v4499, %v4578
    %v4580 = vpop.f32.mrf.mxu0
    %4581 = vdwg.mxu0
    %4582 = vmatprep.subr.mxu0 0.0
    %4583 = vmatpush1.msra.mxu0 0.0
    %4584 = vmatprep.subr.mxu0 0.0
    %4585 = vmatpush1.msra.mxu0 0.0
    %4586 = vmatprep.subr.mxu0 0.0
    %4587 = vmatpush1.msra.mxu0 0.0
    %4588 = vmatprep.subr.mxu0 0.0
    %4589 = vmatpush1.msra.mxu0 0.0
    %4590 = vmatprep.subr.mxu0 0.0
    %4591 = vmatpush1.msra.mxu0 0.0
    %4592 = vmatprep.subr.mxu0 0.0
    %4593 = vmatpush1.msra.mxu0 0.0
    %4594 = vmatprep.subr.mxu0 0.0
    %4595 = vmatpush1.msra.mxu0 0.0
    %4596 = vmatprep.subr.mxu0 0.0
    %4597 = vmatpush1.msra.mxu0 0.0
    %4598 = vmatprep.subr.mxu0 0.0
    %4599 = vmatpush1.msra.mxu0 0.0
    %4600 = vmatprep.subr.mxu0 0.0
    %4601 = vmatpush1.msra.mxu0 0.0
    %4602 = vmatprep.subr.mxu0 0.0
    %4603 = vmatpush1.msra.mxu0 0.0
    %4604 = vmatprep.subr.mxu0 0.0
    %4605 = vmatpush1.msra.mxu0 0.0
    %4606 = vmatprep.subr.mxu0 0.0
    %v4607 = vand.u32 %v107, 4294901760
    %4608 = vmatpush1.msra.mxu0 %v4607
    %4609 = vmatprep.subr.mxu0 0.0
    %v4610 = vand.u32 %v106, 4294901760
    %4611 = vmatpush1.msra.mxu0 %v4610
    %4612 = vmatprep.subr.mxu0 0.0
    %v4613 = vand.u32 %v105, 4294901760
    %4614 = vmatpush1.msra.mxu0 %v4613
    %4615 = vmatprep.subr.mxu0 0.0
    %v4616 = vand.u32 %v104, 4294901760
    %4617 = vmatpush1.msra.mxu0 %v4616
    %4618 = vmatprep.subr.mxu0 0.0
    %4619 = vmatpush2.msra.mxu0 0.0
    %4620 = vmatprep.subr.mxu0 0.0
    %4621 = vmatpush2.msra.mxu0 0.0
    %4622 = vmatprep.subr.mxu0 0.0
    %4623 = vmatpush2.msra.mxu0 0.0
    %4624 = vmatprep.subr.mxu0 0.0
    %4625 = vmatpush2.msra.mxu0 0.0
    %4626 = vmatprep.subr.mxu0 0.0
    %4627 = vmatpush2.msra.mxu0 0.0
    %4628 = vmatprep.subr.mxu0 0.0
    %4629 = vmatpush2.msra.mxu0 0.0
    %4630 = vmatprep.subr.mxu0 0.0
    %4631 = vmatpush2.msra.mxu0 0.0
    %4632 = vmatprep.subr.mxu0 0.0
    %4633 = vmatpush2.msra.mxu0 0.0
    %4634 = vmatprep.subr.mxu0 0.0
    %4635 = vmatpush2.msra.mxu0 0.0
    %4636 = vmatprep.subr.mxu0 0.0
    %4637 = vmatpush2.msra.mxu0 0.0
    %4638 = vmatprep.subr.mxu0 0.0
    %4639 = vmatpush2.msra.mxu0 0.0
    %4640 = vmatprep.subr.mxu0 0.0
    %4641 = vmatpush2.msra.mxu0 0.0
    %4642 = vmatprep.subr.mxu0 0.0
    %4643 = vmatpush2.msra.mxu0 0.0
    %4644 = vmatprep.subr.mxu0 0.0
    %4645 = vmatpush2.msra.mxu0 0.0
    %4646 = vmatprep.subr.mxu0 0.0
    %4647 = vmatpush2.msra.mxu0 0.0
    %4648 = vmatprep.subr.mxu0 0.0
    %4649 = vmatpush2.msra.mxu0 0.0
    %4650 = vmatprep.mubr.f32.mxu0 0.0
    %v4651 = vand.u32 %v4330, 4294901760
    %v4652 = vsub.f32 %v4330, %v4651
    %v4653 = vand.u32 %v4652, 4294901760
    %4654 = vmatmul.mubr.f32.gmra.mxu0 %v4653
    %v4655 = vpop.f32.mrf.mxu0
    %v4656 = vadd.f32 %v4579, %v4655
    %v4657 = vpop.f32.mrf.mxu0
    %4658 = vdwg.mxu0
    %4659 = vmatprep.subr.mxu0 0.0
    %4660 = vmatpush1.msra.mxu0 0.0
    %4661 = vmatprep.subr.mxu0 0.0
    %4662 = vmatpush1.msra.mxu0 0.0
    %4663 = vmatprep.subr.mxu0 0.0
    %4664 = vmatpush1.msra.mxu0 0.0
    %4665 = vmatprep.subr.mxu0 0.0
    %4666 = vmatpush1.msra.mxu0 0.0
    %4667 = vmatprep.subr.mxu0 0.0
    %4668 = vmatpush1.msra.mxu0 0.0
    %4669 = vmatprep.subr.mxu0 0.0
    %4670 = vmatpush1.msra.mxu0 0.0
    %4671 = vmatprep.subr.mxu0 0.0
    %4672 = vmatpush1.msra.mxu0 0.0
    %4673 = vmatprep.subr.mxu0 0.0
    %4674 = vmatpush1.msra.mxu0 0.0
    %4675 = vmatprep.subr.mxu0 0.0
    %4676 = vmatpush1.msra.mxu0 0.0
    %4677 = vmatprep.subr.mxu0 0.0
    %4678 = vmatpush1.msra.mxu0 0.0
    %4679 = vmatprep.subr.mxu0 0.0
    %4680 = vmatpush1.msra.mxu0 0.0
    %4681 = vmatprep.subr.mxu0 0.0
    %4682 = vmatpush1.msra.mxu0 0.0
    %4683 = vmatprep.subr.mxu0 0.0
    %v4684 = vand.u32 %v107, 4294901760
    %v4685 = vsub.f32 %v107, %v4684
    %v4686 = vand.u32 %v4685, 4294901760
    %4687 = vmatpush1.msra.mxu0 %v4686
    %4688 = vmatprep.subr.mxu0 0.0
    %v4689 = vand.u32 %v106, 4294901760
    %v4690 = vsub.f32 %v106, %v4689
    %v4691 = vand.u32 %v4690, 4294901760
    %4692 = vmatpush1.msra.mxu0 %v4691
    %4693 = vmatprep.subr.mxu0 0.0
    %v4694 = vand.u32 %v105, 4294901760
    %v4695 = vsub.f32 %v105, %v4694
    %v4696 = vand.u32 %v4695, 4294901760
    %4697 = vmatpush1.msra.mxu0 %v4696
    %4698 = vmatprep.subr.mxu0 0.0
    %v4699 = vand.u32 %v104, 4294901760
    %v4700 = vsub.f32 %v104, %v4699
    %v4701 = vand.u32 %v4700, 4294901760
    %4702 = vmatpush1.msra.mxu0 %v4701
    %4703 = vmatprep.subr.mxu0 0.0
    %4704 = vmatpush2.msra.mxu0 0.0
    %4705 = vmatprep.subr.mxu0 0.0
    %4706 = vmatpush2.msra.mxu0 0.0
    %4707 = vmatprep.subr.mxu0 0.0
    %4708 = vmatpush2.msra.mxu0 0.0
    %4709 = vmatprep.subr.mxu0 0.0
    %4710 = vmatpush2.msra.mxu0 0.0
    %4711 = vmatprep.subr.mxu0 0.0
    %4712 = vmatpush2.msra.mxu0 0.0
    %4713 = vmatprep.subr.mxu0 0.0
    %4714 = vmatpush2.msra.mxu0 0.0
    %4715 = vmatprep.subr.mxu0 0.0
    %4716 = vmatpush2.msra.mxu0 0.0
    %4717 = vmatprep.subr.mxu0 0.0
    %4718 = vmatpush2.msra.mxu0 0.0
    %4719 = vmatprep.subr.mxu0 0.0
    %4720 = vmatpush2.msra.mxu0 0.0
    %4721 = vmatprep.subr.mxu0 0.0
    %4722 = vmatpush2.msra.mxu0 0.0
    %4723 = vmatprep.subr.mxu0 0.0
    %4724 = vmatpush2.msra.mxu0 0.0
    %4725 = vmatprep.subr.mxu0 0.0
    %4726 = vmatpush2.msra.mxu0 0.0
    %4727 = vmatprep.subr.mxu0 0.0
    %4728 = vmatpush2.msra.mxu0 0.0
    %4729 = vmatprep.subr.mxu0 0.0
    %4730 = vmatpush2.msra.mxu0 0.0
    %4731 = vmatprep.subr.mxu0 0.0
    %4732 = vmatpush2.msra.mxu0 0.0
    %4733 = vmatprep.subr.mxu0 0.0
    %4734 = vmatpush2.msra.mxu0 0.0
    %4735 = vmatprep.mubr.f32.mxu0 0.0
    %v4736 = vand.u32 %v4330, 4294901760
    %4737 = vmatmul.mubr.f32.gmra.mxu0 %v4736
    %v4738 = vpop.f32.mrf.mxu0
    %v4739 = vadd.f32 %v4656, %v4738
    %v4740 = vpop.f32.mrf.mxu0
    %4741 = vdwg.mxu0
    %4742 = vmatprep.subr.mxu0 0.0
    %4743 = vmatpush1.msra.mxu0 0.0
    %4744 = vmatprep.subr.mxu0 0.0
    %4745 = vmatpush1.msra.mxu0 0.0
    %4746 = vmatprep.subr.mxu0 0.0
    %4747 = vmatpush1.msra.mxu0 0.0
    %4748 = vmatprep.subr.mxu0 0.0
    %4749 = vmatpush1.msra.mxu0 0.0
    %4750 = vmatprep.subr.mxu0 0.0
    %4751 = vmatpush1.msra.mxu0 0.0
    %4752 = vmatprep.subr.mxu0 0.0
    %4753 = vmatpush1.msra.mxu0 0.0
    %4754 = vmatprep.subr.mxu0 0.0
    %4755 = vmatpush1.msra.mxu0 0.0
    %4756 = vmatprep.subr.mxu0 0.0
    %4757 = vmatpush1.msra.mxu0 0.0
    %4758 = vmatprep.subr.mxu0 0.0
    %4759 = vmatpush1.msra.mxu0 0.0
    %4760 = vmatprep.subr.mxu0 0.0
    %4761 = vmatpush1.msra.mxu0 0.0
    %4762 = vmatprep.subr.mxu0 0.0
    %4763 = vmatpush1.msra.mxu0 0.0
    %4764 = vmatprep.subr.mxu0 0.0
    %4765 = vmatpush1.msra.mxu0 0.0
    %4766 = vmatprep.subr.mxu0 0.0
    %v4767 = vand.u32 %v107, 4294901760
    %4768 = vmatpush1.msra.mxu0 %v4767
    %4769 = vmatprep.subr.mxu0 0.0
    %v4770 = vand.u32 %v106, 4294901760
    %4771 = vmatpush1.msra.mxu0 %v4770
    %4772 = vmatprep.subr.mxu0 0.0
    %v4773 = vand.u32 %v105, 4294901760
    %4774 = vmatpush1.msra.mxu0 %v4773
    %4775 = vmatprep.subr.mxu0 0.0
    %v4776 = vand.u32 %v104, 4294901760
    %4777 = vmatpush1.msra.mxu0 %v4776
    %4778 = vmatprep.subr.mxu0 0.0
    %4779 = vmatpush2.msra.mxu0 0.0
    %4780 = vmatprep.subr.mxu0 0.0
    %4781 = vmatpush2.msra.mxu0 0.0
    %4782 = vmatprep.subr.mxu0 0.0
    %4783 = vmatpush2.msra.mxu0 0.0
    %4784 = vmatprep.subr.mxu0 0.0
    %4785 = vmatpush2.msra.mxu0 0.0
    %4786 = vmatprep.subr.mxu0 0.0
    %4787 = vmatpush2.msra.mxu0 0.0
    %4788 = vmatprep.subr.mxu0 0.0
    %4789 = vmatpush2.msra.mxu0 0.0
    %4790 = vmatprep.subr.mxu0 0.0
    %4791 = vmatpush2.msra.mxu0 0.0
    %4792 = vmatprep.subr.mxu0 0.0
    %4793 = vmatpush2.msra.mxu0 0.0
    %4794 = vmatprep.subr.mxu0 0.0
    %4795 = vmatpush2.msra.mxu0 0.0
    %4796 = vmatprep.subr.mxu0 0.0
    %4797 = vmatpush2.msra.mxu0 0.0
    %4798 = vmatprep.subr.mxu0 0.0
    %4799 = vmatpush2.msra.mxu0 0.0
    %4800 = vmatprep.subr.mxu0 0.0
    %4801 = vmatpush2.msra.mxu0 0.0
    %4802 = vmatprep.subr.mxu0 0.0
    %4803 = vmatpush2.msra.mxu0 0.0
    %4804 = vmatprep.subr.mxu0 0.0
    %4805 = vmatpush2.msra.mxu0 0.0
    %4806 = vmatprep.subr.mxu0 0.0
    %4807 = vmatpush2.msra.mxu0 0.0
    %4808 = vmatprep.subr.mxu0 0.0
    %4809 = vmatpush2.msra.mxu0 0.0
    %4810 = vmatprep.mubr.f32.mxu0 0.0
    %v4811 = vand.u32 %v4330, 4294901760
    %4812 = vmatmul.mubr.f32.gmra.mxu0 %v4811
    %v4813 = vpop.f32.mrf.mxu0
    %v4814 = vadd.f32 %v4739, %v4813
    %v4815 = vpop.f32.mrf.mxu0
    %4816 = vdwg.mxu0
    %v4818 = vcombine.high %v4814, %v4814
    %v4820 = vunpack.c.l.s4 1966171168
    %v4821 = vunpack.c.0.s8 %v4820
    %v4822 = vlaneseq
    %v4823 = vshrl.u32 %v4822, 7
    %v4824 = vsub.s32 %v4821, %v4823
    %v4825 = vrot.slane %v4814, %v4824
    %v4827 = vunpack.c.l.s4 1966171168
    %v4828 = vunpack.c.0.s8 %v4827
    %v4829 = vlaneseq
    %v4830 = vshrl.u32 %v4829, 7
    %v4831 = vsub.s32 %v4828, %v4830
    %v4832 = vrot.slane %v4818, %v4831
    %v4833 = vcombine.high %v4825, %v4825
    %v4834 = vcombine.high %v4832, %v4832
    %v4836 = vunpack.c.l.s4 1966171168
    %v4837 = vunpack.c.0.s8 %v4836
    %v4838 = vlaneseq
    %v4839 = vshrl.u32 %v4838, 7
    %v4840 = vsub.s32 %v4837, %v4839
    %v4841 = vrot.slane %v4825, %v4840
    %v4843 = vunpack.c.l.s4 1966171168
    %v4844 = vunpack.c.0.s8 %v4843
    %v4845 = vlaneseq
    %v4846 = vshrl.u32 %v4845, 7
    %v4847 = vsub.s32 %v4844, %v4846
    %v4848 = vrot.slane %v4832, %v4847
    %v4850 = vunpack.c.l.s4 1966171168
    %v4851 = vunpack.c.0.s8 %v4850
    %v4852 = vlaneseq
    %v4853 = vshrl.u32 %v4852, 7
    %v4854 = vsub.s32 %v4851, %v4853
    %v4855 = vrot.slane %v4833, %v4854
    %v4857 = vunpack.c.l.s4 1966171168
    %v4858 = vunpack.c.0.s8 %v4857
    %v4859 = vlaneseq
    %v4860 = vshrl.u32 %v4859, 7
    %v4861 = vsub.s32 %v4858, %v4860
    %v4862 = vrot.slane %v4834, %v4861
    %v4863 = vcombine.high %v4841, %v4841
    %v4864 = vcombine.high %v4848, %v4848
    %v4865 = vcombine.high %v4855, %v4855
    %v4866 = vcombine.high %v4862, %v4862
    %4875 = vst [vmem:[#allocation2] sm:$0x1] %v4841
    %4876 = vst [vmem:[#allocation2 + $0x1] sm:$0x1] %v4855
    %4877 = vst [vmem:[#allocation2 + $0x2] sm:$0x1] %v4863
    %4878 = vst [vmem:[#allocation2 + $0x3] sm:$0x1] %v4865
    %4879 = vst [vmem:[#allocation2 + $0x4] sm:$0x1] %v4848
    %4880 = vst [vmem:[#allocation2 + $0x5] sm:$0x1] %v4862
    %4881 = vst [vmem:[#allocation2 + $0x6] sm:$0x1] %v4864
    %4882 = vst [vmem:[#allocation2 + $0x7] sm:$0x1] %v4866
    %s4883 = scalar_lea.vmem %s3, 1
    %v4884 = vld [vmem:[%s4883] sm:$0x1]
    %s4885 = scalar_lea.vmem %s3, 3
    %v4886 = vld [vmem:[%s4885] sm:$0x1]
    %v4887 = vld [vmem:[#allocation2] sm:$0x1]
    %v4889 = vsel %vm124, %v4884, 0
    %4891 = vmatprep.subr.mxu0 0.0
    %4892 = vmatpush1.msra.mxu0 0.0
    %4893 = vmatprep.subr.mxu0 0.0
    %4894 = vmatpush1.msra.mxu0 0.0
    %4895 = vmatprep.subr.mxu0 0.0
    %4896 = vmatpush1.msra.mxu0 0.0
    %4897 = vmatprep.subr.mxu0 0.0
    %4898 = vmatpush1.msra.mxu0 0.0
    %4899 = vmatprep.subr.mxu0 0.0
    %4900 = vmatpush1.msra.mxu0 0.0
    %4901 = vmatprep.subr.mxu0 0.0
    %4902 = vmatpush1.msra.mxu0 0.0
    %4903 = vmatprep.subr.mxu0 0.0
    %4904 = vmatpush1.msra.mxu0 0.0
    %4905 = vmatprep.subr.mxu0 0.0
    %4906 = vmatpush1.msra.mxu0 0.0
    %4907 = vmatprep.subr.mxu0 0.0
    %4908 = vmatpush1.msra.mxu0 0.0
    %4909 = vmatprep.subr.mxu0 0.0
    %4910 = vmatpush1.msra.mxu0 0.0
    %4911 = vmatprep.subr.mxu0 0.0
    %4912 = vmatpush1.msra.mxu0 0.0
    %4913 = vmatprep.subr.mxu0 0.0
    %4914 = vmatpush1.msra.mxu0 0.0
    %4915 = vmatprep.subr.mxu0 0.0
    %v4916 = vand.u32 %v111, 4294901760
    %4917 = vmatpush1.msra.mxu0 %v4916
    %4918 = vmatprep.subr.mxu0 0.0
    %v4919 = vand.u32 %v110, 4294901760
    %4920 = vmatpush1.msra.mxu0 %v4919
    %4921 = vmatprep.subr.mxu0 0.0
    %v4922 = vand.u32 %v109, 4294901760
    %4923 = vmatpush1.msra.mxu0 %v4922
    %4924 = vmatprep.subr.mxu0 0.0
    %v4925 = vand.u32 %v108, 4294901760
    %4926 = vmatpush1.msra.mxu0 %v4925
    %4927 = vmatprep.subr.mxu0 0.0
    %4928 = vmatpush2.msra.mxu0 0.0
    %4929 = vmatprep.subr.mxu0 0.0
    %4930 = vmatpush2.msra.mxu0 0.0
    %4931 = vmatprep.subr.mxu0 0.0
    %4932 = vmatpush2.msra.mxu0 0.0
    %4933 = vmatprep.subr.mxu0 0.0
    %4934 = vmatpush2.msra.mxu0 0.0
    %4935 = vmatprep.subr.mxu0 0.0
    %4936 = vmatpush2.msra.mxu0 0.0
    %4937 = vmatprep.subr.mxu0 0.0
    %4938 = vmatpush2.msra.mxu0 0.0
    %4939 = vmatprep.subr.mxu0 0.0
    %4940 = vmatpush2.msra.mxu0 0.0
    %4941 = vmatprep.subr.mxu0 0.0
    %4942 = vmatpush2.msra.mxu0 0.0
    %4943 = vmatprep.subr.mxu0 0.0
    %4944 = vmatpush2.msra.mxu0 0.0
    %4945 = vmatprep.subr.mxu0 0.0
    %4946 = vmatpush2.msra.mxu0 0.0
    %4947 = vmatprep.subr.mxu0 0.0
    %4948 = vmatpush2.msra.mxu0 0.0
    %4949 = vmatprep.subr.mxu0 0.0
    %4950 = vmatpush2.msra.mxu0 0.0
    %4951 = vmatprep.subr.mxu0 0.0
    %4952 = vmatpush2.msra.mxu0 0.0
    %4953 = vmatprep.subr.mxu0 0.0
    %4954 = vmatpush2.msra.mxu0 0.0
    %4955 = vmatprep.subr.mxu0 0.0
    %4956 = vmatpush2.msra.mxu0 0.0
    %4957 = vmatprep.subr.mxu0 0.0
    %4958 = vmatpush2.msra.mxu0 0.0
    %4959 = vmatprep.mubr.f32.mxu0 0.0
    %v4960 = vand.u32 %v4889, 4294901760
    %v4961 = vsub.f32 %v4889, %v4960
    %v4962 = vand.u32 %v4961, 4294901760
    %v4963 = vsub.f32 %v4961, %v4962
    %v4964 = vand.u32 %v4963, 4294901760
    %4965 = vmatmul.mubr.f32.gmra.mxu0 %v4964
    %v4966 = vpop.f32.mrf.mxu0
    %v4967 = vadd.f32 0.0, %v4966
    %v4968 = vpop.f32.mrf.mxu0
    %4969 = vdwg.mxu0
    %4970 = vmatprep.subr.mxu0 0.0
    %4971 = vmatpush1.msra.mxu0 0.0
    %4972 = vmatprep.subr.mxu0 0.0
    %4973 = vmatpush1.msra.mxu0 0.0
    %4974 = vmatprep.subr.mxu0 0.0
    %4975 = vmatpush1.msra.mxu0 0.0
    %4976 = vmatprep.subr.mxu0 0.0
    %4977 = vmatpush1.msra.mxu0 0.0
    %4978 = vmatprep.subr.mxu0 0.0
    %4979 = vmatpush1.msra.mxu0 0.0
    %4980 = vmatprep.subr.mxu0 0.0
    %4981 = vmatpush1.msra.mxu0 0.0
    %4982 = vmatprep.subr.mxu0 0.0
    %4983 = vmatpush1.msra.mxu0 0.0
    %4984 = vmatprep.subr.mxu0 0.0
    %4985 = vmatpush1.msra.mxu0 0.0
    %4986 = vmatprep.subr.mxu0 0.0
    %4987 = vmatpush1.msra.mxu0 0.0
    %4988 = vmatprep.subr.mxu0 0.0
    %4989 = vmatpush1.msra.mxu0 0.0
    %4990 = vmatprep.subr.mxu0 0.0
    %4991 = vmatpush1.msra.mxu0 0.0
    %4992 = vmatprep.subr.mxu0 0.0
    %4993 = vmatpush1.msra.mxu0 0.0
    %4994 = vmatprep.subr.mxu0 0.0
    %v4995 = vand.u32 %v111, 4294901760
    %v4996 = vsub.f32 %v111, %v4995
    %v4997 = vand.u32 %v4996, 4294901760
    %v4998 = vsub.f32 %v4996, %v4997
    %v4999 = vand.u32 %v4998, 4294901760
    %5000 = vmatpush1.msra.mxu0 %v4999
    %5001 = vmatprep.subr.mxu0 0.0
    %v5002 = vand.u32 %v110, 4294901760
    %v5003 = vsub.f32 %v110, %v5002
    %v5004 = vand.u32 %v5003, 4294901760
    %v5005 = vsub.f32 %v5003, %v5004
    %v5006 = vand.u32 %v5005, 4294901760
    %5007 = vmatpush1.msra.mxu0 %v5006
    %5008 = vmatprep.subr.mxu0 0.0
    %v5009 = vand.u32 %v109, 4294901760
    %v5010 = vsub.f32 %v109, %v5009
    %v5011 = vand.u32 %v5010, 4294901760
    %v5012 = vsub.f32 %v5010, %v5011
    %v5013 = vand.u32 %v5012, 4294901760
    %5014 = vmatpush1.msra.mxu0 %v5013
    %5015 = vmatprep.subr.mxu0 0.0
    %v5016 = vand.u32 %v108, 4294901760
    %v5017 = vsub.f32 %v108, %v5016
    %v5018 = vand.u32 %v5017, 4294901760
    %v5019 = vsub.f32 %v5017, %v5018
    %v5020 = vand.u32 %v5019, 4294901760
    %5021 = vmatpush1.msra.mxu0 %v5020
    %5022 = vmatprep.subr.mxu0 0.0
    %5023 = vmatpush2.msra.mxu0 0.0
    %5024 = vmatprep.subr.mxu0 0.0
    %5025 = vmatpush2.msra.mxu0 0.0
    %5026 = vmatprep.subr.mxu0 0.0
    %5027 = vmatpush2.msra.mxu0 0.0
    %5028 = vmatprep.subr.mxu0 0.0
    %5029 = vmatpush2.msra.mxu0 0.0
    %5030 = vmatprep.subr.mxu0 0.0
    %5031 = vmatpush2.msra.mxu0 0.0
    %5032 = vmatprep.subr.mxu0 0.0
    %5033 = vmatpush2.msra.mxu0 0.0
    %5034 = vmatprep.subr.mxu0 0.0
    %5035 = vmatpush2.msra.mxu0 0.0
    %5036 = vmatprep.subr.mxu0 0.0
    %5037 = vmatpush2.msra.mxu0 0.0
    %5038 = vmatprep.subr.mxu0 0.0
    %5039 = vmatpush2.msra.mxu0 0.0
    %5040 = vmatprep.subr.mxu0 0.0
    %5041 = vmatpush2.msra.mxu0 0.0
    %5042 = vmatprep.subr.mxu0 0.0
    %5043 = vmatpush2.msra.mxu0 0.0
    %5044 = vmatprep.subr.mxu0 0.0
    %5045 = vmatpush2.msra.mxu0 0.0
    %5046 = vmatprep.subr.mxu0 0.0
    %5047 = vmatpush2.msra.mxu0 0.0
    %5048 = vmatprep.subr.mxu0 0.0
    %5049 = vmatpush2.msra.mxu0 0.0
    %5050 = vmatprep.subr.mxu0 0.0
    %5051 = vmatpush2.msra.mxu0 0.0
    %5052 = vmatprep.subr.mxu0 0.0
    %5053 = vmatpush2.msra.mxu0 0.0
    %5054 = vmatprep.mubr.f32.mxu0 0.0
    %v5055 = vand.u32 %v4889, 4294901760
    %5056 = vmatmul.mubr.f32.gmra.mxu0 %v5055
    %v5057 = vpop.f32.mrf.mxu0
    %v5058 = vadd.f32 %v4967, %v5057
    %v5059 = vpop.f32.mrf.mxu0
    %5060 = vdwg.mxu0
    %5061 = vmatprep.subr.mxu0 0.0
    %5062 = vmatpush1.msra.mxu0 0.0
    %5063 = vmatprep.subr.mxu0 0.0
    %5064 = vmatpush1.msra.mxu0 0.0
    %5065 = vmatprep.subr.mxu0 0.0
    %5066 = vmatpush1.msra.mxu0 0.0
    %5067 = vmatprep.subr.mxu0 0.0
    %5068 = vmatpush1.msra.mxu0 0.0
    %5069 = vmatprep.subr.mxu0 0.0
    %5070 = vmatpush1.msra.mxu0 0.0
    %5071 = vmatprep.subr.mxu0 0.0
    %5072 = vmatpush1.msra.mxu0 0.0
    %5073 = vmatprep.subr.mxu0 0.0
    %5074 = vmatpush1.msra.mxu0 0.0
    %5075 = vmatprep.subr.mxu0 0.0
    %5076 = vmatpush1.msra.mxu0 0.0
    %5077 = vmatprep.subr.mxu0 0.0
    %5078 = vmatpush1.msra.mxu0 0.0
    %5079 = vmatprep.subr.mxu0 0.0
    %5080 = vmatpush1.msra.mxu0 0.0
    %5081 = vmatprep.subr.mxu0 0.0
    %5082 = vmatpush1.msra.mxu0 0.0
    %5083 = vmatprep.subr.mxu0 0.0
    %5084 = vmatpush1.msra.mxu0 0.0
    %5085 = vmatprep.subr.mxu0 0.0
    %v5086 = vand.u32 %v111, 4294901760
    %v5087 = vsub.f32 %v111, %v5086
    %5088 = vmatpush1.msra.mxu0 %v5087
    %5089 = vmatprep.subr.mxu0 0.0
    %v5090 = vand.u32 %v110, 4294901760
    %v5091 = vsub.f32 %v110, %v5090
    %5092 = vmatpush1.msra.mxu0 %v5091
    %5093 = vmatprep.subr.mxu0 0.0
    %v5094 = vand.u32 %v109, 4294901760
    %v5095 = vsub.f32 %v109, %v5094
    %5096 = vmatpush1.msra.mxu0 %v5095
    %5097 = vmatprep.subr.mxu0 0.0
    %v5098 = vand.u32 %v108, 4294901760
    %v5099 = vsub.f32 %v108, %v5098
    %5100 = vmatpush1.msra.mxu0 %v5099
    %5101 = vmatprep.subr.mxu0 0.0
    %5102 = vmatpush2.msra.mxu0 0.0
    %5103 = vmatprep.subr.mxu0 0.0
    %5104 = vmatpush2.msra.mxu0 0.0
    %5105 = vmatprep.subr.mxu0 0.0
    %5106 = vmatpush2.msra.mxu0 0.0
    %5107 = vmatprep.subr.mxu0 0.0
    %5108 = vmatpush2.msra.mxu0 0.0
    %5109 = vmatprep.subr.mxu0 0.0
    %5110 = vmatpush2.msra.mxu0 0.0
    %5111 = vmatprep.subr.mxu0 0.0
    %5112 = vmatpush2.msra.mxu0 0.0
    %5113 = vmatprep.subr.mxu0 0.0
    %5114 = vmatpush2.msra.mxu0 0.0
    %5115 = vmatprep.subr.mxu0 0.0
    %5116 = vmatpush2.msra.mxu0 0.0
    %5117 = vmatprep.subr.mxu0 0.0
    %5118 = vmatpush2.msra.mxu0 0.0
    %5119 = vmatprep.subr.mxu0 0.0
    %5120 = vmatpush2.msra.mxu0 0.0
    %5121 = vmatprep.subr.mxu0 0.0
    %5122 = vmatpush2.msra.mxu0 0.0
    %5123 = vmatprep.subr.mxu0 0.0
    %5124 = vmatpush2.msra.mxu0 0.0
    %5125 = vmatprep.subr.mxu0 0.0
    %5126 = vmatpush2.msra.mxu0 0.0
    %5127 = vmatprep.subr.mxu0 0.0
    %5128 = vmatpush2.msra.mxu0 0.0
    %5129 = vmatprep.subr.mxu0 0.0
    %5130 = vmatpush2.msra.mxu0 0.0
    %5131 = vmatprep.subr.mxu0 0.0
    %5132 = vmatpush2.msra.mxu0 0.0
    %5133 = vmatprep.mubr.f32.mxu0 0.0
    %v5134 = vand.u32 %v4889, 4294901760
    %v5135 = vsub.f32 %v4889, %v5134
    %5136 = vmatmul.mubr.f32.gmra.mxu0 %v5135
    %v5137 = vpop.f32.mrf.mxu0
    %v5138 = vadd.f32 %v5058, %v5137
    %v5139 = vpop.f32.mrf.mxu0
    %5140 = vdwg.mxu0
    %5141 = vmatprep.subr.mxu0 0.0
    %5142 = vmatpush1.msra.mxu0 0.0
    %5143 = vmatprep.subr.mxu0 0.0
    %5144 = vmatpush1.msra.mxu0 0.0
    %5145 = vmatprep.subr.mxu0 0.0
    %5146 = vmatpush1.msra.mxu0 0.0
    %5147 = vmatprep.subr.mxu0 0.0
    %5148 = vmatpush1.msra.mxu0 0.0
    %5149 = vmatprep.subr.mxu0 0.0
    %5150 = vmatpush1.msra.mxu0 0.0
    %5151 = vmatprep.subr.mxu0 0.0
    %5152 = vmatpush1.msra.mxu0 0.0
    %5153 = vmatprep.subr.mxu0 0.0
    %5154 = vmatpush1.msra.mxu0 0.0
    %5155 = vmatprep.subr.mxu0 0.0
    %5156 = vmatpush1.msra.mxu0 0.0
    %5157 = vmatprep.subr.mxu0 0.0
    %5158 = vmatpush1.msra.mxu0 0.0
    %5159 = vmatprep.subr.mxu0 0.0
    %5160 = vmatpush1.msra.mxu0 0.0
    %5161 = vmatprep.subr.mxu0 0.0
    %5162 = vmatpush1.msra.mxu0 0.0
    %5163 = vmatprep.subr.mxu0 0.0
    %5164 = vmatpush1.msra.mxu0 0.0
    %5165 = vmatprep.subr.mxu0 0.0
    %v5166 = vand.u32 %v111, 4294901760
    %5167 = vmatpush1.msra.mxu0 %v5166
    %5168 = vmatprep.subr.mxu0 0.0
    %v5169 = vand.u32 %v110, 4294901760
    %5170 = vmatpush1.msra.mxu0 %v5169
    %5171 = vmatprep.subr.mxu0 0.0
    %v5172 = vand.u32 %v109, 4294901760
    %5173 = vmatpush1.msra.mxu0 %v5172
    %5174 = vmatprep.subr.mxu0 0.0
    %v5175 = vand.u32 %v108, 4294901760
    %5176 = vmatpush1.msra.mxu0 %v5175
    %5177 = vmatprep.subr.mxu0 0.0
    %5178 = vmatpush2.msra.mxu0 0.0
    %5179 = vmatprep.subr.mxu0 0.0
    %5180 = vmatpush2.msra.mxu0 0.0
    %5181 = vmatprep.subr.mxu0 0.0
    %5182 = vmatpush2.msra.mxu0 0.0
    %5183 = vmatprep.subr.mxu0 0.0
    %5184 = vmatpush2.msra.mxu0 0.0
    %5185 = vmatprep.subr.mxu0 0.0
    %5186 = vmatpush2.msra.mxu0 0.0
    %5187 = vmatprep.subr.mxu0 0.0
    %5188 = vmatpush2.msra.mxu0 0.0
    %5189 = vmatprep.subr.mxu0 0.0
    %5190 = vmatpush2.msra.mxu0 0.0
    %5191 = vmatprep.subr.mxu0 0.0
    %5192 = vmatpush2.msra.mxu0 0.0
    %5193 = vmatprep.subr.mxu0 0.0
    %5194 = vmatpush2.msra.mxu0 0.0
    %5195 = vmatprep.subr.mxu0 0.0
    %5196 = vmatpush2.msra.mxu0 0.0
    %5197 = vmatprep.subr.mxu0 0.0
    %5198 = vmatpush2.msra.mxu0 0.0
    %5199 = vmatprep.subr.mxu0 0.0
    %5200 = vmatpush2.msra.mxu0 0.0
    %5201 = vmatprep.subr.mxu0 0.0
    %5202 = vmatpush2.msra.mxu0 0.0
    %5203 = vmatprep.subr.mxu0 0.0
    %5204 = vmatpush2.msra.mxu0 0.0
    %5205 = vmatprep.subr.mxu0 0.0
    %5206 = vmatpush2.msra.mxu0 0.0
    %5207 = vmatprep.subr.mxu0 0.0
    %5208 = vmatpush2.msra.mxu0 0.0
    %5209 = vmatprep.mubr.f32.mxu0 0.0
    %v5210 = vand.u32 %v4889, 4294901760
    %v5211 = vsub.f32 %v4889, %v5210
    %v5212 = vand.u32 %v5211, 4294901760
    %5213 = vmatmul.mubr.f32.gmra.mxu0 %v5212
    %v5214 = vpop.f32.mrf.mxu0
    %v5215 = vadd.f32 %v5138, %v5214
    %v5216 = vpop.f32.mrf.mxu0
    %5217 = vdwg.mxu0
    %5218 = vmatprep.subr.mxu0 0.0
    %5219 = vmatpush1.msra.mxu0 0.0
    %5220 = vmatprep.subr.mxu0 0.0
    %5221 = vmatpush1.msra.mxu0 0.0
    %5222 = vmatprep.subr.mxu0 0.0
    %5223 = vmatpush1.msra.mxu0 0.0
    %5224 = vmatprep.subr.mxu0 0.0
    %5225 = vmatpush1.msra.mxu0 0.0
    %5226 = vmatprep.subr.mxu0 0.0
    %5227 = vmatpush1.msra.mxu0 0.0
    %5228 = vmatprep.subr.mxu0 0.0
    %5229 = vmatpush1.msra.mxu0 0.0
    %5230 = vmatprep.subr.mxu0 0.0
    %5231 = vmatpush1.msra.mxu0 0.0
    %5232 = vmatprep.subr.mxu0 0.0
    %5233 = vmatpush1.msra.mxu0 0.0
    %5234 = vmatprep.subr.mxu0 0.0
    %5235 = vmatpush1.msra.mxu0 0.0
    %5236 = vmatprep.subr.mxu0 0.0
    %5237 = vmatpush1.msra.mxu0 0.0
    %5238 = vmatprep.subr.mxu0 0.0
    %5239 = vmatpush1.msra.mxu0 0.0
    %5240 = vmatprep.subr.mxu0 0.0
    %5241 = vmatpush1.msra.mxu0 0.0
    %5242 = vmatprep.subr.mxu0 0.0
    %v5243 = vand.u32 %v111, 4294901760
    %v5244 = vsub.f32 %v111, %v5243
    %v5245 = vand.u32 %v5244, 4294901760
    %5246 = vmatpush1.msra.mxu0 %v5245
    %5247 = vmatprep.subr.mxu0 0.0
    %v5248 = vand.u32 %v110, 4294901760
    %v5249 = vsub.f32 %v110, %v5248
    %v5250 = vand.u32 %v5249, 4294901760
    %5251 = vmatpush1.msra.mxu0 %v5250
    %5252 = vmatprep.subr.mxu0 0.0
    %v5253 = vand.u32 %v109, 4294901760
    %v5254 = vsub.f32 %v109, %v5253
    %v5255 = vand.u32 %v5254, 4294901760
    %5256 = vmatpush1.msra.mxu0 %v5255
    %5257 = vmatprep.subr.mxu0 0.0
    %v5258 = vand.u32 %v108, 4294901760
    %v5259 = vsub.f32 %v108, %v5258
    %v5260 = vand.u32 %v5259, 4294901760
    %5261 = vmatpush1.msra.mxu0 %v5260
    %5262 = vmatprep.subr.mxu0 0.0
    %5263 = vmatpush2.msra.mxu0 0.0
    %5264 = vmatprep.subr.mxu0 0.0
    %5265 = vmatpush2.msra.mxu0 0.0
    %5266 = vmatprep.subr.mxu0 0.0
    %5267 = vmatpush2.msra.mxu0 0.0
    %5268 = vmatprep.subr.mxu0 0.0
    %5269 = vmatpush2.msra.mxu0 0.0
    %5270 = vmatprep.subr.mxu0 0.0
    %5271 = vmatpush2.msra.mxu0 0.0
    %5272 = vmatprep.subr.mxu0 0.0
    %5273 = vmatpush2.msra.mxu0 0.0
    %5274 = vmatprep.subr.mxu0 0.0
    %5275 = vmatpush2.msra.mxu0 0.0
    %5276 = vmatprep.subr.mxu0 0.0
    %5277 = vmatpush2.msra.mxu0 0.0
    %5278 = vmatprep.subr.mxu0 0.0
    %5279 = vmatpush2.msra.mxu0 0.0
    %5280 = vmatprep.subr.mxu0 0.0
    %5281 = vmatpush2.msra.mxu0 0.0
    %5282 = vmatprep.subr.mxu0 0.0
    %5283 = vmatpush2.msra.mxu0 0.0
    %5284 = vmatprep.subr.mxu0 0.0
    %5285 = vmatpush2.msra.mxu0 0.0
    %5286 = vmatprep.subr.mxu0 0.0
    %5287 = vmatpush2.msra.mxu0 0.0
    %5288 = vmatprep.subr.mxu0 0.0
    %5289 = vmatpush2.msra.mxu0 0.0
    %5290 = vmatprep.subr.mxu0 0.0
    %5291 = vmatpush2.msra.mxu0 0.0
    %5292 = vmatprep.subr.mxu0 0.0
    %5293 = vmatpush2.msra.mxu0 0.0
    %5294 = vmatprep.mubr.f32.mxu0 0.0
    %v5295 = vand.u32 %v4889, 4294901760
    %5296 = vmatmul.mubr.f32.gmra.mxu0 %v5295
    %v5297 = vpop.f32.mrf.mxu0
    %v5298 = vadd.f32 %v5215, %v5297
    %v5299 = vpop.f32.mrf.mxu0
    %5300 = vdwg.mxu0
    %5301 = vmatprep.subr.mxu0 0.0
    %5302 = vmatpush1.msra.mxu0 0.0
    %5303 = vmatprep.subr.mxu0 0.0
    %5304 = vmatpush1.msra.mxu0 0.0
    %5305 = vmatprep.subr.mxu0 0.0
    %5306 = vmatpush1.msra.mxu0 0.0
    %5307 = vmatprep.subr.mxu0 0.0
    %5308 = vmatpush1.msra.mxu0 0.0
    %5309 = vmatprep.subr.mxu0 0.0
    %5310 = vmatpush1.msra.mxu0 0.0
    %5311 = vmatprep.subr.mxu0 0.0
    %5312 = vmatpush1.msra.mxu0 0.0
    %5313 = vmatprep.subr.mxu0 0.0
    %5314 = vmatpush1.msra.mxu0 0.0
    %5315 = vmatprep.subr.mxu0 0.0
    %5316 = vmatpush1.msra.mxu0 0.0
    %5317 = vmatprep.subr.mxu0 0.0
    %5318 = vmatpush1.msra.mxu0 0.0
    %5319 = vmatprep.subr.mxu0 0.0
    %5320 = vmatpush1.msra.mxu0 0.0
    %5321 = vmatprep.subr.mxu0 0.0
    %5322 = vmatpush1.msra.mxu0 0.0
    %5323 = vmatprep.subr.mxu0 0.0
    %5324 = vmatpush1.msra.mxu0 0.0
    %5325 = vmatprep.subr.mxu0 0.0
    %v5326 = vand.u32 %v111, 4294901760
    %5327 = vmatpush1.msra.mxu0 %v5326
    %5328 = vmatprep.subr.mxu0 0.0
    %v5329 = vand.u32 %v110, 4294901760
    %5330 = vmatpush1.msra.mxu0 %v5329
    %5331 = vmatprep.subr.mxu0 0.0
    %v5332 = vand.u32 %v109, 4294901760
    %5333 = vmatpush1.msra.mxu0 %v5332
    %5334 = vmatprep.subr.mxu0 0.0
    %v5335 = vand.u32 %v108, 4294901760
    %5336 = vmatpush1.msra.mxu0 %v5335
    %5337 = vmatprep.subr.mxu0 0.0
    %5338 = vmatpush2.msra.mxu0 0.0
    %5339 = vmatprep.subr.mxu0 0.0
    %5340 = vmatpush2.msra.mxu0 0.0
    %5341 = vmatprep.subr.mxu0 0.0
    %5342 = vmatpush2.msra.mxu0 0.0
    %5343 = vmatprep.subr.mxu0 0.0
    %5344 = vmatpush2.msra.mxu0 0.0
    %5345 = vmatprep.subr.mxu0 0.0
    %5346 = vmatpush2.msra.mxu0 0.0
    %5347 = vmatprep.subr.mxu0 0.0
    %5348 = vmatpush2.msra.mxu0 0.0
    %5349 = vmatprep.subr.mxu0 0.0
    %5350 = vmatpush2.msra.mxu0 0.0
    %5351 = vmatprep.subr.mxu0 0.0
    %5352 = vmatpush2.msra.mxu0 0.0
    %5353 = vmatprep.subr.mxu0 0.0
    %5354 = vmatpush2.msra.mxu0 0.0
    %5355 = vmatprep.subr.mxu0 0.0
    %5356 = vmatpush2.msra.mxu0 0.0
    %5357 = vmatprep.subr.mxu0 0.0
    %5358 = vmatpush2.msra.mxu0 0.0
    %5359 = vmatprep.subr.mxu0 0.0
    %5360 = vmatpush2.msra.mxu0 0.0
    %5361 = vmatprep.subr.mxu0 0.0
    %5362 = vmatpush2.msra.mxu0 0.0
    %5363 = vmatprep.subr.mxu0 0.0
    %5364 = vmatpush2.msra.mxu0 0.0
    %5365 = vmatprep.subr.mxu0 0.0
    %5366 = vmatpush2.msra.mxu0 0.0
    %5367 = vmatprep.subr.mxu0 0.0
    %5368 = vmatpush2.msra.mxu0 0.0
    %5369 = vmatprep.mubr.f32.mxu0 0.0
    %v5370 = vand.u32 %v4889, 4294901760
    %5371 = vmatmul.mubr.f32.gmra.mxu0 %v5370
    %v5372 = vpop.f32.mrf.mxu0
    %v5373 = vadd.f32 %v5298, %v5372
    %v5374 = vpop.f32.mrf.mxu0
    %5375 = vdwg.mxu0
    %v5376 = vadd.f32 %v4887, %v5373
    %v5377 = vtanh.pop %v5376
    %v5378 = vmul.f32 %v5377, 0.5
    %v5379 = vadd.f32 %v5378, 0.5
    %v5380 = vsel %vm119, %v5377, %v5379
    %v5382 = vlaneseq
    %v5383 = vshrl.u32 %v5382, 7
    %v5384 = vsub.s32 0, %v5383
    %v5385 = vrot.slane %v4886, %v5384
    %5386 = vrot.lane.b32.xlu0 %v5385, 32
    %v5387 = vpop.permute.xlu0 %5386
    %v5389 = vmul.f32 %v5380, %v5387
    %5391 = vrot.lane.b32.xlu0 %v5380, 64
    %v5392 = vpop.permute.xlu0 %5391
    %v5394 = vmul.f32 %v5380, %v5392
    %5396 = vrot.lane.b32.xlu0 %v5394, 32
    %v5397 = vpop.permute.xlu0 %5396
    %v5399 = vadd.f32 %v5389, %v5397
    %v5400 = vtanh.pop %v5399
    %5402 = vrot.lane.b32.xlu0 %v5400, 64
    %v5403 = vpop.permute.xlu0 %5402
    %v5405 = vmul.f32 %v5380, %v5403
    %v5406 = vld [vmem:[%s68] sm:$0x1]
    %5408 = vrot.lane.b32.xlu0 %v5405, 32
    %v5409 = vpop.permute.xlu0 %5408
    %v5410 = vsel %vm124, %v5409, 0
    %5412 = vmatprep.subr.mxu0 0.0
    %5413 = vmatpush1.msra.mxu0 0.0
    %5414 = vmatprep.subr.mxu0 0.0
    %5415 = vmatpush1.msra.mxu0 0.0
    %5416 = vmatprep.subr.mxu0 0.0
    %5417 = vmatpush1.msra.mxu0 0.0
    %5418 = vmatprep.subr.mxu0 0.0
    %5419 = vmatpush1.msra.mxu0 0.0
    %5420 = vmatprep.subr.mxu0 0.0
    %5421 = vmatpush1.msra.mxu0 0.0
    %5422 = vmatprep.subr.mxu0 0.0
    %5423 = vmatpush1.msra.mxu0 0.0
    %5424 = vmatprep.subr.mxu0 0.0
    %5425 = vmatpush1.msra.mxu0 0.0
    %5426 = vmatprep.subr.mxu0 0.0
    %5427 = vmatpush1.msra.mxu0 0.0
    %5428 = vmatprep.subr.mxu0 0.0
    %5429 = vmatpush1.msra.mxu0 0.0
    %5430 = vmatprep.subr.mxu0 0.0
    %5431 = vmatpush1.msra.mxu0 0.0
    %5432 = vmatprep.subr.mxu0 0.0
    %5433 = vmatpush1.msra.mxu0 0.0
    %5434 = vmatprep.subr.mxu0 0.0
    %5435 = vmatpush1.msra.mxu0 0.0
    %5436 = vmatprep.subr.mxu0 0.0
    %v5437 = vand.u32 %v111, 4294901760
    %5438 = vmatpush1.msra.mxu0 %v5437
    %5439 = vmatprep.subr.mxu0 0.0
    %v5440 = vand.u32 %v110, 4294901760
    %5441 = vmatpush1.msra.mxu0 %v5440
    %5442 = vmatprep.subr.mxu0 0.0
    %v5443 = vand.u32 %v109, 4294901760
    %5444 = vmatpush1.msra.mxu0 %v5443
    %5445 = vmatprep.subr.mxu0 0.0
    %v5446 = vand.u32 %v108, 4294901760
    %5447 = vmatpush1.msra.mxu0 %v5446
    %5448 = vmatprep.subr.mxu0 0.0
    %5449 = vmatpush2.msra.mxu0 0.0
    %5450 = vmatprep.subr.mxu0 0.0
    %5451 = vmatpush2.msra.mxu0 0.0
    %5452 = vmatprep.subr.mxu0 0.0
    %5453 = vmatpush2.msra.mxu0 0.0
    %5454 = vmatprep.subr.mxu0 0.0
    %5455 = vmatpush2.msra.mxu0 0.0
    %5456 = vmatprep.subr.mxu0 0.0
    %5457 = vmatpush2.msra.mxu0 0.0
    %5458 = vmatprep.subr.mxu0 0.0
    %5459 = vmatpush2.msra.mxu0 0.0
    %5460 = vmatprep.subr.mxu0 0.0
    %5461 = vmatpush2.msra.mxu0 0.0
    %5462 = vmatprep.subr.mxu0 0.0
    %5463 = vmatpush2.msra.mxu0 0.0
    %5464 = vmatprep.subr.mxu0 0.0
    %5465 = vmatpush2.msra.mxu0 0.0
    %5466 = vmatprep.subr.mxu0 0.0
    %5467 = vmatpush2.msra.mxu0 0.0
    %5468 = vmatprep.subr.mxu0 0.0
    %5469 = vmatpush2.msra.mxu0 0.0
    %5470 = vmatprep.subr.mxu0 0.0
    %5471 = vmatpush2.msra.mxu0 0.0
    %5472 = vmatprep.subr.mxu0 0.0
    %5473 = vmatpush2.msra.mxu0 0.0
    %5474 = vmatprep.subr.mxu0 0.0
    %5475 = vmatpush2.msra.mxu0 0.0
    %5476 = vmatprep.subr.mxu0 0.0
    %5477 = vmatpush2.msra.mxu0 0.0
    %5478 = vmatprep.subr.mxu0 0.0
    %5479 = vmatpush2.msra.mxu0 0.0
    %5480 = vmatprep.mubr.f32.mxu0 0.0
    %v5481 = vand.u32 %v5410, 4294901760
    %v5482 = vsub.f32 %v5410, %v5481
    %v5483 = vand.u32 %v5482, 4294901760
    %v5484 = vsub.f32 %v5482, %v5483
    %v5485 = vand.u32 %v5484, 4294901760
    %5486 = vmatmul.mubr.f32.gmra.mxu0 %v5485
    %v5487 = vpop.f32.mrf.mxu0
    %v5488 = vadd.f32 0.0, %v5487
    %v5489 = vpop.f32.mrf.mxu0
    %5490 = vdwg.mxu0
    %5491 = vmatprep.subr.mxu0 0.0
    %5492 = vmatpush1.msra.mxu0 0.0
    %5493 = vmatprep.subr.mxu0 0.0
    %5494 = vmatpush1.msra.mxu0 0.0
    %5495 = vmatprep.subr.mxu0 0.0
    %5496 = vmatpush1.msra.mxu0 0.0
    %5497 = vmatprep.subr.mxu0 0.0
    %5498 = vmatpush1.msra.mxu0 0.0
    %5499 = vmatprep.subr.mxu0 0.0
    %5500 = vmatpush1.msra.mxu0 0.0
    %5501 = vmatprep.subr.mxu0 0.0
    %5502 = vmatpush1.msra.mxu0 0.0
    %5503 = vmatprep.subr.mxu0 0.0
    %5504 = vmatpush1.msra.mxu0 0.0
    %5505 = vmatprep.subr.mxu0 0.0
    %5506 = vmatpush1.msra.mxu0 0.0
    %5507 = vmatprep.subr.mxu0 0.0
    %5508 = vmatpush1.msra.mxu0 0.0
    %5509 = vmatprep.subr.mxu0 0.0
    %5510 = vmatpush1.msra.mxu0 0.0
    %5511 = vmatprep.subr.mxu0 0.0
    %5512 = vmatpush1.msra.mxu0 0.0
    %5513 = vmatprep.subr.mxu0 0.0
    %5514 = vmatpush1.msra.mxu0 0.0
    %5515 = vmatprep.subr.mxu0 0.0
    %v5516 = vand.u32 %v111, 4294901760
    %v5517 = vsub.f32 %v111, %v5516
    %v5518 = vand.u32 %v5517, 4294901760
    %v5519 = vsub.f32 %v5517, %v5518
    %v5520 = vand.u32 %v5519, 4294901760
    %5521 = vmatpush1.msra.mxu0 %v5520
    %5522 = vmatprep.subr.mxu0 0.0
    %v5523 = vand.u32 %v110, 4294901760
    %v5524 = vsub.f32 %v110, %v5523
    %v5525 = vand.u32 %v5524, 4294901760
    %v5526 = vsub.f32 %v5524, %v5525
    %v5527 = vand.u32 %v5526, 4294901760
    %5528 = vmatpush1.msra.mxu0 %v5527
    %5529 = vmatprep.subr.mxu0 0.0
    %v5530 = vand.u32 %v109, 4294901760
    %v5531 = vsub.f32 %v109, %v5530
    %v5532 = vand.u32 %v5531, 4294901760
    %v5533 = vsub.f32 %v5531, %v5532
    %v5534 = vand.u32 %v5533, 4294901760
    %5535 = vmatpush1.msra.mxu0 %v5534
    %5536 = vmatprep.subr.mxu0 0.0
    %v5537 = vand.u32 %v108, 4294901760
    %v5538 = vsub.f32 %v108, %v5537
    %v5539 = vand.u32 %v5538, 4294901760
    %v5540 = vsub.f32 %v5538, %v5539
    %v5541 = vand.u32 %v5540, 4294901760
    %5542 = vmatpush1.msra.mxu0 %v5541
    %5543 = vmatprep.subr.mxu0 0.0
    %5544 = vmatpush2.msra.mxu0 0.0
    %5545 = vmatprep.subr.mxu0 0.0
    %5546 = vmatpush2.msra.mxu0 0.0
    %5547 = vmatprep.subr.mxu0 0.0
    %5548 = vmatpush2.msra.mxu0 0.0
    %5549 = vmatprep.subr.mxu0 0.0
    %5550 = vmatpush2.msra.mxu0 0.0
    %5551 = vmatprep.subr.mxu0 0.0
    %5552 = vmatpush2.msra.mxu0 0.0
    %5553 = vmatprep.subr.mxu0 0.0
    %5554 = vmatpush2.msra.mxu0 0.0
    %5555 = vmatprep.subr.mxu0 0.0
    %5556 = vmatpush2.msra.mxu0 0.0
    %5557 = vmatprep.subr.mxu0 0.0
    %5558 = vmatpush2.msra.mxu0 0.0
    %5559 = vmatprep.subr.mxu0 0.0
    %5560 = vmatpush2.msra.mxu0 0.0
    %5561 = vmatprep.subr.mxu0 0.0
    %5562 = vmatpush2.msra.mxu0 0.0
    %5563 = vmatprep.subr.mxu0 0.0
    %5564 = vmatpush2.msra.mxu0 0.0
    %5565 = vmatprep.subr.mxu0 0.0
    %5566 = vmatpush2.msra.mxu0 0.0
    %5567 = vmatprep.subr.mxu0 0.0
    %5568 = vmatpush2.msra.mxu0 0.0
    %5569 = vmatprep.subr.mxu0 0.0
    %5570 = vmatpush2.msra.mxu0 0.0
    %5571 = vmatprep.subr.mxu0 0.0
    %5572 = vmatpush2.msra.mxu0 0.0
    %5573 = vmatprep.subr.mxu0 0.0
    %5574 = vmatpush2.msra.mxu0 0.0
    %5575 = vmatprep.mubr.f32.mxu0 0.0
    %v5576 = vand.u32 %v5410, 4294901760
    %5577 = vmatmul.mubr.f32.gmra.mxu0 %v5576
    %v5578 = vpop.f32.mrf.mxu0
    %v5579 = vadd.f32 %v5488, %v5578
    %v5580 = vpop.f32.mrf.mxu0
    %5581 = vdwg.mxu0
    %5582 = vmatprep.subr.mxu0 0.0
    %5583 = vmatpush1.msra.mxu0 0.0
    %5584 = vmatprep.subr.mxu0 0.0
    %5585 = vmatpush1.msra.mxu0 0.0
    %5586 = vmatprep.subr.mxu0 0.0
    %5587 = vmatpush1.msra.mxu0 0.0
    %5588 = vmatprep.subr.mxu0 0.0
    %5589 = vmatpush1.msra.mxu0 0.0
    %5590 = vmatprep.subr.mxu0 0.0
    %5591 = vmatpush1.msra.mxu0 0.0
    %5592 = vmatprep.subr.mxu0 0.0
    %5593 = vmatpush1.msra.mxu0 0.0
    %5594 = vmatprep.subr.mxu0 0.0
    %5595 = vmatpush1.msra.mxu0 0.0
    %5596 = vmatprep.subr.mxu0 0.0
    %5597 = vmatpush1.msra.mxu0 0.0
    %5598 = vmatprep.subr.mxu0 0.0
    %5599 = vmatpush1.msra.mxu0 0.0
    %5600 = vmatprep.subr.mxu0 0.0
    %5601 = vmatpush1.msra.mxu0 0.0
    %5602 = vmatprep.subr.mxu0 0.0
    %5603 = vmatpush1.msra.mxu0 0.0
    %5604 = vmatprep.subr.mxu0 0.0
    %5605 = vmatpush1.msra.mxu0 0.0
    %5606 = vmatprep.subr.mxu0 0.0
    %v5607 = vand.u32 %v111, 4294901760
    %v5608 = vsub.f32 %v111, %v5607
    %5609 = vmatpush1.msra.mxu0 %v5608
    %5610 = vmatprep.subr.mxu0 0.0
    %v5611 = vand.u32 %v110, 4294901760
    %v5612 = vsub.f32 %v110, %v5611
    %5613 = vmatpush1.msra.mxu0 %v5612
    %5614 = vmatprep.subr.mxu0 0.0
    %v5615 = vand.u32 %v109, 4294901760
    %v5616 = vsub.f32 %v109, %v5615
    %5617 = vmatpush1.msra.mxu0 %v5616
    %5618 = vmatprep.subr.mxu0 0.0
    %v5619 = vand.u32 %v108, 4294901760
    %v5620 = vsub.f32 %v108, %v5619
    %5621 = vmatpush1.msra.mxu0 %v5620
    %5622 = vmatprep.subr.mxu0 0.0
    %5623 = vmatpush2.msra.mxu0 0.0
    %5624 = vmatprep.subr.mxu0 0.0
    %5625 = vmatpush2.msra.mxu0 0.0
    %5626 = vmatprep.subr.mxu0 0.0
    %5627 = vmatpush2.msra.mxu0 0.0
    %5628 = vmatprep.subr.mxu0 0.0
    %5629 = vmatpush2.msra.mxu0 0.0
    %5630 = vmatprep.subr.mxu0 0.0
    %5631 = vmatpush2.msra.mxu0 0.0
    %5632 = vmatprep.subr.mxu0 0.0
    %5633 = vmatpush2.msra.mxu0 0.0
    %5634 = vmatprep.subr.mxu0 0.0
    %5635 = vmatpush2.msra.mxu0 0.0
    %5636 = vmatprep.subr.mxu0 0.0
    %5637 = vmatpush2.msra.mxu0 0.0
    %5638 = vmatprep.subr.mxu0 0.0
    %5639 = vmatpush2.msra.mxu0 0.0
    %5640 = vmatprep.subr.mxu0 0.0
    %5641 = vmatpush2.msra.mxu0 0.0
    %5642 = vmatprep.subr.mxu0 0.0
    %5643 = vmatpush2.msra.mxu0 0.0
    %5644 = vmatprep.subr.mxu0 0.0
    %5645 = vmatpush2.msra.mxu0 0.0
    %5646 = vmatprep.subr.mxu0 0.0
    %5647 = vmatpush2.msra.mxu0 0.0
    %5648 = vmatprep.subr.mxu0 0.0
    %5649 = vmatpush2.msra.mxu0 0.0
    %5650 = vmatprep.subr.mxu0 0.0
    %5651 = vmatpush2.msra.mxu0 0.0
    %5652 = vmatprep.subr.mxu0 0.0
    %5653 = vmatpush2.msra.mxu0 0.0
    %5654 = vmatprep.mubr.f32.mxu0 0.0
    %v5655 = vand.u32 %v5410, 4294901760
    %v5656 = vsub.f32 %v5410, %v5655
    %5657 = vmatmul.mubr.f32.gmra.mxu0 %v5656
    %v5658 = vpop.f32.mrf.mxu0
    %v5659 = vadd.f32 %v5579, %v5658
    %v5660 = vpop.f32.mrf.mxu0
    %5661 = vdwg.mxu0
    %5662 = vmatprep.subr.mxu0 0.0
    %5663 = vmatpush1.msra.mxu0 0.0
    %5664 = vmatprep.subr.mxu0 0.0
    %5665 = vmatpush1.msra.mxu0 0.0
    %5666 = vmatprep.subr.mxu0 0.0
    %5667 = vmatpush1.msra.mxu0 0.0
    %5668 = vmatprep.subr.mxu0 0.0
    %5669 = vmatpush1.msra.mxu0 0.0
    %5670 = vmatprep.subr.mxu0 0.0
    %5671 = vmatpush1.msra.mxu0 0.0
    %5672 = vmatprep.subr.mxu0 0.0
    %5673 = vmatpush1.msra.mxu0 0.0
    %5674 = vmatprep.subr.mxu0 0.0
    %5675 = vmatpush1.msra.mxu0 0.0
    %5676 = vmatprep.subr.mxu0 0.0
    %5677 = vmatpush1.msra.mxu0 0.0
    %5678 = vmatprep.subr.mxu0 0.0
    %5679 = vmatpush1.msra.mxu0 0.0
    %5680 = vmatprep.subr.mxu0 0.0
    %5681 = vmatpush1.msra.mxu0 0.0
    %5682 = vmatprep.subr.mxu0 0.0
    %5683 = vmatpush1.msra.mxu0 0.0
    %5684 = vmatprep.subr.mxu0 0.0
    %5685 = vmatpush1.msra.mxu0 0.0
    %5686 = vmatprep.subr.mxu0 0.0
    %v5687 = vand.u32 %v111, 4294901760
    %5688 = vmatpush1.msra.mxu0 %v5687
    %5689 = vmatprep.subr.mxu0 0.0
    %v5690 = vand.u32 %v110, 4294901760
    %5691 = vmatpush1.msra.mxu0 %v5690
    %5692 = vmatprep.subr.mxu0 0.0
    %v5693 = vand.u32 %v109, 4294901760
    %5694 = vmatpush1.msra.mxu0 %v5693
    %5695 = vmatprep.subr.mxu0 0.0
    %v5696 = vand.u32 %v108, 4294901760
    %5697 = vmatpush1.msra.mxu0 %v5696
    %5698 = vmatprep.subr.mxu0 0.0
    %5699 = vmatpush2.msra.mxu0 0.0
    %5700 = vmatprep.subr.mxu0 0.0
    %5701 = vmatpush2.msra.mxu0 0.0
    %5702 = vmatprep.subr.mxu0 0.0
    %5703 = vmatpush2.msra.mxu0 0.0
    %5704 = vmatprep.subr.mxu0 0.0
    %5705 = vmatpush2.msra.mxu0 0.0
    %5706 = vmatprep.subr.mxu0 0.0
    %5707 = vmatpush2.msra.mxu0 0.0
    %5708 = vmatprep.subr.mxu0 0.0
    %5709 = vmatpush2.msra.mxu0 0.0
    %5710 = vmatprep.subr.mxu0 0.0
    %5711 = vmatpush2.msra.mxu0 0.0
    %5712 = vmatprep.subr.mxu0 0.0
    %5713 = vmatpush2.msra.mxu0 0.0
    %5714 = vmatprep.subr.mxu0 0.0
    %5715 = vmatpush2.msra.mxu0 0.0
    %5716 = vmatprep.subr.mxu0 0.0
    %5717 = vmatpush2.msra.mxu0 0.0
    %5718 = vmatprep.subr.mxu0 0.0
    %5719 = vmatpush2.msra.mxu0 0.0
    %5720 = vmatprep.subr.mxu0 0.0
    %5721 = vmatpush2.msra.mxu0 0.0
    %5722 = vmatprep.subr.mxu0 0.0
    %5723 = vmatpush2.msra.mxu0 0.0
    %5724 = vmatprep.subr.mxu0 0.0
    %5725 = vmatpush2.msra.mxu0 0.0
    %5726 = vmatprep.subr.mxu0 0.0
    %5727 = vmatpush2.msra.mxu0 0.0
    %5728 = vmatprep.subr.mxu0 0.0
    %5729 = vmatpush2.msra.mxu0 0.0
    %5730 = vmatprep.mubr.f32.mxu0 0.0
    %v5731 = vand.u32 %v5410, 4294901760
    %v5732 = vsub.f32 %v5410, %v5731
    %v5733 = vand.u32 %v5732, 4294901760
    %5734 = vmatmul.mubr.f32.gmra.mxu0 %v5733
    %v5735 = vpop.f32.mrf.mxu0
    %v5736 = vadd.f32 %v5659, %v5735
    %v5737 = vpop.f32.mrf.mxu0
    %5738 = vdwg.mxu0
    %5739 = vmatprep.subr.mxu0 0.0
    %5740 = vmatpush1.msra.mxu0 0.0
    %5741 = vmatprep.subr.mxu0 0.0
    %5742 = vmatpush1.msra.mxu0 0.0
    %5743 = vmatprep.subr.mxu0 0.0
    %5744 = vmatpush1.msra.mxu0 0.0
    %5745 = vmatprep.subr.mxu0 0.0
    %5746 = vmatpush1.msra.mxu0 0.0
    %5747 = vmatprep.subr.mxu0 0.0
    %5748 = vmatpush1.msra.mxu0 0.0
    %5749 = vmatprep.subr.mxu0 0.0
    %5750 = vmatpush1.msra.mxu0 0.0
    %5751 = vmatprep.subr.mxu0 0.0
    %5752 = vmatpush1.msra.mxu0 0.0
    %5753 = vmatprep.subr.mxu0 0.0
    %5754 = vmatpush1.msra.mxu0 0.0
    %5755 = vmatprep.subr.mxu0 0.0
    %5756 = vmatpush1.msra.mxu0 0.0
    %5757 = vmatprep.subr.mxu0 0.0
    %5758 = vmatpush1.msra.mxu0 0.0
    %5759 = vmatprep.subr.mxu0 0.0
    %5760 = vmatpush1.msra.mxu0 0.0
    %5761 = vmatprep.subr.mxu0 0.0
    %5762 = vmatpush1.msra.mxu0 0.0
    %5763 = vmatprep.subr.mxu0 0.0
    %v5764 = vand.u32 %v111, 4294901760
    %v5765 = vsub.f32 %v111, %v5764
    %v5766 = vand.u32 %v5765, 4294901760
    %5767 = vmatpush1.msra.mxu0 %v5766
    %5768 = vmatprep.subr.mxu0 0.0
    %v5769 = vand.u32 %v110, 4294901760
    %v5770 = vsub.f32 %v110, %v5769
    %v5771 = vand.u32 %v5770, 4294901760
    %5772 = vmatpush1.msra.mxu0 %v5771
    %5773 = vmatprep.subr.mxu0 0.0
    %v5774 = vand.u32 %v109, 4294901760
    %v5775 = vsub.f32 %v109, %v5774
    %v5776 = vand.u32 %v5775, 4294901760
    %5777 = vmatpush1.msra.mxu0 %v5776
    %5778 = vmatprep.subr.mxu0 0.0
    %v5779 = vand.u32 %v108, 4294901760
    %v5780 = vsub.f32 %v108, %v5779
    %v5781 = vand.u32 %v5780, 4294901760
    %5782 = vmatpush1.msra.mxu0 %v5781
    %5783 = vmatprep.subr.mxu0 0.0
    %5784 = vmatpush2.msra.mxu0 0.0
    %5785 = vmatprep.subr.mxu0 0.0
    %5786 = vmatpush2.msra.mxu0 0.0
    %5787 = vmatprep.subr.mxu0 0.0
    %5788 = vmatpush2.msra.mxu0 0.0
    %5789 = vmatprep.subr.mxu0 0.0
    %5790 = vmatpush2.msra.mxu0 0.0
    %5791 = vmatprep.subr.mxu0 0.0
    %5792 = vmatpush2.msra.mxu0 0.0
    %5793 = vmatprep.subr.mxu0 0.0
    %5794 = vmatpush2.msra.mxu0 0.0
    %5795 = vmatprep.subr.mxu0 0.0
    %5796 = vmatpush2.msra.mxu0 0.0
    %5797 = vmatprep.subr.mxu0 0.0
    %5798 = vmatpush2.msra.mxu0 0.0
    %5799 = vmatprep.subr.mxu0 0.0
    %5800 = vmatpush2.msra.mxu0 0.0
    %5801 = vmatprep.subr.mxu0 0.0
    %5802 = vmatpush2.msra.mxu0 0.0
    %5803 = vmatprep.subr.mxu0 0.0
    %5804 = vmatpush2.msra.mxu0 0.0
    %5805 = vmatprep.subr.mxu0 0.0
    %5806 = vmatpush2.msra.mxu0 0.0
    %5807 = vmatprep.subr.mxu0 0.0
    %5808 = vmatpush2.msra.mxu0 0.0
    %5809 = vmatprep.subr.mxu0 0.0
    %5810 = vmatpush2.msra.mxu0 0.0
    %5811 = vmatprep.subr.mxu0 0.0
    %5812 = vmatpush2.msra.mxu0 0.0
    %5813 = vmatprep.subr.mxu0 0.0
    %5814 = vmatpush2.msra.mxu0 0.0
    %5815 = vmatprep.mubr.f32.mxu0 0.0
    %v5816 = vand.u32 %v5410, 4294901760
    %5817 = vmatmul.mubr.f32.gmra.mxu0 %v5816
    %v5818 = vpop.f32.mrf.mxu0
    %v5819 = vadd.f32 %v5736, %v5818
    %v5820 = vpop.f32.mrf.mxu0
    %5821 = vdwg.mxu0
    %5822 = vmatprep.subr.mxu0 0.0
    %5823 = vmatpush1.msra.mxu0 0.0
    %5824 = vmatprep.subr.mxu0 0.0
    %5825 = vmatpush1.msra.mxu0 0.0
    %5826 = vmatprep.subr.mxu0 0.0
    %5827 = vmatpush1.msra.mxu0 0.0
    %5828 = vmatprep.subr.mxu0 0.0
    %5829 = vmatpush1.msra.mxu0 0.0
    %5830 = vmatprep.subr.mxu0 0.0
    %5831 = vmatpush1.msra.mxu0 0.0
    %5832 = vmatprep.subr.mxu0 0.0
    %5833 = vmatpush1.msra.mxu0 0.0
    %5834 = vmatprep.subr.mxu0 0.0
    %5835 = vmatpush1.msra.mxu0 0.0
    %5836 = vmatprep.subr.mxu0 0.0
    %5837 = vmatpush1.msra.mxu0 0.0
    %5838 = vmatprep.subr.mxu0 0.0
    %5839 = vmatpush1.msra.mxu0 0.0
    %5840 = vmatprep.subr.mxu0 0.0
    %5841 = vmatpush1.msra.mxu0 0.0
    %5842 = vmatprep.subr.mxu0 0.0
    %5843 = vmatpush1.msra.mxu0 0.0
    %5844 = vmatprep.subr.mxu0 0.0
    %5845 = vmatpush1.msra.mxu0 0.0
    %5846 = vmatprep.subr.mxu0 0.0
    %v5847 = vand.u32 %v111, 4294901760
    %5848 = vmatpush1.msra.mxu0 %v5847
    %5849 = vmatprep.subr.mxu0 0.0
    %v5850 = vand.u32 %v110, 4294901760
    %5851 = vmatpush1.msra.mxu0 %v5850
    %5852 = vmatprep.subr.mxu0 0.0
    %v5853 = vand.u32 %v109, 4294901760
    %5854 = vmatpush1.msra.mxu0 %v5853
    %5855 = vmatprep.subr.mxu0 0.0
    %v5856 = vand.u32 %v108, 4294901760
    %5857 = vmatpush1.msra.mxu0 %v5856
    %5858 = vmatprep.subr.mxu0 0.0
    %5859 = vmatpush2.msra.mxu0 0.0
    %5860 = vmatprep.subr.mxu0 0.0
    %5861 = vmatpush2.msra.mxu0 0.0
    %5862 = vmatprep.subr.mxu0 0.0
    %5863 = vmatpush2.msra.mxu0 0.0
    %5864 = vmatprep.subr.mxu0 0.0
    %5865 = vmatpush2.msra.mxu0 0.0
    %5866 = vmatprep.subr.mxu0 0.0
    %5867 = vmatpush2.msra.mxu0 0.0
    %5868 = vmatprep.subr.mxu0 0.0
    %5869 = vmatpush2.msra.mxu0 0.0
    %5870 = vmatprep.subr.mxu0 0.0
    %5871 = vmatpush2.msra.mxu0 0.0
    %5872 = vmatprep.subr.mxu0 0.0
    %5873 = vmatpush2.msra.mxu0 0.0
    %5874 = vmatprep.subr.mxu0 0.0
    %5875 = vmatpush2.msra.mxu0 0.0
    %5876 = vmatprep.subr.mxu0 0.0
    %5877 = vmatpush2.msra.mxu0 0.0
    %5878 = vmatprep.subr.mxu0 0.0
    %5879 = vmatpush2.msra.mxu0 0.0
    %5880 = vmatprep.subr.mxu0 0.0
    %5881 = vmatpush2.msra.mxu0 0.0
    %5882 = vmatprep.subr.mxu0 0.0
    %5883 = vmatpush2.msra.mxu0 0.0
    %5884 = vmatprep.subr.mxu0 0.0
    %5885 = vmatpush2.msra.mxu0 0.0
    %5886 = vmatprep.subr.mxu0 0.0
    %5887 = vmatpush2.msra.mxu0 0.0
    %5888 = vmatprep.subr.mxu0 0.0
    %5889 = vmatpush2.msra.mxu0 0.0
    %5890 = vmatprep.mubr.f32.mxu0 0.0
    %v5891 = vand.u32 %v5410, 4294901760
    %5892 = vmatmul.mubr.f32.gmra.mxu0 %v5891
    %v5893 = vpop.f32.mrf.mxu0
    %v5894 = vadd.f32 %v5819, %v5893
    %v5895 = vpop.f32.mrf.mxu0
    %5896 = vdwg.mxu0
    %v5897 = vadd.f32 %v5406, %v5894
    %v5898 = vtanh.pop %v5897
    %v5899 = vmul.f32 %v5898, 0.5
    %v5900 = vadd.f32 %v5899, 0.5
    %v5901 = vsel %vm119, %v5898, %v5900
    %v5902 = vmul.f32 %v5901, %v5399
    %5904 = vrot.lane.b32.xlu0 %v5901, 64
    %v5905 = vpop.permute.xlu0 %5904
    %v5907 = vmul.f32 %v5901, %v5905
    %5909 = vrot.lane.b32.xlu0 %v5907, 32
    %v5910 = vpop.permute.xlu0 %5909
    %v5912 = vadd.f32 %v5902, %v5910
    %v5913 = vtanh.pop %v5912
    %5915 = vrot.lane.b32.xlu0 %v5913, 64
    %v5916 = vpop.permute.xlu0 %5915
    %v5918 = vmul.f32 %v5901, %v5916
    %v5919 = vld [vmem:[%s73] sm:$0x1]
    %5921 = vrot.lane.b32.xlu0 %v5918, 32
    %v5922 = vpop.permute.xlu0 %5921
    %v5923 = vsel %vm124, %v5922, 0
    %5925 = vmatprep.subr.mxu0 0.0
    %5926 = vmatpush1.msra.mxu0 0.0
    %5927 = vmatprep.subr.mxu0 0.0
    %5928 = vmatpush1.msra.mxu0 0.0
    %5929 = vmatprep.subr.mxu0 0.0
    %5930 = vmatpush1.msra.mxu0 0.0
    %5931 = vmatprep.subr.mxu0 0.0
    %5932 = vmatpush1.msra.mxu0 0.0
    %5933 = vmatprep.subr.mxu0 0.0
    %5934 = vmatpush1.msra.mxu0 0.0
    %5935 = vmatprep.subr.mxu0 0.0
    %5936 = vmatpush1.msra.mxu0 0.0
    %5937 = vmatprep.subr.mxu0 0.0
    %5938 = vmatpush1.msra.mxu0 0.0
    %5939 = vmatprep.subr.mxu0 0.0
    %5940 = vmatpush1.msra.mxu0 0.0
    %5941 = vmatprep.subr.mxu0 0.0
    %5942 = vmatpush1.msra.mxu0 0.0
    %5943 = vmatprep.subr.mxu0 0.0
    %5944 = vmatpush1.msra.mxu0 0.0
    %5945 = vmatprep.subr.mxu0 0.0
    %5946 = vmatpush1.msra.mxu0 0.0
    %5947 = vmatprep.subr.mxu0 0.0
    %5948 = vmatpush1.msra.mxu0 0.0
    %5949 = vmatprep.subr.mxu0 0.0
    %v5950 = vand.u32 %v111, 4294901760
    %5951 = vmatpush1.msra.mxu0 %v5950
    %5952 = vmatprep.subr.mxu0 0.0
    %v5953 = vand.u32 %v110, 4294901760
    %5954 = vmatpush1.msra.mxu0 %v5953
    %5955 = vmatprep.subr.mxu0 0.0
    %v5956 = vand.u32 %v109, 4294901760
    %5957 = vmatpush1.msra.mxu0 %v5956
    %5958 = vmatprep.subr.mxu0 0.0
    %v5959 = vand.u32 %v108, 4294901760
    %5960 = vmatpush1.msra.mxu0 %v5959
    %5961 = vmatprep.subr.mxu0 0.0
    %5962 = vmatpush2.msra.mxu0 0.0
    %5963 = vmatprep.subr.mxu0 0.0
    %5964 = vmatpush2.msra.mxu0 0.0
    %5965 = vmatprep.subr.mxu0 0.0
    %5966 = vmatpush2.msra.mxu0 0.0
    %5967 = vmatprep.subr.mxu0 0.0
    %5968 = vmatpush2.msra.mxu0 0.0
    %5969 = vmatprep.subr.mxu0 0.0
    %5970 = vmatpush2.msra.mxu0 0.0
    %5971 = vmatprep.subr.mxu0 0.0
    %5972 = vmatpush2.msra.mxu0 0.0
    %5973 = vmatprep.subr.mxu0 0.0
    %5974 = vmatpush2.msra.mxu0 0.0
    %5975 = vmatprep.subr.mxu0 0.0
    %5976 = vmatpush2.msra.mxu0 0.0
    %5977 = vmatprep.subr.mxu0 0.0
    %5978 = vmatpush2.msra.mxu0 0.0
    %5979 = vmatprep.subr.mxu0 0.0
    %5980 = vmatpush2.msra.mxu0 0.0
    %5981 = vmatprep.subr.mxu0 0.0
    %5982 = vmatpush2.msra.mxu0 0.0
    %5983 = vmatprep.subr.mxu0 0.0
    %5984 = vmatpush2.msra.mxu0 0.0
    %5985 = vmatprep.subr.mxu0 0.0
    %5986 = vmatpush2.msra.mxu0 0.0
    %5987 = vmatprep.subr.mxu0 0.0
    %5988 = vmatpush2.msra.mxu0 0.0
    %5989 = vmatprep.subr.mxu0 0.0
    %5990 = vmatpush2.msra.mxu0 0.0
    %5991 = vmatprep.subr.mxu0 0.0
    %5992 = vmatpush2.msra.mxu0 0.0
    %5993 = vmatprep.mubr.f32.mxu0 0.0
    %v5994 = vand.u32 %v5923, 4294901760
    %v5995 = vsub.f32 %v5923, %v5994
    %v5996 = vand.u32 %v5995, 4294901760
    %v5997 = vsub.f32 %v5995, %v5996
    %v5998 = vand.u32 %v5997, 4294901760
    %5999 = vmatmul.mubr.f32.gmra.mxu0 %v5998
    %v6000 = vpop.f32.mrf.mxu0
    %v6001 = vadd.f32 0.0, %v6000
    %v6002 = vpop.f32.mrf.mxu0
    %6003 = vdwg.mxu0
    %6004 = vmatprep.subr.mxu0 0.0
    %6005 = vmatpush1.msra.mxu0 0.0
    %6006 = vmatprep.subr.mxu0 0.0
    %6007 = vmatpush1.msra.mxu0 0.0
    %6008 = vmatprep.subr.mxu0 0.0
    %6009 = vmatpush1.msra.mxu0 0.0
    %6010 = vmatprep.subr.mxu0 0.0
    %6011 = vmatpush1.msra.mxu0 0.0
    %6012 = vmatprep.subr.mxu0 0.0
    %6013 = vmatpush1.msra.mxu0 0.0
    %6014 = vmatprep.subr.mxu0 0.0
    %6015 = vmatpush1.msra.mxu0 0.0
    %6016 = vmatprep.subr.mxu0 0.0
    %6017 = vmatpush1.msra.mxu0 0.0
    %6018 = vmatprep.subr.mxu0 0.0
    %6019 = vmatpush1.msra.mxu0 0.0
    %6020 = vmatprep.subr.mxu0 0.0
    %6021 = vmatpush1.msra.mxu0 0.0
    %6022 = vmatprep.subr.mxu0 0.0
    %6023 = vmatpush1.msra.mxu0 0.0
    %6024 = vmatprep.subr.mxu0 0.0
    %6025 = vmatpush1.msra.mxu0 0.0
    %6026 = vmatprep.subr.mxu0 0.0
    %6027 = vmatpush1.msra.mxu0 0.0
    %6028 = vmatprep.subr.mxu0 0.0
    %v6029 = vand.u32 %v111, 4294901760
    %v6030 = vsub.f32 %v111, %v6029
    %v6031 = vand.u32 %v6030, 4294901760
    %v6032 = vsub.f32 %v6030, %v6031
    %v6033 = vand.u32 %v6032, 4294901760
    %6034 = vmatpush1.msra.mxu0 %v6033
    %6035 = vmatprep.subr.mxu0 0.0
    %v6036 = vand.u32 %v110, 4294901760
    %v6037 = vsub.f32 %v110, %v6036
    %v6038 = vand.u32 %v6037, 4294901760
    %v6039 = vsub.f32 %v6037, %v6038
    %v6040 = vand.u32 %v6039, 4294901760
    %6041 = vmatpush1.msra.mxu0 %v6040
    %6042 = vmatprep.subr.mxu0 0.0
    %v6043 = vand.u32 %v109, 4294901760
    %v6044 = vsub.f32 %v109, %v6043
    %v6045 = vand.u32 %v6044, 4294901760
    %v6046 = vsub.f32 %v6044, %v6045
    %v6047 = vand.u32 %v6046, 4294901760
    %6048 = vmatpush1.msra.mxu0 %v6047
    %6049 = vmatprep.subr.mxu0 0.0
    %v6050 = vand.u32 %v108, 4294901760
    %v6051 = vsub.f32 %v108, %v6050
    %v6052 = vand.u32 %v6051, 4294901760
    %v6053 = vsub.f32 %v6051, %v6052
    %v6054 = vand.u32 %v6053, 4294901760
    %6055 = vmatpush1.msra.mxu0 %v6054
    %6056 = vmatprep.subr.mxu0 0.0
    %6057 = vmatpush2.msra.mxu0 0.0
    %6058 = vmatprep.subr.mxu0 0.0
    %6059 = vmatpush2.msra.mxu0 0.0
    %6060 = vmatprep.subr.mxu0 0.0
    %6061 = vmatpush2.msra.mxu0 0.0
    %6062 = vmatprep.subr.mxu0 0.0
    %6063 = vmatpush2.msra.mxu0 0.0
    %6064 = vmatprep.subr.mxu0 0.0
    %6065 = vmatpush2.msra.mxu0 0.0
    %6066 = vmatprep.subr.mxu0 0.0
    %6067 = vmatpush2.msra.mxu0 0.0
    %6068 = vmatprep.subr.mxu0 0.0
    %6069 = vmatpush2.msra.mxu0 0.0
    %6070 = vmatprep.subr.mxu0 0.0
    %6071 = vmatpush2.msra.mxu0 0.0
    %6072 = vmatprep.subr.mxu0 0.0
    %6073 = vmatpush2.msra.mxu0 0.0
    %6074 = vmatprep.subr.mxu0 0.0
    %6075 = vmatpush2.msra.mxu0 0.0
    %6076 = vmatprep.subr.mxu0 0.0
    %6077 = vmatpush2.msra.mxu0 0.0
    %6078 = vmatprep.subr.mxu0 0.0
    %6079 = vmatpush2.msra.mxu0 0.0
    %6080 = vmatprep.subr.mxu0 0.0
    %6081 = vmatpush2.msra.mxu0 0.0
    %6082 = vmatprep.subr.mxu0 0.0
    %6083 = vmatpush2.msra.mxu0 0.0
    %6084 = vmatprep.subr.mxu0 0.0
    %6085 = vmatpush2.msra.mxu0 0.0
    %6086 = vmatprep.subr.mxu0 0.0
    %6087 = vmatpush2.msra.mxu0 0.0
    %6088 = vmatprep.mubr.f32.mxu0 0.0
    %v6089 = vand.u32 %v5923, 4294901760
    %6090 = vmatmul.mubr.f32.gmra.mxu0 %v6089
    %v6091 = vpop.f32.mrf.mxu0
    %v6092 = vadd.f32 %v6001, %v6091
    %v6093 = vpop.f32.mrf.mxu0
    %6094 = vdwg.mxu0
    %6095 = vmatprep.subr.mxu0 0.0
    %6096 = vmatpush1.msra.mxu0 0.0
    %6097 = vmatprep.subr.mxu0 0.0
    %6098 = vmatpush1.msra.mxu0 0.0
    %6099 = vmatprep.subr.mxu0 0.0
    %6100 = vmatpush1.msra.mxu0 0.0
    %6101 = vmatprep.subr.mxu0 0.0
    %6102 = vmatpush1.msra.mxu0 0.0
    %6103 = vmatprep.subr.mxu0 0.0
    %6104 = vmatpush1.msra.mxu0 0.0
    %6105 = vmatprep.subr.mxu0 0.0
    %6106 = vmatpush1.msra.mxu0 0.0
    %6107 = vmatprep.subr.mxu0 0.0
    %6108 = vmatpush1.msra.mxu0 0.0
    %6109 = vmatprep.subr.mxu0 0.0
    %6110 = vmatpush1.msra.mxu0 0.0
    %6111 = vmatprep.subr.mxu0 0.0
    %6112 = vmatpush1.msra.mxu0 0.0
    %6113 = vmatprep.subr.mxu0 0.0
    %6114 = vmatpush1.msra.mxu0 0.0
    %6115 = vmatprep.subr.mxu0 0.0
    %6116 = vmatpush1.msra.mxu0 0.0
    %6117 = vmatprep.subr.mxu0 0.0
    %6118 = vmatpush1.msra.mxu0 0.0
    %6119 = vmatprep.subr.mxu0 0.0
    %v6120 = vand.u32 %v111, 4294901760
    %v6121 = vsub.f32 %v111, %v6120
    %6122 = vmatpush1.msra.mxu0 %v6121
    %6123 = vmatprep.subr.mxu0 0.0
    %v6124 = vand.u32 %v110, 4294901760
    %v6125 = vsub.f32 %v110, %v6124
    %6126 = vmatpush1.msra.mxu0 %v6125
    %6127 = vmatprep.subr.mxu0 0.0
    %v6128 = vand.u32 %v109, 4294901760
    %v6129 = vsub.f32 %v109, %v6128
    %6130 = vmatpush1.msra.mxu0 %v6129
    %6131 = vmatprep.subr.mxu0 0.0
    %v6132 = vand.u32 %v108, 4294901760
    %v6133 = vsub.f32 %v108, %v6132
    %6134 = vmatpush1.msra.mxu0 %v6133
    %6135 = vmatprep.subr.mxu0 0.0
    %6136 = vmatpush2.msra.mxu0 0.0
    %6137 = vmatprep.subr.mxu0 0.0
    %6138 = vmatpush2.msra.mxu0 0.0
    %6139 = vmatprep.subr.mxu0 0.0
    %6140 = vmatpush2.msra.mxu0 0.0
    %6141 = vmatprep.subr.mxu0 0.0
    %6142 = vmatpush2.msra.mxu0 0.0
    %6143 = vmatprep.subr.mxu0 0.0
    %6144 = vmatpush2.msra.mxu0 0.0
    %6145 = vmatprep.subr.mxu0 0.0
    %6146 = vmatpush2.msra.mxu0 0.0
    %6147 = vmatprep.subr.mxu0 0.0
    %6148 = vmatpush2.msra.mxu0 0.0
    %6149 = vmatprep.subr.mxu0 0.0
    %6150 = vmatpush2.msra.mxu0 0.0
    %6151 = vmatprep.subr.mxu0 0.0
    %6152 = vmatpush2.msra.mxu0 0.0
    %6153 = vmatprep.subr.mxu0 0.0
    %6154 = vmatpush2.msra.mxu0 0.0
    %6155 = vmatprep.subr.mxu0 0.0
    %6156 = vmatpush2.msra.mxu0 0.0
    %6157 = vmatprep.subr.mxu0 0.0
    %6158 = vmatpush2.msra.mxu0 0.0
    %6159 = vmatprep.subr.mxu0 0.0
    %6160 = vmatpush2.msra.mxu0 0.0
    %6161 = vmatprep.subr.mxu0 0.0
    %6162 = vmatpush2.msra.mxu0 0.0
    %6163 = vmatprep.subr.mxu0 0.0
    %6164 = vmatpush2.msra.mxu0 0.0
    %6165 = vmatprep.subr.mxu0 0.0
    %6166 = vmatpush2.msra.mxu0 0.0
    %6167 = vmatprep.mubr.f32.mxu0 0.0
    %v6168 = vand.u32 %v5923, 4294901760
    %v6169 = vsub.f32 %v5923, %v6168
    %6170 = vmatmul.mubr.f32.gmra.mxu0 %v6169
    %v6171 = vpop.f32.mrf.mxu0
    %v6172 = vadd.f32 %v6092, %v6171
    %v6173 = vpop.f32.mrf.mxu0
    %6174 = vdwg.mxu0
    %6175 = vmatprep.subr.mxu0 0.0
    %6176 = vmatpush1.msra.mxu0 0.0
    %6177 = vmatprep.subr.mxu0 0.0
    %6178 = vmatpush1.msra.mxu0 0.0
    %6179 = vmatprep.subr.mxu0 0.0
    %6180 = vmatpush1.msra.mxu0 0.0
    %6181 = vmatprep.subr.mxu0 0.0
    %6182 = vmatpush1.msra.mxu0 0.0
    %6183 = vmatprep.subr.mxu0 0.0
    %6184 = vmatpush1.msra.mxu0 0.0
    %6185 = vmatprep.subr.mxu0 0.0
    %6186 = vmatpush1.msra.mxu0 0.0
    %6187 = vmatprep.subr.mxu0 0.0
    %6188 = vmatpush1.msra.mxu0 0.0
    %6189 = vmatprep.subr.mxu0 0.0
    %6190 = vmatpush1.msra.mxu0 0.0
    %6191 = vmatprep.subr.mxu0 0.0
    %6192 = vmatpush1.msra.mxu0 0.0
    %6193 = vmatprep.subr.mxu0 0.0
    %6194 = vmatpush1.msra.mxu0 0.0
    %6195 = vmatprep.subr.mxu0 0.0
    %6196 = vmatpush1.msra.mxu0 0.0
    %6197 = vmatprep.subr.mxu0 0.0
    %6198 = vmatpush1.msra.mxu0 0.0
    %6199 = vmatprep.subr.mxu0 0.0
    %v6200 = vand.u32 %v111, 4294901760
    %6201 = vmatpush1.msra.mxu0 %v6200
    %6202 = vmatprep.subr.mxu0 0.0
    %v6203 = vand.u32 %v110, 4294901760
    %6204 = vmatpush1.msra.mxu0 %v6203
    %6205 = vmatprep.subr.mxu0 0.0
    %v6206 = vand.u32 %v109, 4294901760
    %6207 = vmatpush1.msra.mxu0 %v6206
    %6208 = vmatprep.subr.mxu0 0.0
    %v6209 = vand.u32 %v108, 4294901760
    %6210 = vmatpush1.msra.mxu0 %v6209
    %6211 = vmatprep.subr.mxu0 0.0
    %6212 = vmatpush2.msra.mxu0 0.0
    %6213 = vmatprep.subr.mxu0 0.0
    %6214 = vmatpush2.msra.mxu0 0.0
    %6215 = vmatprep.subr.mxu0 0.0
    %6216 = vmatpush2.msra.mxu0 0.0
    %6217 = vmatprep.subr.mxu0 0.0
    %6218 = vmatpush2.msra.mxu0 0.0
    %6219 = vmatprep.subr.mxu0 0.0
    %6220 = vmatpush2.msra.mxu0 0.0
    %6221 = vmatprep.subr.mxu0 0.0
    %6222 = vmatpush2.msra.mxu0 0.0
    %6223 = vmatprep.subr.mxu0 0.0
    %6224 = vmatpush2.msra.mxu0 0.0
    %6225 = vmatprep.subr.mxu0 0.0
    %6226 = vmatpush2.msra.mxu0 0.0
    %6227 = vmatprep.subr.mxu0 0.0
    %6228 = vmatpush2.msra.mxu0 0.0
    %6229 = vmatprep.subr.mxu0 0.0
    %6230 = vmatpush2.msra.mxu0 0.0
    %6231 = vmatprep.subr.mxu0 0.0
    %6232 = vmatpush2.msra.mxu0 0.0
    %6233 = vmatprep.subr.mxu0 0.0
    %6234 = vmatpush2.msra.mxu0 0.0
    %6235 = vmatprep.subr.mxu0 0.0
    %6236 = vmatpush2.msra.mxu0 0.0
    %6237 = vmatprep.subr.mxu0 0.0
    %6238 = vmatpush2.msra.mxu0 0.0
    %6239 = vmatprep.subr.mxu0 0.0
    %6240 = vmatpush2.msra.mxu0 0.0
    %6241 = vmatprep.subr.mxu0 0.0
    %6242 = vmatpush2.msra.mxu0 0.0
    %6243 = vmatprep.mubr.f32.mxu0 0.0
    %v6244 = vand.u32 %v5923, 4294901760
    %v6245 = vsub.f32 %v5923, %v6244
    %v6246 = vand.u32 %v6245, 4294901760
    %6247 = vmatmul.mubr.f32.gmra.mxu0 %v6246
    %v6248 = vpop.f32.mrf.mxu0
    %v6249 = vadd.f32 %v6172, %v6248
    %v6250 = vpop.f32.mrf.mxu0
    %6251 = vdwg.mxu0
    %6252 = vmatprep.subr.mxu0 0.0
    %6253 = vmatpush1.msra.mxu0 0.0
    %6254 = vmatprep.subr.mxu0 0.0
    %6255 = vmatpush1.msra.mxu0 0.0
    %6256 = vmatprep.subr.mxu0 0.0
    %6257 = vmatpush1.msra.mxu0 0.0
    %6258 = vmatprep.subr.mxu0 0.0
    %6259 = vmatpush1.msra.mxu0 0.0
    %6260 = vmatprep.subr.mxu0 0.0
    %6261 = vmatpush1.msra.mxu0 0.0
    %6262 = vmatprep.subr.mxu0 0.0
    %6263 = vmatpush1.msra.mxu0 0.0
    %6264 = vmatprep.subr.mxu0 0.0
    %6265 = vmatpush1.msra.mxu0 0.0
    %6266 = vmatprep.subr.mxu0 0.0
    %6267 = vmatpush1.msra.mxu0 0.0
    %6268 = vmatprep.subr.mxu0 0.0
    %6269 = vmatpush1.msra.mxu0 0.0
    %6270 = vmatprep.subr.mxu0 0.0
    %6271 = vmatpush1.msra.mxu0 0.0
    %6272 = vmatprep.subr.mxu0 0.0
    %6273 = vmatpush1.msra.mxu0 0.0
    %6274 = vmatprep.subr.mxu0 0.0
    %6275 = vmatpush1.msra.mxu0 0.0
    %6276 = vmatprep.subr.mxu0 0.0
    %v6277 = vand.u32 %v111, 4294901760
    %v6278 = vsub.f32 %v111, %v6277
    %v6279 = vand.u32 %v6278, 4294901760
    %6280 = vmatpush1.msra.mxu0 %v6279
    %6281 = vmatprep.subr.mxu0 0.0
    %v6282 = vand.u32 %v110, 4294901760
    %v6283 = vsub.f32 %v110, %v6282
    %v6284 = vand.u32 %v6283, 4294901760
    %6285 = vmatpush1.msra.mxu0 %v6284
    %6286 = vmatprep.subr.mxu0 0.0
    %v6287 = vand.u32 %v109, 4294901760
    %v6288 = vsub.f32 %v109, %v6287
    %v6289 = vand.u32 %v6288, 4294901760
    %6290 = vmatpush1.msra.mxu0 %v6289
    %6291 = vmatprep.subr.mxu0 0.0
    %v6292 = vand.u32 %v108, 4294901760
    %v6293 = vsub.f32 %v108, %v6292
    %v6294 = vand.u32 %v6293, 4294901760
    %6295 = vmatpush1.msra.mxu0 %v6294
    %6296 = vmatprep.subr.mxu0 0.0
    %6297 = vmatpush2.msra.mxu0 0.0
    %6298 = vmatprep.subr.mxu0 0.0
    %6299 = vmatpush2.msra.mxu0 0.0
    %6300 = vmatprep.subr.mxu0 0.0
    %6301 = vmatpush2.msra.mxu0 0.0
    %6302 = vmatprep.subr.mxu0 0.0
    %6303 = vmatpush2.msra.mxu0 0.0
    %6304 = vmatprep.subr.mxu0 0.0
    %6305 = vmatpush2.msra.mxu0 0.0
    %6306 = vmatprep.subr.mxu0 0.0
    %6307 = vmatpush2.msra.mxu0 0.0
    %6308 = vmatprep.subr.mxu0 0.0
    %6309 = vmatpush2.msra.mxu0 0.0
    %6310 = vmatprep.subr.mxu0 0.0
    %6311 = vmatpush2.msra.mxu0 0.0
    %6312 = vmatprep.subr.mxu0 0.0
    %6313 = vmatpush2.msra.mxu0 0.0
    %6314 = vmatprep.subr.mxu0 0.0
    %6315 = vmatpush2.msra.mxu0 0.0
    %6316 = vmatprep.subr.mxu0 0.0
    %6317 = vmatpush2.msra.mxu0 0.0
    %6318 = vmatprep.subr.mxu0 0.0
    %6319 = vmatpush2.msra.mxu0 0.0
    %6320 = vmatprep.subr.mxu0 0.0
    %6321 = vmatpush2.msra.mxu0 0.0
    %6322 = vmatprep.subr.mxu0 0.0
    %6323 = vmatpush2.msra.mxu0 0.0
    %6324 = vmatprep.subr.mxu0 0.0
    %6325 = vmatpush2.msra.mxu0 0.0
    %6326 = vmatprep.subr.mxu0 0.0
    %6327 = vmatpush2.msra.mxu0 0.0
    %6328 = vmatprep.mubr.f32.mxu0 0.0
    %v6329 = vand.u32 %v5923, 4294901760
    %6330 = vmatmul.mubr.f32.gmra.mxu0 %v6329
    %v6331 = vpop.f32.mrf.mxu0
    %v6332 = vadd.f32 %v6249, %v6331
    %v6333 = vpop.f32.mrf.mxu0
    %6334 = vdwg.mxu0
    %6335 = vmatprep.subr.mxu0 0.0
    %6336 = vmatpush1.msra.mxu0 0.0
    %6337 = vmatprep.subr.mxu0 0.0
    %6338 = vmatpush1.msra.mxu0 0.0
    %6339 = vmatprep.subr.mxu0 0.0
    %6340 = vmatpush1.msra.mxu0 0.0
    %6341 = vmatprep.subr.mxu0 0.0
    %6342 = vmatpush1.msra.mxu0 0.0
    %6343 = vmatprep.subr.mxu0 0.0
    %6344 = vmatpush1.msra.mxu0 0.0
    %6345 = vmatprep.subr.mxu0 0.0
    %6346 = vmatpush1.msra.mxu0 0.0
    %6347 = vmatprep.subr.mxu0 0.0
    %6348 = vmatpush1.msra.mxu0 0.0
    %6349 = vmatprep.subr.mxu0 0.0
    %6350 = vmatpush1.msra.mxu0 0.0
    %6351 = vmatprep.subr.mxu0 0.0
    %6352 = vmatpush1.msra.mxu0 0.0
    %6353 = vmatprep.subr.mxu0 0.0
    %6354 = vmatpush1.msra.mxu0 0.0
    %6355 = vmatprep.subr.mxu0 0.0
    %6356 = vmatpush1.msra.mxu0 0.0
    %6357 = vmatprep.subr.mxu0 0.0
    %6358 = vmatpush1.msra.mxu0 0.0
    %6359 = vmatprep.subr.mxu0 0.0
    %v6360 = vand.u32 %v111, 4294901760
    %6361 = vmatpush1.msra.mxu0 %v6360
    %6362 = vmatprep.subr.mxu0 0.0
    %v6363 = vand.u32 %v110, 4294901760
    %6364 = vmatpush1.msra.mxu0 %v6363
    %6365 = vmatprep.subr.mxu0 0.0
    %v6366 = vand.u32 %v109, 4294901760
    %6367 = vmatpush1.msra.mxu0 %v6366
    %6368 = vmatprep.subr.mxu0 0.0
    %v6369 = vand.u32 %v108, 4294901760
    %6370 = vmatpush1.msra.mxu0 %v6369
    %6371 = vmatprep.subr.mxu0 0.0
    %6372 = vmatpush2.msra.mxu0 0.0
    %6373 = vmatprep.subr.mxu0 0.0
    %6374 = vmatpush2.msra.mxu0 0.0
    %6375 = vmatprep.subr.mxu0 0.0
    %6376 = vmatpush2.msra.mxu0 0.0
    %6377 = vmatprep.subr.mxu0 0.0
    %6378 = vmatpush2.msra.mxu0 0.0
    %6379 = vmatprep.subr.mxu0 0.0
    %6380 = vmatpush2.msra.mxu0 0.0
    %6381 = vmatprep.subr.mxu0 0.0
    %6382 = vmatpush2.msra.mxu0 0.0
    %6383 = vmatprep.subr.mxu0 0.0
    %6384 = vmatpush2.msra.mxu0 0.0
    %6385 = vmatprep.subr.mxu0 0.0
    %6386 = vmatpush2.msra.mxu0 0.0
    %6387 = vmatprep.subr.mxu0 0.0
    %6388 = vmatpush2.msra.mxu0 0.0
    %6389 = vmatprep.subr.mxu0 0.0
    %6390 = vmatpush2.msra.mxu0 0.0
    %6391 = vmatprep.subr.mxu0 0.0
    %6392 = vmatpush2.msra.mxu0 0.0
    %6393 = vmatprep.subr.mxu0 0.0
    %6394 = vmatpush2.msra.mxu0 0.0
    %6395 = vmatprep.subr.mxu0 0.0
    %6396 = vmatpush2.msra.mxu0 0.0
    %6397 = vmatprep.subr.mxu0 0.0
    %6398 = vmatpush2.msra.mxu0 0.0
    %6399 = vmatprep.subr.mxu0 0.0
    %6400 = vmatpush2.msra.mxu0 0.0
    %6401 = vmatprep.subr.mxu0 0.0
    %6402 = vmatpush2.msra.mxu0 0.0
    %6403 = vmatprep.mubr.f32.mxu0 0.0
    %v6404 = vand.u32 %v5923, 4294901760
    %6405 = vmatmul.mubr.f32.gmra.mxu0 %v6404
    %v6406 = vpop.f32.mrf.mxu0
    %v6407 = vadd.f32 %v6332, %v6406
    %v6408 = vpop.f32.mrf.mxu0
    %6409 = vdwg.mxu0
    %v6410 = vadd.f32 %v5919, %v6407
    %v6411 = vtanh.pop %v6410
    %v6412 = vmul.f32 %v6411, 0.5
    %v6413 = vadd.f32 %v6412, 0.5
    %v6414 = vsel %vm119, %v6411, %v6413
    %v6415 = vmul.f32 %v6414, %v5912
    %6417 = vrot.lane.b32.xlu0 %v6414, 64
    %v6418 = vpop.permute.xlu0 %6417
    %v6420 = vmul.f32 %v6414, %v6418
    %6422 = vrot.lane.b32.xlu0 %v6420, 32
    %v6423 = vpop.permute.xlu0 %6422
    %v6425 = vadd.f32 %v6415, %v6423
    %v6426 = vtanh.pop %v6425
    %6428 = vrot.lane.b32.xlu0 %v6426, 64
    %v6429 = vpop.permute.xlu0 %6428
    %v6431 = vmul.f32 %v6414, %v6429
    %v6432 = vld [vmem:[%s78] sm:$0x1]
    %6434 = vrot.lane.b32.xlu0 %v6431, 32
    %v6435 = vpop.permute.xlu0 %6434
    %v6436 = vsel %vm124, %v6435, 0
    %6438 = vmatprep.subr.mxu0 0.0
    %6439 = vmatpush1.msra.mxu0 0.0
    %6440 = vmatprep.subr.mxu0 0.0
    %6441 = vmatpush1.msra.mxu0 0.0
    %6442 = vmatprep.subr.mxu0 0.0
    %6443 = vmatpush1.msra.mxu0 0.0
    %6444 = vmatprep.subr.mxu0 0.0
    %6445 = vmatpush1.msra.mxu0 0.0
    %6446 = vmatprep.subr.mxu0 0.0
    %6447 = vmatpush1.msra.mxu0 0.0
    %6448 = vmatprep.subr.mxu0 0.0
    %6449 = vmatpush1.msra.mxu0 0.0
    %6450 = vmatprep.subr.mxu0 0.0
    %6451 = vmatpush1.msra.mxu0 0.0
    %6452 = vmatprep.subr.mxu0 0.0
    %6453 = vmatpush1.msra.mxu0 0.0
    %6454 = vmatprep.subr.mxu0 0.0
    %6455 = vmatpush1.msra.mxu0 0.0
    %6456 = vmatprep.subr.mxu0 0.0
    %6457 = vmatpush1.msra.mxu0 0.0
    %6458 = vmatprep.subr.mxu0 0.0
    %6459 = vmatpush1.msra.mxu0 0.0
    %6460 = vmatprep.subr.mxu0 0.0
    %6461 = vmatpush1.msra.mxu0 0.0
    %6462 = vmatprep.subr.mxu0 0.0
    %v6463 = vand.u32 %v111, 4294901760
    %6464 = vmatpush1.msra.mxu0 %v6463
    %6465 = vmatprep.subr.mxu0 0.0
    %v6466 = vand.u32 %v110, 4294901760
    %6467 = vmatpush1.msra.mxu0 %v6466
    %6468 = vmatprep.subr.mxu0 0.0
    %v6469 = vand.u32 %v109, 4294901760
    %6470 = vmatpush1.msra.mxu0 %v6469
    %6471 = vmatprep.subr.mxu0 0.0
    %v6472 = vand.u32 %v108, 4294901760
    %6473 = vmatpush1.msra.mxu0 %v6472
    %6474 = vmatprep.subr.mxu0 0.0
    %6475 = vmatpush2.msra.mxu0 0.0
    %6476 = vmatprep.subr.mxu0 0.0
    %6477 = vmatpush2.msra.mxu0 0.0
    %6478 = vmatprep.subr.mxu0 0.0
    %6479 = vmatpush2.msra.mxu0 0.0
    %6480 = vmatprep.subr.mxu0 0.0
    %6481 = vmatpush2.msra.mxu0 0.0
    %6482 = vmatprep.subr.mxu0 0.0
    %6483 = vmatpush2.msra.mxu0 0.0
    %6484 = vmatprep.subr.mxu0 0.0
    %6485 = vmatpush2.msra.mxu0 0.0
    %6486 = vmatprep.subr.mxu0 0.0
    %6487 = vmatpush2.msra.mxu0 0.0
    %6488 = vmatprep.subr.mxu0 0.0
    %6489 = vmatpush2.msra.mxu0 0.0
    %6490 = vmatprep.subr.mxu0 0.0
    %6491 = vmatpush2.msra.mxu0 0.0
    %6492 = vmatprep.subr.mxu0 0.0
    %6493 = vmatpush2.msra.mxu0 0.0
    %6494 = vmatprep.subr.mxu0 0.0
    %6495 = vmatpush2.msra.mxu0 0.0
    %6496 = vmatprep.subr.mxu0 0.0
    %6497 = vmatpush2.msra.mxu0 0.0
    %6498 = vmatprep.subr.mxu0 0.0
    %6499 = vmatpush2.msra.mxu0 0.0
    %6500 = vmatprep.subr.mxu0 0.0
    %6501 = vmatpush2.msra.mxu0 0.0
    %6502 = vmatprep.subr.mxu0 0.0
    %6503 = vmatpush2.msra.mxu0 0.0
    %6504 = vmatprep.subr.mxu0 0.0
    %6505 = vmatpush2.msra.mxu0 0.0
    %6506 = vmatprep.mubr.f32.mxu0 0.0
    %v6507 = vand.u32 %v6436, 4294901760
    %v6508 = vsub.f32 %v6436, %v6507
    %v6509 = vand.u32 %v6508, 4294901760
    %v6510 = vsub.f32 %v6508, %v6509
    %v6511 = vand.u32 %v6510, 4294901760
    %6512 = vmatmul.mubr.f32.gmra.mxu0 %v6511
    %v6513 = vpop.f32.mrf.mxu0
    %v6514 = vadd.f32 0.0, %v6513
    %v6515 = vpop.f32.mrf.mxu0
    %6516 = vdwg.mxu0
    %6517 = vmatprep.subr.mxu0 0.0
    %6518 = vmatpush1.msra.mxu0 0.0
    %6519 = vmatprep.subr.mxu0 0.0
    %6520 = vmatpush1.msra.mxu0 0.0
    %6521 = vmatprep.subr.mxu0 0.0
    %6522 = vmatpush1.msra.mxu0 0.0
    %6523 = vmatprep.subr.mxu0 0.0
    %6524 = vmatpush1.msra.mxu0 0.0
    %6525 = vmatprep.subr.mxu0 0.0
    %6526 = vmatpush1.msra.mxu0 0.0
    %6527 = vmatprep.subr.mxu0 0.0
    %6528 = vmatpush1.msra.mxu0 0.0
    %6529 = vmatprep.subr.mxu0 0.0
    %6530 = vmatpush1.msra.mxu0 0.0
    %6531 = vmatprep.subr.mxu0 0.0
    %6532 = vmatpush1.msra.mxu0 0.0
    %6533 = vmatprep.subr.mxu0 0.0
    %6534 = vmatpush1.msra.mxu0 0.0
    %6535 = vmatprep.subr.mxu0 0.0
    %6536 = vmatpush1.msra.mxu0 0.0
    %6537 = vmatprep.subr.mxu0 0.0
    %6538 = vmatpush1.msra.mxu0 0.0
    %6539 = vmatprep.subr.mxu0 0.0
    %6540 = vmatpush1.msra.mxu0 0.0
    %6541 = vmatprep.subr.mxu0 0.0
    %v6542 = vand.u32 %v111, 4294901760
    %v6543 = vsub.f32 %v111, %v6542
    %v6544 = vand.u32 %v6543, 4294901760
    %v6545 = vsub.f32 %v6543, %v6544
    %v6546 = vand.u32 %v6545, 4294901760
    %6547 = vmatpush1.msra.mxu0 %v6546
    %6548 = vmatprep.subr.mxu0 0.0
    %v6549 = vand.u32 %v110, 4294901760
    %v6550 = vsub.f32 %v110, %v6549
    %v6551 = vand.u32 %v6550, 4294901760
    %v6552 = vsub.f32 %v6550, %v6551
    %v6553 = vand.u32 %v6552, 4294901760
    %6554 = vmatpush1.msra.mxu0 %v6553
    %6555 = vmatprep.subr.mxu0 0.0
    %v6556 = vand.u32 %v109, 4294901760
    %v6557 = vsub.f32 %v109, %v6556
    %v6558 = vand.u32 %v6557, 4294901760
    %v6559 = vsub.f32 %v6557, %v6558
    %v6560 = vand.u32 %v6559, 4294901760
    %6561 = vmatpush1.msra.mxu0 %v6560
    %6562 = vmatprep.subr.mxu0 0.0
    %v6563 = vand.u32 %v108, 4294901760
    %v6564 = vsub.f32 %v108, %v6563
    %v6565 = vand.u32 %v6564, 4294901760
    %v6566 = vsub.f32 %v6564, %v6565
    %v6567 = vand.u32 %v6566, 4294901760
    %6568 = vmatpush1.msra.mxu0 %v6567
    %6569 = vmatprep.subr.mxu0 0.0
    %6570 = vmatpush2.msra.mxu0 0.0
    %6571 = vmatprep.subr.mxu0 0.0
    %6572 = vmatpush2.msra.mxu0 0.0
    %6573 = vmatprep.subr.mxu0 0.0
    %6574 = vmatpush2.msra.mxu0 0.0
    %6575 = vmatprep.subr.mxu0 0.0
    %6576 = vmatpush2.msra.mxu0 0.0
    %6577 = vmatprep.subr.mxu0 0.0
    %6578 = vmatpush2.msra.mxu0 0.0
    %6579 = vmatprep.subr.mxu0 0.0
    %6580 = vmatpush2.msra.mxu0 0.0
    %6581 = vmatprep.subr.mxu0 0.0
    %6582 = vmatpush2.msra.mxu0 0.0
    %6583 = vmatprep.subr.mxu0 0.0
    %6584 = vmatpush2.msra.mxu0 0.0
    %6585 = vmatprep.subr.mxu0 0.0
    %6586 = vmatpush2.msra.mxu0 0.0
    %6587 = vmatprep.subr.mxu0 0.0
    %6588 = vmatpush2.msra.mxu0 0.0
    %6589 = vmatprep.subr.mxu0 0.0
    %6590 = vmatpush2.msra.mxu0 0.0
    %6591 = vmatprep.subr.mxu0 0.0
    %6592 = vmatpush2.msra.mxu0 0.0
    %6593 = vmatprep.subr.mxu0 0.0
    %6594 = vmatpush2.msra.mxu0 0.0
    %6595 = vmatprep.subr.mxu0 0.0
    %6596 = vmatpush2.msra.mxu0 0.0
    %6597 = vmatprep.subr.mxu0 0.0
    %6598 = vmatpush2.msra.mxu0 0.0
    %6599 = vmatprep.subr.mxu0 0.0
    %6600 = vmatpush2.msra.mxu0 0.0
    %6601 = vmatprep.mubr.f32.mxu0 0.0
    %v6602 = vand.u32 %v6436, 4294901760
    %6603 = vmatmul.mubr.f32.gmra.mxu0 %v6602
    %v6604 = vpop.f32.mrf.mxu0
    %v6605 = vadd.f32 %v6514, %v6604
    %v6606 = vpop.f32.mrf.mxu0
    %6607 = vdwg.mxu0
    %6608 = vmatprep.subr.mxu0 0.0
    %6609 = vmatpush1.msra.mxu0 0.0
    %6610 = vmatprep.subr.mxu0 0.0
    %6611 = vmatpush1.msra.mxu0 0.0
    %6612 = vmatprep.subr.mxu0 0.0
    %6613 = vmatpush1.msra.mxu0 0.0
    %6614 = vmatprep.subr.mxu0 0.0
    %6615 = vmatpush1.msra.mxu0 0.0
    %6616 = vmatprep.subr.mxu0 0.0
    %6617 = vmatpush1.msra.mxu0 0.0
    %6618 = vmatprep.subr.mxu0 0.0
    %6619 = vmatpush1.msra.mxu0 0.0
    %6620 = vmatprep.subr.mxu0 0.0
    %6621 = vmatpush1.msra.mxu0 0.0
    %6622 = vmatprep.subr.mxu0 0.0
    %6623 = vmatpush1.msra.mxu0 0.0
    %6624 = vmatprep.subr.mxu0 0.0
    %6625 = vmatpush1.msra.mxu0 0.0
    %6626 = vmatprep.subr.mxu0 0.0
    %6627 = vmatpush1.msra.mxu0 0.0
    %6628 = vmatprep.subr.mxu0 0.0
    %6629 = vmatpush1.msra.mxu0 0.0
    %6630 = vmatprep.subr.mxu0 0.0
    %6631 = vmatpush1.msra.mxu0 0.0
    %6632 = vmatprep.subr.mxu0 0.0
    %v6633 = vand.u32 %v111, 4294901760
    %v6634 = vsub.f32 %v111, %v6633
    %6635 = vmatpush1.msra.mxu0 %v6634
    %6636 = vmatprep.subr.mxu0 0.0
    %v6637 = vand.u32 %v110, 4294901760
    %v6638 = vsub.f32 %v110, %v6637
    %6639 = vmatpush1.msra.mxu0 %v6638
    %6640 = vmatprep.subr.mxu0 0.0
    %v6641 = vand.u32 %v109, 4294901760
    %v6642 = vsub.f32 %v109, %v6641
    %6643 = vmatpush1.msra.mxu0 %v6642
    %6644 = vmatprep.subr.mxu0 0.0
    %v6645 = vand.u32 %v108, 4294901760
    %v6646 = vsub.f32 %v108, %v6645
    %6647 = vmatpush1.msra.mxu0 %v6646
    %6648 = vmatprep.subr.mxu0 0.0
    %6649 = vmatpush2.msra.mxu0 0.0
    %6650 = vmatprep.subr.mxu0 0.0
    %6651 = vmatpush2.msra.mxu0 0.0
    %6652 = vmatprep.subr.mxu0 0.0
    %6653 = vmatpush2.msra.mxu0 0.0
    %6654 = vmatprep.subr.mxu0 0.0
    %6655 = vmatpush2.msra.mxu0 0.0
    %6656 = vmatprep.subr.mxu0 0.0
    %6657 = vmatpush2.msra.mxu0 0.0
    %6658 = vmatprep.subr.mxu0 0.0
    %6659 = vmatpush2.msra.mxu0 0.0
    %6660 = vmatprep.subr.mxu0 0.0
    %6661 = vmatpush2.msra.mxu0 0.0
    %6662 = vmatprep.subr.mxu0 0.0
    %6663 = vmatpush2.msra.mxu0 0.0
    %6664 = vmatprep.subr.mxu0 0.0
    %6665 = vmatpush2.msra.mxu0 0.0
    %6666 = vmatprep.subr.mxu0 0.0
    %6667 = vmatpush2.msra.mxu0 0.0
    %6668 = vmatprep.subr.mxu0 0.0
    %6669 = vmatpush2.msra.mxu0 0.0
    %6670 = vmatprep.subr.mxu0 0.0
    %6671 = vmatpush2.msra.mxu0 0.0
    %6672 = vmatprep.subr.mxu0 0.0
    %6673 = vmatpush2.msra.mxu0 0.0
    %6674 = vmatprep.subr.mxu0 0.0
    %6675 = vmatpush2.msra.mxu0 0.0
    %6676 = vmatprep.subr.mxu0 0.0
    %6677 = vmatpush2.msra.mxu0 0.0
    %6678 = vmatprep.subr.mxu0 0.0
    %6679 = vmatpush2.msra.mxu0 0.0
    %6680 = vmatprep.mubr.f32.mxu0 0.0
    %v6681 = vand.u32 %v6436, 4294901760
    %v6682 = vsub.f32 %v6436, %v6681
    %6683 = vmatmul.mubr.f32.gmra.mxu0 %v6682
    %v6684 = vpop.f32.mrf.mxu0
    %v6685 = vadd.f32 %v6605, %v6684
    %v6686 = vpop.f32.mrf.mxu0
    %6687 = vdwg.mxu0
    %6688 = vmatprep.subr.mxu0 0.0
    %6689 = vmatpush1.msra.mxu0 0.0
    %6690 = vmatprep.subr.mxu0 0.0
    %6691 = vmatpush1.msra.mxu0 0.0
    %6692 = vmatprep.subr.mxu0 0.0
    %6693 = vmatpush1.msra.mxu0 0.0
    %6694 = vmatprep.subr.mxu0 0.0
    %6695 = vmatpush1.msra.mxu0 0.0
    %6696 = vmatprep.subr.mxu0 0.0
    %6697 = vmatpush1.msra.mxu0 0.0
    %6698 = vmatprep.subr.mxu0 0.0
    %6699 = vmatpush1.msra.mxu0 0.0
    %6700 = vmatprep.subr.mxu0 0.0
    %6701 = vmatpush1.msra.mxu0 0.0
    %6702 = vmatprep.subr.mxu0 0.0
    %6703 = vmatpush1.msra.mxu0 0.0
    %6704 = vmatprep.subr.mxu0 0.0
    %6705 = vmatpush1.msra.mxu0 0.0
    %6706 = vmatprep.subr.mxu0 0.0
    %6707 = vmatpush1.msra.mxu0 0.0
    %6708 = vmatprep.subr.mxu0 0.0
    %6709 = vmatpush1.msra.mxu0 0.0
    %6710 = vmatprep.subr.mxu0 0.0
    %6711 = vmatpush1.msra.mxu0 0.0
    %6712 = vmatprep.subr.mxu0 0.0
    %v6713 = vand.u32 %v111, 4294901760
    %6714 = vmatpush1.msra.mxu0 %v6713
    %6715 = vmatprep.subr.mxu0 0.0
    %v6716 = vand.u32 %v110, 4294901760
    %6717 = vmatpush1.msra.mxu0 %v6716
    %6718 = vmatprep.subr.mxu0 0.0
    %v6719 = vand.u32 %v109, 4294901760
    %6720 = vmatpush1.msra.mxu0 %v6719
    %6721 = vmatprep.subr.mxu0 0.0
    %v6722 = vand.u32 %v108, 4294901760
    %6723 = vmatpush1.msra.mxu0 %v6722
    %6724 = vmatprep.subr.mxu0 0.0
    %6725 = vmatpush2.msra.mxu0 0.0
    %6726 = vmatprep.subr.mxu0 0.0
    %6727 = vmatpush2.msra.mxu0 0.0
    %6728 = vmatprep.subr.mxu0 0.0
    %6729 = vmatpush2.msra.mxu0 0.0
    %6730 = vmatprep.subr.mxu0 0.0
    %6731 = vmatpush2.msra.mxu0 0.0
    %6732 = vmatprep.subr.mxu0 0.0
    %6733 = vmatpush2.msra.mxu0 0.0
    %6734 = vmatprep.subr.mxu0 0.0
    %6735 = vmatpush2.msra.mxu0 0.0
    %6736 = vmatprep.subr.mxu0 0.0
    %6737 = vmatpush2.msra.mxu0 0.0
    %6738 = vmatprep.subr.mxu0 0.0
    %6739 = vmatpush2.msra.mxu0 0.0
    %6740 = vmatprep.subr.mxu0 0.0
    %6741 = vmatpush2.msra.mxu0 0.0
    %6742 = vmatprep.subr.mxu0 0.0
    %6743 = vmatpush2.msra.mxu0 0.0
    %6744 = vmatprep.subr.mxu0 0.0
    %6745 = vmatpush2.msra.mxu0 0.0
    %6746 = vmatprep.subr.mxu0 0.0
    %6747 = vmatpush2.msra.mxu0 0.0
    %6748 = vmatprep.subr.mxu0 0.0
    %6749 = vmatpush2.msra.mxu0 0.0
    %6750 = vmatprep.subr.mxu0 0.0
    %6751 = vmatpush2.msra.mxu0 0.0
    %6752 = vmatprep.subr.mxu0 0.0
    %6753 = vmatpush2.msra.mxu0 0.0
    %6754 = vmatprep.subr.mxu0 0.0
    %6755 = vmatpush2.msra.mxu0 0.0
    %6756 = vmatprep.mubr.f32.mxu0 0.0
    %v6757 = vand.u32 %v6436, 4294901760
    %v6758 = vsub.f32 %v6436, %v6757
    %v6759 = vand.u32 %v6758, 4294901760
    %6760 = vmatmul.mubr.f32.gmra.mxu0 %v6759
    %v6761 = vpop.f32.mrf.mxu0
    %v6762 = vadd.f32 %v6685, %v6761
    %v6763 = vpop.f32.mrf.mxu0
    %6764 = vdwg.mxu0
    %6765 = vmatprep.subr.mxu0 0.0
    %6766 = vmatpush1.msra.mxu0 0.0
    %6767 = vmatprep.subr.mxu0 0.0
    %6768 = vmatpush1.msra.mxu0 0.0
    %6769 = vmatprep.subr.mxu0 0.0
    %6770 = vmatpush1.msra.mxu0 0.0
    %6771 = vmatprep.subr.mxu0 0.0
    %6772 = vmatpush1.msra.mxu0 0.0
    %6773 = vmatprep.subr.mxu0 0.0
    %6774 = vmatpush1.msra.mxu0 0.0
    %6775 = vmatprep.subr.mxu0 0.0
    %6776 = vmatpush1.msra.mxu0 0.0
    %6777 = vmatprep.subr.mxu0 0.0
    %6778 = vmatpush1.msra.mxu0 0.0
    %6779 = vmatprep.subr.mxu0 0.0
    %6780 = vmatpush1.msra.mxu0 0.0
    %6781 = vmatprep.subr.mxu0 0.0
    %6782 = vmatpush1.msra.mxu0 0.0
    %6783 = vmatprep.subr.mxu0 0.0
    %6784 = vmatpush1.msra.mxu0 0.0
    %6785 = vmatprep.subr.mxu0 0.0
    %6786 = vmatpush1.msra.mxu0 0.0
    %6787 = vmatprep.subr.mxu0 0.0
    %6788 = vmatpush1.msra.mxu0 0.0
    %6789 = vmatprep.subr.mxu0 0.0
    %v6790 = vand.u32 %v111, 4294901760
    %v6791 = vsub.f32 %v111, %v6790
    %v6792 = vand.u32 %v6791, 4294901760
    %6793 = vmatpush1.msra.mxu0 %v6792
    %6794 = vmatprep.subr.mxu0 0.0
    %v6795 = vand.u32 %v110, 4294901760
    %v6796 = vsub.f32 %v110, %v6795
    %v6797 = vand.u32 %v6796, 4294901760
    %6798 = vmatpush1.msra.mxu0 %v6797
    %6799 = vmatprep.subr.mxu0 0.0
    %v6800 = vand.u32 %v109, 4294901760
    %v6801 = vsub.f32 %v109, %v6800
    %v6802 = vand.u32 %v6801, 4294901760
    %6803 = vmatpush1.msra.mxu0 %v6802
    %6804 = vmatprep.subr.mxu0 0.0
    %v6805 = vand.u32 %v108, 4294901760
    %v6806 = vsub.f32 %v108, %v6805
    %v6807 = vand.u32 %v6806, 4294901760
    %6808 = vmatpush1.msra.mxu0 %v6807
    %6809 = vmatprep.subr.mxu0 0.0
    %6810 = vmatpush2.msra.mxu0 0.0
    %6811 = vmatprep.subr.mxu0 0.0
    %6812 = vmatpush2.msra.mxu0 0.0
    %6813 = vmatprep.subr.mxu0 0.0
    %6814 = vmatpush2.msra.mxu0 0.0
    %6815 = vmatprep.subr.mxu0 0.0
    %6816 = vmatpush2.msra.mxu0 0.0
    %6817 = vmatprep.subr.mxu0 0.0
    %6818 = vmatpush2.msra.mxu0 0.0
    %6819 = vmatprep.subr.mxu0 0.0
    %6820 = vmatpush2.msra.mxu0 0.0
    %6821 = vmatprep.subr.mxu0 0.0
    %6822 = vmatpush2.msra.mxu0 0.0
    %6823 = vmatprep.subr.mxu0 0.0
    %6824 = vmatpush2.msra.mxu0 0.0
    %6825 = vmatprep.subr.mxu0 0.0
    %6826 = vmatpush2.msra.mxu0 0.0
    %6827 = vmatprep.subr.mxu0 0.0
    %6828 = vmatpush2.msra.mxu0 0.0
    %6829 = vmatprep.subr.mxu0 0.0
    %6830 = vmatpush2.msra.mxu0 0.0
    %6831 = vmatprep.subr.mxu0 0.0
    %6832 = vmatpush2.msra.mxu0 0.0
    %6833 = vmatprep.subr.mxu0 0.0
    %6834 = vmatpush2.msra.mxu0 0.0
    %6835 = vmatprep.subr.mxu0 0.0
    %6836 = vmatpush2.msra.mxu0 0.0
    %6837 = vmatprep.subr.mxu0 0.0
    %6838 = vmatpush2.msra.mxu0 0.0
    %6839 = vmatprep.subr.mxu0 0.0
    %6840 = vmatpush2.msra.mxu0 0.0
    %6841 = vmatprep.mubr.f32.mxu0 0.0
    %v6842 = vand.u32 %v6436, 4294901760
    %6843 = vmatmul.mubr.f32.gmra.mxu0 %v6842
    %v6844 = vpop.f32.mrf.mxu0
    %v6845 = vadd.f32 %v6762, %v6844
    %v6846 = vpop.f32.mrf.mxu0
    %6847 = vdwg.mxu0
    %6848 = vmatprep.subr.mxu0 0.0
    %6849 = vmatpush1.msra.mxu0 0.0
    %6850 = vmatprep.subr.mxu0 0.0
    %6851 = vmatpush1.msra.mxu0 0.0
    %6852 = vmatprep.subr.mxu0 0.0
    %6853 = vmatpush1.msra.mxu0 0.0
    %6854 = vmatprep.subr.mxu0 0.0
    %6855 = vmatpush1.msra.mxu0 0.0
    %6856 = vmatprep.subr.mxu0 0.0
    %6857 = vmatpush1.msra.mxu0 0.0
    %6858 = vmatprep.subr.mxu0 0.0
    %6859 = vmatpush1.msra.mxu0 0.0
    %6860 = vmatprep.subr.mxu0 0.0
    %6861 = vmatpush1.msra.mxu0 0.0
    %6862 = vmatprep.subr.mxu0 0.0
    %6863 = vmatpush1.msra.mxu0 0.0
    %6864 = vmatprep.subr.mxu0 0.0
    %6865 = vmatpush1.msra.mxu0 0.0
    %6866 = vmatprep.subr.mxu0 0.0
    %6867 = vmatpush1.msra.mxu0 0.0
    %6868 = vmatprep.subr.mxu0 0.0
    %6869 = vmatpush1.msra.mxu0 0.0
    %6870 = vmatprep.subr.mxu0 0.0
    %6871 = vmatpush1.msra.mxu0 0.0
    %6872 = vmatprep.subr.mxu0 0.0
    %v6873 = vand.u32 %v111, 4294901760
    %6874 = vmatpush1.msra.mxu0 %v6873
    %6875 = vmatprep.subr.mxu0 0.0
    %v6876 = vand.u32 %v110, 4294901760
    %6877 = vmatpush1.msra.mxu0 %v6876
    %6878 = vmatprep.subr.mxu0 0.0
    %v6879 = vand.u32 %v109, 4294901760
    %6880 = vmatpush1.msra.mxu0 %v6879
    %6881 = vmatprep.subr.mxu0 0.0
    %v6882 = vand.u32 %v108, 4294901760
    %6883 = vmatpush1.msra.mxu0 %v6882
    %6884 = vmatprep.subr.mxu0 0.0
    %6885 = vmatpush2.msra.mxu0 0.0
    %6886 = vmatprep.subr.mxu0 0.0
    %6887 = vmatpush2.msra.mxu0 0.0
    %6888 = vmatprep.subr.mxu0 0.0
    %6889 = vmatpush2.msra.mxu0 0.0
    %6890 = vmatprep.subr.mxu0 0.0
    %6891 = vmatpush2.msra.mxu0 0.0
    %6892 = vmatprep.subr.mxu0 0.0
    %6893 = vmatpush2.msra.mxu0 0.0
    %6894 = vmatprep.subr.mxu0 0.0
    %6895 = vmatpush2.msra.mxu0 0.0
    %6896 = vmatprep.subr.mxu0 0.0
    %6897 = vmatpush2.msra.mxu0 0.0
    %6898 = vmatprep.subr.mxu0 0.0
    %6899 = vmatpush2.msra.mxu0 0.0
    %6900 = vmatprep.subr.mxu0 0.0
    %6901 = vmatpush2.msra.mxu0 0.0
    %6902 = vmatprep.subr.mxu0 0.0
    %6903 = vmatpush2.msra.mxu0 0.0
    %6904 = vmatprep.subr.mxu0 0.0
    %6905 = vmatpush2.msra.mxu0 0.0
    %6906 = vmatprep.subr.mxu0 0.0
    %6907 = vmatpush2.msra.mxu0 0.0
    %6908 = vmatprep.subr.mxu0 0.0
    %6909 = vmatpush2.msra.mxu0 0.0
    %6910 = vmatprep.subr.mxu0 0.0
    %6911 = vmatpush2.msra.mxu0 0.0
    %6912 = vmatprep.subr.mxu0 0.0
    %6913 = vmatpush2.msra.mxu0 0.0
    %6914 = vmatprep.subr.mxu0 0.0
    %6915 = vmatpush2.msra.mxu0 0.0
    %6916 = vmatprep.mubr.f32.mxu0 0.0
    %v6917 = vand.u32 %v6436, 4294901760
    %6918 = vmatmul.mubr.f32.gmra.mxu0 %v6917
    %v6919 = vpop.f32.mrf.mxu0
    %v6920 = vadd.f32 %v6845, %v6919
    %v6921 = vpop.f32.mrf.mxu0
    %6922 = vdwg.mxu0
    %v6923 = vadd.f32 %v6432, %v6920
    %v6924 = vtanh.pop %v6923
    %v6925 = vmul.f32 %v6924, 0.5
    %v6926 = vadd.f32 %v6925, 0.5
    %v6927 = vsel %vm119, %v6924, %v6926
    %v6928 = vmul.f32 %v6927, %v6425
    %6930 = vrot.lane.b32.xlu0 %v6927, 64
    %v6931 = vpop.permute.xlu0 %6930
    %v6933 = vmul.f32 %v6927, %v6931
    %6935 = vrot.lane.b32.xlu0 %v6933, 32
    %v6936 = vpop.permute.xlu0 %6935
    %v6938 = vadd.f32 %v6928, %v6936
    %v6939 = vtanh.pop %v6938
    %6941 = vrot.lane.b32.xlu0 %v6939, 64
    %v6942 = vpop.permute.xlu0 %6941
    %v6944 = vmul.f32 %v6927, %v6942
    %v6945 = vld [vmem:[%s83] sm:$0x1]
    %6947 = vrot.lane.b32.xlu0 %v6944, 32
    %v6948 = vpop.permute.xlu0 %6947
    %v6949 = vsel %vm124, %v6948, 0
    %6951 = vmatprep.subr.mxu0 0.0
    %6952 = vmatpush1.msra.mxu0 0.0
    %6953 = vmatprep.subr.mxu0 0.0
    %6954 = vmatpush1.msra.mxu0 0.0
    %6955 = vmatprep.subr.mxu0 0.0
    %6956 = vmatpush1.msra.mxu0 0.0
    %6957 = vmatprep.subr.mxu0 0.0
    %6958 = vmatpush1.msra.mxu0 0.0
    %6959 = vmatprep.subr.mxu0 0.0
    %6960 = vmatpush1.msra.mxu0 0.0
    %6961 = vmatprep.subr.mxu0 0.0
    %6962 = vmatpush1.msra.mxu0 0.0
    %6963 = vmatprep.subr.mxu0 0.0
    %6964 = vmatpush1.msra.mxu0 0.0
    %6965 = vmatprep.subr.mxu0 0.0
    %6966 = vmatpush1.msra.mxu0 0.0
    %6967 = vmatprep.subr.mxu0 0.0
    %6968 = vmatpush1.msra.mxu0 0.0
    %6969 = vmatprep.subr.mxu0 0.0
    %6970 = vmatpush1.msra.mxu0 0.0
    %6971 = vmatprep.subr.mxu0 0.0
    %6972 = vmatpush1.msra.mxu0 0.0
    %6973 = vmatprep.subr.mxu0 0.0
    %6974 = vmatpush1.msra.mxu0 0.0
    %6975 = vmatprep.subr.mxu0 0.0
    %v6976 = vand.u32 %v111, 4294901760
    %6977 = vmatpush1.msra.mxu0 %v6976
    %6978 = vmatprep.subr.mxu0 0.0
    %v6979 = vand.u32 %v110, 4294901760
    %6980 = vmatpush1.msra.mxu0 %v6979
    %6981 = vmatprep.subr.mxu0 0.0
    %v6982 = vand.u32 %v109, 4294901760
    %6983 = vmatpush1.msra.mxu0 %v6982
    %6984 = vmatprep.subr.mxu0 0.0
    %v6985 = vand.u32 %v108, 4294901760
    %6986 = vmatpush1.msra.mxu0 %v6985
    %6987 = vmatprep.subr.mxu0 0.0
    %6988 = vmatpush2.msra.mxu0 0.0
    %6989 = vmatprep.subr.mxu0 0.0
    %6990 = vmatpush2.msra.mxu0 0.0
    %6991 = vmatprep.subr.mxu0 0.0
    %6992 = vmatpush2.msra.mxu0 0.0
    %6993 = vmatprep.subr.mxu0 0.0
    %6994 = vmatpush2.msra.mxu0 0.0
    %6995 = vmatprep.subr.mxu0 0.0
    %6996 = vmatpush2.msra.mxu0 0.0
    %6997 = vmatprep.subr.mxu0 0.0
    %6998 = vmatpush2.msra.mxu0 0.0
    %6999 = vmatprep.subr.mxu0 0.0
    %7000 = vmatpush2.msra.mxu0 0.0
    %7001 = vmatprep.subr.mxu0 0.0
    %7002 = vmatpush2.msra.mxu0 0.0
    %7003 = vmatprep.subr.mxu0 0.0
    %7004 = vmatpush2.msra.mxu0 0.0
    %7005 = vmatprep.subr.mxu0 0.0
    %7006 = vmatpush2.msra.mxu0 0.0
    %7007 = vmatprep.subr.mxu0 0.0
    %7008 = vmatpush2.msra.mxu0 0.0
    %7009 = vmatprep.subr.mxu0 0.0
    %7010 = vmatpush2.msra.mxu0 0.0
    %7011 = vmatprep.subr.mxu0 0.0
    %7012 = vmatpush2.msra.mxu0 0.0
    %7013 = vmatprep.subr.mxu0 0.0
    %7014 = vmatpush2.msra.mxu0 0.0
    %7015 = vmatprep.subr.mxu0 0.0
    %7016 = vmatpush2.msra.mxu0 0.0
    %7017 = vmatprep.subr.mxu0 0.0
    %7018 = vmatpush2.msra.mxu0 0.0
    %7019 = vmatprep.mubr.f32.mxu0 0.0
    %v7020 = vand.u32 %v6949, 4294901760
    %v7021 = vsub.f32 %v6949, %v7020
    %v7022 = vand.u32 %v7021, 4294901760
    %v7023 = vsub.f32 %v7021, %v7022
    %v7024 = vand.u32 %v7023, 4294901760
    %7025 = vmatmul.mubr.f32.gmra.mxu0 %v7024
    %v7026 = vpop.f32.mrf.mxu0
    %v7027 = vadd.f32 0.0, %v7026
    %v7028 = vpop.f32.mrf.mxu0
    %7029 = vdwg.mxu0
    %7030 = vmatprep.subr.mxu0 0.0
    %7031 = vmatpush1.msra.mxu0 0.0
    %7032 = vmatprep.subr.mxu0 0.0
    %7033 = vmatpush1.msra.mxu0 0.0
    %7034 = vmatprep.subr.mxu0 0.0
    %7035 = vmatpush1.msra.mxu0 0.0
    %7036 = vmatprep.subr.mxu0 0.0
    %7037 = vmatpush1.msra.mxu0 0.0
    %7038 = vmatprep.subr.mxu0 0.0
    %7039 = vmatpush1.msra.mxu0 0.0
    %7040 = vmatprep.subr.mxu0 0.0
    %7041 = vmatpush1.msra.mxu0 0.0
    %7042 = vmatprep.subr.mxu0 0.0
    %7043 = vmatpush1.msra.mxu0 0.0
    %7044 = vmatprep.subr.mxu0 0.0
    %7045 = vmatpush1.msra.mxu0 0.0
    %7046 = vmatprep.subr.mxu0 0.0
    %7047 = vmatpush1.msra.mxu0 0.0
    %7048 = vmatprep.subr.mxu0 0.0
    %7049 = vmatpush1.msra.mxu0 0.0
    %7050 = vmatprep.subr.mxu0 0.0
    %7051 = vmatpush1.msra.mxu0 0.0
    %7052 = vmatprep.subr.mxu0 0.0
    %7053 = vmatpush1.msra.mxu0 0.0
    %7054 = vmatprep.subr.mxu0 0.0
    %v7055 = vand.u32 %v111, 4294901760
    %v7056 = vsub.f32 %v111, %v7055
    %v7057 = vand.u32 %v7056, 4294901760
    %v7058 = vsub.f32 %v7056, %v7057
    %v7059 = vand.u32 %v7058, 4294901760
    %7060 = vmatpush1.msra.mxu0 %v7059
    %7061 = vmatprep.subr.mxu0 0.0
    %v7062 = vand.u32 %v110, 4294901760
    %v7063 = vsub.f32 %v110, %v7062
    %v7064 = vand.u32 %v7063, 4294901760
    %v7065 = vsub.f32 %v7063, %v7064
    %v7066 = vand.u32 %v7065, 4294901760
    %7067 = vmatpush1.msra.mxu0 %v7066
    %7068 = vmatprep.subr.mxu0 0.0
    %v7069 = vand.u32 %v109, 4294901760
    %v7070 = vsub.f32 %v109, %v7069
    %v7071 = vand.u32 %v7070, 4294901760
    %v7072 = vsub.f32 %v7070, %v7071
    %v7073 = vand.u32 %v7072, 4294901760
    %7074 = vmatpush1.msra.mxu0 %v7073
    %7075 = vmatprep.subr.mxu0 0.0
    %v7076 = vand.u32 %v108, 4294901760
    %v7077 = vsub.f32 %v108, %v7076
    %v7078 = vand.u32 %v7077, 4294901760
    %v7079 = vsub.f32 %v7077, %v7078
    %v7080 = vand.u32 %v7079, 4294901760
    %7081 = vmatpush1.msra.mxu0 %v7080
    %7082 = vmatprep.subr.mxu0 0.0
    %7083 = vmatpush2.msra.mxu0 0.0
    %7084 = vmatprep.subr.mxu0 0.0
    %7085 = vmatpush2.msra.mxu0 0.0
    %7086 = vmatprep.subr.mxu0 0.0
    %7087 = vmatpush2.msra.mxu0 0.0
    %7088 = vmatprep.subr.mxu0 0.0
    %7089 = vmatpush2.msra.mxu0 0.0
    %7090 = vmatprep.subr.mxu0 0.0
    %7091 = vmatpush2.msra.mxu0 0.0
    %7092 = vmatprep.subr.mxu0 0.0
    %7093 = vmatpush2.msra.mxu0 0.0
    %7094 = vmatprep.subr.mxu0 0.0
    %7095 = vmatpush2.msra.mxu0 0.0
    %7096 = vmatprep.subr.mxu0 0.0
    %7097 = vmatpush2.msra.mxu0 0.0
    %7098 = vmatprep.subr.mxu0 0.0
    %7099 = vmatpush2.msra.mxu0 0.0
    %7100 = vmatprep.subr.mxu0 0.0
    %7101 = vmatpush2.msra.mxu0 0.0
    %7102 = vmatprep.subr.mxu0 0.0
    %7103 = vmatpush2.msra.mxu0 0.0
    %7104 = vmatprep.subr.mxu0 0.0
    %7105 = vmatpush2.msra.mxu0 0.0
    %7106 = vmatprep.subr.mxu0 0.0
    %7107 = vmatpush2.msra.mxu0 0.0
    %7108 = vmatprep.subr.mxu0 0.0
    %7109 = vmatpush2.msra.mxu0 0.0
    %7110 = vmatprep.subr.mxu0 0.0
    %7111 = vmatpush2.msra.mxu0 0.0
    %7112 = vmatprep.subr.mxu0 0.0
    %7113 = vmatpush2.msra.mxu0 0.0
    %7114 = vmatprep.mubr.f32.mxu0 0.0
    %v7115 = vand.u32 %v6949, 4294901760
    %7116 = vmatmul.mubr.f32.gmra.mxu0 %v7115
    %v7117 = vpop.f32.mrf.mxu0
    %v7118 = vadd.f32 %v7027, %v7117
    %v7119 = vpop.f32.mrf.mxu0
    %7120 = vdwg.mxu0
    %7121 = vmatprep.subr.mxu0 0.0
    %7122 = vmatpush1.msra.mxu0 0.0
    %7123 = vmatprep.subr.mxu0 0.0
    %7124 = vmatpush1.msra.mxu0 0.0
    %7125 = vmatprep.subr.mxu0 0.0
    %7126 = vmatpush1.msra.mxu0 0.0
    %7127 = vmatprep.subr.mxu0 0.0
    %7128 = vmatpush1.msra.mxu0 0.0
    %7129 = vmatprep.subr.mxu0 0.0
    %7130 = vmatpush1.msra.mxu0 0.0
    %7131 = vmatprep.subr.mxu0 0.0
    %7132 = vmatpush1.msra.mxu0 0.0
    %7133 = vmatprep.subr.mxu0 0.0
    %7134 = vmatpush1.msra.mxu0 0.0
    %7135 = vmatprep.subr.mxu0 0.0
    %7136 = vmatpush1.msra.mxu0 0.0
    %7137 = vmatprep.subr.mxu0 0.0
    %7138 = vmatpush1.msra.mxu0 0.0
    %7139 = vmatprep.subr.mxu0 0.0
    %7140 = vmatpush1.msra.mxu0 0.0
    %7141 = vmatprep.subr.mxu0 0.0
    %7142 = vmatpush1.msra.mxu0 0.0
    %7143 = vmatprep.subr.mxu0 0.0
    %7144 = vmatpush1.msra.mxu0 0.0
    %7145 = vmatprep.subr.mxu0 0.0
    %v7146 = vand.u32 %v111, 4294901760
    %v7147 = vsub.f32 %v111, %v7146
    %7148 = vmatpush1.msra.mxu0 %v7147
    %7149 = vmatprep.subr.mxu0 0.0
    %v7150 = vand.u32 %v110, 4294901760
    %v7151 = vsub.f32 %v110, %v7150
    %7152 = vmatpush1.msra.mxu0 %v7151
    %7153 = vmatprep.subr.mxu0 0.0
    %v7154 = vand.u32 %v109, 4294901760
    %v7155 = vsub.f32 %v109, %v7154
    %7156 = vmatpush1.msra.mxu0 %v7155
    %7157 = vmatprep.subr.mxu0 0.0
    %v7158 = vand.u32 %v108, 4294901760
    %v7159 = vsub.f32 %v108, %v7158
    %7160 = vmatpush1.msra.mxu0 %v7159
    %7161 = vmatprep.subr.mxu0 0.0
    %7162 = vmatpush2.msra.mxu0 0.0
    %7163 = vmatprep.subr.mxu0 0.0
    %7164 = vmatpush2.msra.mxu0 0.0
    %7165 = vmatprep.subr.mxu0 0.0
    %7166 = vmatpush2.msra.mxu0 0.0
    %7167 = vmatprep.subr.mxu0 0.0
    %7168 = vmatpush2.msra.mxu0 0.0
    %7169 = vmatprep.subr.mxu0 0.0
    %7170 = vmatpush2.msra.mxu0 0.0
    %7171 = vmatprep.subr.mxu0 0.0
    %7172 = vmatpush2.msra.mxu0 0.0
    %7173 = vmatprep.subr.mxu0 0.0
    %7174 = vmatpush2.msra.mxu0 0.0
    %7175 = vmatprep.subr.mxu0 0.0
    %7176 = vmatpush2.msra.mxu0 0.0
    %7177 = vmatprep.subr.mxu0 0.0
    %7178 = vmatpush2.msra.mxu0 0.0
    %7179 = vmatprep.subr.mxu0 0.0
    %7180 = vmatpush2.msra.mxu0 0.0
    %7181 = vmatprep.subr.mxu0 0.0
    %7182 = vmatpush2.msra.mxu0 0.0
    %7183 = vmatprep.subr.mxu0 0.0
    %7184 = vmatpush2.msra.mxu0 0.0
    %7185 = vmatprep.subr.mxu0 0.0
    %7186 = vmatpush2.msra.mxu0 0.0
    %7187 = vmatprep.subr.mxu0 0.0
    %7188 = vmatpush2.msra.mxu0 0.0
    %7189 = vmatprep.subr.mxu0 0.0
    %7190 = vmatpush2.msra.mxu0 0.0
    %7191 = vmatprep.subr.mxu0 0.0
    %7192 = vmatpush2.msra.mxu0 0.0
    %7193 = vmatprep.mubr.f32.mxu0 0.0
    %v7194 = vand.u32 %v6949, 4294901760
    %v7195 = vsub.f32 %v6949, %v7194
    %7196 = vmatmul.mubr.f32.gmra.mxu0 %v7195
    %v7197 = vpop.f32.mrf.mxu0
    %v7198 = vadd.f32 %v7118, %v7197
    %v7199 = vpop.f32.mrf.mxu0
    %7200 = vdwg.mxu0
    %7201 = vmatprep.subr.mxu0 0.0
    %7202 = vmatpush1.msra.mxu0 0.0
    %7203 = vmatprep.subr.mxu0 0.0
    %7204 = vmatpush1.msra.mxu0 0.0
    %7205 = vmatprep.subr.mxu0 0.0
    %7206 = vmatpush1.msra.mxu0 0.0
    %7207 = vmatprep.subr.mxu0 0.0
    %7208 = vmatpush1.msra.mxu0 0.0
    %7209 = vmatprep.subr.mxu0 0.0
    %7210 = vmatpush1.msra.mxu0 0.0
    %7211 = vmatprep.subr.mxu0 0.0
    %7212 = vmatpush1.msra.mxu0 0.0
    %7213 = vmatprep.subr.mxu0 0.0
    %7214 = vmatpush1.msra.mxu0 0.0
    %7215 = vmatprep.subr.mxu0 0.0
    %7216 = vmatpush1.msra.mxu0 0.0
    %7217 = vmatprep.subr.mxu0 0.0
    %7218 = vmatpush1.msra.mxu0 0.0
    %7219 = vmatprep.subr.mxu0 0.0
    %7220 = vmatpush1.msra.mxu0 0.0
    %7221 = vmatprep.subr.mxu0 0.0
    %7222 = vmatpush1.msra.mxu0 0.0
    %7223 = vmatprep.subr.mxu0 0.0
    %7224 = vmatpush1.msra.mxu0 0.0
    %7225 = vmatprep.subr.mxu0 0.0
    %v7226 = vand.u32 %v111, 4294901760
    %7227 = vmatpush1.msra.mxu0 %v7226
    %7228 = vmatprep.subr.mxu0 0.0
    %v7229 = vand.u32 %v110, 4294901760
    %7230 = vmatpush1.msra.mxu0 %v7229
    %7231 = vmatprep.subr.mxu0 0.0
    %v7232 = vand.u32 %v109, 4294901760
    %7233 = vmatpush1.msra.mxu0 %v7232
    %7234 = vmatprep.subr.mxu0 0.0
    %v7235 = vand.u32 %v108, 4294901760
    %7236 = vmatpush1.msra.mxu0 %v7235
    %7237 = vmatprep.subr.mxu0 0.0
    %7238 = vmatpush2.msra.mxu0 0.0
    %7239 = vmatprep.subr.mxu0 0.0
    %7240 = vmatpush2.msra.mxu0 0.0
    %7241 = vmatprep.subr.mxu0 0.0
    %7242 = vmatpush2.msra.mxu0 0.0
    %7243 = vmatprep.subr.mxu0 0.0
    %7244 = vmatpush2.msra.mxu0 0.0
    %7245 = vmatprep.subr.mxu0 0.0
    %7246 = vmatpush2.msra.mxu0 0.0
    %7247 = vmatprep.subr.mxu0 0.0
    %7248 = vmatpush2.msra.mxu0 0.0
    %7249 = vmatprep.subr.mxu0 0.0
    %7250 = vmatpush2.msra.mxu0 0.0
    %7251 = vmatprep.subr.mxu0 0.0
    %7252 = vmatpush2.msra.mxu0 0.0
    %7253 = vmatprep.subr.mxu0 0.0
    %7254 = vmatpush2.msra.mxu0 0.0
    %7255 = vmatprep.subr.mxu0 0.0
    %7256 = vmatpush2.msra.mxu0 0.0
    %7257 = vmatprep.subr.mxu0 0.0
    %7258 = vmatpush2.msra.mxu0 0.0
    %7259 = vmatprep.subr.mxu0 0.0
    %7260 = vmatpush2.msra.mxu0 0.0
    %7261 = vmatprep.subr.mxu0 0.0
    %7262 = vmatpush2.msra.mxu0 0.0
    %7263 = vmatprep.subr.mxu0 0.0
    %7264 = vmatpush2.msra.mxu0 0.0
    %7265 = vmatprep.subr.mxu0 0.0
    %7266 = vmatpush2.msra.mxu0 0.0
    %7267 = vmatprep.subr.mxu0 0.0
    %7268 = vmatpush2.msra.mxu0 0.0
    %7269 = vmatprep.mubr.f32.mxu0 0.0
    %v7270 = vand.u32 %v6949, 4294901760
    %v7271 = vsub.f32 %v6949, %v7270
    %v7272 = vand.u32 %v7271, 4294901760
    %7273 = vmatmul.mubr.f32.gmra.mxu0 %v7272
    %v7274 = vpop.f32.mrf.mxu0
    %v7275 = vadd.f32 %v7198, %v7274
    %v7276 = vpop.f32.mrf.mxu0
    %7277 = vdwg.mxu0
    %7278 = vmatprep.subr.mxu0 0.0
    %7279 = vmatpush1.msra.mxu0 0.0
    %7280 = vmatprep.subr.mxu0 0.0
    %7281 = vmatpush1.msra.mxu0 0.0
    %7282 = vmatprep.subr.mxu0 0.0
    %7283 = vmatpush1.msra.mxu0 0.0
    %7284 = vmatprep.subr.mxu0 0.0
    %7285 = vmatpush1.msra.mxu0 0.0
    %7286 = vmatprep.subr.mxu0 0.0
    %7287 = vmatpush1.msra.mxu0 0.0
    %7288 = vmatprep.subr.mxu0 0.0
    %7289 = vmatpush1.msra.mxu0 0.0
    %7290 = vmatprep.subr.mxu0 0.0
    %7291 = vmatpush1.msra.mxu0 0.0
    %7292 = vmatprep.subr.mxu0 0.0
    %7293 = vmatpush1.msra.mxu0 0.0
    %7294 = vmatprep.subr.mxu0 0.0
    %7295 = vmatpush1.msra.mxu0 0.0
    %7296 = vmatprep.subr.mxu0 0.0
    %7297 = vmatpush1.msra.mxu0 0.0
    %7298 = vmatprep.subr.mxu0 0.0
    %7299 = vmatpush1.msra.mxu0 0.0
    %7300 = vmatprep.subr.mxu0 0.0
    %7301 = vmatpush1.msra.mxu0 0.0
    %7302 = vmatprep.subr.mxu0 0.0
    %v7303 = vand.u32 %v111, 4294901760
    %v7304 = vsub.f32 %v111, %v7303
    %v7305 = vand.u32 %v7304, 4294901760
    %7306 = vmatpush1.msra.mxu0 %v7305
    %7307 = vmatprep.subr.mxu0 0.0
    %v7308 = vand.u32 %v110, 4294901760
    %v7309 = vsub.f32 %v110, %v7308
    %v7310 = vand.u32 %v7309, 4294901760
    %7311 = vmatpush1.msra.mxu0 %v7310
    %7312 = vmatprep.subr.mxu0 0.0
    %v7313 = vand.u32 %v109, 4294901760
    %v7314 = vsub.f32 %v109, %v7313
    %v7315 = vand.u32 %v7314, 4294901760
    %7316 = vmatpush1.msra.mxu0 %v7315
    %7317 = vmatprep.subr.mxu0 0.0
    %v7318 = vand.u32 %v108, 4294901760
    %v7319 = vsub.f32 %v108, %v7318
    %v7320 = vand.u32 %v7319, 4294901760
    %7321 = vmatpush1.msra.mxu0 %v7320
    %7322 = vmatprep.subr.mxu0 0.0
    %7323 = vmatpush2.msra.mxu0 0.0
    %7324 = vmatprep.subr.mxu0 0.0
    %7325 = vmatpush2.msra.mxu0 0.0
    %7326 = vmatprep.subr.mxu0 0.0
    %7327 = vmatpush2.msra.mxu0 0.0
    %7328 = vmatprep.subr.mxu0 0.0
    %7329 = vmatpush2.msra.mxu0 0.0
    %7330 = vmatprep.subr.mxu0 0.0
    %7331 = vmatpush2.msra.mxu0 0.0
    %7332 = vmatprep.subr.mxu0 0.0
    %7333 = vmatpush2.msra.mxu0 0.0
    %7334 = vmatprep.subr.mxu0 0.0
    %7335 = vmatpush2.msra.mxu0 0.0
    %7336 = vmatprep.subr.mxu0 0.0
    %7337 = vmatpush2.msra.mxu0 0.0
    %7338 = vmatprep.subr.mxu0 0.0
    %7339 = vmatpush2.msra.mxu0 0.0
    %7340 = vmatprep.subr.mxu0 0.0
    %7341 = vmatpush2.msra.mxu0 0.0
    %7342 = vmatprep.subr.mxu0 0.0
    %7343 = vmatpush2.msra.mxu0 0.0
    %7344 = vmatprep.subr.mxu0 0.0
    %7345 = vmatpush2.msra.mxu0 0.0
    %7346 = vmatprep.subr.mxu0 0.0
    %7347 = vmatpush2.msra.mxu0 0.0
    %7348 = vmatprep.subr.mxu0 0.0
    %7349 = vmatpush2.msra.mxu0 0.0
    %7350 = vmatprep.subr.mxu0 0.0
    %7351 = vmatpush2.msra.mxu0 0.0
    %7352 = vmatprep.subr.mxu0 0.0
    %7353 = vmatpush2.msra.mxu0 0.0
    %7354 = vmatprep.mubr.f32.mxu0 0.0
    %v7355 = vand.u32 %v6949, 4294901760
    %7356 = vmatmul.mubr.f32.gmra.mxu0 %v7355
    %v7357 = vpop.f32.mrf.mxu0
    %v7358 = vadd.f32 %v7275, %v7357
    %v7359 = vpop.f32.mrf.mxu0
    %7360 = vdwg.mxu0
    %7361 = vmatprep.subr.mxu0 0.0
    %7362 = vmatpush1.msra.mxu0 0.0
    %7363 = vmatprep.subr.mxu0 0.0
    %7364 = vmatpush1.msra.mxu0 0.0
    %7365 = vmatprep.subr.mxu0 0.0
    %7366 = vmatpush1.msra.mxu0 0.0
    %7367 = vmatprep.subr.mxu0 0.0
    %7368 = vmatpush1.msra.mxu0 0.0
    %7369 = vmatprep.subr.mxu0 0.0
    %7370 = vmatpush1.msra.mxu0 0.0
    %7371 = vmatprep.subr.mxu0 0.0
    %7372 = vmatpush1.msra.mxu0 0.0
    %7373 = vmatprep.subr.mxu0 0.0
    %7374 = vmatpush1.msra.mxu0 0.0
    %7375 = vmatprep.subr.mxu0 0.0
    %7376 = vmatpush1.msra.mxu0 0.0
    %7377 = vmatprep.subr.mxu0 0.0
    %7378 = vmatpush1.msra.mxu0 0.0
    %7379 = vmatprep.subr.mxu0 0.0
    %7380 = vmatpush1.msra.mxu0 0.0
    %7381 = vmatprep.subr.mxu0 0.0
    %7382 = vmatpush1.msra.mxu0 0.0
    %7383 = vmatprep.subr.mxu0 0.0
    %7384 = vmatpush1.msra.mxu0 0.0
    %7385 = vmatprep.subr.mxu0 0.0
    %v7386 = vand.u32 %v111, 4294901760
    %7387 = vmatpush1.msra.mxu0 %v7386
    %7388 = vmatprep.subr.mxu0 0.0
    %v7389 = vand.u32 %v110, 4294901760
    %7390 = vmatpush1.msra.mxu0 %v7389
    %7391 = vmatprep.subr.mxu0 0.0
    %v7392 = vand.u32 %v109, 4294901760
    %7393 = vmatpush1.msra.mxu0 %v7392
    %7394 = vmatprep.subr.mxu0 0.0
    %v7395 = vand.u32 %v108, 4294901760
    %7396 = vmatpush1.msra.mxu0 %v7395
    %7397 = vmatprep.subr.mxu0 0.0
    %7398 = vmatpush2.msra.mxu0 0.0
    %7399 = vmatprep.subr.mxu0 0.0
    %7400 = vmatpush2.msra.mxu0 0.0
    %7401 = vmatprep.subr.mxu0 0.0
    %7402 = vmatpush2.msra.mxu0 0.0
    %7403 = vmatprep.subr.mxu0 0.0
    %7404 = vmatpush2.msra.mxu0 0.0
    %7405 = vmatprep.subr.mxu0 0.0
    %7406 = vmatpush2.msra.mxu0 0.0
    %7407 = vmatprep.subr.mxu0 0.0
    %7408 = vmatpush2.msra.mxu0 0.0
    %7409 = vmatprep.subr.mxu0 0.0
    %7410 = vmatpush2.msra.mxu0 0.0
    %7411 = vmatprep.subr.mxu0 0.0
    %7412 = vmatpush2.msra.mxu0 0.0
    %7413 = vmatprep.subr.mxu0 0.0
    %7414 = vmatpush2.msra.mxu0 0.0
    %7415 = vmatprep.subr.mxu0 0.0
    %7416 = vmatpush2.msra.mxu0 0.0
    %7417 = vmatprep.subr.mxu0 0.0
    %7418 = vmatpush2.msra.mxu0 0.0
    %7419 = vmatprep.subr.mxu0 0.0
    %7420 = vmatpush2.msra.mxu0 0.0
    %7421 = vmatprep.subr.mxu0 0.0
    %7422 = vmatpush2.msra.mxu0 0.0
    %7423 = vmatprep.subr.mxu0 0.0
    %7424 = vmatpush2.msra.mxu0 0.0
    %7425 = vmatprep.subr.mxu0 0.0
    %7426 = vmatpush2.msra.mxu0 0.0
    %7427 = vmatprep.subr.mxu0 0.0
    %7428 = vmatpush2.msra.mxu0 0.0
    %7429 = vmatprep.mubr.f32.mxu0 0.0
    %v7430 = vand.u32 %v6949, 4294901760
    %7431 = vmatmul.mubr.f32.gmra.mxu0 %v7430
    %v7432 = vpop.f32.mrf.mxu0
    %v7433 = vadd.f32 %v7358, %v7432
    %v7434 = vpop.f32.mrf.mxu0
    %7435 = vdwg.mxu0
    %v7436 = vadd.f32 %v6945, %v7433
    %v7437 = vtanh.pop %v7436
    %v7438 = vmul.f32 %v7437, 0.5
    %v7439 = vadd.f32 %v7438, 0.5
    %v7440 = vsel %vm119, %v7437, %v7439
    %v7441 = vmul.f32 %v7440, %v6938
    %7443 = vrot.lane.b32.xlu0 %v7440, 64
    %v7444 = vpop.permute.xlu0 %7443
    %v7446 = vmul.f32 %v7440, %v7444
    %7448 = vrot.lane.b32.xlu0 %v7446, 32
    %v7449 = vpop.permute.xlu0 %7448
    %v7451 = vadd.f32 %v7441, %v7449
    %v7452 = vtanh.pop %v7451
    %7454 = vrot.lane.b32.xlu0 %v7452, 64
    %v7455 = vpop.permute.xlu0 %7454
    %v7457 = vmul.f32 %v7440, %v7455
    %v7458 = vld [vmem:[%s88] sm:$0x1]
    %7460 = vrot.lane.b32.xlu0 %v7457, 32
    %v7461 = vpop.permute.xlu0 %7460
    %v7462 = vsel %vm124, %v7461, 0
    %7464 = vmatprep.subr.mxu0 0.0
    %7465 = vmatpush1.msra.mxu0 0.0
    %7466 = vmatprep.subr.mxu0 0.0
    %7467 = vmatpush1.msra.mxu0 0.0
    %7468 = vmatprep.subr.mxu0 0.0
    %7469 = vmatpush1.msra.mxu0 0.0
    %7470 = vmatprep.subr.mxu0 0.0
    %7471 = vmatpush1.msra.mxu0 0.0
    %7472 = vmatprep.subr.mxu0 0.0
    %7473 = vmatpush1.msra.mxu0 0.0
    %7474 = vmatprep.subr.mxu0 0.0
    %7475 = vmatpush1.msra.mxu0 0.0
    %7476 = vmatprep.subr.mxu0 0.0
    %7477 = vmatpush1.msra.mxu0 0.0
    %7478 = vmatprep.subr.mxu0 0.0
    %7479 = vmatpush1.msra.mxu0 0.0
    %7480 = vmatprep.subr.mxu0 0.0
    %7481 = vmatpush1.msra.mxu0 0.0
    %7482 = vmatprep.subr.mxu0 0.0
    %7483 = vmatpush1.msra.mxu0 0.0
    %7484 = vmatprep.subr.mxu0 0.0
    %7485 = vmatpush1.msra.mxu0 0.0
    %7486 = vmatprep.subr.mxu0 0.0
    %7487 = vmatpush1.msra.mxu0 0.0
    %7488 = vmatprep.subr.mxu0 0.0
    %v7489 = vand.u32 %v111, 4294901760
    %7490 = vmatpush1.msra.mxu0 %v7489
    %7491 = vmatprep.subr.mxu0 0.0
    %v7492 = vand.u32 %v110, 4294901760
    %7493 = vmatpush1.msra.mxu0 %v7492
    %7494 = vmatprep.subr.mxu0 0.0
    %v7495 = vand.u32 %v109, 4294901760
    %7496 = vmatpush1.msra.mxu0 %v7495
    %7497 = vmatprep.subr.mxu0 0.0
    %v7498 = vand.u32 %v108, 4294901760
    %7499 = vmatpush1.msra.mxu0 %v7498
    %7500 = vmatprep.subr.mxu0 0.0
    %7501 = vmatpush2.msra.mxu0 0.0
    %7502 = vmatprep.subr.mxu0 0.0
    %7503 = vmatpush2.msra.mxu0 0.0
    %7504 = vmatprep.subr.mxu0 0.0
    %7505 = vmatpush2.msra.mxu0 0.0
    %7506 = vmatprep.subr.mxu0 0.0
    %7507 = vmatpush2.msra.mxu0 0.0
    %7508 = vmatprep.subr.mxu0 0.0
    %7509 = vmatpush2.msra.mxu0 0.0
    %7510 = vmatprep.subr.mxu0 0.0
    %7511 = vmatpush2.msra.mxu0 0.0
    %7512 = vmatprep.subr.mxu0 0.0
    %7513 = vmatpush2.msra.mxu0 0.0
    %7514 = vmatprep.subr.mxu0 0.0
    %7515 = vmatpush2.msra.mxu0 0.0
    %7516 = vmatprep.subr.mxu0 0.0
    %7517 = vmatpush2.msra.mxu0 0.0
    %7518 = vmatprep.subr.mxu0 0.0
    %7519 = vmatpush2.msra.mxu0 0.0
    %7520 = vmatprep.subr.mxu0 0.0
    %7521 = vmatpush2.msra.mxu0 0.0
    %7522 = vmatprep.subr.mxu0 0.0
    %7523 = vmatpush2.msra.mxu0 0.0
    %7524 = vmatprep.subr.mxu0 0.0
    %7525 = vmatpush2.msra.mxu0 0.0
    %7526 = vmatprep.subr.mxu0 0.0
    %7527 = vmatpush2.msra.mxu0 0.0
    %7528 = vmatprep.subr.mxu0 0.0
    %7529 = vmatpush2.msra.mxu0 0.0
    %7530 = vmatprep.subr.mxu0 0.0
    %7531 = vmatpush2.msra.mxu0 0.0
    %7532 = vmatprep.mubr.f32.mxu0 0.0
    %v7533 = vand.u32 %v7462, 4294901760
    %v7534 = vsub.f32 %v7462, %v7533
    %v7535 = vand.u32 %v7534, 4294901760
    %v7536 = vsub.f32 %v7534, %v7535
    %v7537 = vand.u32 %v7536, 4294901760
    %7538 = vmatmul.mubr.f32.gmra.mxu0 %v7537
    %v7539 = vpop.f32.mrf.mxu0
    %v7540 = vadd.f32 0.0, %v7539
    %v7541 = vpop.f32.mrf.mxu0
    %7542 = vdwg.mxu0
    %7543 = vmatprep.subr.mxu0 0.0
    %7544 = vmatpush1.msra.mxu0 0.0
    %7545 = vmatprep.subr.mxu0 0.0
    %7546 = vmatpush1.msra.mxu0 0.0
    %7547 = vmatprep.subr.mxu0 0.0
    %7548 = vmatpush1.msra.mxu0 0.0
    %7549 = vmatprep.subr.mxu0 0.0
    %7550 = vmatpush1.msra.mxu0 0.0
    %7551 = vmatprep.subr.mxu0 0.0
    %7552 = vmatpush1.msra.mxu0 0.0
    %7553 = vmatprep.subr.mxu0 0.0
    %7554 = vmatpush1.msra.mxu0 0.0
    %7555 = vmatprep.subr.mxu0 0.0
    %7556 = vmatpush1.msra.mxu0 0.0
    %7557 = vmatprep.subr.mxu0 0.0
    %7558 = vmatpush1.msra.mxu0 0.0
    %7559 = vmatprep.subr.mxu0 0.0
    %7560 = vmatpush1.msra.mxu0 0.0
    %7561 = vmatprep.subr.mxu0 0.0
    %7562 = vmatpush1.msra.mxu0 0.0
    %7563 = vmatprep.subr.mxu0 0.0
    %7564 = vmatpush1.msra.mxu0 0.0
    %7565 = vmatprep.subr.mxu0 0.0
    %7566 = vmatpush1.msra.mxu0 0.0
    %7567 = vmatprep.subr.mxu0 0.0
    %v7568 = vand.u32 %v111, 4294901760
    %v7569 = vsub.f32 %v111, %v7568
    %v7570 = vand.u32 %v7569, 4294901760
    %v7571 = vsub.f32 %v7569, %v7570
    %v7572 = vand.u32 %v7571, 4294901760
    %7573 = vmatpush1.msra.mxu0 %v7572
    %7574 = vmatprep.subr.mxu0 0.0
    %v7575 = vand.u32 %v110, 4294901760
    %v7576 = vsub.f32 %v110, %v7575
    %v7577 = vand.u32 %v7576, 4294901760
    %v7578 = vsub.f32 %v7576, %v7577
    %v7579 = vand.u32 %v7578, 4294901760
    %7580 = vmatpush1.msra.mxu0 %v7579
    %7581 = vmatprep.subr.mxu0 0.0
    %v7582 = vand.u32 %v109, 4294901760
    %v7583 = vsub.f32 %v109, %v7582
    %v7584 = vand.u32 %v7583, 4294901760
    %v7585 = vsub.f32 %v7583, %v7584
    %v7586 = vand.u32 %v7585, 4294901760
    %7587 = vmatpush1.msra.mxu0 %v7586
    %7588 = vmatprep.subr.mxu0 0.0
    %v7589 = vand.u32 %v108, 4294901760
    %v7590 = vsub.f32 %v108, %v7589
    %v7591 = vand.u32 %v7590, 4294901760
    %v7592 = vsub.f32 %v7590, %v7591
    %v7593 = vand.u32 %v7592, 4294901760
    %7594 = vmatpush1.msra.mxu0 %v7593
    %7595 = vmatprep.subr.mxu0 0.0
    %7596 = vmatpush2.msra.mxu0 0.0
    %7597 = vmatprep.subr.mxu0 0.0
    %7598 = vmatpush2.msra.mxu0 0.0
    %7599 = vmatprep.subr.mxu0 0.0
    %7600 = vmatpush2.msra.mxu0 0.0
    %7601 = vmatprep.subr.mxu0 0.0
    %7602 = vmatpush2.msra.mxu0 0.0
    %7603 = vmatprep.subr.mxu0 0.0
    %7604 = vmatpush2.msra.mxu0 0.0
    %7605 = vmatprep.subr.mxu0 0.0
    %7606 = vmatpush2.msra.mxu0 0.0
    %7607 = vmatprep.subr.mxu0 0.0
    %7608 = vmatpush2.msra.mxu0 0.0
    %7609 = vmatprep.subr.mxu0 0.0
    %7610 = vmatpush2.msra.mxu0 0.0
    %7611 = vmatprep.subr.mxu0 0.0
    %7612 = vmatpush2.msra.mxu0 0.0
    %7613 = vmatprep.subr.mxu0 0.0
    %7614 = vmatpush2.msra.mxu0 0.0
    %7615 = vmatprep.subr.mxu0 0.0
    %7616 = vmatpush2.msra.mxu0 0.0
    %7617 = vmatprep.subr.mxu0 0.0
    %7618 = vmatpush2.msra.mxu0 0.0
    %7619 = vmatprep.subr.mxu0 0.0
    %7620 = vmatpush2.msra.mxu0 0.0
    %7621 = vmatprep.subr.mxu0 0.0
    %7622 = vmatpush2.msra.mxu0 0.0
    %7623 = vmatprep.subr.mxu0 0.0
    %7624 = vmatpush2.msra.mxu0 0.0
    %7625 = vmatprep.subr.mxu0 0.0
    %7626 = vmatpush2.msra.mxu0 0.0
    %7627 = vmatprep.mubr.f32.mxu0 0.0
    %v7628 = vand.u32 %v7462, 4294901760
    %7629 = vmatmul.mubr.f32.gmra.mxu0 %v7628
    %v7630 = vpop.f32.mrf.mxu0
    %v7631 = vadd.f32 %v7540, %v7630
    %v7632 = vpop.f32.mrf.mxu0
    %7633 = vdwg.mxu0
    %7634 = vmatprep.subr.mxu0 0.0
    %7635 = vmatpush1.msra.mxu0 0.0
    %7636 = vmatprep.subr.mxu0 0.0
    %7637 = vmatpush1.msra.mxu0 0.0
    %7638 = vmatprep.subr.mxu0 0.0
    %7639 = vmatpush1.msra.mxu0 0.0
    %7640 = vmatprep.subr.mxu0 0.0
    %7641 = vmatpush1.msra.mxu0 0.0
    %7642 = vmatprep.subr.mxu0 0.0
    %7643 = vmatpush1.msra.mxu0 0.0
    %7644 = vmatprep.subr.mxu0 0.0
    %7645 = vmatpush1.msra.mxu0 0.0
    %7646 = vmatprep.subr.mxu0 0.0
    %7647 = vmatpush1.msra.mxu0 0.0
    %7648 = vmatprep.subr.mxu0 0.0
    %7649 = vmatpush1.msra.mxu0 0.0
    %7650 = vmatprep.subr.mxu0 0.0
    %7651 = vmatpush1.msra.mxu0 0.0
    %7652 = vmatprep.subr.mxu0 0.0
    %7653 = vmatpush1.msra.mxu0 0.0
    %7654 = vmatprep.subr.mxu0 0.0
    %7655 = vmatpush1.msra.mxu0 0.0
    %7656 = vmatprep.subr.mxu0 0.0
    %7657 = vmatpush1.msra.mxu0 0.0
    %7658 = vmatprep.subr.mxu0 0.0
    %v7659 = vand.u32 %v111, 4294901760
    %v7660 = vsub.f32 %v111, %v7659
    %7661 = vmatpush1.msra.mxu0 %v7660
    %7662 = vmatprep.subr.mxu0 0.0
    %v7663 = vand.u32 %v110, 4294901760
    %v7664 = vsub.f32 %v110, %v7663
    %7665 = vmatpush1.msra.mxu0 %v7664
    %7666 = vmatprep.subr.mxu0 0.0
    %v7667 = vand.u32 %v109, 4294901760
    %v7668 = vsub.f32 %v109, %v7667
    %7669 = vmatpush1.msra.mxu0 %v7668
    %7670 = vmatprep.subr.mxu0 0.0
    %v7671 = vand.u32 %v108, 4294901760
    %v7672 = vsub.f32 %v108, %v7671
    %7673 = vmatpush1.msra.mxu0 %v7672
    %7674 = vmatprep.subr.mxu0 0.0
    %7675 = vmatpush2.msra.mxu0 0.0
    %7676 = vmatprep.subr.mxu0 0.0
    %7677 = vmatpush2.msra.mxu0 0.0
    %7678 = vmatprep.subr.mxu0 0.0
    %7679 = vmatpush2.msra.mxu0 0.0
    %7680 = vmatprep.subr.mxu0 0.0
    %7681 = vmatpush2.msra.mxu0 0.0
    %7682 = vmatprep.subr.mxu0 0.0
    %7683 = vmatpush2.msra.mxu0 0.0
    %7684 = vmatprep.subr.mxu0 0.0
    %7685 = vmatpush2.msra.mxu0 0.0
    %7686 = vmatprep.subr.mxu0 0.0
    %7687 = vmatpush2.msra.mxu0 0.0
    %7688 = vmatprep.subr.mxu0 0.0
    %7689 = vmatpush2.msra.mxu0 0.0
    %7690 = vmatprep.subr.mxu0 0.0
    %7691 = vmatpush2.msra.mxu0 0.0
    %7692 = vmatprep.subr.mxu0 0.0
    %7693 = vmatpush2.msra.mxu0 0.0
    %7694 = vmatprep.subr.mxu0 0.0
    %7695 = vmatpush2.msra.mxu0 0.0
    %7696 = vmatprep.subr.mxu0 0.0
    %7697 = vmatpush2.msra.mxu0 0.0
    %7698 = vmatprep.subr.mxu0 0.0
    %7699 = vmatpush2.msra.mxu0 0.0
    %7700 = vmatprep.subr.mxu0 0.0
    %7701 = vmatpush2.msra.mxu0 0.0
    %7702 = vmatprep.subr.mxu0 0.0
    %7703 = vmatpush2.msra.mxu0 0.0
    %7704 = vmatprep.subr.mxu0 0.0
    %7705 = vmatpush2.msra.mxu0 0.0
    %7706 = vmatprep.mubr.f32.mxu0 0.0
    %v7707 = vand.u32 %v7462, 4294901760
    %v7708 = vsub.f32 %v7462, %v7707
    %7709 = vmatmul.mubr.f32.gmra.mxu0 %v7708
    %v7710 = vpop.f32.mrf.mxu0
    %v7711 = vadd.f32 %v7631, %v7710
    %v7712 = vpop.f32.mrf.mxu0
    %7713 = vdwg.mxu0
    %7714 = vmatprep.subr.mxu0 0.0
    %7715 = vmatpush1.msra.mxu0 0.0
    %7716 = vmatprep.subr.mxu0 0.0
    %7717 = vmatpush1.msra.mxu0 0.0
    %7718 = vmatprep.subr.mxu0 0.0
    %7719 = vmatpush1.msra.mxu0 0.0
    %7720 = vmatprep.subr.mxu0 0.0
    %7721 = vmatpush1.msra.mxu0 0.0
    %7722 = vmatprep.subr.mxu0 0.0
    %7723 = vmatpush1.msra.mxu0 0.0
    %7724 = vmatprep.subr.mxu0 0.0
    %7725 = vmatpush1.msra.mxu0 0.0
    %7726 = vmatprep.subr.mxu0 0.0
    %7727 = vmatpush1.msra.mxu0 0.0
    %7728 = vmatprep.subr.mxu0 0.0
    %7729 = vmatpush1.msra.mxu0 0.0
    %7730 = vmatprep.subr.mxu0 0.0
    %7731 = vmatpush1.msra.mxu0 0.0
    %7732 = vmatprep.subr.mxu0 0.0
    %7733 = vmatpush1.msra.mxu0 0.0
    %7734 = vmatprep.subr.mxu0 0.0
    %7735 = vmatpush1.msra.mxu0 0.0
    %7736 = vmatprep.subr.mxu0 0.0
    %7737 = vmatpush1.msra.mxu0 0.0
    %7738 = vmatprep.subr.mxu0 0.0
    %v7739 = vand.u32 %v111, 4294901760
    %7740 = vmatpush1.msra.mxu0 %v7739
    %7741 = vmatprep.subr.mxu0 0.0
    %v7742 = vand.u32 %v110, 4294901760
    %7743 = vmatpush1.msra.mxu0 %v7742
    %7744 = vmatprep.subr.mxu0 0.0
    %v7745 = vand.u32 %v109, 4294901760
    %7746 = vmatpush1.msra.mxu0 %v7745
    %7747 = vmatprep.subr.mxu0 0.0
    %v7748 = vand.u32 %v108, 4294901760
    %7749 = vmatpush1.msra.mxu0 %v7748
    %7750 = vmatprep.subr.mxu0 0.0
    %7751 = vmatpush2.msra.mxu0 0.0
    %7752 = vmatprep.subr.mxu0 0.0
    %7753 = vmatpush2.msra.mxu0 0.0
    %7754 = vmatprep.subr.mxu0 0.0
    %7755 = vmatpush2.msra.mxu0 0.0
    %7756 = vmatprep.subr.mxu0 0.0
    %7757 = vmatpush2.msra.mxu0 0.0
    %7758 = vmatprep.subr.mxu0 0.0
    %7759 = vmatpush2.msra.mxu0 0.0
    %7760 = vmatprep.subr.mxu0 0.0
    %7761 = vmatpush2.msra.mxu0 0.0
    %7762 = vmatprep.subr.mxu0 0.0
    %7763 = vmatpush2.msra.mxu0 0.0
    %7764 = vmatprep.subr.mxu0 0.0
    %7765 = vmatpush2.msra.mxu0 0.0
    %7766 = vmatprep.subr.mxu0 0.0
    %7767 = vmatpush2.msra.mxu0 0.0
    %7768 = vmatprep.subr.mxu0 0.0
    %7769 = vmatpush2.msra.mxu0 0.0
    %7770 = vmatprep.subr.mxu0 0.0
    %7771 = vmatpush2.msra.mxu0 0.0
    %7772 = vmatprep.subr.mxu0 0.0
    %7773 = vmatpush2.msra.mxu0 0.0
    %7774 = vmatprep.subr.mxu0 0.0
    %7775 = vmatpush2.msra.mxu0 0.0
    %7776 = vmatprep.subr.mxu0 0.0
    %7777 = vmatpush2.msra.mxu0 0.0
    %7778 = vmatprep.subr.mxu0 0.0
    %7779 = vmatpush2.msra.mxu0 0.0
    %7780 = vmatprep.subr.mxu0 0.0
    %7781 = vmatpush2.msra.mxu0 0.0
    %7782 = vmatprep.mubr.f32.mxu0 0.0
    %v7783 = vand.u32 %v7462, 4294901760
    %v7784 = vsub.f32 %v7462, %v7783
    %v7785 = vand.u32 %v7784, 4294901760
    %7786 = vmatmul.mubr.f32.gmra.mxu0 %v7785
    %v7787 = vpop.f32.mrf.mxu0
    %v7788 = vadd.f32 %v7711, %v7787
    %v7789 = vpop.f32.mrf.mxu0
    %7790 = vdwg.mxu0
    %7791 = vmatprep.subr.mxu0 0.0
    %7792 = vmatpush1.msra.mxu0 0.0
    %7793 = vmatprep.subr.mxu0 0.0
    %7794 = vmatpush1.msra.mxu0 0.0
    %7795 = vmatprep.subr.mxu0 0.0
    %7796 = vmatpush1.msra.mxu0 0.0
    %7797 = vmatprep.subr.mxu0 0.0
    %7798 = vmatpush1.msra.mxu0 0.0
    %7799 = vmatprep.subr.mxu0 0.0
    %7800 = vmatpush1.msra.mxu0 0.0
    %7801 = vmatprep.subr.mxu0 0.0
    %7802 = vmatpush1.msra.mxu0 0.0
    %7803 = vmatprep.subr.mxu0 0.0
    %7804 = vmatpush1.msra.mxu0 0.0
    %7805 = vmatprep.subr.mxu0 0.0
    %7806 = vmatpush1.msra.mxu0 0.0
    %7807 = vmatprep.subr.mxu0 0.0
    %7808 = vmatpush1.msra.mxu0 0.0
    %7809 = vmatprep.subr.mxu0 0.0
    %7810 = vmatpush1.msra.mxu0 0.0
    %7811 = vmatprep.subr.mxu0 0.0
    %7812 = vmatpush1.msra.mxu0 0.0
    %7813 = vmatprep.subr.mxu0 0.0
    %7814 = vmatpush1.msra.mxu0 0.0
    %7815 = vmatprep.subr.mxu0 0.0
    %v7816 = vand.u32 %v111, 4294901760
    %v7817 = vsub.f32 %v111, %v7816
    %v7818 = vand.u32 %v7817, 4294901760
    %7819 = vmatpush1.msra.mxu0 %v7818
    %7820 = vmatprep.subr.mxu0 0.0
    %v7821 = vand.u32 %v110, 4294901760
    %v7822 = vsub.f32 %v110, %v7821
    %v7823 = vand.u32 %v7822, 4294901760
    %7824 = vmatpush1.msra.mxu0 %v7823
    %7825 = vmatprep.subr.mxu0 0.0
    %v7826 = vand.u32 %v109, 4294901760
    %v7827 = vsub.f32 %v109, %v7826
    %v7828 = vand.u32 %v7827, 4294901760
    %7829 = vmatpush1.msra.mxu0 %v7828
    %7830 = vmatprep.subr.mxu0 0.0
    %v7831 = vand.u32 %v108, 4294901760
    %v7832 = vsub.f32 %v108, %v7831
    %v7833 = vand.u32 %v7832, 4294901760
    %7834 = vmatpush1.msra.mxu0 %v7833
    %7835 = vmatprep.subr.mxu0 0.0
    %7836 = vmatpush2.msra.mxu0 0.0
    %7837 = vmatprep.subr.mxu0 0.0
    %7838 = vmatpush2.msra.mxu0 0.0
    %7839 = vmatprep.subr.mxu0 0.0
    %7840 = vmatpush2.msra.mxu0 0.0
    %7841 = vmatprep.subr.mxu0 0.0
    %7842 = vmatpush2.msra.mxu0 0.0
    %7843 = vmatprep.subr.mxu0 0.0
    %7844 = vmatpush2.msra.mxu0 0.0
    %7845 = vmatprep.subr.mxu0 0.0
    %7846 = vmatpush2.msra.mxu0 0.0
    %7847 = vmatprep.subr.mxu0 0.0
    %7848 = vmatpush2.msra.mxu0 0.0
    %7849 = vmatprep.subr.mxu0 0.0
    %7850 = vmatpush2.msra.mxu0 0.0
    %7851 = vmatprep.subr.mxu0 0.0
    %7852 = vmatpush2.msra.mxu0 0.0
    %7853 = vmatprep.subr.mxu0 0.0
    %7854 = vmatpush2.msra.mxu0 0.0
    %7855 = vmatprep.subr.mxu0 0.0
    %7856 = vmatpush2.msra.mxu0 0.0
    %7857 = vmatprep.subr.mxu0 0.0
    %7858 = vmatpush2.msra.mxu0 0.0
    %7859 = vmatprep.subr.mxu0 0.0
    %7860 = vmatpush2.msra.mxu0 0.0
    %7861 = vmatprep.subr.mxu0 0.0
    %7862 = vmatpush2.msra.mxu0 0.0
    %7863 = vmatprep.subr.mxu0 0.0
    %7864 = vmatpush2.msra.mxu0 0.0
    %7865 = vmatprep.subr.mxu0 0.0
    %7866 = vmatpush2.msra.mxu0 0.0
    %7867 = vmatprep.mubr.f32.mxu0 0.0
    %v7868 = vand.u32 %v7462, 4294901760
    %7869 = vmatmul.mubr.f32.gmra.mxu0 %v7868
    %v7870 = vpop.f32.mrf.mxu0
    %v7871 = vadd.f32 %v7788, %v7870
    %v7872 = vpop.f32.mrf.mxu0
    %7873 = vdwg.mxu0
    %7874 = vmatprep.subr.mxu0 0.0
    %7875 = vmatpush1.msra.mxu0 0.0
    %7876 = vmatprep.subr.mxu0 0.0
    %7877 = vmatpush1.msra.mxu0 0.0
    %7878 = vmatprep.subr.mxu0 0.0
    %7879 = vmatpush1.msra.mxu0 0.0
    %7880 = vmatprep.subr.mxu0 0.0
    %7881 = vmatpush1.msra.mxu0 0.0
    %7882 = vmatprep.subr.mxu0 0.0
    %7883 = vmatpush1.msra.mxu0 0.0
    %7884 = vmatprep.subr.mxu0 0.0
    %7885 = vmatpush1.msra.mxu0 0.0
    %7886 = vmatprep.subr.mxu0 0.0
    %7887 = vmatpush1.msra.mxu0 0.0
    %7888 = vmatprep.subr.mxu0 0.0
    %7889 = vmatpush1.msra.mxu0 0.0
    %7890 = vmatprep.subr.mxu0 0.0
    %7891 = vmatpush1.msra.mxu0 0.0
    %7892 = vmatprep.subr.mxu0 0.0
    %7893 = vmatpush1.msra.mxu0 0.0
    %7894 = vmatprep.subr.mxu0 0.0
    %7895 = vmatpush1.msra.mxu0 0.0
    %7896 = vmatprep.subr.mxu0 0.0
    %7897 = vmatpush1.msra.mxu0 0.0
    %7898 = vmatprep.subr.mxu0 0.0
    %v7899 = vand.u32 %v111, 4294901760
    %7900 = vmatpush1.msra.mxu0 %v7899
    %7901 = vmatprep.subr.mxu0 0.0
    %v7902 = vand.u32 %v110, 4294901760
    %7903 = vmatpush1.msra.mxu0 %v7902
    %7904 = vmatprep.subr.mxu0 0.0
    %v7905 = vand.u32 %v109, 4294901760
    %7906 = vmatpush1.msra.mxu0 %v7905
    %7907 = vmatprep.subr.mxu0 0.0
    %v7908 = vand.u32 %v108, 4294901760
    %7909 = vmatpush1.msra.mxu0 %v7908
    %7910 = vmatprep.subr.mxu0 0.0
    %7911 = vmatpush2.msra.mxu0 0.0
    %7912 = vmatprep.subr.mxu0 0.0
    %7913 = vmatpush2.msra.mxu0 0.0
    %7914 = vmatprep.subr.mxu0 0.0
    %7915 = vmatpush2.msra.mxu0 0.0
    %7916 = vmatprep.subr.mxu0 0.0
    %7917 = vmatpush2.msra.mxu0 0.0
    %7918 = vmatprep.subr.mxu0 0.0
    %7919 = vmatpush2.msra.mxu0 0.0
    %7920 = vmatprep.subr.mxu0 0.0
    %7921 = vmatpush2.msra.mxu0 0.0
    %7922 = vmatprep.subr.mxu0 0.0
    %7923 = vmatpush2.msra.mxu0 0.0
    %7924 = vmatprep.subr.mxu0 0.0
    %7925 = vmatpush2.msra.mxu0 0.0
    %7926 = vmatprep.subr.mxu0 0.0
    %7927 = vmatpush2.msra.mxu0 0.0
    %7928 = vmatprep.subr.mxu0 0.0
    %7929 = vmatpush2.msra.mxu0 0.0
    %7930 = vmatprep.subr.mxu0 0.0
    %7931 = vmatpush2.msra.mxu0 0.0
    %7932 = vmatprep.subr.mxu0 0.0
    %7933 = vmatpush2.msra.mxu0 0.0
    %7934 = vmatprep.subr.mxu0 0.0
    %7935 = vmatpush2.msra.mxu0 0.0
    %7936 = vmatprep.subr.mxu0 0.0
    %7937 = vmatpush2.msra.mxu0 0.0
    %7938 = vmatprep.subr.mxu0 0.0
    %7939 = vmatpush2.msra.mxu0 0.0
    %7940 = vmatprep.subr.mxu0 0.0
    %7941 = vmatpush2.msra.mxu0 0.0
    %7942 = vmatprep.mubr.f32.mxu0 0.0
    %v7943 = vand.u32 %v7462, 4294901760
    %7944 = vmatmul.mubr.f32.gmra.mxu0 %v7943
    %v7945 = vpop.f32.mrf.mxu0
    %v7946 = vadd.f32 %v7871, %v7945
    %v7947 = vpop.f32.mrf.mxu0
    %7948 = vdwg.mxu0
    %v7949 = vadd.f32 %v7458, %v7946
    %v7950 = vtanh.pop %v7949
    %v7951 = vmul.f32 %v7950, 0.5
    %v7952 = vadd.f32 %v7951, 0.5
    %v7953 = vsel %vm119, %v7950, %v7952
    %v7954 = vmul.f32 %v7953, %v7451
    %7956 = vrot.lane.b32.xlu0 %v7953, 64
    %v7957 = vpop.permute.xlu0 %7956
    %v7959 = vmul.f32 %v7953, %v7957
    %7961 = vrot.lane.b32.xlu0 %v7959, 32
    %v7962 = vpop.permute.xlu0 %7961
    %v7964 = vadd.f32 %v7954, %v7962
    %v7965 = vtanh.pop %v7964
    %7967 = vrot.lane.b32.xlu0 %v7965, 64
    %v7968 = vpop.permute.xlu0 %7967
    %v7970 = vmul.f32 %v7953, %v7968
    %v7971 = vld [vmem:[%s93] sm:$0x1]
    %7973 = vrot.lane.b32.xlu0 %v7970, 32
    %v7974 = vpop.permute.xlu0 %7973
    %v7975 = vsel %vm124, %v7974, 0
    %7977 = vmatprep.subr.mxu0 0.0
    %7978 = vmatpush1.msra.mxu0 0.0
    %7979 = vmatprep.subr.mxu0 0.0
    %7980 = vmatpush1.msra.mxu0 0.0
    %7981 = vmatprep.subr.mxu0 0.0
    %7982 = vmatpush1.msra.mxu0 0.0
    %7983 = vmatprep.subr.mxu0 0.0
    %7984 = vmatpush1.msra.mxu0 0.0
    %7985 = vmatprep.subr.mxu0 0.0
    %7986 = vmatpush1.msra.mxu0 0.0
    %7987 = vmatprep.subr.mxu0 0.0
    %7988 = vmatpush1.msra.mxu0 0.0
    %7989 = vmatprep.subr.mxu0 0.0
    %7990 = vmatpush1.msra.mxu0 0.0
    %7991 = vmatprep.subr.mxu0 0.0
    %7992 = vmatpush1.msra.mxu0 0.0
    %7993 = vmatprep.subr.mxu0 0.0
    %7994 = vmatpush1.msra.mxu0 0.0
    %7995 = vmatprep.subr.mxu0 0.0
    %7996 = vmatpush1.msra.mxu0 0.0
    %7997 = vmatprep.subr.mxu0 0.0
    %7998 = vmatpush1.msra.mxu0 0.0
    %7999 = vmatprep.subr.mxu0 0.0
    %8000 = vmatpush1.msra.mxu0 0.0
    %8001 = vmatprep.subr.mxu0 0.0
    %v8002 = vand.u32 %v111, 4294901760
    %8003 = vmatpush1.msra.mxu0 %v8002
    %8004 = vmatprep.subr.mxu0 0.0
    %v8005 = vand.u32 %v110, 4294901760
    %8006 = vmatpush1.msra.mxu0 %v8005
    %8007 = vmatprep.subr.mxu0 0.0
    %v8008 = vand.u32 %v109, 4294901760
    %8009 = vmatpush1.msra.mxu0 %v8008
    %8010 = vmatprep.subr.mxu0 0.0
    %v8011 = vand.u32 %v108, 4294901760
    %8012 = vmatpush1.msra.mxu0 %v8011
    %8013 = vmatprep.subr.mxu0 0.0
    %8014 = vmatpush2.msra.mxu0 0.0
    %8015 = vmatprep.subr.mxu0 0.0
    %8016 = vmatpush2.msra.mxu0 0.0
    %8017 = vmatprep.subr.mxu0 0.0
    %8018 = vmatpush2.msra.mxu0 0.0
    %8019 = vmatprep.subr.mxu0 0.0
    %8020 = vmatpush2.msra.mxu0 0.0
    %8021 = vmatprep.subr.mxu0 0.0
    %8022 = vmatpush2.msra.mxu0 0.0
    %8023 = vmatprep.subr.mxu0 0.0
    %8024 = vmatpush2.msra.mxu0 0.0
    %8025 = vmatprep.subr.mxu0 0.0
    %8026 = vmatpush2.msra.mxu0 0.0
    %8027 = vmatprep.subr.mxu0 0.0
    %8028 = vmatpush2.msra.mxu0 0.0
    %8029 = vmatprep.subr.mxu0 0.0
    %8030 = vmatpush2.msra.mxu0 0.0
    %8031 = vmatprep.subr.mxu0 0.0
    %8032 = vmatpush2.msra.mxu0 0.0
    %8033 = vmatprep.subr.mxu0 0.0
    %8034 = vmatpush2.msra.mxu0 0.0
    %8035 = vmatprep.subr.mxu0 0.0
    %8036 = vmatpush2.msra.mxu0 0.0
    %8037 = vmatprep.subr.mxu0 0.0
    %8038 = vmatpush2.msra.mxu0 0.0
    %8039 = vmatprep.subr.mxu0 0.0
    %8040 = vmatpush2.msra.mxu0 0.0
    %8041 = vmatprep.subr.mxu0 0.0
    %8042 = vmatpush2.msra.mxu0 0.0
    %8043 = vmatprep.subr.mxu0 0.0
    %8044 = vmatpush2.msra.mxu0 0.0
    %8045 = vmatprep.mubr.f32.mxu0 0.0
    %v8046 = vand.u32 %v7975, 4294901760
    %v8047 = vsub.f32 %v7975, %v8046
    %v8048 = vand.u32 %v8047, 4294901760
    %v8049 = vsub.f32 %v8047, %v8048
    %v8050 = vand.u32 %v8049, 4294901760
    %8051 = vmatmul.mubr.f32.gmra.mxu0 %v8050
    %v8052 = vpop.f32.mrf.mxu0
    %v8053 = vadd.f32 0.0, %v8052
    %v8054 = vpop.f32.mrf.mxu0
    %8055 = vdwg.mxu0
    %8056 = vmatprep.subr.mxu0 0.0
    %8057 = vmatpush1.msra.mxu0 0.0
    %8058 = vmatprep.subr.mxu0 0.0
    %8059 = vmatpush1.msra.mxu0 0.0
    %8060 = vmatprep.subr.mxu0 0.0
    %8061 = vmatpush1.msra.mxu0 0.0
    %8062 = vmatprep.subr.mxu0 0.0
    %8063 = vmatpush1.msra.mxu0 0.0
    %8064 = vmatprep.subr.mxu0 0.0
    %8065 = vmatpush1.msra.mxu0 0.0
    %8066 = vmatprep.subr.mxu0 0.0
    %8067 = vmatpush1.msra.mxu0 0.0
    %8068 = vmatprep.subr.mxu0 0.0
    %8069 = vmatpush1.msra.mxu0 0.0
    %8070 = vmatprep.subr.mxu0 0.0
    %8071 = vmatpush1.msra.mxu0 0.0
    %8072 = vmatprep.subr.mxu0 0.0
    %8073 = vmatpush1.msra.mxu0 0.0
    %8074 = vmatprep.subr.mxu0 0.0
    %8075 = vmatpush1.msra.mxu0 0.0
    %8076 = vmatprep.subr.mxu0 0.0
    %8077 = vmatpush1.msra.mxu0 0.0
    %8078 = vmatprep.subr.mxu0 0.0
    %8079 = vmatpush1.msra.mxu0 0.0
    %8080 = vmatprep.subr.mxu0 0.0
    %v8081 = vand.u32 %v111, 4294901760
    %v8082 = vsub.f32 %v111, %v8081
    %v8083 = vand.u32 %v8082, 4294901760
    %v8084 = vsub.f32 %v8082, %v8083
    %v8085 = vand.u32 %v8084, 4294901760
    %8086 = vmatpush1.msra.mxu0 %v8085
    %8087 = vmatprep.subr.mxu0 0.0
    %v8088 = vand.u32 %v110, 4294901760
    %v8089 = vsub.f32 %v110, %v8088
    %v8090 = vand.u32 %v8089, 4294901760
    %v8091 = vsub.f32 %v8089, %v8090
    %v8092 = vand.u32 %v8091, 4294901760
    %8093 = vmatpush1.msra.mxu0 %v8092
    %8094 = vmatprep.subr.mxu0 0.0
    %v8095 = vand.u32 %v109, 4294901760
    %v8096 = vsub.f32 %v109, %v8095
    %v8097 = vand.u32 %v8096, 4294901760
    %v8098 = vsub.f32 %v8096, %v8097
    %v8099 = vand.u32 %v8098, 4294901760
    %8100 = vmatpush1.msra.mxu0 %v8099
    %8101 = vmatprep.subr.mxu0 0.0
    %v8102 = vand.u32 %v108, 4294901760
    %v8103 = vsub.f32 %v108, %v8102
    %v8104 = vand.u32 %v8103, 4294901760
    %v8105 = vsub.f32 %v8103, %v8104
    %v8106 = vand.u32 %v8105, 4294901760
    %8107 = vmatpush1.msra.mxu0 %v8106
    %8108 = vmatprep.subr.mxu0 0.0
    %8109 = vmatpush2.msra.mxu0 0.0
    %8110 = vmatprep.subr.mxu0 0.0
    %8111 = vmatpush2.msra.mxu0 0.0
    %8112 = vmatprep.subr.mxu0 0.0
    %8113 = vmatpush2.msra.mxu0 0.0
    %8114 = vmatprep.subr.mxu0 0.0
    %8115 = vmatpush2.msra.mxu0 0.0
    %8116 = vmatprep.subr.mxu0 0.0
    %8117 = vmatpush2.msra.mxu0 0.0
    %8118 = vmatprep.subr.mxu0 0.0
    %8119 = vmatpush2.msra.mxu0 0.0
    %8120 = vmatprep.subr.mxu0 0.0
    %8121 = vmatpush2.msra.mxu0 0.0
    %8122 = vmatprep.subr.mxu0 0.0
    %8123 = vmatpush2.msra.mxu0 0.0
    %8124 = vmatprep.subr.mxu0 0.0
    %8125 = vmatpush2.msra.mxu0 0.0
    %8126 = vmatprep.subr.mxu0 0.0
    %8127 = vmatpush2.msra.mxu0 0.0
    %8128 = vmatprep.subr.mxu0 0.0
    %8129 = vmatpush2.msra.mxu0 0.0
    %8130 = vmatprep.subr.mxu0 0.0
    %8131 = vmatpush2.msra.mxu0 0.0
    %8132 = vmatprep.subr.mxu0 0.0
    %8133 = vmatpush2.msra.mxu0 0.0
    %8134 = vmatprep.subr.mxu0 0.0
    %8135 = vmatpush2.msra.mxu0 0.0
    %8136 = vmatprep.subr.mxu0 0.0
    %8137 = vmatpush2.msra.mxu0 0.0
    %8138 = vmatprep.subr.mxu0 0.0
    %8139 = vmatpush2.msra.mxu0 0.0
    %8140 = vmatprep.mubr.f32.mxu0 0.0
    %v8141 = vand.u32 %v7975, 4294901760
    %8142 = vmatmul.mubr.f32.gmra.mxu0 %v8141
    %v8143 = vpop.f32.mrf.mxu0
    %v8144 = vadd.f32 %v8053, %v8143
    %v8145 = vpop.f32.mrf.mxu0
    %8146 = vdwg.mxu0
    %8147 = vmatprep.subr.mxu0 0.0
    %8148 = vmatpush1.msra.mxu0 0.0
    %8149 = vmatprep.subr.mxu0 0.0
    %8150 = vmatpush1.msra.mxu0 0.0
    %8151 = vmatprep.subr.mxu0 0.0
    %8152 = vmatpush1.msra.mxu0 0.0
    %8153 = vmatprep.subr.mxu0 0.0
    %8154 = vmatpush1.msra.mxu0 0.0
    %8155 = vmatprep.subr.mxu0 0.0
    %8156 = vmatpush1.msra.mxu0 0.0
    %8157 = vmatprep.subr.mxu0 0.0
    %8158 = vmatpush1.msra.mxu0 0.0
    %8159 = vmatprep.subr.mxu0 0.0
    %8160 = vmatpush1.msra.mxu0 0.0
    %8161 = vmatprep.subr.mxu0 0.0
    %8162 = vmatpush1.msra.mxu0 0.0
    %8163 = vmatprep.subr.mxu0 0.0
    %8164 = vmatpush1.msra.mxu0 0.0
    %8165 = vmatprep.subr.mxu0 0.0
    %8166 = vmatpush1.msra.mxu0 0.0
    %8167 = vmatprep.subr.mxu0 0.0
    %8168 = vmatpush1.msra.mxu0 0.0
    %8169 = vmatprep.subr.mxu0 0.0
    %8170 = vmatpush1.msra.mxu0 0.0
    %8171 = vmatprep.subr.mxu0 0.0
    %v8172 = vand.u32 %v111, 4294901760
    %v8173 = vsub.f32 %v111, %v8172
    %8174 = vmatpush1.msra.mxu0 %v8173
    %8175 = vmatprep.subr.mxu0 0.0
    %v8176 = vand.u32 %v110, 4294901760
    %v8177 = vsub.f32 %v110, %v8176
    %8178 = vmatpush1.msra.mxu0 %v8177
    %8179 = vmatprep.subr.mxu0 0.0
    %v8180 = vand.u32 %v109, 4294901760
    %v8181 = vsub.f32 %v109, %v8180
    %8182 = vmatpush1.msra.mxu0 %v8181
    %8183 = vmatprep.subr.mxu0 0.0
    %v8184 = vand.u32 %v108, 4294901760
    %v8185 = vsub.f32 %v108, %v8184
    %8186 = vmatpush1.msra.mxu0 %v8185
    %8187 = vmatprep.subr.mxu0 0.0
    %8188 = vmatpush2.msra.mxu0 0.0
    %8189 = vmatprep.subr.mxu0 0.0
    %8190 = vmatpush2.msra.mxu0 0.0
    %8191 = vmatprep.subr.mxu0 0.0
    %8192 = vmatpush2.msra.mxu0 0.0
    %8193 = vmatprep.subr.mxu0 0.0
    %8194 = vmatpush2.msra.mxu0 0.0
    %8195 = vmatprep.subr.mxu0 0.0
    %8196 = vmatpush2.msra.mxu0 0.0
    %8197 = vmatprep.subr.mxu0 0.0
    %8198 = vmatpush2.msra.mxu0 0.0
    %8199 = vmatprep.subr.mxu0 0.0
    %8200 = vmatpush2.msra.mxu0 0.0
    %8201 = vmatprep.subr.mxu0 0.0
    %8202 = vmatpush2.msra.mxu0 0.0
    %8203 = vmatprep.subr.mxu0 0.0
    %8204 = vmatpush2.msra.mxu0 0.0
    %8205 = vmatprep.subr.mxu0 0.0
    %8206 = vmatpush2.msra.mxu0 0.0
    %8207 = vmatprep.subr.mxu0 0.0
    %8208 = vmatpush2.msra.mxu0 0.0
    %8209 = vmatprep.subr.mxu0 0.0
    %8210 = vmatpush2.msra.mxu0 0.0
    %8211 = vmatprep.subr.mxu0 0.0
    %8212 = vmatpush2.msra.mxu0 0.0
    %8213 = vmatprep.subr.mxu0 0.0
    %8214 = vmatpush2.msra.mxu0 0.0
    %8215 = vmatprep.subr.mxu0 0.0
    %8216 = vmatpush2.msra.mxu0 0.0
    %8217 = vmatprep.subr.mxu0 0.0
    %8218 = vmatpush2.msra.mxu0 0.0
    %8219 = vmatprep.mubr.f32.mxu0 0.0
    %v8220 = vand.u32 %v7975, 4294901760
    %v8221 = vsub.f32 %v7975, %v8220
    %8222 = vmatmul.mubr.f32.gmra.mxu0 %v8221
    %v8223 = vpop.f32.mrf.mxu0
    %v8224 = vadd.f32 %v8144, %v8223
    %v8225 = vpop.f32.mrf.mxu0
    %8226 = vdwg.mxu0
    %8227 = vmatprep.subr.mxu0 0.0
    %8228 = vmatpush1.msra.mxu0 0.0
    %8229 = vmatprep.subr.mxu0 0.0
    %8230 = vmatpush1.msra.mxu0 0.0
    %8231 = vmatprep.subr.mxu0 0.0
    %8232 = vmatpush1.msra.mxu0 0.0
    %8233 = vmatprep.subr.mxu0 0.0
    %8234 = vmatpush1.msra.mxu0 0.0
    %8235 = vmatprep.subr.mxu0 0.0
    %8236 = vmatpush1.msra.mxu0 0.0
    %8237 = vmatprep.subr.mxu0 0.0
    %8238 = vmatpush1.msra.mxu0 0.0
    %8239 = vmatprep.subr.mxu0 0.0
    %8240 = vmatpush1.msra.mxu0 0.0
    %8241 = vmatprep.subr.mxu0 0.0
    %8242 = vmatpush1.msra.mxu0 0.0
    %8243 = vmatprep.subr.mxu0 0.0
    %8244 = vmatpush1.msra.mxu0 0.0
    %8245 = vmatprep.subr.mxu0 0.0
    %8246 = vmatpush1.msra.mxu0 0.0
    %8247 = vmatprep.subr.mxu0 0.0
    %8248 = vmatpush1.msra.mxu0 0.0
    %8249 = vmatprep.subr.mxu0 0.0
    %8250 = vmatpush1.msra.mxu0 0.0
    %8251 = vmatprep.subr.mxu0 0.0
    %v8252 = vand.u32 %v111, 4294901760
    %8253 = vmatpush1.msra.mxu0 %v8252
    %8254 = vmatprep.subr.mxu0 0.0
    %v8255 = vand.u32 %v110, 4294901760
    %8256 = vmatpush1.msra.mxu0 %v8255
    %8257 = vmatprep.subr.mxu0 0.0
    %v8258 = vand.u32 %v109, 4294901760
    %8259 = vmatpush1.msra.mxu0 %v8258
    %8260 = vmatprep.subr.mxu0 0.0
    %v8261 = vand.u32 %v108, 4294901760
    %8262 = vmatpush1.msra.mxu0 %v8261
    %8263 = vmatprep.subr.mxu0 0.0
    %8264 = vmatpush2.msra.mxu0 0.0
    %8265 = vmatprep.subr.mxu0 0.0
    %8266 = vmatpush2.msra.mxu0 0.0
    %8267 = vmatprep.subr.mxu0 0.0
    %8268 = vmatpush2.msra.mxu0 0.0
    %8269 = vmatprep.subr.mxu0 0.0
    %8270 = vmatpush2.msra.mxu0 0.0
    %8271 = vmatprep.subr.mxu0 0.0
    %8272 = vmatpush2.msra.mxu0 0.0
    %8273 = vmatprep.subr.mxu0 0.0
    %8274 = vmatpush2.msra.mxu0 0.0
    %8275 = vmatprep.subr.mxu0 0.0
    %8276 = vmatpush2.msra.mxu0 0.0
    %8277 = vmatprep.subr.mxu0 0.0
    %8278 = vmatpush2.msra.mxu0 0.0
    %8279 = vmatprep.subr.mxu0 0.0
    %8280 = vmatpush2.msra.mxu0 0.0
    %8281 = vmatprep.subr.mxu0 0.0
    %8282 = vmatpush2.msra.mxu0 0.0
    %8283 = vmatprep.subr.mxu0 0.0
    %8284 = vmatpush2.msra.mxu0 0.0
    %8285 = vmatprep.subr.mxu0 0.0
    %8286 = vmatpush2.msra.mxu0 0.0
    %8287 = vmatprep.subr.mxu0 0.0
    %8288 = vmatpush2.msra.mxu0 0.0
    %8289 = vmatprep.subr.mxu0 0.0
    %8290 = vmatpush2.msra.mxu0 0.0
    %8291 = vmatprep.subr.mxu0 0.0
    %8292 = vmatpush2.msra.mxu0 0.0
    %8293 = vmatprep.subr.mxu0 0.0
    %8294 = vmatpush2.msra.mxu0 0.0
    %8295 = vmatprep.mubr.f32.mxu0 0.0
    %v8296 = vand.u32 %v7975, 4294901760
    %v8297 = vsub.f32 %v7975, %v8296
    %v8298 = vand.u32 %v8297, 4294901760
    %8299 = vmatmul.mubr.f32.gmra.mxu0 %v8298
    %v8300 = vpop.f32.mrf.mxu0
    %v8301 = vadd.f32 %v8224, %v8300
    %v8302 = vpop.f32.mrf.mxu0
    %8303 = vdwg.mxu0
    %8304 = vmatprep.subr.mxu0 0.0
    %8305 = vmatpush1.msra.mxu0 0.0
    %8306 = vmatprep.subr.mxu0 0.0
    %8307 = vmatpush1.msra.mxu0 0.0
    %8308 = vmatprep.subr.mxu0 0.0
    %8309 = vmatpush1.msra.mxu0 0.0
    %8310 = vmatprep.subr.mxu0 0.0
    %8311 = vmatpush1.msra.mxu0 0.0
    %8312 = vmatprep.subr.mxu0 0.0
    %8313 = vmatpush1.msra.mxu0 0.0
    %8314 = vmatprep.subr.mxu0 0.0
    %8315 = vmatpush1.msra.mxu0 0.0
    %8316 = vmatprep.subr.mxu0 0.0
    %8317 = vmatpush1.msra.mxu0 0.0
    %8318 = vmatprep.subr.mxu0 0.0
    %8319 = vmatpush1.msra.mxu0 0.0
    %8320 = vmatprep.subr.mxu0 0.0
    %8321 = vmatpush1.msra.mxu0 0.0
    %8322 = vmatprep.subr.mxu0 0.0
    %8323 = vmatpush1.msra.mxu0 0.0
    %8324 = vmatprep.subr.mxu0 0.0
    %8325 = vmatpush1.msra.mxu0 0.0
    %8326 = vmatprep.subr.mxu0 0.0
    %8327 = vmatpush1.msra.mxu0 0.0
    %8328 = vmatprep.subr.mxu0 0.0
    %v8329 = vand.u32 %v111, 4294901760
    %v8330 = vsub.f32 %v111, %v8329
    %v8331 = vand.u32 %v8330, 4294901760
    %8332 = vmatpush1.msra.mxu0 %v8331
    %8333 = vmatprep.subr.mxu0 0.0
    %v8334 = vand.u32 %v110, 4294901760
    %v8335 = vsub.f32 %v110, %v8334
    %v8336 = vand.u32 %v8335, 4294901760
    %8337 = vmatpush1.msra.mxu0 %v8336
    %8338 = vmatprep.subr.mxu0 0.0
    %v8339 = vand.u32 %v109, 4294901760
    %v8340 = vsub.f32 %v109, %v8339
    %v8341 = vand.u32 %v8340, 4294901760
    %8342 = vmatpush1.msra.mxu0 %v8341
    %8343 = vmatprep.subr.mxu0 0.0
    %v8344 = vand.u32 %v108, 4294901760
    %v8345 = vsub.f32 %v108, %v8344
    %v8346 = vand.u32 %v8345, 4294901760
    %8347 = vmatpush1.msra.mxu0 %v8346
    %8348 = vmatprep.subr.mxu0 0.0
    %8349 = vmatpush2.msra.mxu0 0.0
    %8350 = vmatprep.subr.mxu0 0.0
    %8351 = vmatpush2.msra.mxu0 0.0
    %8352 = vmatprep.subr.mxu0 0.0
    %8353 = vmatpush2.msra.mxu0 0.0
    %8354 = vmatprep.subr.mxu0 0.0
    %8355 = vmatpush2.msra.mxu0 0.0
    %8356 = vmatprep.subr.mxu0 0.0
    %8357 = vmatpush2.msra.mxu0 0.0
    %8358 = vmatprep.subr.mxu0 0.0
    %8359 = vmatpush2.msra.mxu0 0.0
    %8360 = vmatprep.subr.mxu0 0.0
    %8361 = vmatpush2.msra.mxu0 0.0
    %8362 = vmatprep.subr.mxu0 0.0
    %8363 = vmatpush2.msra.mxu0 0.0
    %8364 = vmatprep.subr.mxu0 0.0
    %8365 = vmatpush2.msra.mxu0 0.0
    %8366 = vmatprep.subr.mxu0 0.0
    %8367 = vmatpush2.msra.mxu0 0.0
    %8368 = vmatprep.subr.mxu0 0.0
    %8369 = vmatpush2.msra.mxu0 0.0
    %8370 = vmatprep.subr.mxu0 0.0
    %8371 = vmatpush2.msra.mxu0 0.0
    %8372 = vmatprep.subr.mxu0 0.0
    %8373 = vmatpush2.msra.mxu0 0.0
    %8374 = vmatprep.subr.mxu0 0.0
    %8375 = vmatpush2.msra.mxu0 0.0
    %8376 = vmatprep.subr.mxu0 0.0
    %8377 = vmatpush2.msra.mxu0 0.0
    %8378 = vmatprep.subr.mxu0 0.0
    %8379 = vmatpush2.msra.mxu0 0.0
    %8380 = vmatprep.mubr.f32.mxu0 0.0
    %v8381 = vand.u32 %v7975, 4294901760
    %8382 = vmatmul.mubr.f32.gmra.mxu0 %v8381
    %v8383 = vpop.f32.mrf.mxu0
    %v8384 = vadd.f32 %v8301, %v8383
    %v8385 = vpop.f32.mrf.mxu0
    %8386 = vdwg.mxu0
    %8387 = vmatprep.subr.mxu0 0.0
    %8388 = vmatpush1.msra.mxu0 0.0
    %8389 = vmatprep.subr.mxu0 0.0
    %8390 = vmatpush1.msra.mxu0 0.0
    %8391 = vmatprep.subr.mxu0 0.0
    %8392 = vmatpush1.msra.mxu0 0.0
    %8393 = vmatprep.subr.mxu0 0.0
    %8394 = vmatpush1.msra.mxu0 0.0
    %8395 = vmatprep.subr.mxu0 0.0
    %8396 = vmatpush1.msra.mxu0 0.0
    %8397 = vmatprep.subr.mxu0 0.0
    %8398 = vmatpush1.msra.mxu0 0.0
    %8399 = vmatprep.subr.mxu0 0.0
    %8400 = vmatpush1.msra.mxu0 0.0
    %8401 = vmatprep.subr.mxu0 0.0
    %8402 = vmatpush1.msra.mxu0 0.0
    %8403 = vmatprep.subr.mxu0 0.0
    %8404 = vmatpush1.msra.mxu0 0.0
    %8405 = vmatprep.subr.mxu0 0.0
    %8406 = vmatpush1.msra.mxu0 0.0
    %8407 = vmatprep.subr.mxu0 0.0
    %8408 = vmatpush1.msra.mxu0 0.0
    %8409 = vmatprep.subr.mxu0 0.0
    %8410 = vmatpush1.msra.mxu0 0.0
    %8411 = vmatprep.subr.mxu0 0.0
    %v8412 = vand.u32 %v111, 4294901760
    %8413 = vmatpush1.msra.mxu0 %v8412
    %8414 = vmatprep.subr.mxu0 0.0
    %v8415 = vand.u32 %v110, 4294901760
    %8416 = vmatpush1.msra.mxu0 %v8415
    %8417 = vmatprep.subr.mxu0 0.0
    %v8418 = vand.u32 %v109, 4294901760
    %8419 = vmatpush1.msra.mxu0 %v8418
    %8420 = vmatprep.subr.mxu0 0.0
    %v8421 = vand.u32 %v108, 4294901760
    %8422 = vmatpush1.msra.mxu0 %v8421
    %8423 = vmatprep.subr.mxu0 0.0
    %8424 = vmatpush2.msra.mxu0 0.0
    %8425 = vmatprep.subr.mxu0 0.0
    %8426 = vmatpush2.msra.mxu0 0.0
    %8427 = vmatprep.subr.mxu0 0.0
    %8428 = vmatpush2.msra.mxu0 0.0
    %8429 = vmatprep.subr.mxu0 0.0
    %8430 = vmatpush2.msra.mxu0 0.0
    %8431 = vmatprep.subr.mxu0 0.0
    %8432 = vmatpush2.msra.mxu0 0.0
    %8433 = vmatprep.subr.mxu0 0.0
    %8434 = vmatpush2.msra.mxu0 0.0
    %8435 = vmatprep.subr.mxu0 0.0
    %8436 = vmatpush2.msra.mxu0 0.0
    %8437 = vmatprep.subr.mxu0 0.0
    %8438 = vmatpush2.msra.mxu0 0.0
    %8439 = vmatprep.subr.mxu0 0.0
    %8440 = vmatpush2.msra.mxu0 0.0
    %8441 = vmatprep.subr.mxu0 0.0
    %8442 = vmatpush2.msra.mxu0 0.0
    %8443 = vmatprep.subr.mxu0 0.0
    %8444 = vmatpush2.msra.mxu0 0.0
    %8445 = vmatprep.subr.mxu0 0.0
    %8446 = vmatpush2.msra.mxu0 0.0
    %8447 = vmatprep.subr.mxu0 0.0
    %8448 = vmatpush2.msra.mxu0 0.0
    %8449 = vmatprep.subr.mxu0 0.0
    %8450 = vmatpush2.msra.mxu0 0.0
    %8451 = vmatprep.subr.mxu0 0.0
    %8452 = vmatpush2.msra.mxu0 0.0
    %8453 = vmatprep.subr.mxu0 0.0
    %8454 = vmatpush2.msra.mxu0 0.0
    %8455 = vmatprep.mubr.f32.mxu0 0.0
    %v8456 = vand.u32 %v7975, 4294901760
    %8457 = vmatmul.mubr.f32.gmra.mxu0 %v8456
    %v8458 = vpop.f32.mrf.mxu0
    %v8459 = vadd.f32 %v8384, %v8458
    %v8460 = vpop.f32.mrf.mxu0
    %8461 = vdwg.mxu0
    %v8462 = vadd.f32 %v7971, %v8459
    %v8463 = vtanh.pop %v8462
    %v8464 = vmul.f32 %v8463, 0.5
    %v8465 = vadd.f32 %v8464, 0.5
    %v8466 = vsel %vm119, %v8463, %v8465
    %v8467 = vmul.f32 %v8466, %v7964
    %8469 = vrot.lane.b32.xlu0 %v8466, 64
    %v8470 = vpop.permute.xlu0 %8469
    %v8472 = vmul.f32 %v8466, %v8470
    %8474 = vrot.lane.b32.xlu0 %v8472, 32
    %v8475 = vpop.permute.xlu0 %8474
    %v8477 = vadd.f32 %v8467, %v8475
    %v8478 = vtanh.pop %v8477
    %8480 = vrot.lane.b32.xlu0 %v8478, 64
    %v8481 = vpop.permute.xlu0 %8480
    %v8483 = vmul.f32 %v8466, %v8481
    %v8484 = vld [vmem:[%s98] sm:$0x1]
    %8486 = vrot.lane.b32.xlu0 %v8483, 32
    %v8487 = vpop.permute.xlu0 %8486
    %v8488 = vsel %vm124, %v8487, 0
    %8490 = vmatprep.subr.mxu0 0.0
    %8491 = vmatpush1.msra.mxu0 0.0
    %8492 = vmatprep.subr.mxu0 0.0
    %8493 = vmatpush1.msra.mxu0 0.0
    %8494 = vmatprep.subr.mxu0 0.0
    %8495 = vmatpush1.msra.mxu0 0.0
    %8496 = vmatprep.subr.mxu0 0.0
    %8497 = vmatpush1.msra.mxu0 0.0
    %8498 = vmatprep.subr.mxu0 0.0
    %8499 = vmatpush1.msra.mxu0 0.0
    %8500 = vmatprep.subr.mxu0 0.0
    %8501 = vmatpush1.msra.mxu0 0.0
    %8502 = vmatprep.subr.mxu0 0.0
    %8503 = vmatpush1.msra.mxu0 0.0
    %8504 = vmatprep.subr.mxu0 0.0
    %8505 = vmatpush1.msra.mxu0 0.0
    %8506 = vmatprep.subr.mxu0 0.0
    %8507 = vmatpush1.msra.mxu0 0.0
    %8508 = vmatprep.subr.mxu0 0.0
    %8509 = vmatpush1.msra.mxu0 0.0
    %8510 = vmatprep.subr.mxu0 0.0
    %8511 = vmatpush1.msra.mxu0 0.0
    %8512 = vmatprep.subr.mxu0 0.0
    %8513 = vmatpush1.msra.mxu0 0.0
    %8514 = vmatprep.subr.mxu0 0.0
    %v8515 = vand.u32 %v111, 4294901760
    %8516 = vmatpush1.msra.mxu0 %v8515
    %8517 = vmatprep.subr.mxu0 0.0
    %v8518 = vand.u32 %v110, 4294901760
    %8519 = vmatpush1.msra.mxu0 %v8518
    %8520 = vmatprep.subr.mxu0 0.0
    %v8521 = vand.u32 %v109, 4294901760
    %8522 = vmatpush1.msra.mxu0 %v8521
    %8523 = vmatprep.subr.mxu0 0.0
    %v8524 = vand.u32 %v108, 4294901760
    %8525 = vmatpush1.msra.mxu0 %v8524
    %8526 = vmatprep.subr.mxu0 0.0
    %8527 = vmatpush2.msra.mxu0 0.0
    %8528 = vmatprep.subr.mxu0 0.0
    %8529 = vmatpush2.msra.mxu0 0.0
    %8530 = vmatprep.subr.mxu0 0.0
    %8531 = vmatpush2.msra.mxu0 0.0
    %8532 = vmatprep.subr.mxu0 0.0
    %8533 = vmatpush2.msra.mxu0 0.0
    %8534 = vmatprep.subr.mxu0 0.0
    %8535 = vmatpush2.msra.mxu0 0.0
    %8536 = vmatprep.subr.mxu0 0.0
    %8537 = vmatpush2.msra.mxu0 0.0
    %8538 = vmatprep.subr.mxu0 0.0
    %8539 = vmatpush2.msra.mxu0 0.0
    %8540 = vmatprep.subr.mxu0 0.0
    %8541 = vmatpush2.msra.mxu0 0.0
    %8542 = vmatprep.subr.mxu0 0.0
    %8543 = vmatpush2.msra.mxu0 0.0
    %8544 = vmatprep.subr.mxu0 0.0
    %8545 = vmatpush2.msra.mxu0 0.0
    %8546 = vmatprep.subr.mxu0 0.0
    %8547 = vmatpush2.msra.mxu0 0.0
    %8548 = vmatprep.subr.mxu0 0.0
    %8549 = vmatpush2.msra.mxu0 0.0
    %8550 = vmatprep.subr.mxu0 0.0
    %8551 = vmatpush2.msra.mxu0 0.0
    %8552 = vmatprep.subr.mxu0 0.0
    %8553 = vmatpush2.msra.mxu0 0.0
    %8554 = vmatprep.subr.mxu0 0.0
    %8555 = vmatpush2.msra.mxu0 0.0
    %8556 = vmatprep.subr.mxu0 0.0
    %8557 = vmatpush2.msra.mxu0 0.0
    %8558 = vmatprep.mubr.f32.mxu0 0.0
    %v8559 = vand.u32 %v8488, 4294901760
    %v8560 = vsub.f32 %v8488, %v8559
    %v8561 = vand.u32 %v8560, 4294901760
    %v8562 = vsub.f32 %v8560, %v8561
    %v8563 = vand.u32 %v8562, 4294901760
    %8564 = vmatmul.mubr.f32.gmra.mxu0 %v8563
    %v8565 = vpop.f32.mrf.mxu0
    %v8566 = vadd.f32 0.0, %v8565
    %v8567 = vpop.f32.mrf.mxu0
    %8568 = vdwg.mxu0
    %8569 = vmatprep.subr.mxu0 0.0
    %8570 = vmatpush1.msra.mxu0 0.0
    %8571 = vmatprep.subr.mxu0 0.0
    %8572 = vmatpush1.msra.mxu0 0.0
    %8573 = vmatprep.subr.mxu0 0.0
    %8574 = vmatpush1.msra.mxu0 0.0
    %8575 = vmatprep.subr.mxu0 0.0
    %8576 = vmatpush1.msra.mxu0 0.0
    %8577 = vmatprep.subr.mxu0 0.0
    %8578 = vmatpush1.msra.mxu0 0.0
    %8579 = vmatprep.subr.mxu0 0.0
    %8580 = vmatpush1.msra.mxu0 0.0
    %8581 = vmatprep.subr.mxu0 0.0
    %8582 = vmatpush1.msra.mxu0 0.0
    %8583 = vmatprep.subr.mxu0 0.0
    %8584 = vmatpush1.msra.mxu0 0.0
    %8585 = vmatprep.subr.mxu0 0.0
    %8586 = vmatpush1.msra.mxu0 0.0
    %8587 = vmatprep.subr.mxu0 0.0
    %8588 = vmatpush1.msra.mxu0 0.0
    %8589 = vmatprep.subr.mxu0 0.0
    %8590 = vmatpush1.msra.mxu0 0.0
    %8591 = vmatprep.subr.mxu0 0.0
    %8592 = vmatpush1.msra.mxu0 0.0
    %8593 = vmatprep.subr.mxu0 0.0
    %v8594 = vand.u32 %v111, 4294901760
    %v8595 = vsub.f32 %v111, %v8594
    %v8596 = vand.u32 %v8595, 4294901760
    %v8597 = vsub.f32 %v8595, %v8596
    %v8598 = vand.u32 %v8597, 4294901760
    %8599 = vmatpush1.msra.mxu0 %v8598
    %8600 = vmatprep.subr.mxu0 0.0
    %v8601 = vand.u32 %v110, 4294901760
    %v8602 = vsub.f32 %v110, %v8601
    %v8603 = vand.u32 %v8602, 4294901760
    %v8604 = vsub.f32 %v8602, %v8603
    %v8605 = vand.u32 %v8604, 4294901760
    %8606 = vmatpush1.msra.mxu0 %v8605
    %8607 = vmatprep.subr.mxu0 0.0
    %v8608 = vand.u32 %v109, 4294901760
    %v8609 = vsub.f32 %v109, %v8608
    %v8610 = vand.u32 %v8609, 4294901760
    %v8611 = vsub.f32 %v8609, %v8610
    %v8612 = vand.u32 %v8611, 4294901760
    %8613 = vmatpush1.msra.mxu0 %v8612
    %8614 = vmatprep.subr.mxu0 0.0
    %v8615 = vand.u32 %v108, 4294901760
    %v8616 = vsub.f32 %v108, %v8615
    %v8617 = vand.u32 %v8616, 4294901760
    %v8618 = vsub.f32 %v8616, %v8617
    %v8619 = vand.u32 %v8618, 4294901760
    %8620 = vmatpush1.msra.mxu0 %v8619
    %8621 = vmatprep.subr.mxu0 0.0
    %8622 = vmatpush2.msra.mxu0 0.0
    %8623 = vmatprep.subr.mxu0 0.0
    %8624 = vmatpush2.msra.mxu0 0.0
    %8625 = vmatprep.subr.mxu0 0.0
    %8626 = vmatpush2.msra.mxu0 0.0
    %8627 = vmatprep.subr.mxu0 0.0
    %8628 = vmatpush2.msra.mxu0 0.0
    %8629 = vmatprep.subr.mxu0 0.0
    %8630 = vmatpush2.msra.mxu0 0.0
    %8631 = vmatprep.subr.mxu0 0.0
    %8632 = vmatpush2.msra.mxu0 0.0
    %8633 = vmatprep.subr.mxu0 0.0
    %8634 = vmatpush2.msra.mxu0 0.0
    %8635 = vmatprep.subr.mxu0 0.0
    %8636 = vmatpush2.msra.mxu0 0.0
    %8637 = vmatprep.subr.mxu0 0.0
    %8638 = vmatpush2.msra.mxu0 0.0
    %8639 = vmatprep.subr.mxu0 0.0
    %8640 = vmatpush2.msra.mxu0 0.0
    %8641 = vmatprep.subr.mxu0 0.0
    %8642 = vmatpush2.msra.mxu0 0.0
    %8643 = vmatprep.subr.mxu0 0.0
    %8644 = vmatpush2.msra.mxu0 0.0
    %8645 = vmatprep.subr.mxu0 0.0
    %8646 = vmatpush2.msra.mxu0 0.0
    %8647 = vmatprep.subr.mxu0 0.0
    %8648 = vmatpush2.msra.mxu0 0.0
    %8649 = vmatprep.subr.mxu0 0.0
    %8650 = vmatpush2.msra.mxu0 0.0
    %8651 = vmatprep.subr.mxu0 0.0
    %8652 = vmatpush2.msra.mxu0 0.0
    %8653 = vmatprep.mubr.f32.mxu0 0.0
    %v8654 = vand.u32 %v8488, 4294901760
    %8655 = vmatmul.mubr.f32.gmra.mxu0 %v8654
    %v8656 = vpop.f32.mrf.mxu0
    %v8657 = vadd.f32 %v8566, %v8656
    %v8658 = vpop.f32.mrf.mxu0
    %8659 = vdwg.mxu0
    %8660 = vmatprep.subr.mxu0 0.0
    %8661 = vmatpush1.msra.mxu0 0.0
    %8662 = vmatprep.subr.mxu0 0.0
    %8663 = vmatpush1.msra.mxu0 0.0
    %8664 = vmatprep.subr.mxu0 0.0
    %8665 = vmatpush1.msra.mxu0 0.0
    %8666 = vmatprep.subr.mxu0 0.0
    %8667 = vmatpush1.msra.mxu0 0.0
    %8668 = vmatprep.subr.mxu0 0.0
    %8669 = vmatpush1.msra.mxu0 0.0
    %8670 = vmatprep.subr.mxu0 0.0
    %8671 = vmatpush1.msra.mxu0 0.0
    %8672 = vmatprep.subr.mxu0 0.0
    %8673 = vmatpush1.msra.mxu0 0.0
    %8674 = vmatprep.subr.mxu0 0.0
    %8675 = vmatpush1.msra.mxu0 0.0
    %8676 = vmatprep.subr.mxu0 0.0
    %8677 = vmatpush1.msra.mxu0 0.0
    %8678 = vmatprep.subr.mxu0 0.0
    %8679 = vmatpush1.msra.mxu0 0.0
    %8680 = vmatprep.subr.mxu0 0.0
    %8681 = vmatpush1.msra.mxu0 0.0
    %8682 = vmatprep.subr.mxu0 0.0
    %8683 = vmatpush1.msra.mxu0 0.0
    %8684 = vmatprep.subr.mxu0 0.0
    %v8685 = vand.u32 %v111, 4294901760
    %v8686 = vsub.f32 %v111, %v8685
    %8687 = vmatpush1.msra.mxu0 %v8686
    %8688 = vmatprep.subr.mxu0 0.0
    %v8689 = vand.u32 %v110, 4294901760
    %v8690 = vsub.f32 %v110, %v8689
    %8691 = vmatpush1.msra.mxu0 %v8690
    %8692 = vmatprep.subr.mxu0 0.0
    %v8693 = vand.u32 %v109, 4294901760
    %v8694 = vsub.f32 %v109, %v8693
    %8695 = vmatpush1.msra.mxu0 %v8694
    %8696 = vmatprep.subr.mxu0 0.0
    %v8697 = vand.u32 %v108, 4294901760
    %v8698 = vsub.f32 %v108, %v8697
    %8699 = vmatpush1.msra.mxu0 %v8698
    %8700 = vmatprep.subr.mxu0 0.0
    %8701 = vmatpush2.msra.mxu0 0.0
    %8702 = vmatprep.subr.mxu0 0.0
    %8703 = vmatpush2.msra.mxu0 0.0
    %8704 = vmatprep.subr.mxu0 0.0
    %8705 = vmatpush2.msra.mxu0 0.0
    %8706 = vmatprep.subr.mxu0 0.0
    %8707 = vmatpush2.msra.mxu0 0.0
    %8708 = vmatprep.subr.mxu0 0.0
    %8709 = vmatpush2.msra.mxu0 0.0
    %8710 = vmatprep.subr.mxu0 0.0
    %8711 = vmatpush2.msra.mxu0 0.0
    %8712 = vmatprep.subr.mxu0 0.0
    %8713 = vmatpush2.msra.mxu0 0.0
    %8714 = vmatprep.subr.mxu0 0.0
    %8715 = vmatpush2.msra.mxu0 0.0
    %8716 = vmatprep.subr.mxu0 0.0
    %8717 = vmatpush2.msra.mxu0 0.0
    %8718 = vmatprep.subr.mxu0 0.0
    %8719 = vmatpush2.msra.mxu0 0.0
    %8720 = vmatprep.subr.mxu0 0.0
    %8721 = vmatpush2.msra.mxu0 0.0
    %8722 = vmatprep.subr.mxu0 0.0
    %8723 = vmatpush2.msra.mxu0 0.0
    %8724 = vmatprep.subr.mxu0 0.0
    %8725 = vmatpush2.msra.mxu0 0.0
    %8726 = vmatprep.subr.mxu0 0.0
    %8727 = vmatpush2.msra.mxu0 0.0
    %8728 = vmatprep.subr.mxu0 0.0
    %8729 = vmatpush2.msra.mxu0 0.0
    %8730 = vmatprep.subr.mxu0 0.0
    %8731 = vmatpush2.msra.mxu0 0.0
    %8732 = vmatprep.mubr.f32.mxu0 0.0
    %v8733 = vand.u32 %v8488, 4294901760
    %v8734 = vsub.f32 %v8488, %v8733
    %8735 = vmatmul.mubr.f32.gmra.mxu0 %v8734
    %v8736 = vpop.f32.mrf.mxu0
    %v8737 = vadd.f32 %v8657, %v8736
    %v8738 = vpop.f32.mrf.mxu0
    %8739 = vdwg.mxu0
    %8740 = vmatprep.subr.mxu0 0.0
    %8741 = vmatpush1.msra.mxu0 0.0
    %8742 = vmatprep.subr.mxu0 0.0
    %8743 = vmatpush1.msra.mxu0 0.0
    %8744 = vmatprep.subr.mxu0 0.0
    %8745 = vmatpush1.msra.mxu0 0.0
    %8746 = vmatprep.subr.mxu0 0.0
    %8747 = vmatpush1.msra.mxu0 0.0
    %8748 = vmatprep.subr.mxu0 0.0
    %8749 = vmatpush1.msra.mxu0 0.0
    %8750 = vmatprep.subr.mxu0 0.0
    %8751 = vmatpush1.msra.mxu0 0.0
    %8752 = vmatprep.subr.mxu0 0.0
    %8753 = vmatpush1.msra.mxu0 0.0
    %8754 = vmatprep.subr.mxu0 0.0
    %8755 = vmatpush1.msra.mxu0 0.0
    %8756 = vmatprep.subr.mxu0 0.0
    %8757 = vmatpush1.msra.mxu0 0.0
    %8758 = vmatprep.subr.mxu0 0.0
    %8759 = vmatpush1.msra.mxu0 0.0
    %8760 = vmatprep.subr.mxu0 0.0
    %8761 = vmatpush1.msra.mxu0 0.0
    %8762 = vmatprep.subr.mxu0 0.0
    %8763 = vmatpush1.msra.mxu0 0.0
    %8764 = vmatprep.subr.mxu0 0.0
    %v8765 = vand.u32 %v111, 4294901760
    %8766 = vmatpush1.msra.mxu0 %v8765
    %8767 = vmatprep.subr.mxu0 0.0
    %v8768 = vand.u32 %v110, 4294901760
    %8769 = vmatpush1.msra.mxu0 %v8768
    %8770 = vmatprep.subr.mxu0 0.0
    %v8771 = vand.u32 %v109, 4294901760
    %8772 = vmatpush1.msra.mxu0 %v8771
    %8773 = vmatprep.subr.mxu0 0.0
    %v8774 = vand.u32 %v108, 4294901760
    %8775 = vmatpush1.msra.mxu0 %v8774
    %8776 = vmatprep.subr.mxu0 0.0
    %8777 = vmatpush2.msra.mxu0 0.0
    %8778 = vmatprep.subr.mxu0 0.0
    %8779 = vmatpush2.msra.mxu0 0.0
    %8780 = vmatprep.subr.mxu0 0.0
    %8781 = vmatpush2.msra.mxu0 0.0
    %8782 = vmatprep.subr.mxu0 0.0
    %8783 = vmatpush2.msra.mxu0 0.0
    %8784 = vmatprep.subr.mxu0 0.0
    %8785 = vmatpush2.msra.mxu0 0.0
    %8786 = vmatprep.subr.mxu0 0.0
    %8787 = vmatpush2.msra.mxu0 0.0
    %8788 = vmatprep.subr.mxu0 0.0
    %8789 = vmatpush2.msra.mxu0 0.0
    %8790 = vmatprep.subr.mxu0 0.0
    %8791 = vmatpush2.msra.mxu0 0.0
    %8792 = vmatprep.subr.mxu0 0.0
    %8793 = vmatpush2.msra.mxu0 0.0
    %8794 = vmatprep.subr.mxu0 0.0
    %8795 = vmatpush2.msra.mxu0 0.0
    %8796 = vmatprep.subr.mxu0 0.0
    %8797 = vmatpush2.msra.mxu0 0.0
    %8798 = vmatprep.subr.mxu0 0.0
    %8799 = vmatpush2.msra.mxu0 0.0
    %8800 = vmatprep.subr.mxu0 0.0
    %8801 = vmatpush2.msra.mxu0 0.0
    %8802 = vmatprep.subr.mxu0 0.0
    %8803 = vmatpush2.msra.mxu0 0.0
    %8804 = vmatprep.subr.mxu0 0.0
    %8805 = vmatpush2.msra.mxu0 0.0
    %8806 = vmatprep.subr.mxu0 0.0
    %8807 = vmatpush2.msra.mxu0 0.0
    %8808 = vmatprep.mubr.f32.mxu0 0.0
    %v8809 = vand.u32 %v8488, 4294901760
    %v8810 = vsub.f32 %v8488, %v8809
    %v8811 = vand.u32 %v8810, 4294901760
    %8812 = vmatmul.mubr.f32.gmra.mxu0 %v8811
    %v8813 = vpop.f32.mrf.mxu0
    %v8814 = vadd.f32 %v8737, %v8813
    %v8815 = vpop.f32.mrf.mxu0
    %8816 = vdwg.mxu0
    %8817 = vmatprep.subr.mxu0 0.0
    %8818 = vmatpush1.msra.mxu0 0.0
    %8819 = vmatprep.subr.mxu0 0.0
    %8820 = vmatpush1.msra.mxu0 0.0
    %8821 = vmatprep.subr.mxu0 0.0
    %8822 = vmatpush1.msra.mxu0 0.0
    %8823 = vmatprep.subr.mxu0 0.0
    %8824 = vmatpush1.msra.mxu0 0.0
    %8825 = vmatprep.subr.mxu0 0.0
    %8826 = vmatpush1.msra.mxu0 0.0
    %8827 = vmatprep.subr.mxu0 0.0
    %8828 = vmatpush1.msra.mxu0 0.0
    %8829 = vmatprep.subr.mxu0 0.0
    %8830 = vmatpush1.msra.mxu0 0.0
    %8831 = vmatprep.subr.mxu0 0.0
    %8832 = vmatpush1.msra.mxu0 0.0
    %8833 = vmatprep.subr.mxu0 0.0
    %8834 = vmatpush1.msra.mxu0 0.0
    %8835 = vmatprep.subr.mxu0 0.0
    %8836 = vmatpush1.msra.mxu0 0.0
    %8837 = vmatprep.subr.mxu0 0.0
    %8838 = vmatpush1.msra.mxu0 0.0
    %8839 = vmatprep.subr.mxu0 0.0
    %8840 = vmatpush1.msra.mxu0 0.0
    %8841 = vmatprep.subr.mxu0 0.0
    %v8842 = vand.u32 %v111, 4294901760
    %v8843 = vsub.f32 %v111, %v8842
    %v8844 = vand.u32 %v8843, 4294901760
    %8845 = vmatpush1.msra.mxu0 %v8844
    %8846 = vmatprep.subr.mxu0 0.0
    %v8847 = vand.u32 %v110, 4294901760
    %v8848 = vsub.f32 %v110, %v8847
    %v8849 = vand.u32 %v8848, 4294901760
    %8850 = vmatpush1.msra.mxu0 %v8849
    %8851 = vmatprep.subr.mxu0 0.0
    %v8852 = vand.u32 %v109, 4294901760
    %v8853 = vsub.f32 %v109, %v8852
    %v8854 = vand.u32 %v8853, 4294901760
    %8855 = vmatpush1.msra.mxu0 %v8854
    %8856 = vmatprep.subr.mxu0 0.0
    %v8857 = vand.u32 %v108, 4294901760
    %v8858 = vsub.f32 %v108, %v8857
    %v8859 = vand.u32 %v8858, 4294901760
    %8860 = vmatpush1.msra.mxu0 %v8859
    %8861 = vmatprep.subr.mxu0 0.0
    %8862 = vmatpush2.msra.mxu0 0.0
    %8863 = vmatprep.subr.mxu0 0.0
    %8864 = vmatpush2.msra.mxu0 0.0
    %8865 = vmatprep.subr.mxu0 0.0
    %8866 = vmatpush2.msra.mxu0 0.0
    %8867 = vmatprep.subr.mxu0 0.0
    %8868 = vmatpush2.msra.mxu0 0.0
    %8869 = vmatprep.subr.mxu0 0.0
    %8870 = vmatpush2.msra.mxu0 0.0
    %8871 = vmatprep.subr.mxu0 0.0
    %8872 = vmatpush2.msra.mxu0 0.0
    %8873 = vmatprep.subr.mxu0 0.0
    %8874 = vmatpush2.msra.mxu0 0.0
    %8875 = vmatprep.subr.mxu0 0.0
    %8876 = vmatpush2.msra.mxu0 0.0
    %8877 = vmatprep.subr.mxu0 0.0
    %8878 = vmatpush2.msra.mxu0 0.0
    %8879 = vmatprep.subr.mxu0 0.0
    %8880 = vmatpush2.msra.mxu0 0.0
    %8881 = vmatprep.subr.mxu0 0.0
    %8882 = vmatpush2.msra.mxu0 0.0
    %8883 = vmatprep.subr.mxu0 0.0
    %8884 = vmatpush2.msra.mxu0 0.0
    %8885 = vmatprep.subr.mxu0 0.0
    %8886 = vmatpush2.msra.mxu0 0.0
    %8887 = vmatprep.subr.mxu0 0.0
    %8888 = vmatpush2.msra.mxu0 0.0
    %8889 = vmatprep.subr.mxu0 0.0
    %8890 = vmatpush2.msra.mxu0 0.0
    %8891 = vmatprep.subr.mxu0 0.0
    %8892 = vmatpush2.msra.mxu0 0.0
    %8893 = vmatprep.mubr.f32.mxu0 0.0
    %v8894 = vand.u32 %v8488, 4294901760
    %8895 = vmatmul.mubr.f32.gmra.mxu0 %v8894
    %v8896 = vpop.f32.mrf.mxu0
    %v8897 = vadd.f32 %v8814, %v8896
    %v8898 = vpop.f32.mrf.mxu0
    %8899 = vdwg.mxu0
    %8900 = vmatprep.subr.mxu0 0.0
    %8901 = vmatpush1.msra.mxu0 0.0
    %8902 = vmatprep.subr.mxu0 0.0
    %8903 = vmatpush1.msra.mxu0 0.0
    %8904 = vmatprep.subr.mxu0 0.0
    %8905 = vmatpush1.msra.mxu0 0.0
    %8906 = vmatprep.subr.mxu0 0.0
    %8907 = vmatpush1.msra.mxu0 0.0
    %8908 = vmatprep.subr.mxu0 0.0
    %8909 = vmatpush1.msra.mxu0 0.0
    %8910 = vmatprep.subr.mxu0 0.0
    %8911 = vmatpush1.msra.mxu0 0.0
    %8912 = vmatprep.subr.mxu0 0.0
    %8913 = vmatpush1.msra.mxu0 0.0
    %8914 = vmatprep.subr.mxu0 0.0
    %8915 = vmatpush1.msra.mxu0 0.0
    %8916 = vmatprep.subr.mxu0 0.0
    %8917 = vmatpush1.msra.mxu0 0.0
    %8918 = vmatprep.subr.mxu0 0.0
    %8919 = vmatpush1.msra.mxu0 0.0
    %8920 = vmatprep.subr.mxu0 0.0
    %8921 = vmatpush1.msra.mxu0 0.0
    %8922 = vmatprep.subr.mxu0 0.0
    %8923 = vmatpush1.msra.mxu0 0.0
    %8924 = vmatprep.subr.mxu0 0.0
    %v8925 = vand.u32 %v111, 4294901760
    %8926 = vmatpush1.msra.mxu0 %v8925
    %8927 = vmatprep.subr.mxu0 0.0
    %v8928 = vand.u32 %v110, 4294901760
    %8929 = vmatpush1.msra.mxu0 %v8928
    %8930 = vmatprep.subr.mxu0 0.0
    %v8931 = vand.u32 %v109, 4294901760
    %8932 = vmatpush1.msra.mxu0 %v8931
    %8933 = vmatprep.subr.mxu0 0.0
    %v8934 = vand.u32 %v108, 4294901760
    %8935 = vmatpush1.msra.mxu0 %v8934
    %8936 = vmatprep.subr.mxu0 0.0
    %8937 = vmatpush2.msra.mxu0 0.0
    %8938 = vmatprep.subr.mxu0 0.0
    %8939 = vmatpush2.msra.mxu0 0.0
    %8940 = vmatprep.subr.mxu0 0.0
    %8941 = vmatpush2.msra.mxu0 0.0
    %8942 = vmatprep.subr.mxu0 0.0
    %8943 = vmatpush2.msra.mxu0 0.0
    %8944 = vmatprep.subr.mxu0 0.0
    %8945 = vmatpush2.msra.mxu0 0.0
    %8946 = vmatprep.subr.mxu0 0.0
    %8947 = vmatpush2.msra.mxu0 0.0
    %8948 = vmatprep.subr.mxu0 0.0
    %8949 = vmatpush2.msra.mxu0 0.0
    %8950 = vmatprep.subr.mxu0 0.0
    %8951 = vmatpush2.msra.mxu0 0.0
    %8952 = vmatprep.subr.mxu0 0.0
    %8953 = vmatpush2.msra.mxu0 0.0
    %8954 = vmatprep.subr.mxu0 0.0
    %8955 = vmatpush2.msra.mxu0 0.0
    %8956 = vmatprep.subr.mxu0 0.0
    %8957 = vmatpush2.msra.mxu0 0.0
    %8958 = vmatprep.subr.mxu0 0.0
    %8959 = vmatpush2.msra.mxu0 0.0
    %8960 = vmatprep.subr.mxu0 0.0
    %8961 = vmatpush2.msra.mxu0 0.0
    %8962 = vmatprep.subr.mxu0 0.0
    %8963 = vmatpush2.msra.mxu0 0.0
    %8964 = vmatprep.subr.mxu0 0.0
    %8965 = vmatpush2.msra.mxu0 0.0
    %8966 = vmatprep.subr.mxu0 0.0
    %8967 = vmatpush2.msra.mxu0 0.0
    %8968 = vmatprep.mubr.f32.mxu0 0.0
    %v8969 = vand.u32 %v8488, 4294901760
    %8970 = vmatmul.mubr.f32.gmra.mxu0 %v8969
    %v8971 = vpop.f32.mrf.mxu0
    %v8972 = vadd.f32 %v8897, %v8971
    %v8973 = vpop.f32.mrf.mxu0
    %8974 = vdwg.mxu0
    %v8975 = vadd.f32 %v8484, %v8972
    %v8976 = vtanh.pop %v8975
    %v8977 = vmul.f32 %v8976, 0.5
    %v8978 = vadd.f32 %v8977, 0.5
    %v8979 = vsel %vm119, %v8976, %v8978
    %v8980 = vmul.f32 %v8979, %v8477
    %8982 = vrot.lane.b32.xlu0 %v8979, 64
    %v8983 = vpop.permute.xlu0 %8982
    %v8985 = vmul.f32 %v8979, %v8983
    %8987 = vrot.lane.b32.xlu0 %v8985, 32
    %v8988 = vpop.permute.xlu0 %8987
    %v8990 = vadd.f32 %v8980, %v8988
    %v8991 = vtanh.pop %v8990
    %8993 = vrot.lane.b32.xlu0 %v8991, 64
    %v8994 = vpop.permute.xlu0 %8993
    %v8996 = vmul.f32 %v8979, %v8994
    %8997 = vst.msk [vmem:[%s5] sm:$0x1] %vm647, %v4257
    %8999 = vrot.lane.b32.xlu0 %v8996, 32
    %v9000 = vpop.permute.xlu0 %8999
    %s9002 = scalar_lea.vmem %s5, 1
    %9003 = vst.msk [vmem:[%s9002] sm:$0x1] %vm647, %v9000
    %9005 = vrot.lane.b32.xlu0 %v4248, 96
    %v9006 = vpop.permute.xlu0 %9005
    %s9008 = scalar_lea.vmem %s5, 2
    %9009 = vst.msk [vmem:[%s9008] sm:$0x1] %vm647, %v9006
    %9011 = vrot.lane.b32.xlu0 %v8990, 96
    %v9012 = vpop.permute.xlu0 %9011
    %s9014 = scalar_lea.vmem %s5, 3
    %9015 = vst.msk [vmem:[%s9014] sm:$0x1] %vm647, %v9012
    %9017 = vrot.lane.b32.xlu0 %v113, 96
    %v9018 = vpop.permute.xlu0 %9017
    %v9020 = vmul.f32 %v8996, %v9018
    %9022 = vrot.lane.b32.xlu0 %v9020, 32
    %v9023 = vpop.permute.xlu0 %9022
    %v9025 = vsel %vm647, %v9023, 0.0
    %9026 = vadd.xlane.f32.xlu0 %v9025
    %v9027 = vpop.xlane.xlu0 %9026
    %v9028 = vadd.f32 %v9027, %v114
    %v9029 = vxor.u32 %v9028, 2147483648
    %v9030 = vmul.f32 %v9029, 1.442695
    %v9031 = vpow.pop %v9030
    %v9032 = vadd.f32 %v9031, 1.0
    %v9033 = vrcp.pop %v9032
    %v9034 = vmul.f32 1.0, %v9033
    %vm9035 = vcmask 0
    %9036 = vst.msk [vmem:[#allocation11] sm:$0x1] %vm9035, %v9034
    // Predicated region
    $region30: #{sentiment_lstm_forward.1} parent=1 // pred_check
      _
    $region31: #{sentiment_lstm_forward.1} parent=1 // pred_check_branch
      %9038 = sbr.rel (0) target = $region33
    $region32: #{sentiment_lstm_forward.1} parent=1 // pred_region
      %s9040 = ssub.s32 16, 16
      %9041 = vsyncadd [#allocation6], %s9040
      %s9043 = sshll.u32 [#allocation11], 4
      %s9044 = int_to_ptr.vmem [resolvable:$true] %s9043
      %9046 = dma.vmem_to_hbm [thread:$0]  %s9044, 16, %s4, [#allocation6]
    $region33: #{sentiment_lstm_forward.1} parent=1 // pred_fallthru
      _
    // Predicated region
    $region34: #{sentiment_lstm_forward.1} parent=1 // pred_check
      _
    $region35: #{sentiment_lstm_forward.1} parent=1 // pred_check_branch
      %9048 = sbr.rel (0) target = $region37
    $region36: #{sentiment_lstm_forward.1} parent=1 // pred_region
      _
    $region37: #{sentiment_lstm_forward.1} parent=1 // pred_fallthru
      _
    // Predicated region
    $region38: #{sentiment_lstm_forward.1} parent=1 // pred_check
      _
    $region39: #{sentiment_lstm_forward.1} parent=1 // pred_check_branch
      %9050 = sbr.rel (0) target = $region41
    $region40: #{sentiment_lstm_forward.1} parent=1 // pred_region
      %9051 = dma.done [#allocation6], 16
    $region41: #{sentiment_lstm_forward.1} parent=1 // pred_fallthru
      _
    // Predicated region
    $region42: #{sentiment_lstm_forward.1} parent=1 // pred_check
      _
    $region43: #{sentiment_lstm_forward.1} parent=1 // pred_check_branch
      %9053 = sbr.rel (0) target = $region45
    $region44: #{sentiment_lstm_forward.1} parent=1 // pred_region
      _
    $region45: #{sentiment_lstm_forward.1} parent=1 // pred_fallthru
      _
    %9054 = vsyncpa [#allocation5], 1
    %9055 = vsyncpa [#allocation10], 1
    %9056 = vsyncpa [#allocation6], 1
    %9057 = vsyncpa [#allocation7], 1

</llo_original>
